<compile_context>
chip_gen: v5e
topology: v5e:2x2
jax: 0.10.0
libtpu: 0.0.40
codegen_flags: <defaults>
</compile_context>

<pallas_src>
import numpy as np
import jax
import jax.numpy as jnp
from jax import lax
from jax.experimental import pallas as pl
from jax.experimental.pallas import tpu as pltpu

H1_R1, H2_R1 = 1600, 200     # Relation1 hidden sizes (fixed by the PyTorch spec)
H1_R2, H2_R2 = 512, 64       # Relation2 hidden sizes


def _round_up(x, m):
    return (x + m - 1) // m * m


def _sel_matrices(n, m_pad):
    """S = [J | I] with J[r, j] = (j == r % m_pad), I[r, i] = (i == r // m_pad).

    h1_pre = S @ concat([c; a]) expands fc1 activations to the flat pair layout
    (row r = pair (i = r // m_pad, j = r % m_pad)) in a single selection GEMM.
    C = I^T collects flat rows back to [n, ...]; sel = S[:, :m_pad] masks columns.
    """
    r = np.arange(n * m_pad)
    J = (r[:, None] % m_pad == np.arange(m_pad)[None, :]).astype(np.float32)
    I = (r[:, None] // m_pad == np.arange(n)[None, :]).astype(np.float32)
    return np.concatenate([J, I], axis=1), np.ascontiguousarray(I.T)


# ----------------------------------------------------------------------------
# fused forward kernel (one grid step = support path + relation2 + one query
# block of relation1)
# ----------------------------------------------------------------------------

def _make_kernel(shot, way, q_blk, f_dim, z_dim, G, m1_pad, m2_pad):
    f32, bf16 = jnp.float32, jnp.bfloat16
    n1b, n2 = q_blk, way

    def kernel(shot_x_ref, query_x_ref, glob_ref, vec_ref,
               base_w_ref, reg_w_ref, r1_w1_ref, r1_w2_ref,
               r2_w1_ref, r2_w2_ref, w3_ref, s_ref, c_ref,
               out1_ref, logits2_ref):
        # ---- unpack packed constants (static slices of VMEM-resident blobs) --
        vb = vec_ref[...]                                   # [13, vec_w] f32
        base_b = vb[0:1, 0:f_dim]
        rs_b = vb[1:2, 0:z_dim]
        rq_b = vb[2:3, 0:z_dim]
        rs_g = vb[3:4, 0:z_dim]
        rq_g = vb[4:5, 0:z_dim]
        rs_be = vb[5:6, 0:z_dim]
        rq_be = vb[6:7, 0:z_dim]
        r2_b1 = vb[7:8, 0:H1_R2]
        r2_b2 = vb[8:9, 0:H2_R2]
        r2_b3 = vb[9:10, 0:1]
        r1_b1 = vb[10:11, 0:H1_R1]
        r1_b2 = vb[11:12, 0:H2_R1]
        r1_b3 = vb[12:13, 0:1]

        sb = s_ref[...]                                     # bf16 selection blob
        cb = c_ref[...]                                     # f32 collect/avg blob
        S1 = sb[0:n1b * m1_pad, 0:m1_pad + n1b]
        S2 = sb[n1b * m1_pad:n1b * m1_pad + n2 * m2_pad, 0:m2_pad + n2]
        C1 = cb[0:n1b, 0:n1b * m1_pad]
        C2 = cb[n1b:n1b + n2, 0:n2 * m2_pad]
        AVG = cb[n1b + n2:n1b + 2 * n2, 0:shot * way]

        w3b = w3_ref[...]                                   # bf16, w3 tiled to m_pad cols
        w3t_1 = w3b[0:H2_R1, 0:m1_pad]
        w3t_2 = w3b[H2_R1:H2_R1 + H2_R2, 0:m2_pad]

        base_w = base_w_ref[...]
        glob = glob_ref[...]                                # [G, f_dim] f32

        def base_model(x):
            # TODO(synk): baseModel is an injected external backbone in PyTorch;
            # modeled here as flatten(NCHW) + Linear + ReLU (single MXU GEMM).
            y = jnp.dot(x.astype(bf16), base_w, preferred_element_type=f32) + base_b
            return jnp.maximum(y, 0.0)

        def bn_relu(t, g, b):
            # BatchNorm1d, training-mode batch stats (biased variance) + ReLU.
            # TODO(synk): eval-mode running-stat BN is not modeled.
            mu = jnp.mean(t, axis=0, keepdims=True)
            var = jnp.mean((t - mu) * (t - mu), axis=0, keepdims=True)
            return jnp.maximum((t - mu) * lax.rsqrt(var + 1e-5) * g + b, 0.0)

        def pair_relation(x1, x2p, S, C, m_pad, w1, b1, w2, b2, w3t, b3):
            """out[i, j] = fc3(relu(fc2(relu(fc1(cat[x1_i, x2p_j])))))  ->  [n, m_pad]

            fc1 is split (cat @ W1 == x1 @ W1a + x2 @ W1b); the pair expansion is a
            single 0/1 selection GEMM (S); flat activations are carried in bf16.
            """
            n, d = x1.shape
            w1a = w1[0:d, :]
            w1b = w1[d:2 * d, :]
            a = jnp.dot(x1.astype(bf16), w1a, preferred_element_type=f32)        # [n, H1]
            c = jnp.dot(x2p.astype(bf16), w1b, preferred_element_type=f32) + b1  # [m_pad, H1]
            ac = jnp.concatenate([c, a], axis=0).astype(bf16)                    # [m_pad+n, H1]
            h1 = jnp.maximum(jnp.dot(S, ac, preferred_element_type=f32), 0.0)
            h1 = h1.astype(bf16)                                                 # [n*m_pad, H1]
            h2 = jnp.dot(h1, w2, preferred_element_type=f32) + b2
            h2 = jnp.maximum(h2, 0.0).astype(bf16)                               # [n*m_pad, H2]
            z = jnp.dot(h2, w3t, preferred_element_type=f32)                     # [n*m_pad, m_pad]
            sel = S[:, 0:m_pad]                                                  # exact 0/1 mask
            out = jnp.dot(C, z * sel, preferred_element_type=f32)                # [n, m_pad]
            return out + b3

        # ---- support path (small; recomputed per grid step so the query-block
        #      axis stays "parallel" across TensorCores) ------------------------
        proto = base_model(shot_x_ref[...])                              # [shot*way, f_dim]
        proto_final = jnp.dot(AVG, proto, preferred_element_type=f32) * (1.0 / shot)

        # Registrator: Linear -> BN(train) -> ReLU, support & query branches
        ys = jnp.dot(glob.astype(bf16), reg_w_ref[0], preferred_element_type=f32) + rs_b
        yq = jnp.dot(proto_final.astype(bf16), reg_w_ref[1],
                     preferred_element_type=f32) + rq_b
        global_new = bn_relu(ys, rs_g, rs_be)                            # [G, z_dim]
        proto_new = bn_relu(yq, rq_g, rq_be)                             # [way, z_dim]

        # Relation2 + L1-normalize + feature (glob already resident in VMEM)
        gnew_p = global_new
        if m2_pad > G:
            gnew_p = jnp.concatenate(
                [global_new, jnp.zeros((m2_pad - G, z_dim), f32)], axis=0)
        out2 = pair_relation(proto_new, gnew_p, S2, C2, m2_pad,
                             r2_w1_ref[...], r2_b1, r2_w2_ref[...], r2_b2,
                             w3t_2, r2_b3)                               # [way, m2_pad]
        logits2 = out2[:, 0:G]                                           # [way, G]
        logits2_ref[0] = logits2

        denom = jnp.maximum(jnp.sum(jnp.abs(logits2), axis=-1, keepdims=True), 1e-12)
        sim = logits2 / denom
        feature = jnp.dot(sim.astype(bf16), glob.astype(bf16),
                          preferred_element_type=f32)                    # [way, f_dim]

        # ---- relation1 for this query block vs. merged x2 = [feature; glob] ---
        q_proto = base_model(query_x_ref[...])                           # [q_blk, f_dim]
        parts = [feature, glob]
        if m1_pad > way + G:
            parts.append(jnp.zeros((m1_pad - (way + G), f_dim), f32))
        x2p = jnp.concatenate(parts, axis=0)                             # [m1_pad, f_dim]
        out1 = pair_relation(q_proto, x2p, S1, C1, m1_pad,
                             r1_w1_ref[...], r1_b1, r1_w2_ref[...], r1_b2,
                             w3t_1, r1_b3)                               # [q_blk, m1_pad]
        out1_ref[...] = out1

    return kernel


# ----------------------------------------------------------------------------
# GCR_ni forward (single pallas_call; label/gt bookkeeping in plain JAX)
# ----------------------------------------------------------------------------

def gcr_ni_forward(params, cfg, data_shot, data_query, lab, mode='train'):
    if mode == 'train':
        way, query = cfg['train_way'], cfg['query']
    else:
        way, query = cfg['test_way'], cfg['query_val']
    shot, f_dim, z_dim = cfg['shot'], cfg['f_dim'], cfg['z_dim']
    p = shot * way
    gt = lab[:p].reshape(shot, way)[0, :]

    glob = jnp.concatenate([params['global_base'], params['global_novel']], axis=0)
    G = glob.shape[0]
    n1 = query * way
    m1_pad = _round_up(way + G, 8)
    m2_pad = _round_up(G, 8)

    # Query rows processed in blocks (grid axis, "parallel" -> both TCs on v7x),
    # which also bounds the [q_blk*m1_pad, 1600] flat relation1 intermediate.
    q_blk = 8 if (n1 % 8 == 0 and n1 >= 8) else n1
    num_blocks = n1 // q_blk
    # TODO(synk): at production G/f_dim also cap q_blk*m1_pad*1600*6B to ~8-16 MiB
    # so the per-step working set stays inside v7x's 64 MiB physical VMEM.

    shot_x = data_shot.reshape(data_shot.shape[0], -1)
    query_x = data_query.reshape(data_query.shape[0], -1)
    in_dim = shot_x.shape[1]

    rs, rq = params['reg_support'], params['reg_query']
    r1, r2 = params['relation1'], params['relation2']

    # --- pack all small f32 vectors into one blob (1 DMA instead of 13) -------
    vec_w = max(f_dim, z_dim, H1_R1, H2_R1, H1_R2, H2_R2)

    def row(v):
        v = jnp.asarray(v, jnp.float32).reshape(1, -1)
        return jnp.pad(v, ((0, 0), (0, vec_w - v.shape[1])))

    vec_blob = jnp.concatenate([
        row(params['base']['b']),
        row(rs['b']), row(rq['b']),
        row(rs['gamma']), row(rq['gamma']),
        row(rs['beta']), row(rq['beta']),
        row(r2['b1']), row(r2['b2']), row(r2['b3']),
        row(r1['b1']), row(r1['b2']), row(r1['b3']),
    ], axis=0)

    # --- packed bf16 weights ----------------------------------------------------
    reg_w = jnp.stack([rs['w'], rq['w']], axis=0)                # [2, f_dim, z_dim]
    w3_w = max(m1_pad, m2_pad)
    w3_blob = jnp.concatenate([
        jnp.pad(jnp.tile(r1['w3'], (1, m1_pad)), ((0, 0), (0, w3_w - m1_pad))),
        jnp.pad(jnp.tile(r2['w3'], (1, m2_pad)), ((0, 0), (0, w3_w - m2_pad))),
    ], axis=0).astype(jnp.bfloat16)                              # [H2_R1+H2_R2, w3_w]

    # --- hoisted 0/1 selection / collect / averaging constants ------------------
    S1_np, C1_np = _sel_matrices(q_blk, m1_pad)
    S2_np, C2_np = _sel_matrices(way, m2_pad)
    s_w = max(S1_np.shape[1], S2_np.shape[1])
    S_blob = jnp.asarray(np.concatenate([
        np.pad(S1_np, ((0, 0), (0, s_w - S1_np.shape[1]))),
        np.pad(S2_np, ((0, 0), (0, s_w - S2_np.shape[1]))),
    ], axis=0), jnp.bfloat16)
    avg_np = (np.arange(shot * way)[None, :] % way
              == np.arange(way)[:, None]).astype(np.float32)     # proto.mean(0) as a GEMM
    c_w = max(C1_np.shape[1], C2_np.shape[1], avg_np.shape[1])
    C_blob = jnp.asarray(np.concatenate([
        np.pad(C1_np, ((0, 0), (0, c_w - C1_np.shape[1]))),
        np.pad(C2_np, ((0, 0), (0, c_w - C2_np.shape[1]))),
        np.pad(avg_np, ((0, 0), (0, c_w - avg_np.shape[1]))),
    ], axis=0), jnp.float32)

    args = (shot_x, query_x, glob, vec_blob,
            params['base']['w'], reg_w, r1['w1'], r1['w2'], r2['w1'], r2['w2'],
            w3_blob, S_blob, C_blob)

    def full(a):
        nd = a.ndim
        return pl.BlockSpec(a.shape, lambda i: (0,) * nd)

    in_specs = [
        full(shot_x),
        pl.BlockSpec((q_blk, in_dim), lambda i: (i, 0)),
        full(glob), full(vec_blob), full(params['base']['w']), full(reg_w),
        full(r1['w1']), full(r1['w2']), full(r2['w1']), full(r2['w2']),
        full(w3_blob), full(S_blob), full(C_blob),
    ]
    out_shape = (jax.ShapeDtypeStruct((n1, m1_pad), jnp.float32),
                 jax.ShapeDtypeStruct((num_blocks, way, G), jnp.float32))
    out_specs = (pl.BlockSpec((q_blk, m1_pad), lambda i: (i, 0)),
                 pl.BlockSpec((1, way, G), lambda i: (i, 0, 0)))

    # scoped-VMEM budget: resident blocks (double-buffered) + flat intermediates
    def nbytes(a):
        return int(np.prod(a.shape)) * jnp.dtype(a.dtype).itemsize

    resident = sum(nbytes(a) for a in args) + n1 * m1_pad * 4 + num_blocks * way * G * 4
    flat = q_blk * m1_pad * H1_R1 * 6 + way * m2_pad * H1_R2 * 6
    vmem_limit = int(min(100 << 20, max(32 << 20, 2 * resident + 2 * flat + (4 << 20))))

    kernel = _make_kernel(shot, way, q_blk, f_dim, z_dim, G, m1_pad, m2_pad)
    out1, logits2_steps = pl.pallas_call(
        kernel,
        grid=(num_blocks,),
        in_specs=in_specs,
        out_specs=out_specs,
        out_shape=out_shape,
        compiler_params=pltpu.CompilerParams(
            dimension_semantics=("parallel",),
            vmem_limit_bytes=vmem_limit),
    )(*args)

    logits2 = logits2_steps[0]                  # identical across grid steps
    logits = out1[:, :way]                      # relation1 vs. feature
    logits3 = out1[:, way:way + G]              # relation1 vs. [global_base; global_novel]

    label = jnp.tile(jnp.arange(way, dtype=jnp.int32), query)
    gt3 = jnp.tile(gt, query)
    return logits, label, logits2, gt, logits3, gt3


# ----------------------------------------------------------------------------
# Deterministic parameter initialization (synthetic; matmul weights in bf16)
# ----------------------------------------------------------------------------

def _init_linear(key, d_in, d_out, scale=0.05):
    kw, kb = jax.random.split(key)
    w = (jax.random.normal(kw, (d_in, d_out), jnp.float32) * scale).astype(jnp.bfloat16)
    b = jax.random.normal(kb, (1, d_out), jnp.float32) * scale
    return w, b


def _init_relation(key, h_dim, h1, h2):
    k1, k2, k3 = jax.random.split(key, 3)
    w1, b1 = _init_linear(k1, h_dim, h1)
    w2, b2 = _init_linear(k2, h1, h2)
    w3, b3 = _init_linear(k3, h2, 1)
    return dict(w1=w1, b1=b1, w2=w2, b2=b2, w3=w3, b3=b3)


def init_params(key, cfg, in_dim, n_base, n_novel):
    ks = jax.random.split(key, 7)
    f_dim, z_dim = cfg['f_dim'], cfg['z_dim']
    wb, bb = _init_linear(ks[0], in_dim, f_dim)
    ws, bs = _init_linear(ks[1], f_dim, z_dim)
    wq, bq = _init_linear(ks[2], f_dim, z_dim)
    return dict(
        base=dict(w=wb, b=bb),
        reg_support=dict(w=ws, b=bs,
                         gamma=jnp.ones((1, z_dim), jnp.float32),
                         beta=jnp.zeros((1, z_dim), jnp.float32)),
        reg_query=dict(w=wq, b=bq,
                       gamma=jnp.ones((1, z_dim), jnp.float32),
                       beta=jnp.zeros((1, z_dim), jnp.float32)),
        relation1=_init_relation(ks[3], 2 * f_dim, H1_R1, H2_R1),
        relation2=_init_relation(ks[4], 2 * z_dim, H1_R2, H2_R2),
        global_base=jax.random.normal(ks[5], (n_base, f_dim), jnp.float32) * 0.05,
        global_novel=jax.random.normal(ks[6], (n_novel, f_dim), jnp.float32) * 0.05,
    )


# ----------------------------------------------------------------------------

if __name__ == "__main__":
    cfg = dict(train_way=4, test_way=4, shot=2, query=4, query_val=4,
               f_dim=64, z_dim=32)
    C, H, W = 4, 8, 8
    n_base, n_novel = 6, 4

    key = jax.random.PRNGKey(0)
    kp, k1, k2 = jax.random.split(key, 3)

    params = init_params(kp, cfg, in_dim=C * H * W, n_base=n_base, n_novel=n_novel)

    way, shot, query = cfg['train_way'], cfg['shot'], cfg['query']
    data_shot = jax.random.normal(k1, (shot * way, C, H, W), jnp.float32)
    data_query = jax.random.normal(k2, (query * way, C, H, W), jnp.float32)
    lab = jnp.tile(jnp.arange(way, dtype=jnp.int32) + 100, shot)   # class ids for shots

    outs = gcr_ni_forward(params, cfg, data_shot, data_query, lab, mode='train')
    outs = jax.block_until_ready(outs)

    logits, label, logits2, gt, logits3, gt3 = outs
    G = n_base + n_novel
    assert logits.shape == (query * way, way)
    assert label.shape == (query * way,)
    assert logits2.shape == (way, G)
    assert gt.shape == (way,)
    assert logits3.shape == (query * way, G)
    assert gt3.shape == (query * way,)
    assert bool(jnp.all(jnp.isfinite(logits)))
    assert bool(jnp.all(jnp.isfinite(logits2)))
    assert bool(jnp.all(jnp.isfinite(logits3)))
    print("KERNEL_OK")
</pallas_src>

<mosaic_0001>
module attributes {stable_mosaic.version = 11 : i64} {
  func.func @kernel(%arg0: i32, %arg1: memref<8x256xf32, #tpu.memory_space<vmem>>, %arg2: memref<8x256xf32, #tpu.memory_space<vmem>>, %arg3: memref<10x64xf32, #tpu.memory_space<vmem>>, %arg4: memref<13x1600xf32, #tpu.memory_space<vmem>>, %arg5: memref<256x64xbf16, #tpu.memory_space<vmem>>, %arg6: memref<2x64x32xbf16, #tpu.memory_space<vmem>>, %arg7: memref<128x1600xbf16, #tpu.memory_space<vmem>>, %arg8: memref<1600x200xbf16, #tpu.memory_space<vmem>>, %arg9: memref<64x512xbf16, #tpu.memory_space<vmem>>, %arg10: memref<512x64xbf16, #tpu.memory_space<vmem>>, %arg11: memref<264x16xbf16, #tpu.memory_space<vmem>>, %arg12: memref<192x24xbf16, #tpu.memory_space<vmem>>, %arg13: memref<16x128xf32, #tpu.memory_space<vmem>>, %arg14: memref<8x16xf32, #tpu.memory_space<vmem>>, %arg15: memref<1x4x10xf32, #tpu.memory_space<vmem>>) attributes {dimension_semantics = [#tpu.dimension_semantics<parallel>], iteration_bounds = array<i64: 2>, scalar_prefetch = 0 : i64, scratch_operands = 0 : i64, tpu.core_type = #tpu.core_type<tc>, window_params = [{pipeline_mode = #tpu.pipeline_mode<synchronous>, transform_indices = @transform_0, window_bounds = array<i64: 8, 256>}, {transform_indices = @transform_1, window_bounds = array<i64: 8, 256>}, {pipeline_mode = #tpu.pipeline_mode<synchronous>, transform_indices = @transform_2, window_bounds = array<i64: 10, 64>}, {pipeline_mode = #tpu.pipeline_mode<synchronous>, transform_indices = @transform_3, window_bounds = array<i64: 13, 1600>}, {pipeline_mode = #tpu.pipeline_mode<synchronous>, transform_indices = @transform_4, window_bounds = array<i64: 256, 64>}, {pipeline_mode = #tpu.pipeline_mode<synchronous>, transform_indices = @transform_5, window_bounds = array<i64: 2, 64, 32>}, {pipeline_mode = #tpu.pipeline_mode<synchronous>, transform_indices = @transform_6, window_bounds = array<i64: 128, 1600>}, {pipeline_mode = #tpu.pipeline_mode<synchronous>, transform_indices = @transform_7, window_bounds = array<i64: 1600, 200>}, {pipeline_mode = #tpu.pipeline_mode<synchronous>, transform_indices = @transform_8, window_bounds = array<i64: 64, 512>}, {pipeline_mode = #tpu.pipeline_mode<synchronous>, transform_indices = @transform_9, window_bounds = array<i64: 512, 64>}, {pipeline_mode = #tpu.pipeline_mode<synchronous>, transform_indices = @transform_10, window_bounds = array<i64: 264, 16>}, {pipeline_mode = #tpu.pipeline_mode<synchronous>, transform_indices = @transform_11, window_bounds = array<i64: 192, 24>}, {pipeline_mode = #tpu.pipeline_mode<synchronous>, transform_indices = @transform_12, window_bounds = array<i64: 16, 128>}, {transform_indices = @transform_13, window_bounds = array<i64: 8, 16>}, {transform_indices = @transform_14, window_bounds = array<i64: 1, 4, 10>}]} {
    %c0 = arith.constant 0 : index
    %c0_0 = arith.constant 0 : index
    %0 = vector.load %arg4[%c0, %c0_0] : memref<13x1600xf32, #tpu.memory_space<vmem>>, vector<13x1600xf32>
    %1 = vector.extract_strided_slice %0 {offsets = [0, 0], sizes = [1, 64], strides = [1, 1]} : vector<13x1600xf32> to vector<1x64xf32>
    %2 = vector.extract_strided_slice %0 {offsets = [1, 0], sizes = [1, 32], strides = [1, 1]} : vector<13x1600xf32> to vector<1x32xf32>
    %3 = vector.extract_strided_slice %0 {offsets = [2, 0], sizes = [1, 32], strides = [1, 1]} : vector<13x1600xf32> to vector<1x32xf32>
    %4 = vector.extract_strided_slice %0 {offsets = [3, 0], sizes = [1, 32], strides = [1, 1]} : vector<13x1600xf32> to vector<1x32xf32>
    %5 = vector.extract_strided_slice %0 {offsets = [4, 0], sizes = [1, 32], strides = [1, 1]} : vector<13x1600xf32> to vector<1x32xf32>
    %6 = vector.extract_strided_slice %0 {offsets = [5, 0], sizes = [1, 32], strides = [1, 1]} : vector<13x1600xf32> to vector<1x32xf32>
    %7 = vector.extract_strided_slice %0 {offsets = [6, 0], sizes = [1, 32], strides = [1, 1]} : vector<13x1600xf32> to vector<1x32xf32>
    %8 = vector.extract_strided_slice %0 {offsets = [7, 0], sizes = [1, 512], strides = [1, 1]} : vector<13x1600xf32> to vector<1x512xf32>
    %9 = vector.extract_strided_slice %0 {offsets = [8, 0], sizes = [1, 64], strides = [1, 1]} : vector<13x1600xf32> to vector<1x64xf32>
    %10 = vector.extract_strided_slice %0 {offsets = [9, 0], sizes = [1, 1], strides = [1, 1]} : vector<13x1600xf32> to vector<1x1xf32>
    %11 = vector.extract_strided_slice %0 {offsets = [10, 0], sizes = [1, 1600], strides = [1, 1]} : vector<13x1600xf32> to vector<1x1600xf32>
    %12 = vector.extract_strided_slice %0 {offsets = [11, 0], sizes = [1, 200], strides = [1, 1]} : vector<13x1600xf32> to vector<1x200xf32>
    %13 = vector.extract_strided_slice %0 {offsets = [12, 0], sizes = [1, 1], strides = [1, 1]} : vector<13x1600xf32> to vector<1x1xf32>
    %c0_1 = arith.constant 0 : index
    %c0_2 = arith.constant 0 : index
    %14 = vector.load %arg12[%c0_1, %c0_2] : memref<192x24xbf16, #tpu.memory_space<vmem>>, vector<192x24xbf16>
    %c0_3 = arith.constant 0 : index
    %c0_4 = arith.constant 0 : index
    %15 = vector.load %arg13[%c0_3, %c0_4] : memref<16x128xf32, #tpu.memory_space<vmem>>, vector<16x128xf32>
    %16 = vector.extract_strided_slice %14 {offsets = [0, 0], sizes = [128, 24], strides = [1, 1]} : vector<192x24xbf16> to vector<128x24xbf16>
    %17 = vector.extract_strided_slice %14 {offsets = [128, 0], sizes = [64, 20], strides = [1, 1]} : vector<192x24xbf16> to vector<64x20xbf16>
    %18 = vector.extract_strided_slice %15 {offsets = [0, 0], sizes = [8, 128], strides = [1, 1]} : vector<16x128xf32> to vector<8x128xf32>
    %19 = vector.extract_strided_slice %15 {offsets = [8, 0], sizes = [4, 64], strides = [1, 1]} : vector<16x128xf32> to vector<4x64xf32>
    %20 = vector.extract_strided_slice %15 {offsets = [12, 0], sizes = [4, 8], strides = [1, 1]} : vector<16x128xf32> to vector<4x8xf32>
    %c0_5 = arith.constant 0 : index
    %c0_6 = arith.constant 0 : index
    %21 = vector.load %arg11[%c0_5, %c0_6] : memref<264x16xbf16, #tpu.memory_space<vmem>>, vector<264x16xbf16>
    %22 = vector.extract_strided_slice %21 {offsets = [0, 0], sizes = [200, 16], strides = [1, 1]} : vector<264x16xbf16> to vector<200x16xbf16>
    %23 = vector.extract_strided_slice %21 {offsets = [200, 0], sizes = [64, 16], strides = [1, 1]} : vector<264x16xbf16> to vector<64x16xbf16>
    %c0_7 = arith.constant 0 : index
    %c0_8 = arith.constant 0 : index
    %24 = vector.load %arg5[%c0_7, %c0_8] : memref<256x64xbf16, #tpu.memory_space<vmem>>, vector<256x64xbf16>
    %c0_9 = arith.constant 0 : index
    %c0_10 = arith.constant 0 : index
    %25 = vector.load %arg3[%c0_9, %c0_10] : memref<10x64xf32, #tpu.memory_space<vmem>>, vector<10x64xf32>
    %c0_11 = arith.constant 0 : index
    %c0_12 = arith.constant 0 : index
    %26 = vector.load %arg1[%c0_11, %c0_12] : memref<8x256xf32, #tpu.memory_space<vmem>>, vector<8x256xf32>
    %27 = arith.truncf %26 : vector<8x256xf32> to vector<8x256xbf16>
    %cst = arith.constant dense<0.000000e+00> : vector<8x64xf32>
    %28 = tpu.matmul %27, %24, %cst {dimension_numbers = #tpu.dot_dimension_numbers<[1], [0], [0], [1], [0, 0, 1, 1], [], []>} : vector<8x256xbf16>, vector<256x64xbf16>, vector<8x64xf32> -> vector<8x64xf32>
    %29 = vector.broadcast %1 : vector<1x64xf32> to vector<8x64xf32>
    %30 = arith.addf %28, %29 : vector<8x64xf32>
    %cst_13 = arith.constant 0.000000e+00 : f32
    %31 = vector.broadcast %cst_13 : f32 to vector<8x64xf32>
    %32 = arith.maximumf %30, %31 : vector<8x64xf32>
    %cst_14 = arith.constant dense<0.000000e+00> : vector<4x64xf32>
    %33 = tpu.matmul %20, %32, %cst_14 {dimension_numbers = #tpu.dot_dimension_numbers<[1], [0], [0], [1], [0, 0, 1, 1], [], []>} : vector<4x8xf32>, vector<8x64xf32>, vector<4x64xf32> -> vector<4x64xf32>
    %cst_15 = arith.constant 5.000000e-01 : f32
    %34 = vector.broadcast %cst_15 : f32 to vector<4x64xf32>
    %35 = arith.mulf %33, %34 : vector<4x64xf32>
    %36 = arith.truncf %25 : vector<10x64xf32> to vector<10x64xbf16>
    %c0_16 = arith.constant 0 : index
    %c0_17 = arith.constant 0 : index
    %c0_18 = arith.constant 0 : index
    %37 = vector.load %arg6[%c0_16, %c0_17, %c0_18] : memref<2x64x32xbf16, #tpu.memory_space<vmem>>, vector<1x64x32xbf16>
    %38 = vector.shape_cast %37 : vector<1x64x32xbf16> to vector<64x32xbf16>
    %cst_19 = arith.constant dense<0.000000e+00> : vector<10x32xf32>
    %39 = tpu.matmul %36, %38, %cst_19 {dimension_numbers = #tpu.dot_dimension_numbers<[1], [0], [0], [1], [0, 0, 1, 1], [], []>} : vector<10x64xbf16>, vector<64x32xbf16>, vector<10x32xf32> -> vector<10x32xf32>
    %40 = vector.broadcast %2 : vector<1x32xf32> to vector<10x32xf32>
    %41 = arith.addf %39, %40 : vector<10x32xf32>
    %42 = arith.truncf %35 : vector<4x64xf32> to vector<4x64xbf16>
    %c1 = arith.constant 1 : index
    %c0_20 = arith.constant 0 : index
    %c0_21 = arith.constant 0 : index
    %43 = vector.load %arg6[%c1, %c0_20, %c0_21] : memref<2x64x32xbf16, #tpu.memory_space<vmem>>, vector<1x64x32xbf16>
    %44 = vector.shape_cast %43 : vector<1x64x32xbf16> to vector<64x32xbf16>
    %cst_22 = arith.constant dense<0.000000e+00> : vector<4x32xf32>
    %45 = tpu.matmul %42, %44, %cst_22 {dimension_numbers = #tpu.dot_dimension_numbers<[1], [0], [0], [1], [0, 0, 1, 1], [], []>} : vector<4x64xbf16>, vector<64x32xbf16>, vector<4x32xf32> -> vector<4x32xf32>
    %46 = vector.broadcast %3 : vector<1x32xf32> to vector<4x32xf32>
    %47 = arith.addf %45, %46 : vector<4x32xf32>
    %cst_23 = arith.constant dense<0.000000e+00> : vector<32xf32>
    %48 = vector.multi_reduction <add>, %41, %cst_23 [0] : vector<10x32xf32> to vector<32xf32>
    %49 = vector.shape_cast %48 : vector<32xf32> to vector<1x32xf32>
    %cst_24 = arith.constant 1.000000e+01 : f32
    %50 = vector.broadcast %cst_24 : f32 to vector<1x32xf32>
    %51 = arith.divf %49, %50 : vector<1x32xf32>
    %52 = vector.broadcast %51 : vector<1x32xf32> to vector<10x32xf32>
    %53 = arith.subf %41, %52 : vector<10x32xf32>
    %54 = vector.broadcast %51 : vector<1x32xf32> to vector<10x32xf32>
    %55 = arith.subf %41, %54 : vector<10x32xf32>
    %56 = arith.mulf %53, %55 : vector<10x32xf32>
    %cst_25 = arith.constant dense<0.000000e+00> : vector<32xf32>
    %57 = vector.multi_reduction <add>, %56, %cst_25 [0] : vector<10x32xf32> to vector<32xf32>
    %58 = vector.shape_cast %57 : vector<32xf32> to vector<1x32xf32>
    %cst_26 = arith.constant 1.000000e+01 : f32
    %59 = vector.broadcast %cst_26 : f32 to vector<1x32xf32>
    %60 = arith.divf %58, %59 : vector<1x32xf32>
    %61 = vector.broadcast %51 : vector<1x32xf32> to vector<10x32xf32>
    %62 = arith.subf %41, %61 : vector<10x32xf32>
    %cst_27 = arith.constant 9.99999974E-6 : f32
    %63 = vector.broadcast %cst_27 : f32 to vector<1x32xf32>
    %64 = arith.addf %60, %63 : vector<1x32xf32>
    %65 = math.rsqrt %64 : vector<1x32xf32>
    %66 = vector.broadcast %65 : vector<1x32xf32> to vector<10x32xf32>
    %67 = arith.mulf %62, %66 : vector<10x32xf32>
    %68 = vector.broadcast %4 : vector<1x32xf32> to vector<10x32xf32>
    %69 = arith.mulf %67, %68 : vector<10x32xf32>
    %70 = vector.broadcast %6 : vector<1x32xf32> to vector<10x32xf32>
    %71 = arith.addf %69, %70 : vector<10x32xf32>
    %cst_28 = arith.constant 0.000000e+00 : f32
    %72 = vector.broadcast %cst_28 : f32 to vector<10x32xf32>
    %73 = arith.maximumf %71, %72 : vector<10x32xf32>
    %cst_29 = arith.constant dense<0.000000e+00> : vector<32xf32>
    %74 = vector.multi_reduction <add>, %47, %cst_29 [0] : vector<4x32xf32> to vector<32xf32>
    %75 = vector.shape_cast %74 : vector<32xf32> to vector<1x32xf32>
    %cst_30 = arith.constant 4.000000e+00 : f32
    %76 = vector.broadcast %cst_30 : f32 to vector<1x32xf32>
    %77 = arith.divf %75, %76 : vector<1x32xf32>
    %78 = vector.broadcast %77 : vector<1x32xf32> to vector<4x32xf32>
    %79 = arith.subf %47, %78 : vector<4x32xf32>
    %80 = vector.broadcast %77 : vector<1x32xf32> to vector<4x32xf32>
    %81 = arith.subf %47, %80 : vector<4x32xf32>
    %82 = arith.mulf %79, %81 : vector<4x32xf32>
    %cst_31 = arith.constant dense<0.000000e+00> : vector<32xf32>
    %83 = vector.multi_reduction <add>, %82, %cst_31 [0] : vector<4x32xf32> to vector<32xf32>
    %84 = vector.shape_cast %83 : vector<32xf32> to vector<1x32xf32>
    %cst_32 = arith.constant 4.000000e+00 : f32
    %85 = vector.broadcast %cst_32 : f32 to vector<1x32xf32>
    %86 = arith.divf %84, %85 : vector<1x32xf32>
    %87 = vector.broadcast %77 : vector<1x32xf32> to vector<4x32xf32>
    %88 = arith.subf %47, %87 : vector<4x32xf32>
    %cst_33 = arith.constant 9.99999974E-6 : f32
    %89 = vector.broadcast %cst_33 : f32 to vector<1x32xf32>
    %90 = arith.addf %86, %89 : vector<1x32xf32>
    %91 = math.rsqrt %90 : vector<1x32xf32>
    %92 = vector.broadcast %91 : vector<1x32xf32> to vector<4x32xf32>
    %93 = arith.mulf %88, %92 : vector<4x32xf32>
    %94 = vector.broadcast %5 : vector<1x32xf32> to vector<4x32xf32>
    %95 = arith.mulf %93, %94 : vector<4x32xf32>
    %96 = vector.broadcast %7 : vector<1x32xf32> to vector<4x32xf32>
    %97 = arith.addf %95, %96 : vector<4x32xf32>
    %cst_34 = arith.constant 0.000000e+00 : f32
    %98 = vector.broadcast %cst_34 : f32 to vector<4x32xf32>
    %99 = arith.maximumf %97, %98 : vector<4x32xf32>
    %cst_35 = arith.constant 0.000000e+00 : f32
    %100 = vector.broadcast %cst_35 : f32 to vector<6x32xf32>
    %101 = tpu.concatenate %73, %100 in 0 : vector<10x32xf32>, vector<6x32xf32> -> vector<16x32xf32>
    %c0_36 = arith.constant 0 : index
    %c0_37 = arith.constant 0 : index
    %102 = vector.load %arg9[%c0_36, %c0_37] : memref<64x512xbf16, #tpu.memory_space<vmem>>, vector<64x512xbf16>
    %c0_38 = arith.constant 0 : index
    %c0_39 = arith.constant 0 : index
    %103 = vector.load %arg10[%c0_38, %c0_39] : memref<512x64xbf16, #tpu.memory_space<vmem>>, vector<512x64xbf16>
    %104 = vector.extract_strided_slice %102 {offsets = [0, 0], sizes = [32, 512], strides = [1, 1]} : vector<64x512xbf16> to vector<32x512xbf16>
    %105 = vector.extract_strided_slice %102 {offsets = [32, 0], sizes = [32, 512], strides = [1, 1]} : vector<64x512xbf16> to vector<32x512xbf16>
    %106 = arith.truncf %99 : vector<4x32xf32> to vector<4x32xbf16>
    %cst_40 = arith.constant dense<0.000000e+00> : vector<4x512xf32>
    %107 = tpu.matmul %106, %104, %cst_40 {dimension_numbers = #tpu.dot_dimension_numbers<[1], [0], [0], [1], [0, 0, 1, 1], [], []>} : vector<4x32xbf16>, vector<32x512xbf16>, vector<4x512xf32> -> vector<4x512xf32>
    %108 = arith.truncf %101 : vector<16x32xf32> to vector<16x32xbf16>
    %cst_41 = arith.constant dense<0.000000e+00> : vector<16x512xf32>
    %109 = tpu.matmul %108, %105, %cst_41 {dimension_numbers = #tpu.dot_dimension_numbers<[1], [0], [0], [1], [0, 0, 1, 1], [], []>} : vector<16x32xbf16>, vector<32x512xbf16>, vector<16x512xf32> -> vector<16x512xf32>
    %110 = vector.broadcast %8 : vector<1x512xf32> to vector<16x512xf32>
    %111 = arith.addf %109, %110 : vector<16x512xf32>
    %112 = tpu.concatenate %111, %107 in 0 : vector<16x512xf32>, vector<4x512xf32> -> vector<20x512xf32>
    %113 = arith.truncf %112 : vector<20x512xf32> to vector<20x512xbf16>
    %cst_42 = arith.constant dense<0.000000e+00> : vector<64x512xf32>
    %114 = tpu.matmul %17, %113, %cst_42 {dimension_numbers = #tpu.dot_dimension_numbers<[1], [0], [0], [1], [0, 0, 1, 1], [], []>} : vector<64x20xbf16>, vector<20x512xbf16>, vector<64x512xf32> -> vector<64x512xf32>
    %cst_43 = arith.constant 0.000000e+00 : f32
    %115 = vector.broadcast %cst_43 : f32 to vector<64x512xf32>
    %116 = arith.maximumf %114, %115 : vector<64x512xf32>
    %117 = arith.truncf %116 : vector<64x512xf32> to vector<64x512xbf16>
    %cst_44 = arith.constant dense<0.000000e+00> : vector<64x64xf32>
    %118 = tpu.matmul %117, %103, %cst_44 {dimension_numbers = #tpu.dot_dimension_numbers<[1], [0], [0], [1], [0, 0, 1, 1], [], []>} : vector<64x512xbf16>, vector<512x64xbf16>, vector<64x64xf32> -> vector<64x64xf32>
    %119 = vector.broadcast %9 : vector<1x64xf32> to vector<64x64xf32>
    %120 = arith.addf %118, %119 : vector<64x64xf32>
    %cst_45 = arith.constant 0.000000e+00 : f32
    %121 = vector.broadcast %cst_45 : f32 to vector<64x64xf32>
    %122 = arith.maximumf %120, %121 : vector<64x64xf32>
    %123 = arith.truncf %122 : vector<64x64xf32> to vector<64x64xbf16>
    %cst_46 = arith.constant dense<0.000000e+00> : vector<64x16xf32>
    %124 = tpu.matmul %123, %23, %cst_46 {dimension_numbers = #tpu.dot_dimension_numbers<[1], [0], [0], [1], [0, 0, 1, 1], [], []>} : vector<64x64xbf16>, vector<64x16xbf16>, vector<64x16xf32> -> vector<64x16xf32>
    %125 = vector.extract_strided_slice %17 {offsets = [0, 0], sizes = [64, 16], strides = [1, 1]} : vector<64x20xbf16> to vector<64x16xbf16>
    %126 = arith.extf %125 : vector<64x16xbf16> to vector<64x16xf32>
    %127 = arith.mulf %124, %126 : vector<64x16xf32>
    %cst_47 = arith.constant dense<0.000000e+00> : vector<4x16xf32>
    %128 = tpu.matmul %19, %127, %cst_47 {dimension_numbers = #tpu.dot_dimension_numbers<[1], [0], [0], [1], [0, 0, 1, 1], [], []>} : vector<4x64xf32>, vector<64x16xf32>, vector<4x16xf32> -> vector<4x16xf32>
    %129 = vector.broadcast %10 : vector<1x1xf32> to vector<4x16xf32>
    %130 = arith.addf %128, %129 : vector<4x16xf32>
    %131 = vector.extract_strided_slice %130 {offsets = [0, 0], sizes = [4, 10], strides = [1, 1]} : vector<4x16xf32> to vector<4x10xf32>
    %c0_48 = arith.constant 0 : index
    %c0_49 = arith.constant 0 : index
    %c0_50 = arith.constant 0 : index
    %132 = vector.load %arg15[%c0_48, %c0_49, %c0_50] : memref<1x4x10xf32, #tpu.memory_space<vmem>>, vector<1x4x10xf32>
    %133 = vector.shape_cast %132 : vector<1x4x10xf32> to vector<4x10xf32>
    %134 = vector.shape_cast %131 : vector<4x10xf32> to vector<1x4x10xf32>
    tpu.vector_store %arg15[%c0_48, %c0_49, %c0_50], %134 {strides = array<i32>} : memref<1x4x10xf32, #tpu.memory_space<vmem>>, vector<1x4x10xf32>,
    %135 = math.absf %131 : vector<4x10xf32>
    %cst_51 = arith.constant dense<0.000000e+00> : vector<4xf32>
    %136 = vector.multi_reduction <add>, %135, %cst_51 [1] : vector<4x10xf32> to vector<4xf32>
    %137 = vector.shape_cast %136 : vector<4xf32> to vector<4x1xf32>
    %cst_52 = arith.constant 9.99999996E-13 : f32
    %138 = vector.broadcast %cst_52 : f32 to vector<4x1xf32>
    %139 = arith.maximumf %137, %138 : vector<4x1xf32>
    %140 = vector.broadcast %139 : vector<4x1xf32> to vector<4x10xf32>
    %141 = arith.divf %131, %140 : vector<4x10xf32>
    %142 = arith.truncf %141 : vector<4x10xf32> to vector<4x10xbf16>
    %143 = arith.truncf %25 : vector<10x64xf32> to vector<10x64xbf16>
    %cst_53 = arith.constant dense<0.000000e+00> : vector<4x64xf32>
    %144 = tpu.matmul %142, %143, %cst_53 {dimension_numbers = #tpu.dot_dimension_numbers<[1], [0], [0], [1], [0, 0, 1, 1], [], []>} : vector<4x10xbf16>, vector<10x64xbf16>, vector<4x64xf32> -> vector<4x64xf32>
    %c0_54 = arith.constant 0 : index
    %c0_55 = arith.constant 0 : index
    %145 = vector.load %arg2[%c0_54, %c0_55] : memref<8x256xf32, #tpu.memory_space<vmem>>, vector<8x256xf32>
    %146 = arith.truncf %145 : vector<8x256xf32> to vector<8x256xbf16>
    %cst_56 = arith.constant dense<0.000000e+00> : vector<8x64xf32>
    %147 = tpu.matmul %146, %24, %cst_56 {dimension_numbers = #tpu.dot_dimension_numbers<[1], [0], [0], [1], [0, 0, 1, 1], [], []>} : vector<8x256xbf16>, vector<256x64xbf16>, vector<8x64xf32> -> vector<8x64xf32>
    %148 = vector.broadcast %1 : vector<1x64xf32> to vector<8x64xf32>
    %149 = arith.addf %147, %148 : vector<8x64xf32>
    %cst_57 = arith.constant 0.000000e+00 : f32
    %150 = vector.broadcast %cst_57 : f32 to vector<8x64xf32>
    %151 = arith.maximumf %149, %150 : vector<8x64xf32>
    %cst_58 = arith.constant 0.000000e+00 : f32
    %152 = vector.broadcast %cst_58 : f32 to vector<2x64xf32>
    %153 = tpu.concatenate %144, %25, %152 in 0 : vector<4x64xf32>, vector<10x64xf32>, vector<2x64xf32> -> vector<16x64xf32>
    %c0_59 = arith.constant 0 : index
    %c0_60 = arith.constant 0 : index
    %154 = vector.load %arg7[%c0_59, %c0_60] : memref<128x1600xbf16, #tpu.memory_space<vmem>>, vector<128x1600xbf16>
    %c0_61 = arith.constant 0 : index
    %c0_62 = arith.constant 0 : index
    %155 = vector.load %arg8[%c0_61, %c0_62] : memref<1600x200xbf16, #tpu.memory_space<vmem>>, vector<1600x200xbf16>
    %156 = vector.extract_strided_slice %154 {offsets = [0, 0], sizes = [64, 1600], strides = [1, 1]} : vector<128x1600xbf16> to vector<64x1600xbf16>
    %157 = vector.extract_strided_slice %154 {offsets = [64, 0], sizes = [64, 1600], strides = [1, 1]} : vector<128x1600xbf16> to vector<64x1600xbf16>
    %158 = arith.truncf %151 : vector<8x64xf32> to vector<8x64xbf16>
    %cst_63 = arith.constant dense<0.000000e+00> : vector<8x1600xf32>
    %159 = tpu.matmul %158, %156, %cst_63 {dimension_numbers = #tpu.dot_dimension_numbers<[1], [0], [0], [1], [0, 0, 1, 1], [], []>} : vector<8x64xbf16>, vector<64x1600xbf16>, vector<8x1600xf32> -> vector<8x1600xf32>
    %160 = arith.truncf %153 : vector<16x64xf32> to vector<16x64xbf16>
    %cst_64 = arith.constant dense<0.000000e+00> : vector<16x1600xf32>
    %161 = tpu.matmul %160, %157, %cst_64 {dimension_numbers = #tpu.dot_dimension_numbers<[1], [0], [0], [1], [0, 0, 1, 1], [], []>} : vector<16x64xbf16>, vector<64x1600xbf16>, vector<16x1600xf32> -> vector<16x1600xf32>
    %162 = vector.broadcast %11 : vector<1x1600xf32> to vector<16x1600xf32>
    %163 = arith.addf %161, %162 : vector<16x1600xf32>
    %164 = tpu.concatenate %163, %159 in 0 : vector<16x1600xf32>, vector<8x1600xf32> -> vector<24x1600xf32>
    %165 = arith.truncf %164 : vector<24x1600xf32> to vector<24x1600xbf16>
    %cst_65 = arith.constant dense<0.000000e+00> : vector<128x1600xf32>
    %166 = tpu.matmul %16, %165, %cst_65 {dimension_numbers = #tpu.dot_dimension_numbers<[1], [0], [0], [1], [0, 0, 1, 1], [], []>} : vector<128x24xbf16>, vector<24x1600xbf16>, vector<128x1600xf32> -> vector<128x1600xf32>
    %cst_66 = arith.constant 0.000000e+00 : f32
    %167 = vector.broadcast %cst_66 : f32 to vector<128x1600xf32>
    %168 = arith.maximumf %166, %167 : vector<128x1600xf32>
    %169 = arith.truncf %168 : vector<128x1600xf32> to vector<128x1600xbf16>
    %cst_67 = arith.constant dense<0.000000e+00> : vector<128x200xf32>
    %170 = tpu.matmul %169, %155, %cst_67 {dimension_numbers = #tpu.dot_dimension_numbers<[1], [0], [0], [1], [0, 0, 1, 1], [], []>} : vector<128x1600xbf16>, vector<1600x200xbf16>, vector<128x200xf32> -> vector<128x200xf32>
    %171 = vector.broadcast %12 : vector<1x200xf32> to vector<128x200xf32>
    %172 = arith.addf %170, %171 : vector<128x200xf32>
    %cst_68 = arith.constant 0.000000e+00 : f32
    %173 = vector.broadcast %cst_68 : f32 to vector<128x200xf32>
    %174 = arith.maximumf %172, %173 : vector<128x200xf32>
    %175 = arith.truncf %174 : vector<128x200xf32> to vector<128x200xbf16>
    %cst_69 = arith.constant dense<0.000000e+00> : vector<128x16xf32>
    %176 = tpu.matmul %175, %22, %cst_69 {dimension_numbers = #tpu.dot_dimension_numbers<[1], [0], [0], [1], [0, 0, 1, 1], [], []>} : vector<128x200xbf16>, vector<200x16xbf16>, vector<128x16xf32> -> vector<128x16xf32>
    %177 = vector.extract_strided_slice %16 {offsets = [0, 0], sizes = [128, 16], strides = [1, 1]} : vector<128x24xbf16> to vector<128x16xbf16>
    %178 = arith.extf %177 : vector<128x16xbf16> to vector<128x16xf32>
    %179 = arith.mulf %176, %178 : vector<128x16xf32>
    %cst_70 = arith.constant dense<0.000000e+00> : vector<8x16xf32>
    %180 = tpu.matmul %18, %179, %cst_70 {dimension_numbers = #tpu.dot_dimension_numbers<[1], [0], [0], [1], [0, 0, 1, 1], [], []>} : vector<8x128xf32>, vector<128x16xf32>, vector<8x16xf32> -> vector<8x16xf32>
    %181 = vector.broadcast %13 : vector<1x1xf32> to vector<8x16xf32>
    %182 = arith.addf %180, %181 : vector<8x16xf32>
    %c0_71 = arith.constant 0 : index
    %c0_72 = arith.constant 0 : index
    %183 = vector.load %arg14[%c0_71, %c0_72] : memref<8x16xf32, #tpu.memory_space<vmem>>, vector<8x16xf32>
    tpu.vector_store %arg14[%c0_71, %c0_72], %182 {strides = array<i32>} : memref<8x16xf32, #tpu.memory_space<vmem>>, vector<8x16xf32>,
    return
  }
  func.func @transform_0(%arg0: i32) -> (i32, i32) {
    %c0_i32 = arith.constant 0 : i32
    %c0_i32_0 = arith.constant 0 : i32
    %c0_i32_1 = arith.constant 0 : i32
    return %c0_i32, %c0_i32_0 : i32, i32
  }
  func.func @transform_1(%arg0: i32) -> (i32, i32) {
    %c0_i32 = arith.constant 0 : i32
    %c0_i32_0 = arith.constant 0 : i32
    return %arg0, %c0_i32 : i32, i32
  }
  func.func @transform_2(%arg0: i32) -> (i32, i32) {
    %c0_i32 = arith.constant 0 : i32
    %c0_i32_0 = arith.constant 0 : i32
    %c0_i32_1 = arith.constant 0 : i32
    return %c0_i32, %c0_i32_0 : i32, i32
  }
  func.func @transform_3(%arg0: i32) -> (i32, i32) {
    %c0_i32 = arith.constant 0 : i32
    %c0_i32_0 = arith.constant 0 : i32
    %c0_i32_1 = arith.constant 0 : i32
    return %c0_i32, %c0_i32_0 : i32, i32
  }
  func.func @transform_4(%arg0: i32) -> (i32, i32) {
    %c0_i32 = arith.constant 0 : i32
    %c0_i32_0 = arith.constant 0 : i32
    %c0_i32_1 = arith.constant 0 : i32
    return %c0_i32, %c0_i32_0 : i32, i32
  }
  func.func @transform_5(%arg0: i32) -> (i32, i32, i32) {
    %c0_i32 = arith.constant 0 : i32
    %c0_i32_0 = arith.constant 0 : i32
    %c0_i32_1 = arith.constant 0 : i32
    %c0_i32_2 = arith.constant 0 : i32
    return %c0_i32, %c0_i32_0, %c0_i32_1 : i32, i32, i32
  }
  func.func @transform_6(%arg0: i32) -> (i32, i32) {
    %c0_i32 = arith.constant 0 : i32
    %c0_i32_0 = arith.constant 0 : i32
    %c0_i32_1 = arith.constant 0 : i32
    return %c0_i32, %c0_i32_0 : i32, i32
  }
  func.func @transform_7(%arg0: i32) -> (i32, i32) {
    %c0_i32 = arith.constant 0 : i32
    %c0_i32_0 = arith.constant 0 : i32
    %c0_i32_1 = arith.constant 0 : i32
    return %c0_i32, %c0_i32_0 : i32, i32
  }
  func.func @transform_8(%arg0: i32) -> (i32, i32) {
    %c0_i32 = arith.constant 0 : i32
    %c0_i32_0 = arith.constant 0 : i32
    %c0_i32_1 = arith.constant 0 : i32
    return %c0_i32, %c0_i32_0 : i32, i32
  }
  func.func @transform_9(%arg0: i32) -> (i32, i32) {
    %c0_i32 = arith.constant 0 : i32
    %c0_i32_0 = arith.constant 0 : i32
    %c0_i32_1 = arith.constant 0 : i32
    return %c0_i32, %c0_i32_0 : i32, i32
  }
  func.func @transform_10(%arg0: i32) -> (i32, i32) {
    %c0_i32 = arith.constant 0 : i32
    %c0_i32_0 = arith.constant 0 : i32
    %c0_i32_1 = arith.constant 0 : i32
    return %c0_i32, %c0_i32_0 : i32, i32
  }
  func.func @transform_11(%arg0: i32) -> (i32, i32) {
    %c0_i32 = arith.constant 0 : i32
    %c0_i32_0 = arith.constant 0 : i32
    %c0_i32_1 = arith.constant 0 : i32
    return %c0_i32, %c0_i32_0 : i32, i32
  }
  func.func @transform_12(%arg0: i32) -> (i32, i32) {
    %c0_i32 = arith.constant 0 : i32
    %c0_i32_0 = arith.constant 0 : i32
    %c0_i32_1 = arith.constant 0 : i32
    return %c0_i32, %c0_i32_0 : i32, i32
  }
  func.func @transform_13(%arg0: i32) -> (i32, i32) {
    %c0_i32 = arith.constant 0 : i32
    %c0_i32_0 = arith.constant 0 : i32
    return %arg0, %c0_i32 : i32, i32
  }
  func.func @transform_14(%arg0: i32) -> (i32, i32, i32) {
    %c0_i32 = arith.constant 0 : i32
    %c0_i32_0 = arith.constant 0 : i32
    %c0_i32_1 = arith.constant 0 : i32
    return %arg0, %c0_i32, %c0_i32_0 : i32, i32, i32
  }
}

</mosaic_0001>

<llo_original>
// kernel: tpu_custom_call.1
$region0: #{tpu_custom_call.1}
  #allocation0 [shape = 'u32[]', space=smem, size = 0x4, offset = 0x4, fixed_abs, tag = 'smem constant byte address 0x4 - core index']
  #allocation1 [shape = 'u32[72,128]{1,0:T(1,128)}', space=vmem, size = 0x9000, scoped, tag = 'internal scratch']
  %s0 = inlined_call_operand.vmem [shape: f32[8,256], index: 0, kind: input, shape index: {}]
  %s1 = inlined_call_operand.vmem [shape: f32[16,256], index: 1, kind: input, shape index: {}]
  %s2 = inlined_call_operand.vmem [shape: f32[10,64], index: 2, kind: input, shape index: {}]
  %s3 = inlined_call_operand.vmem [shape: f32[13,1600], index: 3, kind: input, shape index: {}]
  %s4 = inlined_call_operand.vmem [shape: bf16[256,64], index: 4, kind: input, shape index: {}]
  %s5 = inlined_call_operand.vmem [shape: bf16[2,64,32], index: 5, kind: input, shape index: {}]
  %s6 = inlined_call_operand.vmem [shape: bf16[128,1600], index: 6, kind: input, shape index: {}]
  %s7 = inlined_call_operand.vmem [shape: bf16[1600,200], index: 7, kind: input, shape index: {}]
  %s8 = inlined_call_operand.vmem [shape: bf16[64,512], index: 8, kind: input, shape index: {}]
  %s9 = inlined_call_operand.vmem [shape: bf16[512,64], index: 9, kind: input, shape index: {}]
  %s10 = inlined_call_operand.vmem [shape: bf16[264,16], index: 10, kind: input, shape index: {}]
  %s11 = inlined_call_operand.vmem [shape: bf16[192,24], index: 11, kind: input, shape index: {}]
  %s12 = inlined_call_operand.vmem [shape: f32[16,128], index: 12, kind: input, shape index: {}]
  %s13 = inlined_call_operand.hbm [shape: f32[16,16], index: 13, kind: output, shape index: {0}]
  %s14 = inlined_call_operand.hbm [shape: f32[2,4,10], index: 14, kind: output, shape index: {1}]
  %15 = xla_tuple %s13, %s14
  %s16 = sld [smem:[#allocation0]]
  $region93: #{tpu_custom_call.1} parent=0
    _
  %s18 = ssub.s32 1, %s16
  %s19 = scalar_select 0, %s18, %s16
  $region1: #{tpu_custom_call.1} parent=0
    #allocation2 [shape = 'u8[8192]{0}', space=vmem, size = 0x2000, scoped, tag = 'output window, operand 0']
    #allocation3 [shape = 's32[2]{0}', space=sflag, size = 0x8, scoped, tag = 'scoped memory for tpu_custom_call.1']
    #allocation4 [shape = 'u8[4096]{0}', space=vmem, size = 0x1000, scoped, tag = 'output window, operand 1']
    #allocation5 [shape = 's32[2]{0}', space=sflag, size = 0x8, scoped, tag = 'scoped memory for tpu_custom_call.1']
    %20 = vsyncpa [#allocation3], 0
    %s21 = scalar_lea.sflag [#allocation3], 1
    %22 = vsyncpa %s21, 0
    %23 = vsyncpa [#allocation5], 0
    %s24 = scalar_lea.sflag [#allocation5], 1
    %25 = vsyncpa %s24, 0
    loop: start=0, step=1, limit=4
    $region2: #{tpu_custom_call.1} parent=1 // loop_pre_header
      _
    $region3: #{tpu_custom_call.1} parent=1 // loop_header
      %s27 = sphi 0, %s31
      %p28 = scmp.ge.s32.totalorder %s27, 4
      %s35 = sphi 0, %s35
      %s37 = sphi 0, %s35
      %s38 = sphi 0, %s37
      %s52 = sphi 0, %s38
      %s58 = sphi 0, %s60
      %s61 = sphi 0, %s58
      %s62 = sphi 0, %s61
      %s78 = sphi 0, %s62
      %s82 = sphi 0, %s82
      %s84 = sphi 0, %s82
      %s85 = sphi 0, %s84
      %s99 = sphi 0, %s85
      %s103 = sphi 0, %s103
      %s105 = sphi 0, %s103
      %s106 = sphi 0, %s105
      %s120 = sphi 0, %s106
      %s124 = sphi 0, %s124
      %s126 = sphi 0, %s124
      %s127 = sphi 0, %s126
      %s141 = sphi 0, %s127
      %s145 = sphi 0, %s145
      %s147 = sphi 0, %s145
      %s148 = sphi 0, %s147
      %s162 = sphi 0, %s148
      %s166 = sphi 0, %s166
      %s168 = sphi 0, %s166
      %s169 = sphi 0, %s168
      %s183 = sphi 0, %s169
      %s187 = sphi 0, %s187
      %s189 = sphi 0, %s187
      %s190 = sphi 0, %s189
      %s204 = sphi 0, %s190
      %s208 = sphi 0, %s208
      %s210 = sphi 0, %s208
      %s211 = sphi 0, %s210
      %s225 = sphi 0, %s211
      %s229 = sphi 0, %s229
      %s231 = sphi 0, %s229
      %s232 = sphi 0, %s231
      %s246 = sphi 0, %s232
      %s250 = sphi 0, %s250
      %s252 = sphi 0, %s250
      %s253 = sphi 0, %s252
      %s267 = sphi 0, %s253
      %s271 = sphi 0, %s271
      %s273 = sphi 0, %s271
      %s274 = sphi 0, %s273
      %s288 = sphi 0, %s274
      %s292 = sphi 0, %s292
      %s294 = sphi 0, %s292
      %s295 = sphi 0, %s294
      %s309 = sphi 0, %s295
      %s315 = sphi 0, %s317
      %s318 = sphi 0, %s315
      %s319 = sphi 0, %s318
      %s335 = sphi 0, %s319
      %s341 = sphi 0, %s343
      %s344 = sphi 0, %s341
      %s345 = sphi 0, %s344
      %s361 = sphi 0, %s345
    $region4: #{tpu_custom_call.1} parent=1 // loop_header_branch
      %30 = sbr.rel (%p28) target = $region8
    $region5: #{tpu_custom_call.1} parent=1 // loop_body
      %s32 = ssub.s32 %s27, 1
      %s33 = ssub.s32 %s27, 2
      %s34 = sadd.s32 %s27, 1
      %s36 = sadd.s32 %s35, 1
      %p39 = scmp.eq.s32.totalorder %s27, 1
      %p40 = scmp.ne.s32.totalorder %s35, %s37
      %p41 = scmp.eq.s32.totalorder %s27, 0
      %p42 = por %p40, %p41
      %p43 = scmp.ne.s32.totalorder %s35, %s37
      %p44 = scmp.eq.s32.totalorder %s32, 1
      %p45 = por %p43, %p44
      %p46 = scmp.ne.s32.totalorder %s37, %s38
      %p47 = scmp.eq.s32.totalorder %s32, 0
      %p48 = por %p46, %p47
      %p49 = scmp.ne.s32.totalorder %s37, %s38
      %p50 = scmp.eq.s32.totalorder %s33, 1
      %p51 = por %p49, %p50
      %p53 = scmp.ne.s32.totalorder %s38, %s52
      %p54 = scmp.eq.s32.totalorder %s33, 0
      %p55 = por %p53, %p54
      %s56 = ssub.s32 %s27, %s34
      %p57 = scmp.eq.s32.totalorder %s56, 0
      %s59 = sadd.s32 %s58, 1
      %s60 = scalar_select %p57, %s58, %s59
      %p63 = pneg %p57
      %p64 = scmp.eq.s32.totalorder %s27, 1
      %p65 = por %p63, %p64
      %p66 = scmp.ne.s32.totalorder %s58, %s61
      %p67 = scmp.eq.s32.totalorder %s27, 0
      %p68 = por %p66, %p67
      %p69 = scmp.ne.s32.totalorder %s58, %s61
      %p70 = scmp.eq.s32.totalorder %s32, 1
      %p71 = por %p69, %p70
      %p72 = scmp.ne.s32.totalorder %s61, %s62
      %p73 = scmp.eq.s32.totalorder %s32, 0
      %p74 = por %p72, %p73
      %p75 = scmp.ne.s32.totalorder %s61, %s62
      %p76 = scmp.eq.s32.totalorder %s33, 1
      %p77 = por %p75, %p76
      %p79 = scmp.ne.s32.totalorder %s62, %s78
      %p80 = scmp.eq.s32.totalorder %s33, 0
      %p81 = por %p79, %p80
      %s83 = sadd.s32 %s82, 1
      %p86 = scmp.eq.s32.totalorder %s27, 1
      %p87 = scmp.ne.s32.totalorder %s82, %s84
      %p88 = scmp.eq.s32.totalorder %s27, 0
      %p89 = por %p87, %p88
      %p90 = scmp.ne.s32.totalorder %s82, %s84
      %p91 = scmp.eq.s32.totalorder %s32, 1
      %p92 = por %p90, %p91
      %p93 = scmp.ne.s32.totalorder %s84, %s85
      %p94 = scmp.eq.s32.totalorder %s32, 0
      %p95 = por %p93, %p94
      %p96 = scmp.ne.s32.totalorder %s84, %s85
      %p97 = scmp.eq.s32.totalorder %s33, 1
      %p98 = por %p96, %p97
      %p100 = scmp.ne.s32.totalorder %s85, %s99
      %p101 = scmp.eq.s32.totalorder %s33, 0
      %p102 = por %p100, %p101
      %s104 = sadd.s32 %s103, 1
      %p107 = scmp.eq.s32.totalorder %s27, 1
      %p108 = scmp.ne.s32.totalorder %s103, %s105
      %p109 = scmp.eq.s32.totalorder %s27, 0
      %p110 = por %p108, %p109
      %p111 = scmp.ne.s32.totalorder %s103, %s105
      %p112 = scmp.eq.s32.totalorder %s32, 1
      %p113 = por %p111, %p112
      %p114 = scmp.ne.s32.totalorder %s105, %s106
      %p115 = scmp.eq.s32.totalorder %s32, 0
      %p116 = por %p114, %p115
      %p117 = scmp.ne.s32.totalorder %s105, %s106
      %p118 = scmp.eq.s32.totalorder %s33, 1
      %p119 = por %p117, %p118
      %p121 = scmp.ne.s32.totalorder %s106, %s120
      %p122 = scmp.eq.s32.totalorder %s33, 0
      %p123 = por %p121, %p122
      %s125 = sadd.s32 %s124, 1
      %p128 = scmp.eq.s32.totalorder %s27, 1
      %p129 = scmp.ne.s32.totalorder %s124, %s126
      %p130 = scmp.eq.s32.totalorder %s27, 0
      %p131 = por %p129, %p130
      %p132 = scmp.ne.s32.totalorder %s124, %s126
      %p133 = scmp.eq.s32.totalorder %s32, 1
      %p134 = por %p132, %p133
      %p135 = scmp.ne.s32.totalorder %s126, %s127
      %p136 = scmp.eq.s32.totalorder %s32, 0
      %p137 = por %p135, %p136
      %p138 = scmp.ne.s32.totalorder %s126, %s127
      %p139 = scmp.eq.s32.totalorder %s33, 1
      %p140 = por %p138, %p139
      %p142 = scmp.ne.s32.totalorder %s127, %s141
      %p143 = scmp.eq.s32.totalorder %s33, 0
      %p144 = por %p142, %p143
      %s146 = sadd.s32 %s145, 1
      %p149 = scmp.eq.s32.totalorder %s27, 1
      %p150 = scmp.ne.s32.totalorder %s145, %s147
      %p151 = scmp.eq.s32.totalorder %s27, 0
      %p152 = por %p150, %p151
      %p153 = scmp.ne.s32.totalorder %s145, %s147
      %p154 = scmp.eq.s32.totalorder %s32, 1
      %p155 = por %p153, %p154
      %p156 = scmp.ne.s32.totalorder %s147, %s148
      %p157 = scmp.eq.s32.totalorder %s32, 0
      %p158 = por %p156, %p157
      %p159 = scmp.ne.s32.totalorder %s147, %s148
      %p160 = scmp.eq.s32.totalorder %s33, 1
      %p161 = por %p159, %p160
      %p163 = scmp.ne.s32.totalorder %s148, %s162
      %p164 = scmp.eq.s32.totalorder %s33, 0
      %p165 = por %p163, %p164
      %s167 = sadd.s32 %s166, 1
      %p170 = scmp.eq.s32.totalorder %s27, 1
      %p171 = scmp.ne.s32.totalorder %s166, %s168
      %p172 = scmp.eq.s32.totalorder %s27, 0
      %p173 = por %p171, %p172
      %p174 = scmp.ne.s32.totalorder %s166, %s168
      %p175 = scmp.eq.s32.totalorder %s32, 1
      %p176 = por %p174, %p175
      %p177 = scmp.ne.s32.totalorder %s168, %s169
      %p178 = scmp.eq.s32.totalorder %s32, 0
      %p179 = por %p177, %p178
      %p180 = scmp.ne.s32.totalorder %s168, %s169
      %p181 = scmp.eq.s32.totalorder %s33, 1
      %p182 = por %p180, %p181
      %p184 = scmp.ne.s32.totalorder %s169, %s183
      %p185 = scmp.eq.s32.totalorder %s33, 0
      %p186 = por %p184, %p185
      %s188 = sadd.s32 %s187, 1
      %p191 = scmp.eq.s32.totalorder %s27, 1
      %p192 = scmp.ne.s32.totalorder %s187, %s189
      %p193 = scmp.eq.s32.totalorder %s27, 0
      %p194 = por %p192, %p193
      %p195 = scmp.ne.s32.totalorder %s187, %s189
      %p196 = scmp.eq.s32.totalorder %s32, 1
      %p197 = por %p195, %p196
      %p198 = scmp.ne.s32.totalorder %s189, %s190
      %p199 = scmp.eq.s32.totalorder %s32, 0
      %p200 = por %p198, %p199
      %p201 = scmp.ne.s32.totalorder %s189, %s190
      %p202 = scmp.eq.s32.totalorder %s33, 1
      %p203 = por %p201, %p202
      %p205 = scmp.ne.s32.totalorder %s190, %s204
      %p206 = scmp.eq.s32.totalorder %s33, 0
      %p207 = por %p205, %p206
      %s209 = sadd.s32 %s208, 1
      %p212 = scmp.eq.s32.totalorder %s27, 1
      %p213 = scmp.ne.s32.totalorder %s208, %s210
      %p214 = scmp.eq.s32.totalorder %s27, 0
      %p215 = por %p213, %p214
      %p216 = scmp.ne.s32.totalorder %s208, %s210
      %p217 = scmp.eq.s32.totalorder %s32, 1
      %p218 = por %p216, %p217
      %p219 = scmp.ne.s32.totalorder %s210, %s211
      %p220 = scmp.eq.s32.totalorder %s32, 0
      %p221 = por %p219, %p220
      %p222 = scmp.ne.s32.totalorder %s210, %s211
      %p223 = scmp.eq.s32.totalorder %s33, 1
      %p224 = por %p222, %p223
      %p226 = scmp.ne.s32.totalorder %s211, %s225
      %p227 = scmp.eq.s32.totalorder %s33, 0
      %p228 = por %p226, %p227
      %s230 = sadd.s32 %s229, 1
      %p233 = scmp.eq.s32.totalorder %s27, 1
      %p234 = scmp.ne.s32.totalorder %s229, %s231
      %p235 = scmp.eq.s32.totalorder %s27, 0
      %p236 = por %p234, %p235
      %p237 = scmp.ne.s32.totalorder %s229, %s231
      %p238 = scmp.eq.s32.totalorder %s32, 1
      %p239 = por %p237, %p238
      %p240 = scmp.ne.s32.totalorder %s231, %s232
      %p241 = scmp.eq.s32.totalorder %s32, 0
      %p242 = por %p240, %p241
      %p243 = scmp.ne.s32.totalorder %s231, %s232
      %p244 = scmp.eq.s32.totalorder %s33, 1
      %p245 = por %p243, %p244
      %p247 = scmp.ne.s32.totalorder %s232, %s246
      %p248 = scmp.eq.s32.totalorder %s33, 0
      %p249 = por %p247, %p248
      %s251 = sadd.s32 %s250, 1
      %p254 = scmp.eq.s32.totalorder %s27, 1
      %p255 = scmp.ne.s32.totalorder %s250, %s252
      %p256 = scmp.eq.s32.totalorder %s27, 0
      %p257 = por %p255, %p256
      %p258 = scmp.ne.s32.totalorder %s250, %s252
      %p259 = scmp.eq.s32.totalorder %s32, 1
      %p260 = por %p258, %p259
      %p261 = scmp.ne.s32.totalorder %s252, %s253
      %p262 = scmp.eq.s32.totalorder %s32, 0
      %p263 = por %p261, %p262
      %p264 = scmp.ne.s32.totalorder %s252, %s253
      %p265 = scmp.eq.s32.totalorder %s33, 1
      %p266 = por %p264, %p265
      %p268 = scmp.ne.s32.totalorder %s253, %s267
      %p269 = scmp.eq.s32.totalorder %s33, 0
      %p270 = por %p268, %p269
      %s272 = sadd.s32 %s271, 1
      %p275 = scmp.eq.s32.totalorder %s27, 1
      %p276 = scmp.ne.s32.totalorder %s271, %s273
      %p277 = scmp.eq.s32.totalorder %s27, 0
      %p278 = por %p276, %p277
      %p279 = scmp.ne.s32.totalorder %s271, %s273
      %p280 = scmp.eq.s32.totalorder %s32, 1
      %p281 = por %p279, %p280
      %p282 = scmp.ne.s32.totalorder %s273, %s274
      %p283 = scmp.eq.s32.totalorder %s32, 0
      %p284 = por %p282, %p283
      %p285 = scmp.ne.s32.totalorder %s273, %s274
      %p286 = scmp.eq.s32.totalorder %s33, 1
      %p287 = por %p285, %p286
      %p289 = scmp.ne.s32.totalorder %s274, %s288
      %p290 = scmp.eq.s32.totalorder %s33, 0
      %p291 = por %p289, %p290
      %s293 = sadd.s32 %s292, 1
      %p296 = scmp.eq.s32.totalorder %s27, 1
      %p297 = scmp.ne.s32.totalorder %s292, %s294
      %p298 = scmp.eq.s32.totalorder %s27, 0
      %p299 = por %p297, %p298
      %p300 = scmp.ne.s32.totalorder %s292, %s294
      %p301 = scmp.eq.s32.totalorder %s32, 1
      %p302 = por %p300, %p301
      %p303 = scmp.ne.s32.totalorder %s294, %s295
      %p304 = scmp.eq.s32.totalorder %s32, 0
      %p305 = por %p303, %p304
      %p306 = scmp.ne.s32.totalorder %s294, %s295
      %p307 = scmp.eq.s32.totalorder %s33, 1
      %p308 = por %p306, %p307
      %p310 = scmp.ne.s32.totalorder %s295, %s309
      %p311 = scmp.eq.s32.totalorder %s33, 0
      %p312 = por %p310, %p311
      %s313 = ssub.s32 %s27, %s34
      %p314 = scmp.eq.s32.totalorder %s313, 0
      %s316 = sadd.s32 %s315, 1
      %s317 = scalar_select %p314, %s315, %s316
      %p320 = pneg %p314
      %p321 = scmp.eq.s32.totalorder %s27, 1
      %p322 = por %p320, %p321
      %p323 = scmp.ne.s32.totalorder %s315, %s318
      %p324 = scmp.eq.s32.totalorder %s27, 0
      %p325 = por %p323, %p324
      %p326 = scmp.ne.s32.totalorder %s315, %s318
      %p327 = scmp.eq.s32.totalorder %s32, 1
      %p328 = por %p326, %p327
      %p329 = scmp.ne.s32.totalorder %s318, %s319
      %p330 = scmp.eq.s32.totalorder %s32, 0
      %p331 = por %p329, %p330
      %p332 = scmp.ne.s32.totalorder %s318, %s319
      %p333 = scmp.eq.s32.totalorder %s33, 1
      %p334 = por %p332, %p333
      %p336 = scmp.ne.s32.totalorder %s319, %s335
      %p337 = scmp.eq.s32.totalorder %s33, 0
      %p338 = por %p336, %p337
      %s339 = ssub.s32 %s27, %s34
      %p340 = scmp.eq.s32.totalorder %s339, 0
      %s342 = sadd.s32 %s341, 1
      %s343 = scalar_select %p340, %s341, %s342
      %p346 = pneg %p340
      %p347 = scmp.eq.s32.totalorder %s27, 1
      %p348 = por %p346, %p347
      %p349 = scmp.ne.s32.totalorder %s341, %s344
      %p350 = scmp.eq.s32.totalorder %s27, 0
      %p351 = por %p349, %p350
      %p352 = scmp.ne.s32.totalorder %s341, %s344
      %p353 = scmp.eq.s32.totalorder %s32, 1
      %p354 = por %p352, %p353
      %p355 = scmp.ne.s32.totalorder %s344, %s345
      %p356 = scmp.eq.s32.totalorder %s32, 0
      %p357 = por %p355, %p356
      %p358 = scmp.ne.s32.totalorder %s344, %s345
      %p359 = scmp.eq.s32.totalorder %s33, 1
      %p360 = por %p358, %p359
      %p362 = scmp.ne.s32.totalorder %s345, %s361
      %p363 = scmp.eq.s32.totalorder %s33, 0
      %p364 = por %p362, %p363
      %p365 = scmp.le.s32.totalorder 1, %s27
      %p366 = scmp.lt.s32.totalorder %s27, 3
      %p367 = pnand %p365, %p366
      %p368 = pneg %p367
      // Predicated region
      $region9: #{tpu_custom_call.1} parent=5 // pred_check
        _
      $region10: #{tpu_custom_call.1} parent=5 // pred_check_branch
        %370 = sbr.rel (%p367) target = $region12
      $region11: #{tpu_custom_call.1} parent=5 // pred_region
        %s371 = ssub.s32 %s27, 1
        // Predicated region
        $region13: #{tpu_custom_call.1} parent=11 // pred_check
          %p372 = pneg %p48
        $region14: #{tpu_custom_call.1} parent=11 // pred_check_branch
          %374 = sbr.rel (%p372) target = $region16
        $region15: #{tpu_custom_call.1} parent=11 // pred_region
          _
        $region16: #{tpu_custom_call.1} parent=11 // pred_fallthru
          _
        // Predicated region
        $region17: #{tpu_custom_call.1} parent=11 // pred_check
          %p375 = pneg %p95
        $region18: #{tpu_custom_call.1} parent=11 // pred_check_branch
          %377 = sbr.rel (%p375) target = $region20
        $region19: #{tpu_custom_call.1} parent=11 // pred_region
          _
        $region20: #{tpu_custom_call.1} parent=11 // pred_fallthru
          _
        // Predicated region
        $region21: #{tpu_custom_call.1} parent=11 // pred_check
          %p378 = pneg %p116
        $region22: #{tpu_custom_call.1} parent=11 // pred_check_branch
          %380 = sbr.rel (%p378) target = $region24
        $region23: #{tpu_custom_call.1} parent=11 // pred_region
          _
        $region24: #{tpu_custom_call.1} parent=11 // pred_fallthru
          _
        // Predicated region
        $region25: #{tpu_custom_call.1} parent=11 // pred_check
          %p381 = pneg %p137
        $region26: #{tpu_custom_call.1} parent=11 // pred_check_branch
          %383 = sbr.rel (%p381) target = $region28
        $region27: #{tpu_custom_call.1} parent=11 // pred_region
          _
        $region28: #{tpu_custom_call.1} parent=11 // pred_fallthru
          _
        // Predicated region
        $region29: #{tpu_custom_call.1} parent=11 // pred_check
          %p384 = pneg %p158
        $region30: #{tpu_custom_call.1} parent=11 // pred_check_branch
          %386 = sbr.rel (%p384) target = $region32
        $region31: #{tpu_custom_call.1} parent=11 // pred_region
          _
        $region32: #{tpu_custom_call.1} parent=11 // pred_fallthru
          _
        // Predicated region
        $region33: #{tpu_custom_call.1} parent=11 // pred_check
          %p387 = pneg %p179
        $region34: #{tpu_custom_call.1} parent=11 // pred_check_branch
          %389 = sbr.rel (%p387) target = $region36
        $region35: #{tpu_custom_call.1} parent=11 // pred_region
          _
        $region36: #{tpu_custom_call.1} parent=11 // pred_fallthru
          _
        // Predicated region
        $region37: #{tpu_custom_call.1} parent=11 // pred_check
          %p390 = pneg %p200
        $region38: #{tpu_custom_call.1} parent=11 // pred_check_branch
          %392 = sbr.rel (%p390) target = $region40
        $region39: #{tpu_custom_call.1} parent=11 // pred_region
          _
        $region40: #{tpu_custom_call.1} parent=11 // pred_fallthru
          _
        // Predicated region
        $region41: #{tpu_custom_call.1} parent=11 // pred_check
          %p393 = pneg %p221
        $region42: #{tpu_custom_call.1} parent=11 // pred_check_branch
          %395 = sbr.rel (%p393) target = $region44
        $region43: #{tpu_custom_call.1} parent=11 // pred_region
          _
        $region44: #{tpu_custom_call.1} parent=11 // pred_fallthru
          _
        // Predicated region
        $region45: #{tpu_custom_call.1} parent=11 // pred_check
          %p396 = pneg %p242
        $region46: #{tpu_custom_call.1} parent=11 // pred_check_branch
          %398 = sbr.rel (%p396) target = $region48
        $region47: #{tpu_custom_call.1} parent=11 // pred_region
          _
        $region48: #{tpu_custom_call.1} parent=11 // pred_fallthru
          _
        // Predicated region
        $region49: #{tpu_custom_call.1} parent=11 // pred_check
          %p399 = pneg %p263
        $region50: #{tpu_custom_call.1} parent=11 // pred_check_branch
          %401 = sbr.rel (%p399) target = $region52
        $region51: #{tpu_custom_call.1} parent=11 // pred_region
          _
        $region52: #{tpu_custom_call.1} parent=11 // pred_fallthru
          _
        // Predicated region
        $region53: #{tpu_custom_call.1} parent=11 // pred_check
          %p402 = pneg %p284
        $region54: #{tpu_custom_call.1} parent=11 // pred_check_branch
          %404 = sbr.rel (%p402) target = $region56
        $region55: #{tpu_custom_call.1} parent=11 // pred_region
          _
        $region56: #{tpu_custom_call.1} parent=11 // pred_fallthru
          _
        // Predicated region
        $region57: #{tpu_custom_call.1} parent=11 // pred_check
          %p405 = pneg %p305
        $region58: #{tpu_custom_call.1} parent=11 // pred_check_branch
          %407 = sbr.rel (%p405) target = $region60
        $region59: #{tpu_custom_call.1} parent=11 // pred_region
          _
        $region60: #{tpu_custom_call.1} parent=11 // pred_fallthru
          _
      $region12: #{tpu_custom_call.1} parent=5 // pred_fallthru
        _
      %p408 = scmp.lt.s32.totalorder %s27, 2
      // Predicated region
      $region61: #{tpu_custom_call.1} parent=5 // pred_check
        %p409 = pneg %p408
      $region62: #{tpu_custom_call.1} parent=5 // pred_check_branch
        %411 = sbr.rel (%p409) target = $region64
      $region63: #{tpu_custom_call.1} parent=5 // pred_region
        // Predicated region
        $region65: #{tpu_custom_call.1} parent=63 // pred_check
          %p412 = pneg %p68
        $region66: #{tpu_custom_call.1} parent=63 // pred_check_branch
          %414 = sbr.rel (%p412) target = $region68
        $region67: #{tpu_custom_call.1} parent=63 // pred_region
          %p415 = scmp.lt.s32.totalorder %s27, 1
          %s416 = scalar_select %p415, %s27, 1
          %s417 = smul.addr %s416, 2
          %s418 = smul.addr %s417, 8
          %s419 = scalar_lea.vmem %s1, %s418
        $region68: #{tpu_custom_call.1} parent=63 // pred_fallthru
          _
      $region64: #{tpu_custom_call.1} parent=5 // pred_fallthru
        _
      %p420 = scmp.le.s32.totalorder 1, %s27
      %p421 = scmp.lt.s32.totalorder %s27, 3
      %p422 = pnand %p420, %p421
      %p423 = pneg %p422
      // Predicated region
      $region69: #{tpu_custom_call.1} parent=5 // pred_check
        _
      $region70: #{tpu_custom_call.1} parent=5 // pred_check_branch
        %425 = sbr.rel (%p422) target = $region72
      $region71: #{tpu_custom_call.1} parent=5 // pred_region
        %s426 = ssub.s32 %s27, 1
        %p427 = pneg %p48
        %p428 = pneg %p45
        %p429 = scmp.lt.s32.totalorder %s32, 1
        %s430 = scalar_select %p429, %s32, 1
        %s431 = smul.addr %s430, 2
        %s432 = smul.addr %s431, 8
        %s433 = scalar_lea.vmem %s1, %s432
        %p434 = pneg %p74
        %p435 = pneg %p71
        %p436 = pneg %p95
        %p437 = pneg %p92
        %p438 = pneg %p116
        %p439 = pneg %p113
        %p440 = pneg %p137
        %p441 = pneg %p134
        %p442 = pneg %p158
        %p443 = pneg %p155
        %p444 = pneg %p179
        %p445 = pneg %p176
        %p446 = pneg %p200
        %p447 = pneg %p197
        %p448 = pneg %p221
        %p449 = pneg %p218
        %p450 = pneg %p242
        %p451 = pneg %p239
        %p452 = pneg %p263
        %p453 = pneg %p260
        %p454 = pneg %p284
        %p455 = pneg %p281
        %p456 = pneg %p305
        %p457 = pneg %p302
        %p458 = pneg %p331
        %p459 = pneg %p328
        %s460 = sand.u32 %s318, 1
        %s461 = scalar_lea.sflag [#allocation3], %s460
        %s462 = sand.u32 %s318, 1
        %s463 = smul.addr %s462, 8
        %s464 = scalar_lea.vmem [#allocation2], %s463
        %p465 = pneg %p357
        %p466 = pneg %p354
        %s467 = sand.u32 %s344, 1
        %s468 = scalar_lea.sflag [#allocation5], %s467
        %s469 = sand.u32 %s344, 1
        %s470 = smul.addr %s469, 4
        %s471 = scalar_lea.vmem [#allocation4], %s470
        %p472 = scmp.lt.s32.totalorder %s32, 1
        %s473 = scalar_select %p472, %s32, 1
        %s474 = smul.addr %s473, 2
        %s475 = smul.addr %s474, 8
        %s476 = scalar_lea.vmem %s1, %s475
        %v478 = vld [vmem:[%s3] sm:$0xff]
        %v479 = vld [vmem:[%s3 + $0x8] sm:$0xff]
        %v480 = vld [vmem:[%s3 + $0x10] sm:$0xff]
        %v481 = vld [vmem:[%s3 + $0x18] sm:$0xff]
        %v482 = vld [vmem:[%s3 + $0x68] sm:$0x1f]
        %v483 = vld [vmem:[%s3 + $0x70] sm:$0x1f]
        %v484 = vld [vmem:[%s3 + $0x78] sm:$0x1f]
        %v485 = vld [vmem:[%s3 + $0x80] sm:$0x1f]
        %v486 = vld [vmem:[%s3 + $0x88] sm:$0x1f]
        %v487 = vld [vmem:[%s3 + $0x90] sm:$0x1f]
        %v488 = vld [vmem:[%s3 + $0x98] sm:$0x1f]
        %v489 = vld [vmem:[%s3 + $0xa0] sm:$0x1f]
        %v490 = vld [vmem:[%s3 + $0xa8] sm:$0x1f]
        %v491 = vld [vmem:[%s3 + $0xb0] sm:$0x1f]
        %v492 = vld [vmem:[%s3 + $0xb8] sm:$0x1f]
        %v493 = vld [vmem:[%s3 + $0xc0] sm:$0x1f]
        %v494 = vld [vmem:[%s3 + $0xc8] sm:$0x1f]
        %v495 = vld [vmem:[%s11] sm:$0xf]
        %v496 = vld [vmem:[%s11 + $0x4] sm:$0xf]
        %v497 = vld [vmem:[%s11 + $0x8] sm:$0xf]
        %v498 = vld [vmem:[%s11 + $0xc] sm:$0xf]
        %v499 = vld [vmem:[%s11 + $0x10] sm:$0xf]
        %v500 = vld [vmem:[%s11 + $0x14] sm:$0xf]
        %v501 = vld [vmem:[%s11 + $0x18] sm:$0xf]
        %v502 = vld [vmem:[%s11 + $0x1c] sm:$0xf]
        %v503 = vld [vmem:[%s11 + $0x20] sm:$0xf]
        %v504 = vld [vmem:[%s11 + $0x24] sm:$0xf]
        %v505 = vld [vmem:[%s11 + $0x28] sm:$0xf]
        %v506 = vld [vmem:[%s11 + $0x2c] sm:$0xf]
        %v507 = vld [vmem:[%s11 + $0x30] sm:$0xf]
        %v508 = vld [vmem:[%s11 + $0x34] sm:$0xf]
        %v509 = vld [vmem:[%s11 + $0x38] sm:$0xf]
        %v510 = vld [vmem:[%s11 + $0x3c] sm:$0xf]
        %v511 = vld [vmem:[%s11 + $0x40] sm:$0xf]
        %v512 = vld [vmem:[%s11 + $0x44] sm:$0xf]
        %v513 = vld [vmem:[%s11 + $0x48] sm:$0xf]
        %v514 = vld [vmem:[%s11 + $0x4c] sm:$0xf]
        %v515 = vld [vmem:[%s11 + $0x50] sm:$0xf]
        %v516 = vld [vmem:[%s11 + $0x54] sm:$0xf]
        %v517 = vld [vmem:[%s11 + $0x58] sm:$0xf]
        %v518 = vld [vmem:[%s11 + $0x5c] sm:$0xf]
        %v519 = vld [vmem:[%s12] sm:$0xff]
        %v520 = vld [vmem:[%s12 + $0x8] sm:$0xff]
        %v521 = vld [vmem:[%s10] sm:$0xf]
        %v522 = vld [vmem:[%s10 + $0x4] sm:$0xf]
        %v523 = vld [vmem:[%s10 + $0x8] sm:$0xf]
        %v524 = vld [vmem:[%s10 + $0xc] sm:$0xf]
        %v525 = vld [vmem:[%s10 + $0x10] sm:$0xf]
        %v526 = vld [vmem:[%s10 + $0x14] sm:$0xf]
        %v527 = vld [vmem:[%s10 + $0x18] sm:$0xf]
        %v528 = vld [vmem:[%s10 + $0x1c] sm:$0xf]
        %v529 = vld [vmem:[%s10 + $0x20] sm:$0xf]
        %v530 = vld [vmem:[%s10 + $0x24] sm:$0xf]
        %v531 = vld [vmem:[%s10 + $0x28] sm:$0xf]
        %v532 = vld [vmem:[%s10 + $0x2c] sm:$0xf]
        %v533 = vld [vmem:[%s10 + $0x30] sm:$0xf]
        %v534 = vld [vmem:[%s10 + $0x34] sm:$0xf]
        %v535 = vld [vmem:[%s10 + $0x38] sm:$0xf]
        %v536 = vld [vmem:[%s10 + $0x3c] sm:$0xf]
        %v537 = vld [vmem:[%s10 + $0x40] sm:$0xf]
        %v538 = vld [vmem:[%s10 + $0x44] sm:$0xf]
        %v539 = vld [vmem:[%s10 + $0x48] sm:$0xf]
        %v540 = vld [vmem:[%s10 + $0x4c] sm:$0xf]
        %v541 = vld [vmem:[%s10 + $0x50] sm:$0xf]
        %v542 = vld [vmem:[%s10 + $0x54] sm:$0xf]
        %v543 = vld [vmem:[%s10 + $0x58] sm:$0xf]
        %v544 = vld [vmem:[%s10 + $0x5c] sm:$0xf]
        %v545 = vld [vmem:[%s10 + $0x60] sm:$0xf]
        %v546 = vld [vmem:[%s10 + $0x64] sm:$0xf]
        %v547 = vld [vmem:[%s10 + $0x68] sm:$0xf]
        %v548 = vld [vmem:[%s10 + $0x6c] sm:$0xf]
        %v549 = vld [vmem:[%s10 + $0x70] sm:$0xf]
        %v550 = vld [vmem:[%s10 + $0x74] sm:$0xf]
        %v551 = vld [vmem:[%s10 + $0x78] sm:$0xf]
        %v552 = vld [vmem:[%s10 + $0x7c] sm:$0xf]
        %v553 = vld [vmem:[%s10 + $0x80] sm:$0xf]
        %v554 = vld [vmem:[%s4] sm:$0xf]
        %v555 = vld [vmem:[%s4 + $0x4] sm:$0xf]
        %v556 = vld [vmem:[%s4 + $0x8] sm:$0xf]
        %v557 = vld [vmem:[%s4 + $0xc] sm:$0xf]
        %v558 = vld [vmem:[%s4 + $0x10] sm:$0xf]
        %v559 = vld [vmem:[%s4 + $0x14] sm:$0xf]
        %v560 = vld [vmem:[%s4 + $0x18] sm:$0xf]
        %v561 = vld [vmem:[%s4 + $0x1c] sm:$0xf]
        %v562 = vld [vmem:[%s4 + $0x20] sm:$0xf]
        %v563 = vld [vmem:[%s4 + $0x24] sm:$0xf]
        %v564 = vld [vmem:[%s4 + $0x28] sm:$0xf]
        %v565 = vld [vmem:[%s4 + $0x2c] sm:$0xf]
        %v566 = vld [vmem:[%s4 + $0x30] sm:$0xf]
        %v567 = vld [vmem:[%s4 + $0x34] sm:$0xf]
        %v568 = vld [vmem:[%s4 + $0x38] sm:$0xf]
        %v569 = vld [vmem:[%s4 + $0x3c] sm:$0xf]
        %v570 = vld [vmem:[%s4 + $0x40] sm:$0xf]
        %v571 = vld [vmem:[%s4 + $0x44] sm:$0xf]
        %v572 = vld [vmem:[%s4 + $0x48] sm:$0xf]
        %v573 = vld [vmem:[%s4 + $0x4c] sm:$0xf]
        %v574 = vld [vmem:[%s4 + $0x50] sm:$0xf]
        %v575 = vld [vmem:[%s4 + $0x54] sm:$0xf]
        %v576 = vld [vmem:[%s4 + $0x58] sm:$0xf]
        %v577 = vld [vmem:[%s4 + $0x5c] sm:$0xf]
        %v578 = vld [vmem:[%s4 + $0x60] sm:$0xf]
        %v579 = vld [vmem:[%s4 + $0x64] sm:$0xf]
        %v580 = vld [vmem:[%s4 + $0x68] sm:$0xf]
        %v581 = vld [vmem:[%s4 + $0x6c] sm:$0xf]
        %v582 = vld [vmem:[%s4 + $0x70] sm:$0xf]
        %v583 = vld [vmem:[%s4 + $0x74] sm:$0xf]
        %v584 = vld [vmem:[%s4 + $0x78] sm:$0xf]
        %v585 = vld [vmem:[%s4 + $0x7c] sm:$0xf]
        %v586 = vld [vmem:[%s2] sm:$0xff]
        %v587 = vld [vmem:[%s2 + $0x8] sm:$0x3]
        %v588 = vld [vmem:[%s0] sm:$0xff]
        %v589 = vld [vmem:[%s0 + $0x8] sm:$0xff]
        %v590 = vpack.c.bf16 %v588, %v588
        %v591 = vpack.c.bf16 %v589, %v589
        %v592 = vperm.slane %v478, 0
        %v625 = vunpack.c.l.b16 %v554
        %v626 = vunpack.c.l.b16 %v555
        %v627 = vunpack.c.l.b16 %v556
        %v628 = vunpack.c.l.b16 %v557
        %v629 = vunpack.c.l.b16 %v558
        %v630 = vunpack.c.l.b16 %v559
        %v631 = vunpack.c.l.b16 %v560
        %v632 = vunpack.c.l.b16 %v561
        %v633 = vunpack.c.l.b16 %v562
        %v634 = vunpack.c.l.b16 %v563
        %v635 = vunpack.c.l.b16 %v564
        %v636 = vunpack.c.l.b16 %v565
        %v637 = vunpack.c.l.b16 %v566
        %v638 = vunpack.c.l.b16 %v567
        %v639 = vunpack.c.l.b16 %v568
        %v640 = vunpack.c.l.b16 %v569
        %v641 = vunpack.c.l.b16 %v570
        %v642 = vunpack.c.l.b16 %v571
        %v643 = vunpack.c.l.b16 %v572
        %v644 = vunpack.c.l.b16 %v573
        %v645 = vunpack.c.l.b16 %v574
        %v646 = vunpack.c.l.b16 %v575
        %v647 = vunpack.c.l.b16 %v576
        %v648 = vunpack.c.l.b16 %v577
        %v649 = vunpack.c.l.b16 %v578
        %v650 = vunpack.c.l.b16 %v579
        %v651 = vunpack.c.l.b16 %v580
        %v652 = vunpack.c.l.b16 %v581
        %v653 = vunpack.c.l.b16 %v582
        %v654 = vunpack.c.l.b16 %v583
        %v655 = vunpack.c.l.b16 %v584
        %v656 = vunpack.c.l.b16 %v585
        %v657 = vpack.c.b16 %v626, %v625
        %v658 = vpack.c.b16 %v628, %v627
        %v659 = vpack.c.b16 %v630, %v629
        %v660 = vpack.c.b16 %v632, %v631
        %v661 = vpack.c.b16 %v634, %v633
        %v662 = vpack.c.b16 %v636, %v635
        %v663 = vpack.c.b16 %v638, %v637
        %v664 = vpack.c.b16 %v640, %v639
        %v665 = vpack.c.b16 %v642, %v641
        %v666 = vpack.c.b16 %v644, %v643
        %v667 = vpack.c.b16 %v646, %v645
        %v668 = vpack.c.b16 %v648, %v647
        %v669 = vpack.c.b16 %v650, %v649
        %v670 = vpack.c.b16 %v652, %v651
        %v671 = vpack.c.b16 %v654, %v653
        %v672 = vpack.c.b16 %v656, %v655
        %689 = vmatpush.bf16.msra.mxu0 %v664
        %690 = vmatpush.bf16.msra.mxu0 %v663
        %691 = vmatpush.bf16.msra.mxu0 %v662
        %692 = vmatpush.bf16.msra.mxu0 %v661
        %693 = vmatpush.bf16.msra.mxu0 %v660
        %694 = vmatpush.bf16.msra.mxu0 %v659
        %695 = vmatpush.bf16.msra.mxu0 %v658
        %696 = vmatpush.bf16.msra.mxu0 %v657
        %697 = vmatmul.bf16.gmra.mxu0 %v590
        %v698 = vpop.f32.mrf.mxu0
        %v699 = vadd.f32 %v592, %v698
        %v700 = vpop.f32.mrf.mxu0
        %701 = vdwg.mxu0
        %702 = vmatpush.bf16.msra.mxu0 %v672
        %703 = vmatpush.bf16.msra.mxu0 %v671
        %704 = vmatpush.bf16.msra.mxu0 %v670
        %705 = vmatpush.bf16.msra.mxu0 %v669
        %706 = vmatpush.bf16.msra.mxu0 %v668
        %707 = vmatpush.bf16.msra.mxu0 %v667
        %708 = vmatpush.bf16.msra.mxu0 %v666
        %709 = vmatpush.bf16.msra.mxu0 %v665
        %710 = vmatmul.bf16.gmra.mxu0 %v591
        %v711 = vpop.f32.mrf.mxu0
        %v712 = vadd.f32 %v699, %v711
        %v713 = vpop.f32.mrf.mxu0
        %714 = vdwg.mxu0
        %v715 = vmax.f32 %v712, 0.0
        %v717 = vrot.slane %v520, 4
        %vm718 = vcmask 64512
        %v719 = vsel %vm718, %v717, 0
        %721 = vmatpush.msra.mxu0 0.0
        %722 = vmatpush.msra.mxu0 0.0
        %723 = vmatpush.msra.mxu0 0.0
        %724 = vmatpush.msra.mxu0 0.0
        %725 = vmatpush.msra.mxu0 0.0
        %726 = vmatpush.msra.mxu0 0.0
        %727 = vmatpush.msra.mxu0 0.0
        %728 = vmatpush.msra.mxu0 0.0
        %729 = vmatpush.msra.mxu0 0.0
        %730 = vmatpush.msra.mxu0 0.0
        %731 = vmatpush.msra.mxu0 0.0
        %732 = vmatpush.msra.mxu0 0.0
        %733 = vmatpush.msra.mxu0 0.0
        %734 = vmatpush.msra.mxu0 0.0
        %735 = vmatpush.msra.mxu0 0.0
        %736 = vmatpush.msra.mxu0 %v715
        %737 = vmatmul.f32.gmra.mxu0 %v719
        %v738 = vpop.f32.mrf.mxu0
        %v739 = vadd.f32 0.0, %v738
        %740 = vdwg.mxu0
        %v741 = vmul.f32 %v739, 0.5
        %v742 = vpack.c.bf16 %v587, %v586
        %v743 = vld [vmem:[%s5] sm:$0xf]
        %v744 = vld [vmem:[%s5 + $0x4] sm:$0xf]
        %v745 = vld [vmem:[%s5 + $0x8] sm:$0xf]
        %v746 = vld [vmem:[%s5 + $0xc] sm:$0xf]
        %v747 = vld [vmem:[%s5 + $0x10] sm:$0xf]
        %v748 = vld [vmem:[%s5 + $0x14] sm:$0xf]
        %v749 = vld [vmem:[%s5 + $0x18] sm:$0xf]
        %v750 = vld [vmem:[%s5 + $0x1c] sm:$0xf]
        %v751 = vperm.slane %v478, 1
        %v760 = vunpack.c.l.b16 %v743
        %v761 = vunpack.c.l.b16 %v744
        %v762 = vunpack.c.l.b16 %v745
        %v763 = vunpack.c.l.b16 %v746
        %v764 = vunpack.c.l.b16 %v747
        %v765 = vunpack.c.l.b16 %v748
        %v766 = vunpack.c.l.b16 %v749
        %v767 = vunpack.c.l.b16 %v750
        %v768 = vpack.c.b16 %v761, %v760
        %v769 = vpack.c.b16 %v763, %v762
        %v770 = vpack.c.b16 %v765, %v764
        %v771 = vpack.c.b16 %v767, %v766
        %vm776 = vcmask 523264
        %v778 = vsel %vm776, %v742, 0
        %780 = vmatpush.bf16.msra.mxu0 0
        %781 = vmatpush.bf16.msra.mxu0 0
        %782 = vmatpush.bf16.msra.mxu0 0
        %783 = vmatpush.bf16.msra.mxu0 0
        %784 = vmatpush.bf16.msra.mxu0 %v771
        %785 = vmatpush.bf16.msra.mxu0 %v770
        %786 = vmatpush.bf16.msra.mxu0 %v769
        %787 = vmatpush.bf16.msra.mxu0 %v768
        %788 = vmatmul.bf16.gmra.mxu0 %v778
        %v789 = vpop.f32.mrf.mxu0
        %v790 = vadd.f32 %v751, %v789
        %v791 = vpop.f32.mrf.mxu0
        %v792 = vadd.f32 %v751, %v791
        %793 = vdwg.mxu0
        %v794 = vpack.c.bf16 %v741, %v741
        %s795 = scalar_lea.vmem %s5, 32
        %v796 = vld [vmem:[%s795] sm:$0xf]
        %v797 = vld [vmem:[%s795 + $0x4] sm:$0xf]
        %v798 = vld [vmem:[%s795 + $0x8] sm:$0xf]
        %v799 = vld [vmem:[%s795 + $0xc] sm:$0xf]
        %v800 = vld [vmem:[%s795 + $0x10] sm:$0xf]
        %v801 = vld [vmem:[%s795 + $0x14] sm:$0xf]
        %v802 = vld [vmem:[%s795 + $0x18] sm:$0xf]
        %v803 = vld [vmem:[%s795 + $0x1c] sm:$0xf]
        %v804 = vperm.slane %v478, 2
        %v813 = vunpack.c.l.b16 %v796
        %v814 = vunpack.c.l.b16 %v797
        %v815 = vunpack.c.l.b16 %v798
        %v816 = vunpack.c.l.b16 %v799
        %v817 = vunpack.c.l.b16 %v800
        %v818 = vunpack.c.l.b16 %v801
        %v819 = vunpack.c.l.b16 %v802
        %v820 = vunpack.c.l.b16 %v803
        %v821 = vpack.c.b16 %v814, %v813
        %v822 = vpack.c.b16 %v816, %v815
        %v823 = vpack.c.b16 %v818, %v817
        %v824 = vpack.c.b16 %v820, %v819
        %v830 = vsel %vm776, %v794, 0
        %832 = vmatpush.bf16.msra.mxu0 0
        %833 = vmatpush.bf16.msra.mxu0 0
        %834 = vmatpush.bf16.msra.mxu0 0
        %835 = vmatpush.bf16.msra.mxu0 0
        %836 = vmatpush.bf16.msra.mxu0 %v824
        %837 = vmatpush.bf16.msra.mxu0 %v823
        %838 = vmatpush.bf16.msra.mxu0 %v822
        %839 = vmatpush.bf16.msra.mxu0 %v821
        %840 = vmatmul.bf16.gmra.mxu0 %v830
        %v841 = vpop.f32.mrf.mxu0
        %v842 = vadd.f32 %v804, %v841
        %v843 = vpop.f32.mrf.mxu0
        %844 = vdwg.mxu0
        %vm845 = vcmask 261120
        %v846 = vsel %vm845, %v790, 0.0
        %vm847 = vcmask 254976
        %v848 = vsel %vm847, %v792, 0.0
        %v849 = vadd.f32 %v846, %v848
        %v850 = vrot.slane %v849, 4
        %v851 = vadd.f32 %v849, %v850
        %v852 = vrot.slane %v851, 2
        %v853 = vadd.f32 %v851, %v852
        %v854 = vrot.slane %v853, 1
        %v855 = vadd.f32 %v853, %v854
        %v856 = vrcp.pop 10.0
        %v857 = vmul.f32 10.0, %v856
        %v858 = vsub.f32 1.0, %v857
        %v859 = vmul.f32 %v856, %v858
        %v860 = vadd.f32 %v856, %v859
        %vm861 = vweird.f32 %v856
        %v862 = vsel %vm861, %v856, %v860
        %v863 = vmul.f32 %v855, %v862
        %v864 = vsub.f32 %v790, %v863
        %v865 = vsub.f32 %v792, %v863
        %v866 = vmul.f32 %v864, %v864
        %v867 = vmul.f32 %v865, %v865
        %v868 = vsel %vm845, %v866, 0.0
        %v869 = vsel %vm847, %v867, 0.0
        %v870 = vadd.f32 %v868, %v869
        %v871 = vrot.slane %v870, 4
        %v872 = vadd.f32 %v870, %v871
        %v873 = vrot.slane %v872, 2
        %v874 = vadd.f32 %v872, %v873
        %v875 = vrot.slane %v874, 1
        %v876 = vadd.f32 %v874, %v875
        %v877 = vmul.f32 %v876, %v862
        %v878 = vadd.f32 %v877, 1e-05
        %v879 = vrsqrt.pop %v878
        %v880 = vmul.f32 %v879, %v878
        %v881 = vmul.f32 %v880, %v879
        %v882 = vmul.f32 0.5, %v881
        %v883 = vsub.f32 1.5, %v882
        %v884 = vmul.f32 %v879, %v883
        %vm885 = vweird.f32 %v878
        %vm886 = vweird.f32 %v879
        %vm887 = vmor %vm885, %vm886
        %v888 = vsel %vm887, %v879, %v884
        %v889 = vmul.f32 %v864, %v888
        %v890 = vmul.f32 %v865, %v888
        %v891 = vperm.slane %v478, 3
        %v892 = vmul.f32 %v889, %v891
        %v893 = vmul.f32 %v890, %v891
        %v894 = vperm.slane %v478, 5
        %v895 = vadd.f32 %v892, %v894
        %v896 = vadd.f32 %v893, %v894
        %v897 = vmax.f32 %v895, 0.0
        %v898 = vmax.f32 %v896, 0.0
        %vm899 = vcmask 257024
        %v900 = vsel %vm899, %v842, 0.0
        %v901 = vrot.slane %v900, 4
        %v902 = vadd.f32 %v900, %v901
        %v903 = vrot.slane %v902, 2
        %v904 = vadd.f32 %v902, %v903
        %v905 = vrot.slane %v904, 1
        %v906 = vadd.f32 %v904, %v905
        %v907 = vrcp.pop 4.0
        %v908 = vmul.f32 4.0, %v907
        %v909 = vsub.f32 1.0, %v908
        %v910 = vmul.f32 %v907, %v909
        %v911 = vadd.f32 %v907, %v910
        %vm912 = vweird.f32 %v907
        %v913 = vsel %vm912, %v907, %v911
        %v914 = vmul.f32 %v906, %v913
        %v915 = vsub.f32 %v842, %v914
        %v916 = vmul.f32 %v915, %v915
        %v917 = vsel %vm899, %v916, 0.0
        %v918 = vrot.slane %v917, 4
        %v919 = vadd.f32 %v917, %v918
        %v920 = vrot.slane %v919, 2
        %v921 = vadd.f32 %v919, %v920
        %v922 = vrot.slane %v921, 1
        %v923 = vadd.f32 %v921, %v922
        %v924 = vmul.f32 %v923, %v913
        %v925 = vadd.f32 %v924, 1e-05
        %v926 = vrsqrt.pop %v925
        %v927 = vmul.f32 %v926, %v925
        %v928 = vmul.f32 %v927, %v926
        %v929 = vmul.f32 0.5, %v928
        %v930 = vsub.f32 1.5, %v929
        %v931 = vmul.f32 %v926, %v930
        %vm932 = vweird.f32 %v925
        %vm933 = vweird.f32 %v926
        %vm934 = vmor %vm932, %vm933
        %v935 = vsel %vm934, %v926, %v931
        %v936 = vmul.f32 %v915, %v935
        %v937 = vperm.slane %v478, 4
        %v938 = vmul.f32 %v936, %v937
        %v939 = vperm.slane %v478, 6
        %v940 = vadd.f32 %v938, %v939
        %v941 = vmax.f32 %v940, 0.0
        %vm942 = vcmask 1041408
        %v943 = vsel %vm942, %v898, 0.0
        %v944 = vld [vmem:[%s8] sm:$0xff]
        %v945 = vld [vmem:[%s8 + $0x8] sm:$0xff]
        %v946 = vld [vmem:[%s8 + $0x10] sm:$0xff]
        %v947 = vld [vmem:[%s8 + $0x18] sm:$0xff]
        %v948 = vld [vmem:[%s8 + $0x20] sm:$0xff]
        %v949 = vld [vmem:[%s8 + $0x28] sm:$0xff]
        %v950 = vld [vmem:[%s8 + $0x30] sm:$0xff]
        %v951 = vld [vmem:[%s8 + $0x38] sm:$0xff]
        %v952 = vld [vmem:[%s8 + $0x40] sm:$0xff]
        %v953 = vld [vmem:[%s8 + $0x48] sm:$0xff]
        %v954 = vld [vmem:[%s8 + $0x50] sm:$0xff]
        %v955 = vld [vmem:[%s8 + $0x58] sm:$0xff]
        %v956 = vld [vmem:[%s8 + $0x60] sm:$0xff]
        %v957 = vld [vmem:[%s8 + $0x68] sm:$0xff]
        %v958 = vld [vmem:[%s8 + $0x70] sm:$0xff]
        %v959 = vld [vmem:[%s8 + $0x78] sm:$0xff]
        %v960 = vld [vmem:[%s9] sm:$0xf]
        %v961 = vld [vmem:[%s9 + $0x4] sm:$0xf]
        %v962 = vld [vmem:[%s9 + $0x8] sm:$0xf]
        %v963 = vld [vmem:[%s9 + $0xc] sm:$0xf]
        %v964 = vld [vmem:[%s9 + $0x10] sm:$0xf]
        %v965 = vld [vmem:[%s9 + $0x14] sm:$0xf]
        %v966 = vld [vmem:[%s9 + $0x18] sm:$0xf]
        %v967 = vld [vmem:[%s9 + $0x1c] sm:$0xf]
        %v968 = vld [vmem:[%s9 + $0x20] sm:$0xf]
        %v969 = vld [vmem:[%s9 + $0x24] sm:$0xf]
        %v970 = vld [vmem:[%s9 + $0x28] sm:$0xf]
        %v971 = vld [vmem:[%s9 + $0x2c] sm:$0xf]
        %v972 = vld [vmem:[%s9 + $0x30] sm:$0xf]
        %v973 = vld [vmem:[%s9 + $0x34] sm:$0xf]
        %v974 = vld [vmem:[%s9 + $0x38] sm:$0xf]
        %v975 = vld [vmem:[%s9 + $0x3c] sm:$0xf]
        %v976 = vld [vmem:[%s9 + $0x40] sm:$0xf]
        %v977 = vld [vmem:[%s9 + $0x44] sm:$0xf]
        %v978 = vld [vmem:[%s9 + $0x48] sm:$0xf]
        %v979 = vld [vmem:[%s9 + $0x4c] sm:$0xf]
        %v980 = vld [vmem:[%s9 + $0x50] sm:$0xf]
        %v981 = vld [vmem:[%s9 + $0x54] sm:$0xf]
        %v982 = vld [vmem:[%s9 + $0x58] sm:$0xf]
        %v983 = vld [vmem:[%s9 + $0x5c] sm:$0xf]
        %v984 = vld [vmem:[%s9 + $0x60] sm:$0xf]
        %v985 = vld [vmem:[%s9 + $0x64] sm:$0xf]
        %v986 = vld [vmem:[%s9 + $0x68] sm:$0xf]
        %v987 = vld [vmem:[%s9 + $0x6c] sm:$0xf]
        %v988 = vld [vmem:[%s9 + $0x70] sm:$0xf]
        %v989 = vld [vmem:[%s9 + $0x74] sm:$0xf]
        %v990 = vld [vmem:[%s9 + $0x78] sm:$0xf]
        %v991 = vld [vmem:[%s9 + $0x7c] sm:$0xf]
        %v992 = vld [vmem:[%s9 + $0x80] sm:$0xf]
        %v993 = vld [vmem:[%s9 + $0x84] sm:$0xf]
        %v994 = vld [vmem:[%s9 + $0x88] sm:$0xf]
        %v995 = vld [vmem:[%s9 + $0x8c] sm:$0xf]
        %v996 = vld [vmem:[%s9 + $0x90] sm:$0xf]
        %v997 = vld [vmem:[%s9 + $0x94] sm:$0xf]
        %v998 = vld [vmem:[%s9 + $0x98] sm:$0xf]
        %v999 = vld [vmem:[%s9 + $0x9c] sm:$0xf]
        %v1000 = vld [vmem:[%s9 + $0xa0] sm:$0xf]
        %v1001 = vld [vmem:[%s9 + $0xa4] sm:$0xf]
        %v1002 = vld [vmem:[%s9 + $0xa8] sm:$0xf]
        %v1003 = vld [vmem:[%s9 + $0xac] sm:$0xf]
        %v1004 = vld [vmem:[%s9 + $0xb0] sm:$0xf]
        %v1005 = vld [vmem:[%s9 + $0xb4] sm:$0xf]
        %v1006 = vld [vmem:[%s9 + $0xb8] sm:$0xf]
        %v1007 = vld [vmem:[%s9 + $0xbc] sm:$0xf]
        %v1008 = vld [vmem:[%s9 + $0xc0] sm:$0xf]
        %v1009 = vld [vmem:[%s9 + $0xc4] sm:$0xf]
        %v1010 = vld [vmem:[%s9 + $0xc8] sm:$0xf]
        %v1011 = vld [vmem:[%s9 + $0xcc] sm:$0xf]
        %v1012 = vld [vmem:[%s9 + $0xd0] sm:$0xf]
        %v1013 = vld [vmem:[%s9 + $0xd4] sm:$0xf]
        %v1014 = vld [vmem:[%s9 + $0xd8] sm:$0xf]
        %v1015 = vld [vmem:[%s9 + $0xdc] sm:$0xf]
        %v1016 = vld [vmem:[%s9 + $0xe0] sm:$0xf]
        %v1017 = vld [vmem:[%s9 + $0xe4] sm:$0xf]
        %v1018 = vld [vmem:[%s9 + $0xe8] sm:$0xf]
        %v1019 = vld [vmem:[%s9 + $0xec] sm:$0xf]
        %v1020 = vld [vmem:[%s9 + $0xf0] sm:$0xf]
        %v1021 = vld [vmem:[%s9 + $0xf4] sm:$0xf]
        %v1022 = vld [vmem:[%s9 + $0xf8] sm:$0xf]
        %v1023 = vld [vmem:[%s9 + $0xfc] sm:$0xf]
        %v1024 = vpack.c.bf16 %v941, %v941
        %v1033 = vunpack.c.l.b16 %v944
        %v1034 = vunpack.c.h.b16 %v944
        %v1035 = vunpack.c.l.b16 %v945
        %v1036 = vunpack.c.h.b16 %v945
        %v1037 = vunpack.c.l.b16 %v946
        %v1038 = vunpack.c.h.b16 %v946
        %v1039 = vunpack.c.l.b16 %v947
        %v1040 = vunpack.c.h.b16 %v947
        %v1041 = vunpack.c.l.b16 %v948
        %v1042 = vunpack.c.h.b16 %v948
        %v1043 = vunpack.c.l.b16 %v949
        %v1044 = vunpack.c.h.b16 %v949
        %v1045 = vunpack.c.l.b16 %v950
        %v1046 = vunpack.c.h.b16 %v950
        %v1047 = vunpack.c.l.b16 %v951
        %v1048 = vunpack.c.h.b16 %v951
        %v1049 = vpack.c.b16 %v1037, %v1033
        %v1050 = vpack.c.b16 %v1038, %v1034
        %v1051 = vpack.c.b16 %v1039, %v1035
        %v1052 = vpack.c.b16 %v1040, %v1036
        %v1053 = vpack.c.b16 %v1045, %v1041
        %v1054 = vpack.c.b16 %v1046, %v1042
        %v1055 = vpack.c.b16 %v1047, %v1043
        %v1056 = vpack.c.b16 %v1048, %v1044
        %v1066 = vsel %vm845, %v1024, 0
        %1068 = vmatpush.bf16.msra.mxu0 0
        %1069 = vmatpush.bf16.msra.mxu0 0
        %1070 = vmatpush.bf16.msra.mxu0 0
        %1071 = vmatpush.bf16.msra.mxu0 0
        %1072 = vmatpush.bf16.msra.mxu0 0
        %1073 = vmatpush.bf16.msra.mxu0 0
        %1074 = vmatpush.bf16.msra.mxu0 %v1053
        %1075 = vmatpush.bf16.msra.mxu0 %v1049
        %1076 = vmatmul.bf16.gmra.mxu0 %v1066
        %v1077 = vpop.f32.mrf.mxu0
        %v1078 = vadd.f32 0.0, %v1077
        %v1079 = vpop.f32.mrf.mxu0
        %1080 = vdwg.mxu0
        %1081 = vmatpush.bf16.msra.mxu0 0
        %1082 = vmatpush.bf16.msra.mxu0 0
        %1083 = vmatpush.bf16.msra.mxu0 0
        %1084 = vmatpush.bf16.msra.mxu0 0
        %1085 = vmatpush.bf16.msra.mxu0 0
        %1086 = vmatpush.bf16.msra.mxu0 0
        %1087 = vmatpush.bf16.msra.mxu0 %v1054
        %1088 = vmatpush.bf16.msra.mxu0 %v1050
        %1089 = vmatmul.bf16.gmra.mxu0 %v1066
        %v1090 = vpop.f32.mrf.mxu0
        %v1091 = vadd.f32 0.0, %v1090
        %v1092 = vpop.f32.mrf.mxu0
        %1093 = vdwg.mxu0
        %1094 = vmatpush.bf16.msra.mxu0 0
        %1095 = vmatpush.bf16.msra.mxu0 0
        %1096 = vmatpush.bf16.msra.mxu0 0
        %1097 = vmatpush.bf16.msra.mxu0 0
        %1098 = vmatpush.bf16.msra.mxu0 0
        %1099 = vmatpush.bf16.msra.mxu0 0
        %1100 = vmatpush.bf16.msra.mxu0 %v1055
        %1101 = vmatpush.bf16.msra.mxu0 %v1051
        %1102 = vmatmul.bf16.gmra.mxu0 %v1066
        %v1103 = vpop.f32.mrf.mxu0
        %v1104 = vadd.f32 0.0, %v1103
        %v1105 = vpop.f32.mrf.mxu0
        %1106 = vdwg.mxu0
        %1107 = vmatpush.bf16.msra.mxu0 0
        %1108 = vmatpush.bf16.msra.mxu0 0
        %1109 = vmatpush.bf16.msra.mxu0 0
        %1110 = vmatpush.bf16.msra.mxu0 0
        %1111 = vmatpush.bf16.msra.mxu0 0
        %1112 = vmatpush.bf16.msra.mxu0 0
        %1113 = vmatpush.bf16.msra.mxu0 %v1056
        %1114 = vmatpush.bf16.msra.mxu0 %v1052
        %1115 = vmatmul.bf16.gmra.mxu0 %v1066
        %v1116 = vpop.f32.mrf.mxu0
        %v1117 = vadd.f32 0.0, %v1116
        %v1118 = vpop.f32.mrf.mxu0
        %1119 = vdwg.mxu0
        %v1120 = vpack.c.bf16 %v943, %v897
        %v1121 = vperm.slane %v478, 7
        %v1122 = vperm.slane %v479, 7
        %v1123 = vperm.slane %v480, 7
        %v1124 = vperm.slane %v481, 7
        %v1133 = vunpack.c.l.b16 %v952
        %v1134 = vunpack.c.h.b16 %v952
        %v1135 = vunpack.c.l.b16 %v953
        %v1136 = vunpack.c.h.b16 %v953
        %v1137 = vunpack.c.l.b16 %v954
        %v1138 = vunpack.c.h.b16 %v954
        %v1139 = vunpack.c.l.b16 %v955
        %v1140 = vunpack.c.h.b16 %v955
        %v1141 = vunpack.c.l.b16 %v956
        %v1142 = vunpack.c.h.b16 %v956
        %v1143 = vunpack.c.l.b16 %v957
        %v1144 = vunpack.c.h.b16 %v957
        %v1145 = vunpack.c.l.b16 %v958
        %v1146 = vunpack.c.h.b16 %v958
        %v1147 = vunpack.c.l.b16 %v959
        %v1148 = vunpack.c.h.b16 %v959
        %v1149 = vpack.c.b16 %v1137, %v1133
        %v1150 = vpack.c.b16 %v1138, %v1134
        %v1151 = vpack.c.b16 %v1139, %v1135
        %v1152 = vpack.c.b16 %v1140, %v1136
        %v1153 = vpack.c.b16 %v1145, %v1141
        %v1154 = vpack.c.b16 %v1146, %v1142
        %v1155 = vpack.c.b16 %v1147, %v1143
        %v1156 = vpack.c.b16 %v1148, %v1144
        %v1166 = vsel %vm845, %v1120, 0
        %1168 = vmatpush.bf16.msra.mxu0 0
        %1169 = vmatpush.bf16.msra.mxu0 0
        %1170 = vmatpush.bf16.msra.mxu0 0
        %1171 = vmatpush.bf16.msra.mxu0 0
        %1172 = vmatpush.bf16.msra.mxu0 0
        %1173 = vmatpush.bf16.msra.mxu0 0
        %1174 = vmatpush.bf16.msra.mxu0 %v1153
        %1175 = vmatpush.bf16.msra.mxu0 %v1149
        %1176 = vmatmul.bf16.gmra.mxu0 %v1166
        %v1177 = vpop.f32.mrf.mxu0
        %v1178 = vadd.f32 %v1121, %v1177
        %v1179 = vpop.f32.mrf.mxu0
        %v1180 = vadd.f32 %v1121, %v1179
        %1181 = vdwg.mxu0
        %1182 = vmatpush.bf16.msra.mxu0 0
        %1183 = vmatpush.bf16.msra.mxu0 0
        %1184 = vmatpush.bf16.msra.mxu0 0
        %1185 = vmatpush.bf16.msra.mxu0 0
        %1186 = vmatpush.bf16.msra.mxu0 0
        %1187 = vmatpush.bf16.msra.mxu0 0
        %1188 = vmatpush.bf16.msra.mxu0 %v1154
        %1189 = vmatpush.bf16.msra.mxu0 %v1150
        %1190 = vmatmul.bf16.gmra.mxu0 %v1166
        %v1191 = vpop.f32.mrf.mxu0
        %v1192 = vadd.f32 %v1122, %v1191
        %v1193 = vpop.f32.mrf.mxu0
        %v1194 = vadd.f32 %v1122, %v1193
        %1195 = vdwg.mxu0
        %1196 = vmatpush.bf16.msra.mxu0 0
        %1197 = vmatpush.bf16.msra.mxu0 0
        %1198 = vmatpush.bf16.msra.mxu0 0
        %1199 = vmatpush.bf16.msra.mxu0 0
        %1200 = vmatpush.bf16.msra.mxu0 0
        %1201 = vmatpush.bf16.msra.mxu0 0
        %1202 = vmatpush.bf16.msra.mxu0 %v1155
        %1203 = vmatpush.bf16.msra.mxu0 %v1151
        %1204 = vmatmul.bf16.gmra.mxu0 %v1166
        %v1205 = vpop.f32.mrf.mxu0
        %v1206 = vadd.f32 %v1123, %v1205
        %v1207 = vpop.f32.mrf.mxu0
        %v1208 = vadd.f32 %v1123, %v1207
        %1209 = vdwg.mxu0
        %1210 = vmatpush.bf16.msra.mxu0 0
        %1211 = vmatpush.bf16.msra.mxu0 0
        %1212 = vmatpush.bf16.msra.mxu0 0
        %1213 = vmatpush.bf16.msra.mxu0 0
        %1214 = vmatpush.bf16.msra.mxu0 0
        %1215 = vmatpush.bf16.msra.mxu0 0
        %1216 = vmatpush.bf16.msra.mxu0 %v1156
        %1217 = vmatpush.bf16.msra.mxu0 %v1152
        %1218 = vmatmul.bf16.gmra.mxu0 %v1166
        %v1219 = vpop.f32.mrf.mxu0
        %v1220 = vadd.f32 %v1124, %v1219
        %v1221 = vpop.f32.mrf.mxu0
        %v1222 = vadd.f32 %v1124, %v1221
        %1223 = vdwg.mxu0
        %v1224 = vpack.c.bf16 %v1180, %v1178
        %v1225 = vpack.c.bf16 %v1194, %v1192
        %v1226 = vpack.c.bf16 %v1208, %v1206
        %v1227 = vpack.c.bf16 %v1222, %v1220
        %v1228 = vpack.c.bf16 %v1078, %v1078
        %v1229 = vpack.c.bf16 %v1091, %v1091
        %v1230 = vpack.c.bf16 %v1104, %v1104
        %v1231 = vpack.c.bf16 %v1117, %v1117
        %v1240 = vunpack.c.l.b16 %v511
        %v1241 = vunpack.c.l.b16 %v512
        %v1242 = vunpack.c.l.b16 %v513
        %v1243 = vunpack.c.l.b16 %v514
        %v1244 = vunpack.c.l.b16 %v515
        %v1245 = vunpack.c.l.b16 %v516
        %v1246 = vunpack.c.l.b16 %v517
        %v1247 = vunpack.c.l.b16 %v518
        %v1248 = vpack.c.b16 %v1241, %v1240
        %v1249 = vpack.c.b16 %v1243, %v1242
        %v1250 = vpack.c.b16 %v1245, %v1244
        %v1251 = vpack.c.b16 %v1247, %v1246
        %vm1252 = vcmask 162816
        %v1254 = vsel %vm1252, %v1248, 0
        %v1257 = vsel %vm1252, %v1249, 0
        %v1260 = vsel %vm1252, %v1250, 0
        %v1263 = vsel %vm1252, %v1251, 0
        %v1266 = vsel %vm942, %v1228, 0
        %v1269 = vsel %vm942, %v1229, 0
        %v1272 = vsel %vm942, %v1230, 0
        %v1275 = vsel %vm942, %v1231, 0
        %1277 = vmatpush.bf16.msra.mxu0 0
        %1278 = vmatpush.bf16.msra.mxu0 0
        %1279 = vmatpush.bf16.msra.mxu0 0
        %1280 = vmatpush.bf16.msra.mxu0 0
        %1281 = vmatpush.bf16.msra.mxu0 0
        %1282 = vmatpush.bf16.msra.mxu0 0
        %1283 = vmatpush.bf16.msra.mxu0 %v1266
        %1284 = vmatpush.bf16.msra.mxu0 %v1224
        %1285 = vmatmul.bf16.gmra.mxu0 %v1254
        %v1286 = vpop.f32.mrf.mxu0
        %v1287 = vadd.f32 0.0, %v1286
        %v1288 = vpop.f32.mrf.mxu0
        %v1289 = vadd.f32 0.0, %v1288
        %1290 = vmatmul.bf16.gmra.mxu0 %v1257
        %v1291 = vpop.f32.mrf.mxu0
        %v1292 = vadd.f32 0.0, %v1291
        %v1293 = vpop.f32.mrf.mxu0
        %v1294 = vadd.f32 0.0, %v1293
        %1295 = vmatmul.bf16.gmra.mxu0 %v1260
        %v1296 = vpop.f32.mrf.mxu0
        %v1297 = vadd.f32 0.0, %v1296
        %v1298 = vpop.f32.mrf.mxu0
        %v1299 = vadd.f32 0.0, %v1298
        %1300 = vmatmul.bf16.gmra.mxu0 %v1263
        %v1301 = vpop.f32.mrf.mxu0
        %v1302 = vadd.f32 0.0, %v1301
        %v1303 = vpop.f32.mrf.mxu0
        %v1304 = vadd.f32 0.0, %v1303
        %1305 = vdwg.mxu0
        %1306 = vmatpush.bf16.msra.mxu0 0
        %1307 = vmatpush.bf16.msra.mxu0 0
        %1308 = vmatpush.bf16.msra.mxu0 0
        %1309 = vmatpush.bf16.msra.mxu0 0
        %1310 = vmatpush.bf16.msra.mxu0 0
        %1311 = vmatpush.bf16.msra.mxu0 0
        %1312 = vmatpush.bf16.msra.mxu0 %v1269
        %1313 = vmatpush.bf16.msra.mxu0 %v1225
        %1314 = vmatmul.bf16.gmra.mxu0 %v1254
        %v1315 = vpop.f32.mrf.mxu0
        %v1316 = vadd.f32 0.0, %v1315
        %v1317 = vpop.f32.mrf.mxu0
        %v1318 = vadd.f32 0.0, %v1317
        %1319 = vmatmul.bf16.gmra.mxu0 %v1257
        %v1320 = vpop.f32.mrf.mxu0
        %v1321 = vadd.f32 0.0, %v1320
        %v1322 = vpop.f32.mrf.mxu0
        %v1323 = vadd.f32 0.0, %v1322
        %1324 = vmatmul.bf16.gmra.mxu0 %v1260
        %v1325 = vpop.f32.mrf.mxu0
        %v1326 = vadd.f32 0.0, %v1325
        %v1327 = vpop.f32.mrf.mxu0
        %v1328 = vadd.f32 0.0, %v1327
        %1329 = vmatmul.bf16.gmra.mxu0 %v1263
        %v1330 = vpop.f32.mrf.mxu0
        %v1331 = vadd.f32 0.0, %v1330
        %v1332 = vpop.f32.mrf.mxu0
        %v1333 = vadd.f32 0.0, %v1332
        %1334 = vdwg.mxu0
        %1335 = vmatpush.bf16.msra.mxu0 0
        %1336 = vmatpush.bf16.msra.mxu0 0
        %1337 = vmatpush.bf16.msra.mxu0 0
        %1338 = vmatpush.bf16.msra.mxu0 0
        %1339 = vmatpush.bf16.msra.mxu0 0
        %1340 = vmatpush.bf16.msra.mxu0 0
        %1341 = vmatpush.bf16.msra.mxu0 %v1272
        %1342 = vmatpush.bf16.msra.mxu0 %v1226
        %1343 = vmatmul.bf16.gmra.mxu0 %v1254
        %v1344 = vpop.f32.mrf.mxu0
        %v1345 = vadd.f32 0.0, %v1344
        %v1346 = vpop.f32.mrf.mxu0
        %v1347 = vadd.f32 0.0, %v1346
        %1348 = vmatmul.bf16.gmra.mxu0 %v1257
        %v1349 = vpop.f32.mrf.mxu0
        %v1350 = vadd.f32 0.0, %v1349
        %v1351 = vpop.f32.mrf.mxu0
        %v1352 = vadd.f32 0.0, %v1351
        %1353 = vmatmul.bf16.gmra.mxu0 %v1260
        %v1354 = vpop.f32.mrf.mxu0
        %v1355 = vadd.f32 0.0, %v1354
        %v1356 = vpop.f32.mrf.mxu0
        %v1357 = vadd.f32 0.0, %v1356
        %1358 = vmatmul.bf16.gmra.mxu0 %v1263
        %v1359 = vpop.f32.mrf.mxu0
        %v1360 = vadd.f32 0.0, %v1359
        %v1361 = vpop.f32.mrf.mxu0
        %v1362 = vadd.f32 0.0, %v1361
        %1363 = vdwg.mxu0
        %1364 = vmatpush.bf16.msra.mxu0 0
        %1365 = vmatpush.bf16.msra.mxu0 0
        %1366 = vmatpush.bf16.msra.mxu0 0
        %1367 = vmatpush.bf16.msra.mxu0 0
        %1368 = vmatpush.bf16.msra.mxu0 0
        %1369 = vmatpush.bf16.msra.mxu0 0
        %1370 = vmatpush.bf16.msra.mxu0 %v1275
        %1371 = vmatpush.bf16.msra.mxu0 %v1227
        %1372 = vmatmul.bf16.gmra.mxu0 %v1254
        %v1373 = vpop.f32.mrf.mxu0
        %v1374 = vadd.f32 0.0, %v1373
        %v1375 = vpop.f32.mrf.mxu0
        %v1376 = vadd.f32 0.0, %v1375
        %1377 = vmatmul.bf16.gmra.mxu0 %v1257
        %v1378 = vpop.f32.mrf.mxu0
        %v1379 = vadd.f32 0.0, %v1378
        %v1380 = vpop.f32.mrf.mxu0
        %v1381 = vadd.f32 0.0, %v1380
        %1382 = vmatmul.bf16.gmra.mxu0 %v1260
        %v1383 = vpop.f32.mrf.mxu0
        %v1384 = vadd.f32 0.0, %v1383
        %v1385 = vpop.f32.mrf.mxu0
        %v1386 = vadd.f32 0.0, %v1385
        %1387 = vmatmul.bf16.gmra.mxu0 %v1263
        %v1388 = vpop.f32.mrf.mxu0
        %v1389 = vadd.f32 0.0, %v1388
        %v1390 = vpop.f32.mrf.mxu0
        %v1391 = vadd.f32 0.0, %v1390
        %1392 = vdwg.mxu0
        %v1393 = vmax.f32 %v1287, 0.0
        %v1394 = vmax.f32 %v1316, 0.0
        %v1395 = vmax.f32 %v1345, 0.0
        %v1396 = vmax.f32 %v1374, 0.0
        %v1397 = vmax.f32 %v1289, 0.0
        %v1398 = vmax.f32 %v1318, 0.0
        %v1399 = vmax.f32 %v1347, 0.0
        %v1400 = vmax.f32 %v1376, 0.0
        %v1401 = vmax.f32 %v1292, 0.0
        %v1402 = vmax.f32 %v1321, 0.0
        %v1403 = vmax.f32 %v1350, 0.0
        %v1404 = vmax.f32 %v1379, 0.0
        %v1405 = vmax.f32 %v1294, 0.0
        %v1406 = vmax.f32 %v1323, 0.0
        %v1407 = vmax.f32 %v1352, 0.0
        %v1408 = vmax.f32 %v1381, 0.0
        %v1409 = vmax.f32 %v1297, 0.0
        %v1410 = vmax.f32 %v1326, 0.0
        %v1411 = vmax.f32 %v1355, 0.0
        %v1412 = vmax.f32 %v1384, 0.0
        %v1413 = vmax.f32 %v1299, 0.0
        %v1414 = vmax.f32 %v1328, 0.0
        %v1415 = vmax.f32 %v1357, 0.0
        %v1416 = vmax.f32 %v1386, 0.0
        %v1417 = vmax.f32 %v1302, 0.0
        %v1418 = vmax.f32 %v1331, 0.0
        %v1419 = vmax.f32 %v1360, 0.0
        %v1420 = vmax.f32 %v1389, 0.0
        %v1421 = vmax.f32 %v1304, 0.0
        %v1422 = vmax.f32 %v1333, 0.0
        %v1423 = vmax.f32 %v1362, 0.0
        %v1424 = vmax.f32 %v1391, 0.0
        %v1425 = vpack.c.bf16 %v1397, %v1393
        %v1426 = vpack.c.bf16 %v1398, %v1394
        %v1427 = vpack.c.bf16 %v1399, %v1395
        %v1428 = vpack.c.bf16 %v1400, %v1396
        %v1429 = vpack.c.bf16 %v1405, %v1401
        %v1430 = vpack.c.bf16 %v1406, %v1402
        %v1431 = vpack.c.bf16 %v1407, %v1403
        %v1432 = vpack.c.bf16 %v1408, %v1404
        %v1433 = vpack.c.bf16 %v1413, %v1409
        %v1434 = vpack.c.bf16 %v1414, %v1410
        %v1435 = vpack.c.bf16 %v1415, %v1411
        %v1436 = vpack.c.bf16 %v1416, %v1412
        %v1437 = vpack.c.bf16 %v1421, %v1417
        %v1438 = vpack.c.bf16 %v1422, %v1418
        %v1439 = vpack.c.bf16 %v1423, %v1419
        %v1440 = vpack.c.bf16 %v1424, %v1420
        %v1441 = vperm.slane %v482, 0
        %v1506 = vunpack.c.l.b16 %v960
        %v1507 = vunpack.c.l.b16 %v961
        %v1508 = vunpack.c.l.b16 %v962
        %v1509 = vunpack.c.l.b16 %v963
        %v1510 = vunpack.c.l.b16 %v964
        %v1511 = vunpack.c.l.b16 %v965
        %v1512 = vunpack.c.l.b16 %v966
        %v1513 = vunpack.c.l.b16 %v967
        %v1514 = vunpack.c.l.b16 %v968
        %v1515 = vunpack.c.l.b16 %v969
        %v1516 = vunpack.c.l.b16 %v970
        %v1517 = vunpack.c.l.b16 %v971
        %v1518 = vunpack.c.l.b16 %v972
        %v1519 = vunpack.c.l.b16 %v973
        %v1520 = vunpack.c.l.b16 %v974
        %v1521 = vunpack.c.l.b16 %v975
        %v1522 = vunpack.c.l.b16 %v976
        %v1523 = vunpack.c.l.b16 %v977
        %v1524 = vunpack.c.l.b16 %v978
        %v1525 = vunpack.c.l.b16 %v979
        %v1526 = vunpack.c.l.b16 %v980
        %v1527 = vunpack.c.l.b16 %v981
        %v1528 = vunpack.c.l.b16 %v982
        %v1529 = vunpack.c.l.b16 %v983
        %v1530 = vunpack.c.l.b16 %v984
        %v1531 = vunpack.c.l.b16 %v985
        %v1532 = vunpack.c.l.b16 %v986
        %v1533 = vunpack.c.l.b16 %v987
        %v1534 = vunpack.c.l.b16 %v988
        %v1535 = vunpack.c.l.b16 %v989
        %v1536 = vunpack.c.l.b16 %v990
        %v1537 = vunpack.c.l.b16 %v991
        %v1538 = vunpack.c.l.b16 %v992
        %v1539 = vunpack.c.l.b16 %v993
        %v1540 = vunpack.c.l.b16 %v994
        %v1541 = vunpack.c.l.b16 %v995
        %v1542 = vunpack.c.l.b16 %v996
        %v1543 = vunpack.c.l.b16 %v997
        %v1544 = vunpack.c.l.b16 %v998
        %v1545 = vunpack.c.l.b16 %v999
        %v1546 = vunpack.c.l.b16 %v1000
        %v1547 = vunpack.c.l.b16 %v1001
        %v1548 = vunpack.c.l.b16 %v1002
        %v1549 = vunpack.c.l.b16 %v1003
        %v1550 = vunpack.c.l.b16 %v1004
        %v1551 = vunpack.c.l.b16 %v1005
        %v1552 = vunpack.c.l.b16 %v1006
        %v1553 = vunpack.c.l.b16 %v1007
        %v1554 = vunpack.c.l.b16 %v1008
        %v1555 = vunpack.c.l.b16 %v1009
        %v1556 = vunpack.c.l.b16 %v1010
        %v1557 = vunpack.c.l.b16 %v1011
        %v1558 = vunpack.c.l.b16 %v1012
        %v1559 = vunpack.c.l.b16 %v1013
        %v1560 = vunpack.c.l.b16 %v1014
        %v1561 = vunpack.c.l.b16 %v1015
        %v1562 = vunpack.c.l.b16 %v1016
        %v1563 = vunpack.c.l.b16 %v1017
        %v1564 = vunpack.c.l.b16 %v1018
        %v1565 = vunpack.c.l.b16 %v1019
        %v1566 = vunpack.c.l.b16 %v1020
        %v1567 = vunpack.c.l.b16 %v1021
        %v1568 = vunpack.c.l.b16 %v1022
        %v1569 = vunpack.c.l.b16 %v1023
        %v1570 = vpack.c.b16 %v1507, %v1506
        %v1571 = vpack.c.b16 %v1509, %v1508
        %v1572 = vpack.c.b16 %v1511, %v1510
        %v1573 = vpack.c.b16 %v1513, %v1512
        %v1574 = vpack.c.b16 %v1515, %v1514
        %v1575 = vpack.c.b16 %v1517, %v1516
        %v1576 = vpack.c.b16 %v1519, %v1518
        %v1577 = vpack.c.b16 %v1521, %v1520
        %v1578 = vpack.c.b16 %v1523, %v1522
        %v1579 = vpack.c.b16 %v1525, %v1524
        %v1580 = vpack.c.b16 %v1527, %v1526
        %v1581 = vpack.c.b16 %v1529, %v1528
        %v1582 = vpack.c.b16 %v1531, %v1530
        %v1583 = vpack.c.b16 %v1533, %v1532
        %v1584 = vpack.c.b16 %v1535, %v1534
        %v1585 = vpack.c.b16 %v1537, %v1536
        %v1586 = vpack.c.b16 %v1539, %v1538
        %v1587 = vpack.c.b16 %v1541, %v1540
        %v1588 = vpack.c.b16 %v1543, %v1542
        %v1589 = vpack.c.b16 %v1545, %v1544
        %v1590 = vpack.c.b16 %v1547, %v1546
        %v1591 = vpack.c.b16 %v1549, %v1548
        %v1592 = vpack.c.b16 %v1551, %v1550
        %v1593 = vpack.c.b16 %v1553, %v1552
        %v1594 = vpack.c.b16 %v1555, %v1554
        %v1595 = vpack.c.b16 %v1557, %v1556
        %v1596 = vpack.c.b16 %v1559, %v1558
        %v1597 = vpack.c.b16 %v1561, %v1560
        %v1598 = vpack.c.b16 %v1563, %v1562
        %v1599 = vpack.c.b16 %v1565, %v1564
        %v1600 = vpack.c.b16 %v1567, %v1566
        %v1601 = vpack.c.b16 %v1569, %v1568
        %1634 = vmatpush.bf16.msra.mxu0 %v1577
        %1635 = vmatpush.bf16.msra.mxu0 %v1576
        %1636 = vmatpush.bf16.msra.mxu0 %v1575
        %1637 = vmatpush.bf16.msra.mxu0 %v1574
        %1638 = vmatpush.bf16.msra.mxu0 %v1573
        %1639 = vmatpush.bf16.msra.mxu0 %v1572
        %1640 = vmatpush.bf16.msra.mxu0 %v1571
        %1641 = vmatpush.bf16.msra.mxu0 %v1570
        %1642 = vmatmul.bf16.gmra.mxu0 %v1425
        %v1643 = vpop.f32.mrf.mxu0
        %v1644 = vadd.f32 %v1441, %v1643
        %v1645 = vpop.f32.mrf.mxu0
        %v1646 = vadd.f32 %v1441, %v1645
        %1647 = vmatmul.bf16.gmra.mxu0 %v1429
        %v1648 = vpop.f32.mrf.mxu0
        %v1649 = vadd.f32 %v1441, %v1648
        %v1650 = vpop.f32.mrf.mxu0
        %v1651 = vadd.f32 %v1441, %v1650
        %1652 = vmatmul.bf16.gmra.mxu0 %v1433
        %v1653 = vpop.f32.mrf.mxu0
        %v1654 = vadd.f32 %v1441, %v1653
        %v1655 = vpop.f32.mrf.mxu0
        %v1656 = vadd.f32 %v1441, %v1655
        %1657 = vmatmul.bf16.gmra.mxu0 %v1437
        %v1658 = vpop.f32.mrf.mxu0
        %v1659 = vadd.f32 %v1441, %v1658
        %v1660 = vpop.f32.mrf.mxu0
        %v1661 = vadd.f32 %v1441, %v1660
        %1662 = vdwg.mxu0
        %1663 = vmatpush.bf16.msra.mxu0 %v1585
        %1664 = vmatpush.bf16.msra.mxu0 %v1584
        %1665 = vmatpush.bf16.msra.mxu0 %v1583
        %1666 = vmatpush.bf16.msra.mxu0 %v1582
        %1667 = vmatpush.bf16.msra.mxu0 %v1581
        %1668 = vmatpush.bf16.msra.mxu0 %v1580
        %1669 = vmatpush.bf16.msra.mxu0 %v1579
        %1670 = vmatpush.bf16.msra.mxu0 %v1578
        %1671 = vmatmul.bf16.gmra.mxu0 %v1426
        %v1672 = vpop.f32.mrf.mxu0
        %v1673 = vadd.f32 %v1644, %v1672
        %v1674 = vpop.f32.mrf.mxu0
        %v1675 = vadd.f32 %v1646, %v1674
        %1676 = vmatmul.bf16.gmra.mxu0 %v1430
        %v1677 = vpop.f32.mrf.mxu0
        %v1678 = vadd.f32 %v1649, %v1677
        %v1679 = vpop.f32.mrf.mxu0
        %v1680 = vadd.f32 %v1651, %v1679
        %1681 = vmatmul.bf16.gmra.mxu0 %v1434
        %v1682 = vpop.f32.mrf.mxu0
        %v1683 = vadd.f32 %v1654, %v1682
        %v1684 = vpop.f32.mrf.mxu0
        %v1685 = vadd.f32 %v1656, %v1684
        %1686 = vmatmul.bf16.gmra.mxu0 %v1438
        %v1687 = vpop.f32.mrf.mxu0
        %v1688 = vadd.f32 %v1659, %v1687
        %v1689 = vpop.f32.mrf.mxu0
        %v1690 = vadd.f32 %v1661, %v1689
        %1691 = vdwg.mxu0
        %1692 = vmatpush.bf16.msra.mxu0 %v1593
        %1693 = vmatpush.bf16.msra.mxu0 %v1592
        %1694 = vmatpush.bf16.msra.mxu0 %v1591
        %1695 = vmatpush.bf16.msra.mxu0 %v1590
        %1696 = vmatpush.bf16.msra.mxu0 %v1589
        %1697 = vmatpush.bf16.msra.mxu0 %v1588
        %1698 = vmatpush.bf16.msra.mxu0 %v1587
        %1699 = vmatpush.bf16.msra.mxu0 %v1586
        %1700 = vmatmul.bf16.gmra.mxu0 %v1427
        %v1701 = vpop.f32.mrf.mxu0
        %v1702 = vadd.f32 %v1673, %v1701
        %v1703 = vpop.f32.mrf.mxu0
        %v1704 = vadd.f32 %v1675, %v1703
        %1705 = vmatmul.bf16.gmra.mxu0 %v1431
        %v1706 = vpop.f32.mrf.mxu0
        %v1707 = vadd.f32 %v1678, %v1706
        %v1708 = vpop.f32.mrf.mxu0
        %v1709 = vadd.f32 %v1680, %v1708
        %1710 = vmatmul.bf16.gmra.mxu0 %v1435
        %v1711 = vpop.f32.mrf.mxu0
        %v1712 = vadd.f32 %v1683, %v1711
        %v1713 = vpop.f32.mrf.mxu0
        %v1714 = vadd.f32 %v1685, %v1713
        %1715 = vmatmul.bf16.gmra.mxu0 %v1439
        %v1716 = vpop.f32.mrf.mxu0
        %v1717 = vadd.f32 %v1688, %v1716
        %v1718 = vpop.f32.mrf.mxu0
        %v1719 = vadd.f32 %v1690, %v1718
        %1720 = vdwg.mxu0
        %1721 = vmatpush.bf16.msra.mxu0 %v1601
        %1722 = vmatpush.bf16.msra.mxu0 %v1600
        %1723 = vmatpush.bf16.msra.mxu0 %v1599
        %1724 = vmatpush.bf16.msra.mxu0 %v1598
        %1725 = vmatpush.bf16.msra.mxu0 %v1597
        %1726 = vmatpush.bf16.msra.mxu0 %v1596
        %1727 = vmatpush.bf16.msra.mxu0 %v1595
        %1728 = vmatpush.bf16.msra.mxu0 %v1594
        %1729 = vmatmul.bf16.gmra.mxu0 %v1428
        %v1730 = vpop.f32.mrf.mxu0
        %v1731 = vadd.f32 %v1702, %v1730
        %v1732 = vpop.f32.mrf.mxu0
        %v1733 = vadd.f32 %v1704, %v1732
        %1734 = vmatmul.bf16.gmra.mxu0 %v1432
        %v1735 = vpop.f32.mrf.mxu0
        %v1736 = vadd.f32 %v1707, %v1735
        %v1737 = vpop.f32.mrf.mxu0
        %v1738 = vadd.f32 %v1709, %v1737
        %1739 = vmatmul.bf16.gmra.mxu0 %v1436
        %v1740 = vpop.f32.mrf.mxu0
        %v1741 = vadd.f32 %v1712, %v1740
        %v1742 = vpop.f32.mrf.mxu0
        %v1743 = vadd.f32 %v1714, %v1742
        %1744 = vmatmul.bf16.gmra.mxu0 %v1440
        %v1745 = vpop.f32.mrf.mxu0
        %v1746 = vadd.f32 %v1717, %v1745
        %v1747 = vpop.f32.mrf.mxu0
        %v1748 = vadd.f32 %v1719, %v1747
        %1749 = vdwg.mxu0
        %v1750 = vmax.f32 %v1731, 0.0
        %v1751 = vmax.f32 %v1733, 0.0
        %v1752 = vmax.f32 %v1736, 0.0
        %v1753 = vmax.f32 %v1738, 0.0
        %v1754 = vmax.f32 %v1741, 0.0
        %v1755 = vmax.f32 %v1743, 0.0
        %v1756 = vmax.f32 %v1746, 0.0
        %v1757 = vmax.f32 %v1748, 0.0
        %v1758 = vpack.c.bf16 %v1751, %v1750
        %v1759 = vpack.c.bf16 %v1753, %v1752
        %v1760 = vpack.c.bf16 %v1755, %v1754
        %v1761 = vpack.c.bf16 %v1757, %v1756
        %v1770 = vunpack.c.l.b16 %v546
        %v1771 = vunpack.c.l.b16 %v547
        %v1772 = vunpack.c.l.b16 %v548
        %v1773 = vunpack.c.l.b16 %v549
        %v1774 = vunpack.c.l.b16 %v550
        %v1775 = vunpack.c.l.b16 %v551
        %v1776 = vunpack.c.l.b16 %v552
        %v1777 = vunpack.c.l.b16 %v553
        %v1778 = vpack.c.b16 %v1771, %v1770
        %v1779 = vpack.c.b16 %v1773, %v1772
        %v1780 = vpack.c.b16 %v1775, %v1774
        %v1781 = vpack.c.b16 %v1777, %v1776
        %v1787 = vsel %vm776, %v1758, 0
        %v1790 = vsel %vm776, %v1759, 0
        %v1793 = vsel %vm776, %v1760, 0
        %v1796 = vsel %vm776, %v1761, 0
        %1798 = vmatpush.bf16.msra.mxu0 0
        %1799 = vmatpush.bf16.msra.mxu0 0
        %1800 = vmatpush.bf16.msra.mxu0 0
        %1801 = vmatpush.bf16.msra.mxu0 0
        %1802 = vmatpush.bf16.msra.mxu0 %v1781
        %1803 = vmatpush.bf16.msra.mxu0 %v1780
        %1804 = vmatpush.bf16.msra.mxu0 %v1779
        %1805 = vmatpush.bf16.msra.mxu0 %v1778
        %1806 = vmatmul.bf16.gmra.mxu0 %v1787
        %v1807 = vpop.f32.mrf.mxu0
        %v1808 = vadd.f32 0.0, %v1807
        %v1809 = vpop.f32.mrf.mxu0
        %v1810 = vadd.f32 0.0, %v1809
        %1811 = vmatmul.bf16.gmra.mxu0 %v1790
        %v1812 = vpop.f32.mrf.mxu0
        %v1813 = vadd.f32 0.0, %v1812
        %v1814 = vpop.f32.mrf.mxu0
        %v1815 = vadd.f32 0.0, %v1814
        %1816 = vmatmul.bf16.gmra.mxu0 %v1793
        %v1817 = vpop.f32.mrf.mxu0
        %v1818 = vadd.f32 0.0, %v1817
        %v1819 = vpop.f32.mrf.mxu0
        %v1820 = vadd.f32 0.0, %v1819
        %1821 = vmatmul.bf16.gmra.mxu0 %v1796
        %v1822 = vpop.f32.mrf.mxu0
        %v1823 = vadd.f32 0.0, %v1822
        %v1824 = vpop.f32.mrf.mxu0
        %v1825 = vadd.f32 0.0, %v1824
        %1826 = vdwg.mxu0
        %v1827 = vunpack.c.l.bf16 %v511
        %v1828 = vunpack.c.l.bf16 %v512
        %v1829 = vunpack.c.l.bf16 %v513
        %v1830 = vunpack.c.l.bf16 %v514
        %v1831 = vunpack.c.l.bf16 %v515
        %v1832 = vunpack.c.l.bf16 %v516
        %v1833 = vunpack.c.l.bf16 %v517
        %v1834 = vunpack.c.l.bf16 %v518
        %v1835 = vmul.f32 %v1808, %v1827
        %v1836 = vmul.f32 %v1810, %v1828
        %v1837 = vmul.f32 %v1813, %v1829
        %v1838 = vmul.f32 %v1815, %v1830
        %v1839 = vmul.f32 %v1818, %v1831
        %v1840 = vmul.f32 %v1820, %v1832
        %v1841 = vmul.f32 %v1823, %v1833
        %v1842 = vmul.f32 %v1825, %v1834
        %v1844 = vrot.slane %v482, 1
        %s1845 = vtos %v1844
        %v1846 = vstv %s1845
        %v1848 = vsel %vm776, %v520, 0
        %1850 = vmatpush.msra.mxu0 0.0
        %1851 = vmatpush.msra.mxu0 0.0
        %1852 = vmatpush.msra.mxu0 0.0
        %1853 = vmatpush.msra.mxu0 0.0
        %1854 = vmatpush.msra.mxu0 0.0
        %1855 = vmatpush.msra.mxu0 0.0
        %1856 = vmatpush.msra.mxu0 0.0
        %1857 = vmatpush.msra.mxu0 0.0
        %1858 = vmatpush.msra.mxu0 %v1842
        %1859 = vmatpush.msra.mxu0 %v1841
        %1860 = vmatpush.msra.mxu0 %v1840
        %1861 = vmatpush.msra.mxu0 %v1839
        %1862 = vmatpush.msra.mxu0 %v1838
        %1863 = vmatpush.msra.mxu0 %v1837
        %1864 = vmatpush.msra.mxu0 %v1836
        %1865 = vmatpush.msra.mxu0 %v1835
        %1866 = vmatmul.f32.gmra.mxu0 %v1848
        %v1867 = vpop.f32.mrf.mxu0
        %v1868 = vadd.f32 %v1846, %v1867
        %1869 = vdwg.mxu0
        %vm1870 = vcmask 76800
        %1871 = vst.msk [vmem:[%s471] sm:$0xf] %vm1870, %v1868
        %v1872 = vand.u32 2147483647, %v1868
        %v1873 = vsel %vm1870, %v1872, 0.0
        %1874 = vadd.xlane.f32.xlu0 %v1873
        %v1875 = vpop.xlane.xlu0 %1874
        %v1876 = vmax.f32 %v1875, 1e-12
        %v1877 = vrcp.pop %v1876
        %v1878 = vmul.f32 %v1876, %v1877
        %v1879 = vsub.f32 1.0, %v1878
        %v1880 = vmul.f32 %v1877, %v1879
        %v1881 = vadd.f32 %v1877, %v1880
        %vm1882 = vweird.f32 %v1876
        %vm1883 = vweird.f32 %v1877
        %vm1884 = vmor %vm1882, %vm1883
        %v1885 = vsel %vm1884, %v1877, %v1881
        %v1886 = vand.u32 2147483647, %v1876
        %vm1887 = vcmp.eq.f32.partialorder %v1886, 8.507059e+37
        %v1888 = vand.u32 %v1876, 2147483648
        %v1889 = vor.u32 1.1754944e-38, %v1888
        %v1890 = vsel %vm1887, %v1889, %v1885
        %v1891 = vmul.f32 %v1868, %v1890
        %v1892 = vpack.c.bf16 %v1891, %v1891
        %vm1893 = vcmask 80896
        %v1895 = vsel %vm1893, %v1892, 0
        %vm1897 = vcmask 1044480
        %v1898 = vsel %vm1897, %v742, 0
        %1900 = vmatpush.bf16.msra.mxu0 0
        %1901 = vmatpush.bf16.msra.mxu0 0
        %1902 = vmatpush.bf16.msra.mxu0 0
        %1903 = vmatpush.bf16.msra.mxu0 0
        %1904 = vmatpush.bf16.msra.mxu0 0
        %1905 = vmatpush.bf16.msra.mxu0 0
        %1906 = vmatpush.bf16.msra.mxu0 0
        %1907 = vmatpush.bf16.msra.mxu0 %v1898
        %1908 = vmatmul.bf16.gmra.mxu0 %v1895
        %v1909 = vpop.f32.mrf.mxu0
        %v1910 = vadd.f32 0.0, %v1909
        %v1911 = vpop.f32.mrf.mxu0
        %1912 = vdwg.mxu0
        %v1913 = vld [vmem:[%s476] sm:$0xff]
        %v1914 = vld [vmem:[%s476 + $0x8] sm:$0xff]
        %v1915 = vpack.c.bf16 %v1913, %v1913
        %v1916 = vpack.c.bf16 %v1914, %v1914
        %1917 = vmatpush.bf16.msra.mxu0 %v664
        %1918 = vmatpush.bf16.msra.mxu0 %v663
        %1919 = vmatpush.bf16.msra.mxu0 %v662
        %1920 = vmatpush.bf16.msra.mxu0 %v661
        %1921 = vmatpush.bf16.msra.mxu0 %v660
        %1922 = vmatpush.bf16.msra.mxu0 %v659
        %1923 = vmatpush.bf16.msra.mxu0 %v658
        %1924 = vmatpush.bf16.msra.mxu0 %v657
        %1925 = vmatmul.bf16.gmra.mxu0 %v1915
        %v1926 = vpop.f32.mrf.mxu0
        %v1927 = vadd.f32 %v592, %v1926
        %v1928 = vpop.f32.mrf.mxu0
        %1929 = vdwg.mxu0
        %1930 = vmatpush.bf16.msra.mxu0 %v672
        %1931 = vmatpush.bf16.msra.mxu0 %v671
        %1932 = vmatpush.bf16.msra.mxu0 %v670
        %1933 = vmatpush.bf16.msra.mxu0 %v669
        %1934 = vmatpush.bf16.msra.mxu0 %v668
        %1935 = vmatpush.bf16.msra.mxu0 %v667
        %1936 = vmatpush.bf16.msra.mxu0 %v666
        %1937 = vmatpush.bf16.msra.mxu0 %v665
        %1938 = vmatmul.bf16.gmra.mxu0 %v1916
        %v1939 = vpop.f32.mrf.mxu0
        %v1940 = vadd.f32 %v1927, %v1939
        %v1941 = vpop.f32.mrf.mxu0
        %1942 = vdwg.mxu0
        %v1943 = vmax.f32 %v1940, 0.0
        %vm1946 = vcmask 1043456
        %v1947 = vrot.slane %v586, 4
        %v1948 = vrot.slane %v587, 4
        %v1949 = vsel %vm1946, %v1947, %v1948
        %v1952 = vsel %vm1946, %v1910, %v1947
        %vm1953 = vcmask 1045504
        %v1954 = vsel %vm1953, %v1949, 0.0
        %v1955 = vld [vmem:[%s6] sm:$0xff]
        %v1956 = vld [vmem:[%s6 + $0x8] sm:$0xff]
        %v1957 = vld [vmem:[%s6 + $0x10] sm:$0xff]
        %v1958 = vld [vmem:[%s6 + $0x18] sm:$0xff]
        %v1959 = vld [vmem:[%s6 + $0x20] sm:$0xff]
        %v1960 = vld [vmem:[%s6 + $0x28] sm:$0xff]
        %v1961 = vld [vmem:[%s6 + $0x30] sm:$0xf]
        %v1962 = vld [vmem:[%s6 + $0x34] sm:$0xff]
        %v1963 = vld [vmem:[%s6 + $0x3c] sm:$0xff]
        %v1964 = vld [vmem:[%s6 + $0x44] sm:$0xff]
        %v1965 = vld [vmem:[%s6 + $0x4c] sm:$0xff]
        %v1966 = vld [vmem:[%s6 + $0x54] sm:$0xff]
        %v1967 = vld [vmem:[%s6 + $0x5c] sm:$0xff]
        %v1968 = vld [vmem:[%s6 + $0x64] sm:$0xf]
        %v1969 = vld [vmem:[%s6 + $0x68] sm:$0xff]
        %v1970 = vld [vmem:[%s6 + $0x70] sm:$0xff]
        %v1971 = vld [vmem:[%s6 + $0x78] sm:$0xff]
        %v1972 = vld [vmem:[%s6 + $0x80] sm:$0xff]
        %v1973 = vld [vmem:[%s6 + $0x88] sm:$0xff]
        %v1974 = vld [vmem:[%s6 + $0x90] sm:$0xff]
        %v1975 = vld [vmem:[%s6 + $0x98] sm:$0xf]
        %v1976 = vld [vmem:[%s6 + $0x9c] sm:$0xff]
        %v1977 = vld [vmem:[%s6 + $0xa4] sm:$0xff]
        %v1978 = vld [vmem:[%s6 + $0xac] sm:$0xff]
        %v1979 = vld [vmem:[%s6 + $0xb4] sm:$0xff]
        %v1980 = vld [vmem:[%s6 + $0xbc] sm:$0xff]
        %v1981 = vld [vmem:[%s6 + $0xc4] sm:$0xff]
        %v1982 = vld [vmem:[%s6 + $0xcc] sm:$0xf]
        %v1983 = vld [vmem:[%s6 + $0xd0] sm:$0xff]
        %v1984 = vld [vmem:[%s6 + $0xd8] sm:$0xff]
        %v1985 = vld [vmem:[%s6 + $0xe0] sm:$0xff]
        %v1986 = vld [vmem:[%s6 + $0xe8] sm:$0xff]
        %v1987 = vld [vmem:[%s6 + $0xf0] sm:$0xff]
        %v1988 = vld [vmem:[%s6 + $0xf8] sm:$0xff]
        %v1989 = vld [vmem:[%s6 + $0x100] sm:$0xf]
        %v1990 = vld [vmem:[%s6 + $0x104] sm:$0xff]
        %v1991 = vld [vmem:[%s6 + $0x10c] sm:$0xff]
        %v1992 = vld [vmem:[%s6 + $0x114] sm:$0xff]
        %v1993 = vld [vmem:[%s6 + $0x11c] sm:$0xff]
        %v1994 = vld [vmem:[%s6 + $0x124] sm:$0xff]
        %v1995 = vld [vmem:[%s6 + $0x12c] sm:$0xff]
        %v1996 = vld [vmem:[%s6 + $0x134] sm:$0xf]
        %v1997 = vld [vmem:[%s6 + $0x138] sm:$0xff]
        %v1998 = vld [vmem:[%s6 + $0x140] sm:$0xff]
        %v1999 = vld [vmem:[%s6 + $0x148] sm:$0xff]
        %v2000 = vld [vmem:[%s6 + $0x150] sm:$0xff]
        %v2001 = vld [vmem:[%s6 + $0x158] sm:$0xff]
        %v2002 = vld [vmem:[%s6 + $0x160] sm:$0xff]
        %v2003 = vld [vmem:[%s6 + $0x168] sm:$0xf]
        %v2004 = vld [vmem:[%s6 + $0x16c] sm:$0xff]
        %v2005 = vld [vmem:[%s6 + $0x174] sm:$0xff]
        %v2006 = vld [vmem:[%s6 + $0x17c] sm:$0xff]
        %v2007 = vld [vmem:[%s6 + $0x184] sm:$0xff]
        %v2008 = vld [vmem:[%s6 + $0x18c] sm:$0xff]
        %v2009 = vld [vmem:[%s6 + $0x194] sm:$0xff]
        %v2010 = vld [vmem:[%s6 + $0x19c] sm:$0xf]
        %v2011 = vld [vmem:[%s6 + $0x1a0] sm:$0xff]
        %v2012 = vld [vmem:[%s6 + $0x1a8] sm:$0xff]
        %v2013 = vld [vmem:[%s6 + $0x1b0] sm:$0xff]
        %v2014 = vld [vmem:[%s6 + $0x1b8] sm:$0xff]
        %v2015 = vld [vmem:[%s6 + $0x1c0] sm:$0xff]
        %v2016 = vld [vmem:[%s6 + $0x1c8] sm:$0xff]
        %v2017 = vld [vmem:[%s6 + $0x1d0] sm:$0xf]
        %v2018 = vld [vmem:[%s6 + $0x1d4] sm:$0xff]
        %v2019 = vld [vmem:[%s6 + $0x1dc] sm:$0xff]
        %v2020 = vld [vmem:[%s6 + $0x1e4] sm:$0xff]
        %v2021 = vld [vmem:[%s6 + $0x1ec] sm:$0xff]
        %v2022 = vld [vmem:[%s6 + $0x1f4] sm:$0xff]
        %v2023 = vld [vmem:[%s6 + $0x1fc] sm:$0xff]
        %v2024 = vld [vmem:[%s6 + $0x204] sm:$0xf]
        %v2025 = vld [vmem:[%s6 + $0x208] sm:$0xff]
        %v2026 = vld [vmem:[%s6 + $0x210] sm:$0xff]
        %v2027 = vld [vmem:[%s6 + $0x218] sm:$0xff]
        %v2028 = vld [vmem:[%s6 + $0x220] sm:$0xff]
        %v2029 = vld [vmem:[%s6 + $0x228] sm:$0xff]
        %v2030 = vld [vmem:[%s6 + $0x230] sm:$0xff]
        %v2031 = vld [vmem:[%s6 + $0x238] sm:$0xf]
        %v2032 = vld [vmem:[%s6 + $0x23c] sm:$0xff]
        %v2033 = vld [vmem:[%s6 + $0x244] sm:$0xff]
        %v2034 = vld [vmem:[%s6 + $0x24c] sm:$0xff]
        %v2035 = vld [vmem:[%s6 + $0x254] sm:$0xff]
        %v2036 = vld [vmem:[%s6 + $0x25c] sm:$0xff]
        %v2037 = vld [vmem:[%s6 + $0x264] sm:$0xff]
        %v2038 = vld [vmem:[%s6 + $0x26c] sm:$0xf]
        %v2039 = vld [vmem:[%s6 + $0x270] sm:$0xff]
        %v2040 = vld [vmem:[%s6 + $0x278] sm:$0xff]
        %v2041 = vld [vmem:[%s6 + $0x280] sm:$0xff]
        %v2042 = vld [vmem:[%s6 + $0x288] sm:$0xff]
        %v2043 = vld [vmem:[%s6 + $0x290] sm:$0xff]
        %v2044 = vld [vmem:[%s6 + $0x298] sm:$0xff]
        %v2045 = vld [vmem:[%s6 + $0x2a0] sm:$0xf]
        %v2046 = vld [vmem:[%s6 + $0x2a4] sm:$0xff]
        %v2047 = vld [vmem:[%s6 + $0x2ac] sm:$0xff]
        %v2048 = vld [vmem:[%s6 + $0x2b4] sm:$0xff]
        %v2049 = vld [vmem:[%s6 + $0x2bc] sm:$0xff]
        %v2050 = vld [vmem:[%s6 + $0x2c4] sm:$0xff]
        %v2051 = vld [vmem:[%s6 + $0x2cc] sm:$0xff]
        %v2052 = vld [vmem:[%s6 + $0x2d4] sm:$0xf]
        %v2053 = vld [vmem:[%s6 + $0x2d8] sm:$0xff]
        %v2054 = vld [vmem:[%s6 + $0x2e0] sm:$0xff]
        %v2055 = vld [vmem:[%s6 + $0x2e8] sm:$0xff]
        %v2056 = vld [vmem:[%s6 + $0x2f0] sm:$0xff]
        %v2057 = vld [vmem:[%s6 + $0x2f8] sm:$0xff]
        %v2058 = vld [vmem:[%s6 + $0x300] sm:$0xff]
        %v2059 = vld [vmem:[%s6 + $0x308] sm:$0xf]
        %v2060 = vld [vmem:[%s6 + $0x30c] sm:$0xff]
        %v2061 = vld [vmem:[%s6 + $0x314] sm:$0xff]
        %v2062 = vld [vmem:[%s6 + $0x31c] sm:$0xff]
        %v2063 = vld [vmem:[%s6 + $0x324] sm:$0xff]
        %v2064 = vld [vmem:[%s6 + $0x32c] sm:$0xff]
        %v2065 = vld [vmem:[%s6 + $0x334] sm:$0xff]
        %v2066 = vld [vmem:[%s6 + $0x33c] sm:$0xf]
        %v2067 = vld [vmem:[%s7] sm:$0xff]
        %v2068 = vld [vmem:[%s7 + $0x8] sm:$0xff]
        %v2069 = vld [vmem:[%s7 + $0x10] sm:$0xff]
        %v2070 = vld [vmem:[%s7 + $0x18] sm:$0xff]
        %v2071 = vld [vmem:[%s7 + $0x20] sm:$0xff]
        %v2072 = vld [vmem:[%s7 + $0x28] sm:$0xff]
        %v2073 = vld [vmem:[%s7 + $0x30] sm:$0xff]
        %v2074 = vld [vmem:[%s7 + $0x38] sm:$0xff]
        %v2075 = vld [vmem:[%s7 + $0x40] sm:$0xff]
        %v2076 = vld [vmem:[%s7 + $0x48] sm:$0xff]
        %v2077 = vld [vmem:[%s7 + $0x50] sm:$0xff]
        %v2078 = vld [vmem:[%s7 + $0x58] sm:$0xff]
        %v2079 = vld [vmem:[%s7 + $0x60] sm:$0xff]
        %v2080 = vld [vmem:[%s7 + $0x68] sm:$0xff]
        %v2081 = vld [vmem:[%s7 + $0x70] sm:$0xff]
        %v2082 = vld [vmem:[%s7 + $0x78] sm:$0xff]
        %v2083 = vld [vmem:[%s7 + $0x80] sm:$0xff]
        %v2084 = vld [vmem:[%s7 + $0x88] sm:$0xff]
        %v2085 = vld [vmem:[%s7 + $0x90] sm:$0xff]
        %v2086 = vld [vmem:[%s7 + $0x98] sm:$0xff]
        %v2087 = vld [vmem:[%s7 + $0xa0] sm:$0xff]
        %v2088 = vld [vmem:[%s7 + $0xa8] sm:$0xff]
        %v2089 = vld [vmem:[%s7 + $0xb0] sm:$0xff]
        %v2090 = vld [vmem:[%s7 + $0xb8] sm:$0xff]
        %v2091 = vld [vmem:[%s7 + $0xc0] sm:$0xff]
        %v2092 = vld [vmem:[%s7 + $0xc8] sm:$0xff]
        %v2093 = vld [vmem:[%s7 + $0xd0] sm:$0xff]
        %v2094 = vld [vmem:[%s7 + $0xd8] sm:$0xff]
        %v2095 = vld [vmem:[%s7 + $0xe0] sm:$0xff]
        %v2096 = vld [vmem:[%s7 + $0xe8] sm:$0xff]
        %v2097 = vld [vmem:[%s7 + $0xf0] sm:$0xff]
        %v2098 = vld [vmem:[%s7 + $0xf8] sm:$0xff]
        %v2099 = vld [vmem:[%s7 + $0x100] sm:$0xff]
        %v2100 = vld [vmem:[%s7 + $0x108] sm:$0xff]
        %v2101 = vld [vmem:[%s7 + $0x110] sm:$0xff]
        %v2102 = vld [vmem:[%s7 + $0x118] sm:$0xff]
        %v2103 = vld [vmem:[%s7 + $0x120] sm:$0xff]
        %v2104 = vld [vmem:[%s7 + $0x128] sm:$0xff]
        %v2105 = vld [vmem:[%s7 + $0x130] sm:$0xff]
        %v2106 = vld [vmem:[%s7 + $0x138] sm:$0xff]
        %v2107 = vld [vmem:[%s7 + $0x140] sm:$0xff]
        %v2108 = vld [vmem:[%s7 + $0x148] sm:$0xff]
        %v2109 = vld [vmem:[%s7 + $0x150] sm:$0xff]
        %v2110 = vld [vmem:[%s7 + $0x158] sm:$0xff]
        %v2111 = vld [vmem:[%s7 + $0x160] sm:$0xff]
        %v2112 = vld [vmem:[%s7 + $0x168] sm:$0xff]
        %v2113 = vld [vmem:[%s7 + $0x170] sm:$0xff]
        %v2114 = vld [vmem:[%s7 + $0x178] sm:$0xff]
        %v2115 = vld [vmem:[%s7 + $0x180] sm:$0xff]
        %v2116 = vld [vmem:[%s7 + $0x188] sm:$0xff]
        %v2117 = vld [vmem:[%s7 + $0x190] sm:$0xff]
        %v2118 = vld [vmem:[%s7 + $0x198] sm:$0xff]
        %v2119 = vld [vmem:[%s7 + $0x1a0] sm:$0xff]
        %v2120 = vld [vmem:[%s7 + $0x1a8] sm:$0xff]
        %v2121 = vld [vmem:[%s7 + $0x1b0] sm:$0xff]
        %v2122 = vld [vmem:[%s7 + $0x1b8] sm:$0xff]
        %v2123 = vld [vmem:[%s7 + $0x1c0] sm:$0xff]
        %v2124 = vld [vmem:[%s7 + $0x1c8] sm:$0xff]
        %v2125 = vld [vmem:[%s7 + $0x1d0] sm:$0xff]
        %v2126 = vld [vmem:[%s7 + $0x1d8] sm:$0xff]
        %v2127 = vld [vmem:[%s7 + $0x1e0] sm:$0xff]
        %v2128 = vld [vmem:[%s7 + $0x1e8] sm:$0xff]
        %v2129 = vld [vmem:[%s7 + $0x1f0] sm:$0xff]
        %v2130 = vld [vmem:[%s7 + $0x1f8] sm:$0xff]
        %v2131 = vld [vmem:[%s7 + $0x200] sm:$0xff]
        %v2132 = vld [vmem:[%s7 + $0x208] sm:$0xff]
        %v2133 = vld [vmem:[%s7 + $0x210] sm:$0xff]
        %v2134 = vld [vmem:[%s7 + $0x218] sm:$0xff]
        %v2135 = vld [vmem:[%s7 + $0x220] sm:$0xff]
        %v2136 = vld [vmem:[%s7 + $0x228] sm:$0xff]
        %v2137 = vld [vmem:[%s7 + $0x230] sm:$0xff]
        %v2138 = vld [vmem:[%s7 + $0x238] sm:$0xff]
        %v2139 = vld [vmem:[%s7 + $0x240] sm:$0xff]
        %v2140 = vld [vmem:[%s7 + $0x248] sm:$0xff]
        %v2141 = vld [vmem:[%s7 + $0x250] sm:$0xff]
        %v2142 = vld [vmem:[%s7 + $0x258] sm:$0xff]
        %v2143 = vld [vmem:[%s7 + $0x260] sm:$0xff]
        %v2144 = vld [vmem:[%s7 + $0x268] sm:$0xff]
        %v2145 = vld [vmem:[%s7 + $0x270] sm:$0xff]
        %v2146 = vld [vmem:[%s7 + $0x278] sm:$0xff]
        %v2147 = vld [vmem:[%s7 + $0x280] sm:$0xff]
        %v2148 = vld [vmem:[%s7 + $0x288] sm:$0xff]
        %v2149 = vld [vmem:[%s7 + $0x290] sm:$0xff]
        %v2150 = vld [vmem:[%s7 + $0x298] sm:$0xff]
        %v2151 = vld [vmem:[%s7 + $0x2a0] sm:$0xff]
        %v2152 = vld [vmem:[%s7 + $0x2a8] sm:$0xff]
        %v2153 = vld [vmem:[%s7 + $0x2b0] sm:$0xff]
        %v2154 = vld [vmem:[%s7 + $0x2b8] sm:$0xff]
        %v2155 = vld [vmem:[%s7 + $0x2c0] sm:$0xff]
        %v2156 = vld [vmem:[%s7 + $0x2c8] sm:$0xff]
        %v2157 = vld [vmem:[%s7 + $0x2d0] sm:$0xff]
        %v2158 = vld [vmem:[%s7 + $0x2d8] sm:$0xff]
        %v2159 = vld [vmem:[%s7 + $0x2e0] sm:$0xff]
        %v2160 = vld [vmem:[%s7 + $0x2e8] sm:$0xff]
        %v2161 = vld [vmem:[%s7 + $0x2f0] sm:$0xff]
        %v2162 = vld [vmem:[%s7 + $0x2f8] sm:$0xff]
        %v2163 = vld [vmem:[%s7 + $0x300] sm:$0xff]
        %v2164 = vld [vmem:[%s7 + $0x308] sm:$0xff]
        %v2165 = vld [vmem:[%s7 + $0x310] sm:$0xff]
        %v2166 = vld [vmem:[%s7 + $0x318] sm:$0xff]
        %v2167 = vld [vmem:[%s7 + $0x320] sm:$0xff]
        %v2168 = vld [vmem:[%s7 + $0x328] sm:$0xff]
        %v2169 = vld [vmem:[%s7 + $0x330] sm:$0xff]
        %v2170 = vld [vmem:[%s7 + $0x338] sm:$0xff]
        %v2171 = vld [vmem:[%s7 + $0x340] sm:$0xff]
        %v2172 = vld [vmem:[%s7 + $0x348] sm:$0xff]
        %v2173 = vld [vmem:[%s7 + $0x350] sm:$0xff]
        %v2174 = vld [vmem:[%s7 + $0x358] sm:$0xff]
        %v2175 = vld [vmem:[%s7 + $0x360] sm:$0xff]
        %v2176 = vld [vmem:[%s7 + $0x368] sm:$0xff]
        %v2177 = vld [vmem:[%s7 + $0x370] sm:$0xff]
        %v2178 = vld [vmem:[%s7 + $0x378] sm:$0xff]
        %v2179 = vld [vmem:[%s7 + $0x380] sm:$0xff]
        %v2180 = vld [vmem:[%s7 + $0x388] sm:$0xff]
        %v2181 = vld [vmem:[%s7 + $0x390] sm:$0xff]
        %v2182 = vld [vmem:[%s7 + $0x398] sm:$0xff]
        %v2183 = vld [vmem:[%s7 + $0x3a0] sm:$0xff]
        %v2184 = vld [vmem:[%s7 + $0x3a8] sm:$0xff]
        %v2185 = vld [vmem:[%s7 + $0x3b0] sm:$0xff]
        %v2186 = vld [vmem:[%s7 + $0x3b8] sm:$0xff]
        %v2187 = vld [vmem:[%s7 + $0x3c0] sm:$0xff]
        %v2188 = vld [vmem:[%s7 + $0x3c8] sm:$0xff]
        %v2189 = vld [vmem:[%s7 + $0x3d0] sm:$0xff]
        %v2190 = vld [vmem:[%s7 + $0x3d8] sm:$0xff]
        %v2191 = vld [vmem:[%s7 + $0x3e0] sm:$0xff]
        %v2192 = vld [vmem:[%s7 + $0x3e8] sm:$0xff]
        %v2193 = vld [vmem:[%s7 + $0x3f0] sm:$0xff]
        %v2194 = vld [vmem:[%s7 + $0x3f8] sm:$0xff]
        %v2195 = vld [vmem:[%s7 + $0x400] sm:$0xff]
        %v2196 = vld [vmem:[%s7 + $0x408] sm:$0xff]
        %v2197 = vld [vmem:[%s7 + $0x410] sm:$0xff]
        %v2198 = vld [vmem:[%s7 + $0x418] sm:$0xff]
        %v2199 = vld [vmem:[%s7 + $0x420] sm:$0xff]
        %v2200 = vld [vmem:[%s7 + $0x428] sm:$0xff]
        %v2201 = vld [vmem:[%s7 + $0x430] sm:$0xff]
        %v2202 = vld [vmem:[%s7 + $0x438] sm:$0xff]
        %v2203 = vld [vmem:[%s7 + $0x440] sm:$0xff]
        %v2204 = vld [vmem:[%s7 + $0x448] sm:$0xff]
        %v2205 = vld [vmem:[%s7 + $0x450] sm:$0xff]
        %v2206 = vld [vmem:[%s7 + $0x458] sm:$0xff]
        %v2207 = vld [vmem:[%s7 + $0x460] sm:$0xff]
        %v2208 = vld [vmem:[%s7 + $0x468] sm:$0xff]
        %v2209 = vld [vmem:[%s7 + $0x470] sm:$0xff]
        %v2210 = vld [vmem:[%s7 + $0x478] sm:$0xff]
        %v2211 = vld [vmem:[%s7 + $0x480] sm:$0xff]
        %v2212 = vld [vmem:[%s7 + $0x488] sm:$0xff]
        %v2213 = vld [vmem:[%s7 + $0x490] sm:$0xff]
        %v2214 = vld [vmem:[%s7 + $0x498] sm:$0xff]
        %v2215 = vld [vmem:[%s7 + $0x4a0] sm:$0xff]
        %v2216 = vld [vmem:[%s7 + $0x4a8] sm:$0xff]
        %v2217 = vld [vmem:[%s7 + $0x4b0] sm:$0xff]
        %v2218 = vld [vmem:[%s7 + $0x4b8] sm:$0xff]
        %v2219 = vld [vmem:[%s7 + $0x4c0] sm:$0xff]
        %v2220 = vld [vmem:[%s7 + $0x4c8] sm:$0xff]
        %v2221 = vld [vmem:[%s7 + $0x4d0] sm:$0xff]
        %v2222 = vld [vmem:[%s7 + $0x4d8] sm:$0xff]
        %v2223 = vld [vmem:[%s7 + $0x4e0] sm:$0xff]
        %v2224 = vld [vmem:[%s7 + $0x4e8] sm:$0xff]
        %v2225 = vld [vmem:[%s7 + $0x4f0] sm:$0xff]
        %v2226 = vld [vmem:[%s7 + $0x4f8] sm:$0xff]
        %v2227 = vld [vmem:[%s7 + $0x500] sm:$0xff]
        %v2228 = vld [vmem:[%s7 + $0x508] sm:$0xff]
        %v2229 = vld [vmem:[%s7 + $0x510] sm:$0xff]
        %v2230 = vld [vmem:[%s7 + $0x518] sm:$0xff]
        %v2231 = vld [vmem:[%s7 + $0x520] sm:$0xff]
        %v2232 = vld [vmem:[%s7 + $0x528] sm:$0xff]
        %v2233 = vld [vmem:[%s7 + $0x530] sm:$0xff]
        %v2234 = vld [vmem:[%s7 + $0x538] sm:$0xff]
        %v2235 = vld [vmem:[%s7 + $0x540] sm:$0xff]
        %v2236 = vld [vmem:[%s7 + $0x548] sm:$0xff]
        %v2237 = vld [vmem:[%s7 + $0x550] sm:$0xff]
        %v2238 = vld [vmem:[%s7 + $0x558] sm:$0xff]
        %v2239 = vld [vmem:[%s7 + $0x560] sm:$0xff]
        %v2240 = vld [vmem:[%s7 + $0x568] sm:$0xff]
        %v2241 = vld [vmem:[%s7 + $0x570] sm:$0xff]
        %v2242 = vld [vmem:[%s7 + $0x578] sm:$0xff]
        %v2243 = vld [vmem:[%s7 + $0x580] sm:$0xff]
        %v2244 = vld [vmem:[%s7 + $0x588] sm:$0xff]
        %v2245 = vld [vmem:[%s7 + $0x590] sm:$0xff]
        %v2246 = vld [vmem:[%s7 + $0x598] sm:$0xff]
        %v2247 = vld [vmem:[%s7 + $0x5a0] sm:$0xff]
        %v2248 = vld [vmem:[%s7 + $0x5a8] sm:$0xff]
        %v2249 = vld [vmem:[%s7 + $0x5b0] sm:$0xff]
        %v2250 = vld [vmem:[%s7 + $0x5b8] sm:$0xff]
        %v2251 = vld [vmem:[%s7 + $0x5c0] sm:$0xff]
        %v2252 = vld [vmem:[%s7 + $0x5c8] sm:$0xff]
        %v2253 = vld [vmem:[%s7 + $0x5d0] sm:$0xff]
        %v2254 = vld [vmem:[%s7 + $0x5d8] sm:$0xff]
        %v2255 = vld [vmem:[%s7 + $0x5e0] sm:$0xff]
        %v2256 = vld [vmem:[%s7 + $0x5e8] sm:$0xff]
        %v2257 = vld [vmem:[%s7 + $0x5f0] sm:$0xff]
        %v2258 = vld [vmem:[%s7 + $0x5f8] sm:$0xff]
        %v2259 = vld [vmem:[%s7 + $0x600] sm:$0xff]
        %v2260 = vld [vmem:[%s7 + $0x608] sm:$0xff]
        %v2261 = vld [vmem:[%s7 + $0x610] sm:$0xff]
        %v2262 = vld [vmem:[%s7 + $0x618] sm:$0xff]
        %v2263 = vld [vmem:[%s7 + $0x620] sm:$0xff]
        %v2264 = vld [vmem:[%s7 + $0x628] sm:$0xff]
        %v2265 = vld [vmem:[%s7 + $0x630] sm:$0xff]
        %v2266 = vld [vmem:[%s7 + $0x638] sm:$0xff]
        %v2267 = vpack.c.bf16 %v1943, %v1943
        %v2324 = vunpack.c.l.b16 %v1955
        %v2325 = vunpack.c.h.b16 %v1955
        %v2326 = vunpack.c.l.b16 %v1956
        %v2327 = vunpack.c.h.b16 %v1956
        %v2328 = vunpack.c.l.b16 %v1957
        %v2329 = vunpack.c.h.b16 %v1957
        %v2330 = vunpack.c.l.b16 %v1958
        %v2331 = vunpack.c.h.b16 %v1958
        %v2332 = vunpack.c.l.b16 %v1959
        %v2333 = vunpack.c.h.b16 %v1959
        %v2334 = vunpack.c.l.b16 %v1960
        %v2335 = vunpack.c.h.b16 %v1960
        %v2336 = vunpack.c.l.b16 %v1961
        %v2337 = vunpack.c.l.b16 %v1962
        %v2338 = vunpack.c.h.b16 %v1962
        %v2339 = vunpack.c.l.b16 %v1963
        %v2340 = vunpack.c.h.b16 %v1963
        %v2341 = vunpack.c.l.b16 %v1964
        %v2342 = vunpack.c.h.b16 %v1964
        %v2343 = vunpack.c.l.b16 %v1965
        %v2344 = vunpack.c.h.b16 %v1965
        %v2345 = vunpack.c.l.b16 %v1966
        %v2346 = vunpack.c.h.b16 %v1966
        %v2347 = vunpack.c.l.b16 %v1967
        %v2348 = vunpack.c.h.b16 %v1967
        %v2349 = vunpack.c.l.b16 %v1968
        %v2350 = vunpack.c.l.b16 %v1969
        %v2351 = vunpack.c.h.b16 %v1969
        %v2352 = vunpack.c.l.b16 %v1970
        %v2353 = vunpack.c.h.b16 %v1970
        %v2354 = vunpack.c.l.b16 %v1971
        %v2355 = vunpack.c.h.b16 %v1971
        %v2356 = vunpack.c.l.b16 %v1972
        %v2357 = vunpack.c.h.b16 %v1972
        %v2358 = vunpack.c.l.b16 %v1973
        %v2359 = vunpack.c.h.b16 %v1973
        %v2360 = vunpack.c.l.b16 %v1974
        %v2361 = vunpack.c.h.b16 %v1974
        %v2362 = vunpack.c.l.b16 %v1975
        %v2363 = vunpack.c.l.b16 %v1976
        %v2364 = vunpack.c.h.b16 %v1976
        %v2365 = vunpack.c.l.b16 %v1977
        %v2366 = vunpack.c.h.b16 %v1977
        %v2367 = vunpack.c.l.b16 %v1978
        %v2368 = vunpack.c.h.b16 %v1978
        %v2369 = vunpack.c.l.b16 %v1979
        %v2370 = vunpack.c.h.b16 %v1979
        %v2371 = vunpack.c.l.b16 %v1980
        %v2372 = vunpack.c.h.b16 %v1980
        %v2373 = vunpack.c.l.b16 %v1981
        %v2374 = vunpack.c.h.b16 %v1981
        %v2375 = vunpack.c.l.b16 %v1982
        %v2376 = vunpack.c.l.b16 %v1983
        %v2377 = vunpack.c.h.b16 %v1983
        %v2378 = vunpack.c.l.b16 %v1984
        %v2379 = vunpack.c.h.b16 %v1984
        %v2380 = vunpack.c.l.b16 %v1985
        %v2381 = vunpack.c.h.b16 %v1985
        %v2382 = vunpack.c.l.b16 %v1986
        %v2383 = vunpack.c.h.b16 %v1986
        %v2384 = vunpack.c.l.b16 %v1987
        %v2385 = vunpack.c.h.b16 %v1987
        %v2386 = vunpack.c.l.b16 %v1988
        %v2387 = vunpack.c.h.b16 %v1988
        %v2388 = vunpack.c.l.b16 %v1989
        %v2389 = vunpack.c.l.b16 %v1990
        %v2390 = vunpack.c.h.b16 %v1990
        %v2391 = vunpack.c.l.b16 %v1991
        %v2392 = vunpack.c.h.b16 %v1991
        %v2393 = vunpack.c.l.b16 %v1992
        %v2394 = vunpack.c.h.b16 %v1992
        %v2395 = vunpack.c.l.b16 %v1993
        %v2396 = vunpack.c.h.b16 %v1993
        %v2397 = vunpack.c.l.b16 %v1994
        %v2398 = vunpack.c.h.b16 %v1994
        %v2399 = vunpack.c.l.b16 %v1995
        %v2400 = vunpack.c.h.b16 %v1995
        %v2401 = vunpack.c.l.b16 %v1996
        %v2402 = vunpack.c.l.b16 %v1997
        %v2403 = vunpack.c.h.b16 %v1997
        %v2404 = vunpack.c.l.b16 %v1998
        %v2405 = vunpack.c.h.b16 %v1998
        %v2406 = vunpack.c.l.b16 %v1999
        %v2407 = vunpack.c.h.b16 %v1999
        %v2408 = vunpack.c.l.b16 %v2000
        %v2409 = vunpack.c.h.b16 %v2000
        %v2410 = vunpack.c.l.b16 %v2001
        %v2411 = vunpack.c.h.b16 %v2001
        %v2412 = vunpack.c.l.b16 %v2002
        %v2413 = vunpack.c.h.b16 %v2002
        %v2414 = vunpack.c.l.b16 %v2003
        %v2415 = vunpack.c.l.b16 %v2004
        %v2416 = vunpack.c.h.b16 %v2004
        %v2417 = vunpack.c.l.b16 %v2005
        %v2418 = vunpack.c.h.b16 %v2005
        %v2419 = vunpack.c.l.b16 %v2006
        %v2420 = vunpack.c.h.b16 %v2006
        %v2421 = vunpack.c.l.b16 %v2007
        %v2422 = vunpack.c.h.b16 %v2007
        %v2423 = vunpack.c.l.b16 %v2008
        %v2424 = vunpack.c.h.b16 %v2008
        %v2425 = vunpack.c.l.b16 %v2009
        %v2426 = vunpack.c.h.b16 %v2009
        %v2427 = vunpack.c.l.b16 %v2010
        %v2428 = vpack.c.b16 %v2337, %v2324
        %v2429 = vpack.c.b16 %v2338, %v2325
        %v2430 = vpack.c.b16 %v2339, %v2326
        %v2431 = vpack.c.b16 %v2340, %v2327
        %v2432 = vpack.c.b16 %v2341, %v2328
        %v2433 = vpack.c.b16 %v2342, %v2329
        %v2434 = vpack.c.b16 %v2343, %v2330
        %v2435 = vpack.c.b16 %v2344, %v2331
        %v2436 = vpack.c.b16 %v2345, %v2332
        %v2437 = vpack.c.b16 %v2346, %v2333
        %v2438 = vpack.c.b16 %v2347, %v2334
        %v2439 = vpack.c.b16 %v2348, %v2335
        %v2440 = vpack.c.b16 %v2349, %v2336
        %v2441 = vpack.c.b16 %v2363, %v2350
        %v2442 = vpack.c.b16 %v2364, %v2351
        %v2443 = vpack.c.b16 %v2365, %v2352
        %v2444 = vpack.c.b16 %v2366, %v2353
        %v2445 = vpack.c.b16 %v2367, %v2354
        %v2446 = vpack.c.b16 %v2368, %v2355
        %v2447 = vpack.c.b16 %v2369, %v2356
        %v2448 = vpack.c.b16 %v2370, %v2357
        %v2449 = vpack.c.b16 %v2371, %v2358
        %v2450 = vpack.c.b16 %v2372, %v2359
        %v2451 = vpack.c.b16 %v2373, %v2360
        %v2452 = vpack.c.b16 %v2374, %v2361
        %v2453 = vpack.c.b16 %v2375, %v2362
        %v2454 = vpack.c.b16 %v2389, %v2376
        %v2455 = vpack.c.b16 %v2390, %v2377
        %v2456 = vpack.c.b16 %v2391, %v2378
        %v2457 = vpack.c.b16 %v2392, %v2379
        %v2458 = vpack.c.b16 %v2393, %v2380
        %v2459 = vpack.c.b16 %v2394, %v2381
        %v2460 = vpack.c.b16 %v2395, %v2382
        %v2461 = vpack.c.b16 %v2396, %v2383
        %v2462 = vpack.c.b16 %v2397, %v2384
        %v2463 = vpack.c.b16 %v2398, %v2385
        %v2464 = vpack.c.b16 %v2399, %v2386
        %v2465 = vpack.c.b16 %v2400, %v2387
        %v2466 = vpack.c.b16 %v2401, %v2388
        %v2467 = vpack.c.b16 %v2415, %v2402
        %v2468 = vpack.c.b16 %v2416, %v2403
        %v2469 = vpack.c.b16 %v2417, %v2404
        %v2470 = vpack.c.b16 %v2418, %v2405
        %v2471 = vpack.c.b16 %v2419, %v2406
        %v2472 = vpack.c.b16 %v2420, %v2407
        %v2473 = vpack.c.b16 %v2421, %v2408
        %v2474 = vpack.c.b16 %v2422, %v2409
        %v2475 = vpack.c.b16 %v2423, %v2410
        %v2476 = vpack.c.b16 %v2424, %v2411
        %v2477 = vpack.c.b16 %v2425, %v2412
        %v2478 = vpack.c.b16 %v2426, %v2413
        %v2479 = vpack.c.b16 %v2427, %v2414
        %v2533 = vsel %vm776, %v2267, 0
        %2535 = vmatpush.bf16.msra.mxu0 0
        %2536 = vmatpush.bf16.msra.mxu0 0
        %2537 = vmatpush.bf16.msra.mxu0 0
        %2538 = vmatpush.bf16.msra.mxu0 0
        %2539 = vmatpush.bf16.msra.mxu0 %v2467
        %2540 = vmatpush.bf16.msra.mxu0 %v2454
        %2541 = vmatpush.bf16.msra.mxu0 %v2441
        %2542 = vmatpush.bf16.msra.mxu0 %v2428
        %2543 = vmatmul.bf16.gmra.mxu0 %v2533
        %v2544 = vpop.f32.mrf.mxu0
        %v2545 = vadd.f32 0.0, %v2544
        %v2546 = vpop.f32.mrf.mxu0
        %2547 = vdwg.mxu0
        %2548 = vmatpush.bf16.msra.mxu0 0
        %2549 = vmatpush.bf16.msra.mxu0 0
        %2550 = vmatpush.bf16.msra.mxu0 0
        %2551 = vmatpush.bf16.msra.mxu0 0
        %2552 = vmatpush.bf16.msra.mxu0 %v2468
        %2553 = vmatpush.bf16.msra.mxu0 %v2455
        %2554 = vmatpush.bf16.msra.mxu0 %v2442
        %2555 = vmatpush.bf16.msra.mxu0 %v2429
        %2556 = vmatmul.bf16.gmra.mxu0 %v2533
        %v2557 = vpop.f32.mrf.mxu0
        %v2558 = vadd.f32 0.0, %v2557
        %v2559 = vpop.f32.mrf.mxu0
        %2560 = vdwg.mxu0
        %2561 = vmatpush.bf16.msra.mxu0 0
        %2562 = vmatpush.bf16.msra.mxu0 0
        %2563 = vmatpush.bf16.msra.mxu0 0
        %2564 = vmatpush.bf16.msra.mxu0 0
        %2565 = vmatpush.bf16.msra.mxu0 %v2469
        %2566 = vmatpush.bf16.msra.mxu0 %v2456
        %2567 = vmatpush.bf16.msra.mxu0 %v2443
        %2568 = vmatpush.bf16.msra.mxu0 %v2430
        %2569 = vmatmul.bf16.gmra.mxu0 %v2533
        %v2570 = vpop.f32.mrf.mxu0
        %v2571 = vadd.f32 0.0, %v2570
        %v2572 = vpop.f32.mrf.mxu0
        %2573 = vdwg.mxu0
        %2574 = vmatpush.bf16.msra.mxu0 0
        %2575 = vmatpush.bf16.msra.mxu0 0
        %2576 = vmatpush.bf16.msra.mxu0 0
        %2577 = vmatpush.bf16.msra.mxu0 0
        %2578 = vmatpush.bf16.msra.mxu0 %v2470
        %2579 = vmatpush.bf16.msra.mxu0 %v2457
        %2580 = vmatpush.bf16.msra.mxu0 %v2444
        %2581 = vmatpush.bf16.msra.mxu0 %v2431
        %2582 = vmatmul.bf16.gmra.mxu0 %v2533
        %v2583 = vpop.f32.mrf.mxu0
        %v2584 = vadd.f32 0.0, %v2583
        %v2585 = vpop.f32.mrf.mxu0
        %2586 = vdwg.mxu0
        %2587 = vmatpush.bf16.msra.mxu0 0
        %2588 = vmatpush.bf16.msra.mxu0 0
        %2589 = vmatpush.bf16.msra.mxu0 0
        %2590 = vmatpush.bf16.msra.mxu0 0
        %2591 = vmatpush.bf16.msra.mxu0 %v2471
        %2592 = vmatpush.bf16.msra.mxu0 %v2458
        %2593 = vmatpush.bf16.msra.mxu0 %v2445
        %2594 = vmatpush.bf16.msra.mxu0 %v2432
        %2595 = vmatmul.bf16.gmra.mxu0 %v2533
        %v2596 = vpop.f32.mrf.mxu0
        %v2597 = vadd.f32 0.0, %v2596
        %v2598 = vpop.f32.mrf.mxu0
        %2599 = vdwg.mxu0
        %2600 = vmatpush.bf16.msra.mxu0 0
        %2601 = vmatpush.bf16.msra.mxu0 0
        %2602 = vmatpush.bf16.msra.mxu0 0
        %2603 = vmatpush.bf16.msra.mxu0 0
        %2604 = vmatpush.bf16.msra.mxu0 %v2472
        %2605 = vmatpush.bf16.msra.mxu0 %v2459
        %2606 = vmatpush.bf16.msra.mxu0 %v2446
        %2607 = vmatpush.bf16.msra.mxu0 %v2433
        %2608 = vmatmul.bf16.gmra.mxu0 %v2533
        %v2609 = vpop.f32.mrf.mxu0
        %v2610 = vadd.f32 0.0, %v2609
        %v2611 = vpop.f32.mrf.mxu0
        %2612 = vdwg.mxu0
        %2613 = vmatpush.bf16.msra.mxu0 0
        %2614 = vmatpush.bf16.msra.mxu0 0
        %2615 = vmatpush.bf16.msra.mxu0 0
        %2616 = vmatpush.bf16.msra.mxu0 0
        %2617 = vmatpush.bf16.msra.mxu0 %v2473
        %2618 = vmatpush.bf16.msra.mxu0 %v2460
        %2619 = vmatpush.bf16.msra.mxu0 %v2447
        %2620 = vmatpush.bf16.msra.mxu0 %v2434
        %2621 = vmatmul.bf16.gmra.mxu0 %v2533
        %v2622 = vpop.f32.mrf.mxu0
        %v2623 = vadd.f32 0.0, %v2622
        %v2624 = vpop.f32.mrf.mxu0
        %2625 = vdwg.mxu0
        %2626 = vmatpush.bf16.msra.mxu0 0
        %2627 = vmatpush.bf16.msra.mxu0 0
        %2628 = vmatpush.bf16.msra.mxu0 0
        %2629 = vmatpush.bf16.msra.mxu0 0
        %2630 = vmatpush.bf16.msra.mxu0 %v2474
        %2631 = vmatpush.bf16.msra.mxu0 %v2461
        %2632 = vmatpush.bf16.msra.mxu0 %v2448
        %2633 = vmatpush.bf16.msra.mxu0 %v2435
        %2634 = vmatmul.bf16.gmra.mxu0 %v2533
        %v2635 = vpop.f32.mrf.mxu0
        %v2636 = vadd.f32 0.0, %v2635
        %v2637 = vpop.f32.mrf.mxu0
        %2638 = vdwg.mxu0
        %2639 = vmatpush.bf16.msra.mxu0 0
        %2640 = vmatpush.bf16.msra.mxu0 0
        %2641 = vmatpush.bf16.msra.mxu0 0
        %2642 = vmatpush.bf16.msra.mxu0 0
        %2643 = vmatpush.bf16.msra.mxu0 %v2475
        %2644 = vmatpush.bf16.msra.mxu0 %v2462
        %2645 = vmatpush.bf16.msra.mxu0 %v2449
        %2646 = vmatpush.bf16.msra.mxu0 %v2436
        %2647 = vmatmul.bf16.gmra.mxu0 %v2533
        %v2648 = vpop.f32.mrf.mxu0
        %v2649 = vadd.f32 0.0, %v2648
        %v2650 = vpop.f32.mrf.mxu0
        %2651 = vdwg.mxu0
        %2652 = vmatpush.bf16.msra.mxu0 0
        %2653 = vmatpush.bf16.msra.mxu0 0
        %2654 = vmatpush.bf16.msra.mxu0 0
        %2655 = vmatpush.bf16.msra.mxu0 0
        %2656 = vmatpush.bf16.msra.mxu0 %v2476
        %2657 = vmatpush.bf16.msra.mxu0 %v2463
        %2658 = vmatpush.bf16.msra.mxu0 %v2450
        %2659 = vmatpush.bf16.msra.mxu0 %v2437
        %2660 = vmatmul.bf16.gmra.mxu0 %v2533
        %v2661 = vpop.f32.mrf.mxu0
        %v2662 = vadd.f32 0.0, %v2661
        %v2663 = vpop.f32.mrf.mxu0
        %2664 = vdwg.mxu0
        %2665 = vmatpush.bf16.msra.mxu0 0
        %2666 = vmatpush.bf16.msra.mxu0 0
        %2667 = vmatpush.bf16.msra.mxu0 0
        %2668 = vmatpush.bf16.msra.mxu0 0
        %2669 = vmatpush.bf16.msra.mxu0 %v2477
        %2670 = vmatpush.bf16.msra.mxu0 %v2464
        %2671 = vmatpush.bf16.msra.mxu0 %v2451
        %2672 = vmatpush.bf16.msra.mxu0 %v2438
        %2673 = vmatmul.bf16.gmra.mxu0 %v2533
        %v2674 = vpop.f32.mrf.mxu0
        %v2675 = vadd.f32 0.0, %v2674
        %v2676 = vpop.f32.mrf.mxu0
        %2677 = vdwg.mxu0
        %2678 = vmatpush.bf16.msra.mxu0 0
        %2679 = vmatpush.bf16.msra.mxu0 0
        %2680 = vmatpush.bf16.msra.mxu0 0
        %2681 = vmatpush.bf16.msra.mxu0 0
        %2682 = vmatpush.bf16.msra.mxu0 %v2478
        %2683 = vmatpush.bf16.msra.mxu0 %v2465
        %2684 = vmatpush.bf16.msra.mxu0 %v2452
        %2685 = vmatpush.bf16.msra.mxu0 %v2439
        %2686 = vmatmul.bf16.gmra.mxu0 %v2533
        %v2687 = vpop.f32.mrf.mxu0
        %v2688 = vadd.f32 0.0, %v2687
        %v2689 = vpop.f32.mrf.mxu0
        %2690 = vdwg.mxu0
        %2691 = vmatpush.bf16.msra.mxu0 0
        %2692 = vmatpush.bf16.msra.mxu0 0
        %2693 = vmatpush.bf16.msra.mxu0 0
        %2694 = vmatpush.bf16.msra.mxu0 0
        %2695 = vmatpush.bf16.msra.mxu0 %v2479
        %2696 = vmatpush.bf16.msra.mxu0 %v2466
        %2697 = vmatpush.bf16.msra.mxu0 %v2453
        %2698 = vmatpush.bf16.msra.mxu0 %v2440
        %2699 = vmatmul.bf16.gmra.mxu0 %v2533
        %v2700 = vpop.f32.mrf.mxu0
        %v2701 = vadd.f32 0.0, %v2700
        %v2702 = vpop.f32.mrf.mxu0
        %2703 = vdwg.mxu0
        %v2704 = vpack.c.bf16 %v1954, %v1952
        %v2705 = vperm.slane %v482, 2
        %v2706 = vperm.slane %v483, 2
        %v2707 = vperm.slane %v484, 2
        %v2708 = vperm.slane %v485, 2
        %v2709 = vperm.slane %v486, 2
        %v2710 = vperm.slane %v487, 2
        %v2711 = vperm.slane %v488, 2
        %v2712 = vperm.slane %v489, 2
        %v2713 = vperm.slane %v490, 2
        %v2714 = vperm.slane %v491, 2
        %v2715 = vperm.slane %v492, 2
        %v2716 = vperm.slane %v493, 2
        %v2717 = vperm.slane %v494, 2
        %v2774 = vunpack.c.l.b16 %v2011
        %v2775 = vunpack.c.h.b16 %v2011
        %v2776 = vunpack.c.l.b16 %v2012
        %v2777 = vunpack.c.h.b16 %v2012
        %v2778 = vunpack.c.l.b16 %v2013
        %v2779 = vunpack.c.h.b16 %v2013
        %v2780 = vunpack.c.l.b16 %v2014
        %v2781 = vunpack.c.h.b16 %v2014
        %v2782 = vunpack.c.l.b16 %v2015
        %v2783 = vunpack.c.h.b16 %v2015
        %v2784 = vunpack.c.l.b16 %v2016
        %v2785 = vunpack.c.h.b16 %v2016
        %v2786 = vunpack.c.l.b16 %v2017
        %v2787 = vunpack.c.l.b16 %v2018
        %v2788 = vunpack.c.h.b16 %v2018
        %v2789 = vunpack.c.l.b16 %v2019
        %v2790 = vunpack.c.h.b16 %v2019
        %v2791 = vunpack.c.l.b16 %v2020
        %v2792 = vunpack.c.h.b16 %v2020
        %v2793 = vunpack.c.l.b16 %v2021
        %v2794 = vunpack.c.h.b16 %v2021
        %v2795 = vunpack.c.l.b16 %v2022
        %v2796 = vunpack.c.h.b16 %v2022
        %v2797 = vunpack.c.l.b16 %v2023
        %v2798 = vunpack.c.h.b16 %v2023
        %v2799 = vunpack.c.l.b16 %v2024
        %v2800 = vunpack.c.l.b16 %v2025
        %v2801 = vunpack.c.h.b16 %v2025
        %v2802 = vunpack.c.l.b16 %v2026
        %v2803 = vunpack.c.h.b16 %v2026
        %v2804 = vunpack.c.l.b16 %v2027
        %v2805 = vunpack.c.h.b16 %v2027
        %v2806 = vunpack.c.l.b16 %v2028
        %v2807 = vunpack.c.h.b16 %v2028
        %v2808 = vunpack.c.l.b16 %v2029
        %v2809 = vunpack.c.h.b16 %v2029
        %v2810 = vunpack.c.l.b16 %v2030
        %v2811 = vunpack.c.h.b16 %v2030
        %v2812 = vunpack.c.l.b16 %v2031
        %v2813 = vunpack.c.l.b16 %v2032
        %v2814 = vunpack.c.h.b16 %v2032
        %v2815 = vunpack.c.l.b16 %v2033
        %v2816 = vunpack.c.h.b16 %v2033
        %v2817 = vunpack.c.l.b16 %v2034
        %v2818 = vunpack.c.h.b16 %v2034
        %v2819 = vunpack.c.l.b16 %v2035
        %v2820 = vunpack.c.h.b16 %v2035
        %v2821 = vunpack.c.l.b16 %v2036
        %v2822 = vunpack.c.h.b16 %v2036
        %v2823 = vunpack.c.l.b16 %v2037
        %v2824 = vunpack.c.h.b16 %v2037
        %v2825 = vunpack.c.l.b16 %v2038
        %v2826 = vunpack.c.l.b16 %v2039
        %v2827 = vunpack.c.h.b16 %v2039
        %v2828 = vunpack.c.l.b16 %v2040
        %v2829 = vunpack.c.h.b16 %v2040
        %v2830 = vunpack.c.l.b16 %v2041
        %v2831 = vunpack.c.h.b16 %v2041
        %v2832 = vunpack.c.l.b16 %v2042
        %v2833 = vunpack.c.h.b16 %v2042
        %v2834 = vunpack.c.l.b16 %v2043
        %v2835 = vunpack.c.h.b16 %v2043
        %v2836 = vunpack.c.l.b16 %v2044
        %v2837 = vunpack.c.h.b16 %v2044
        %v2838 = vunpack.c.l.b16 %v2045
        %v2839 = vunpack.c.l.b16 %v2046
        %v2840 = vunpack.c.h.b16 %v2046
        %v2841 = vunpack.c.l.b16 %v2047
        %v2842 = vunpack.c.h.b16 %v2047
        %v2843 = vunpack.c.l.b16 %v2048
        %v2844 = vunpack.c.h.b16 %v2048
        %v2845 = vunpack.c.l.b16 %v2049
        %v2846 = vunpack.c.h.b16 %v2049
        %v2847 = vunpack.c.l.b16 %v2050
        %v2848 = vunpack.c.h.b16 %v2050
        %v2849 = vunpack.c.l.b16 %v2051
        %v2850 = vunpack.c.h.b16 %v2051
        %v2851 = vunpack.c.l.b16 %v2052
        %v2852 = vunpack.c.l.b16 %v2053
        %v2853 = vunpack.c.h.b16 %v2053
        %v2854 = vunpack.c.l.b16 %v2054
        %v2855 = vunpack.c.h.b16 %v2054
        %v2856 = vunpack.c.l.b16 %v2055
        %v2857 = vunpack.c.h.b16 %v2055
        %v2858 = vunpack.c.l.b16 %v2056
        %v2859 = vunpack.c.h.b16 %v2056
        %v2860 = vunpack.c.l.b16 %v2057
        %v2861 = vunpack.c.h.b16 %v2057
        %v2862 = vunpack.c.l.b16 %v2058
        %v2863 = vunpack.c.h.b16 %v2058
        %v2864 = vunpack.c.l.b16 %v2059
        %v2865 = vunpack.c.l.b16 %v2060
        %v2866 = vunpack.c.h.b16 %v2060
        %v2867 = vunpack.c.l.b16 %v2061
        %v2868 = vunpack.c.h.b16 %v2061
        %v2869 = vunpack.c.l.b16 %v2062
        %v2870 = vunpack.c.h.b16 %v2062
        %v2871 = vunpack.c.l.b16 %v2063
        %v2872 = vunpack.c.h.b16 %v2063
        %v2873 = vunpack.c.l.b16 %v2064
        %v2874 = vunpack.c.h.b16 %v2064
        %v2875 = vunpack.c.l.b16 %v2065
        %v2876 = vunpack.c.h.b16 %v2065
        %v2877 = vunpack.c.l.b16 %v2066
        %v2878 = vpack.c.b16 %v2787, %v2774
        %v2879 = vpack.c.b16 %v2788, %v2775
        %v2880 = vpack.c.b16 %v2789, %v2776
        %v2881 = vpack.c.b16 %v2790, %v2777
        %v2882 = vpack.c.b16 %v2791, %v2778
        %v2883 = vpack.c.b16 %v2792, %v2779
        %v2884 = vpack.c.b16 %v2793, %v2780
        %v2885 = vpack.c.b16 %v2794, %v2781
        %v2886 = vpack.c.b16 %v2795, %v2782
        %v2887 = vpack.c.b16 %v2796, %v2783
        %v2888 = vpack.c.b16 %v2797, %v2784
        %v2889 = vpack.c.b16 %v2798, %v2785
        %v2890 = vpack.c.b16 %v2799, %v2786
        %v2891 = vpack.c.b16 %v2813, %v2800
        %v2892 = vpack.c.b16 %v2814, %v2801
        %v2893 = vpack.c.b16 %v2815, %v2802
        %v2894 = vpack.c.b16 %v2816, %v2803
        %v2895 = vpack.c.b16 %v2817, %v2804
        %v2896 = vpack.c.b16 %v2818, %v2805
        %v2897 = vpack.c.b16 %v2819, %v2806
        %v2898 = vpack.c.b16 %v2820, %v2807
        %v2899 = vpack.c.b16 %v2821, %v2808
        %v2900 = vpack.c.b16 %v2822, %v2809
        %v2901 = vpack.c.b16 %v2823, %v2810
        %v2902 = vpack.c.b16 %v2824, %v2811
        %v2903 = vpack.c.b16 %v2825, %v2812
        %v2904 = vpack.c.b16 %v2839, %v2826
        %v2905 = vpack.c.b16 %v2840, %v2827
        %v2906 = vpack.c.b16 %v2841, %v2828
        %v2907 = vpack.c.b16 %v2842, %v2829
        %v2908 = vpack.c.b16 %v2843, %v2830
        %v2909 = vpack.c.b16 %v2844, %v2831
        %v2910 = vpack.c.b16 %v2845, %v2832
        %v2911 = vpack.c.b16 %v2846, %v2833
        %v2912 = vpack.c.b16 %v2847, %v2834
        %v2913 = vpack.c.b16 %v2848, %v2835
        %v2914 = vpack.c.b16 %v2849, %v2836
        %v2915 = vpack.c.b16 %v2850, %v2837
        %v2916 = vpack.c.b16 %v2851, %v2838
        %v2917 = vpack.c.b16 %v2865, %v2852
        %v2918 = vpack.c.b16 %v2866, %v2853
        %v2919 = vpack.c.b16 %v2867, %v2854
        %v2920 = vpack.c.b16 %v2868, %v2855
        %v2921 = vpack.c.b16 %v2869, %v2856
        %v2922 = vpack.c.b16 %v2870, %v2857
        %v2923 = vpack.c.b16 %v2871, %v2858
        %v2924 = vpack.c.b16 %v2872, %v2859
        %v2925 = vpack.c.b16 %v2873, %v2860
        %v2926 = vpack.c.b16 %v2874, %v2861
        %v2927 = vpack.c.b16 %v2875, %v2862
        %v2928 = vpack.c.b16 %v2876, %v2863
        %v2929 = vpack.c.b16 %v2877, %v2864
        %v2983 = vsel %vm776, %v2704, 0
        %2985 = vmatpush.bf16.msra.mxu0 0
        %2986 = vmatpush.bf16.msra.mxu0 0
        %2987 = vmatpush.bf16.msra.mxu0 0
        %2988 = vmatpush.bf16.msra.mxu0 0
        %2989 = vmatpush.bf16.msra.mxu0 %v2917
        %2990 = vmatpush.bf16.msra.mxu0 %v2904
        %2991 = vmatpush.bf16.msra.mxu0 %v2891
        %2992 = vmatpush.bf16.msra.mxu0 %v2878
        %2993 = vmatmul.bf16.gmra.mxu0 %v2983
        %v2994 = vpop.f32.mrf.mxu0
        %v2995 = vadd.f32 %v2705, %v2994
        %v2996 = vpop.f32.mrf.mxu0
        %v2997 = vadd.f32 %v2705, %v2996
        %2998 = vdwg.mxu0
        %2999 = vmatpush.bf16.msra.mxu0 0
        %3000 = vmatpush.bf16.msra.mxu0 0
        %3001 = vmatpush.bf16.msra.mxu0 0
        %3002 = vmatpush.bf16.msra.mxu0 0
        %3003 = vmatpush.bf16.msra.mxu0 %v2918
        %3004 = vmatpush.bf16.msra.mxu0 %v2905
        %3005 = vmatpush.bf16.msra.mxu0 %v2892
        %3006 = vmatpush.bf16.msra.mxu0 %v2879
        %3007 = vmatmul.bf16.gmra.mxu0 %v2983
        %v3008 = vpop.f32.mrf.mxu0
        %v3009 = vadd.f32 %v2706, %v3008
        %v3010 = vpop.f32.mrf.mxu0
        %v3011 = vadd.f32 %v2706, %v3010
        %3012 = vdwg.mxu0
        %3013 = vmatpush.bf16.msra.mxu0 0
        %3014 = vmatpush.bf16.msra.mxu0 0
        %3015 = vmatpush.bf16.msra.mxu0 0
        %3016 = vmatpush.bf16.msra.mxu0 0
        %3017 = vmatpush.bf16.msra.mxu0 %v2919
        %3018 = vmatpush.bf16.msra.mxu0 %v2906
        %3019 = vmatpush.bf16.msra.mxu0 %v2893
        %3020 = vmatpush.bf16.msra.mxu0 %v2880
        %3021 = vmatmul.bf16.gmra.mxu0 %v2983
        %v3022 = vpop.f32.mrf.mxu0
        %v3023 = vadd.f32 %v2707, %v3022
        %v3024 = vpop.f32.mrf.mxu0
        %v3025 = vadd.f32 %v2707, %v3024
        %3026 = vdwg.mxu0
        %3027 = vmatpush.bf16.msra.mxu0 0
        %3028 = vmatpush.bf16.msra.mxu0 0
        %3029 = vmatpush.bf16.msra.mxu0 0
        %3030 = vmatpush.bf16.msra.mxu0 0
        %3031 = vmatpush.bf16.msra.mxu0 %v2920
        %3032 = vmatpush.bf16.msra.mxu0 %v2907
        %3033 = vmatpush.bf16.msra.mxu0 %v2894
        %3034 = vmatpush.bf16.msra.mxu0 %v2881
        %3035 = vmatmul.bf16.gmra.mxu0 %v2983
        %v3036 = vpop.f32.mrf.mxu0
        %v3037 = vadd.f32 %v2708, %v3036
        %v3038 = vpop.f32.mrf.mxu0
        %v3039 = vadd.f32 %v2708, %v3038
        %3040 = vdwg.mxu0
        %3041 = vmatpush.bf16.msra.mxu0 0
        %3042 = vmatpush.bf16.msra.mxu0 0
        %3043 = vmatpush.bf16.msra.mxu0 0
        %3044 = vmatpush.bf16.msra.mxu0 0
        %3045 = vmatpush.bf16.msra.mxu0 %v2921
        %3046 = vmatpush.bf16.msra.mxu0 %v2908
        %3047 = vmatpush.bf16.msra.mxu0 %v2895
        %3048 = vmatpush.bf16.msra.mxu0 %v2882
        %3049 = vmatmul.bf16.gmra.mxu0 %v2983
        %v3050 = vpop.f32.mrf.mxu0
        %v3051 = vadd.f32 %v2709, %v3050
        %v3052 = vpop.f32.mrf.mxu0
        %v3053 = vadd.f32 %v2709, %v3052
        %3054 = vdwg.mxu0
        %3055 = vmatpush.bf16.msra.mxu0 0
        %3056 = vmatpush.bf16.msra.mxu0 0
        %3057 = vmatpush.bf16.msra.mxu0 0
        %3058 = vmatpush.bf16.msra.mxu0 0
        %3059 = vmatpush.bf16.msra.mxu0 %v2922
        %3060 = vmatpush.bf16.msra.mxu0 %v2909
        %3061 = vmatpush.bf16.msra.mxu0 %v2896
        %3062 = vmatpush.bf16.msra.mxu0 %v2883
        %3063 = vmatmul.bf16.gmra.mxu0 %v2983
        %v3064 = vpop.f32.mrf.mxu0
        %v3065 = vadd.f32 %v2710, %v3064
        %v3066 = vpop.f32.mrf.mxu0
        %v3067 = vadd.f32 %v2710, %v3066
        %3068 = vdwg.mxu0
        %3069 = vmatpush.bf16.msra.mxu0 0
        %3070 = vmatpush.bf16.msra.mxu0 0
        %3071 = vmatpush.bf16.msra.mxu0 0
        %3072 = vmatpush.bf16.msra.mxu0 0
        %3073 = vmatpush.bf16.msra.mxu0 %v2923
        %3074 = vmatpush.bf16.msra.mxu0 %v2910
        %3075 = vmatpush.bf16.msra.mxu0 %v2897
        %3076 = vmatpush.bf16.msra.mxu0 %v2884
        %3077 = vmatmul.bf16.gmra.mxu0 %v2983
        %v3078 = vpop.f32.mrf.mxu0
        %v3079 = vadd.f32 %v2711, %v3078
        %v3080 = vpop.f32.mrf.mxu0
        %v3081 = vadd.f32 %v2711, %v3080
        %3082 = vdwg.mxu0
        %3083 = vmatpush.bf16.msra.mxu0 0
        %3084 = vmatpush.bf16.msra.mxu0 0
        %3085 = vmatpush.bf16.msra.mxu0 0
        %3086 = vmatpush.bf16.msra.mxu0 0
        %3087 = vmatpush.bf16.msra.mxu0 %v2924
        %3088 = vmatpush.bf16.msra.mxu0 %v2911
        %3089 = vmatpush.bf16.msra.mxu0 %v2898
        %3090 = vmatpush.bf16.msra.mxu0 %v2885
        %3091 = vmatmul.bf16.gmra.mxu0 %v2983
        %v3092 = vpop.f32.mrf.mxu0
        %v3093 = vadd.f32 %v2712, %v3092
        %v3094 = vpop.f32.mrf.mxu0
        %v3095 = vadd.f32 %v2712, %v3094
        %3096 = vdwg.mxu0
        %3097 = vmatpush.bf16.msra.mxu0 0
        %3098 = vmatpush.bf16.msra.mxu0 0
        %3099 = vmatpush.bf16.msra.mxu0 0
        %3100 = vmatpush.bf16.msra.mxu0 0
        %3101 = vmatpush.bf16.msra.mxu0 %v2925
        %3102 = vmatpush.bf16.msra.mxu0 %v2912
        %3103 = vmatpush.bf16.msra.mxu0 %v2899
        %3104 = vmatpush.bf16.msra.mxu0 %v2886
        %3105 = vmatmul.bf16.gmra.mxu0 %v2983
        %v3106 = vpop.f32.mrf.mxu0
        %v3107 = vadd.f32 %v2713, %v3106
        %v3108 = vpop.f32.mrf.mxu0
        %v3109 = vadd.f32 %v2713, %v3108
        %3110 = vdwg.mxu0
        %3111 = vmatpush.bf16.msra.mxu0 0
        %3112 = vmatpush.bf16.msra.mxu0 0
        %3113 = vmatpush.bf16.msra.mxu0 0
        %3114 = vmatpush.bf16.msra.mxu0 0
        %3115 = vmatpush.bf16.msra.mxu0 %v2926
        %3116 = vmatpush.bf16.msra.mxu0 %v2913
        %3117 = vmatpush.bf16.msra.mxu0 %v2900
        %3118 = vmatpush.bf16.msra.mxu0 %v2887
        %3119 = vmatmul.bf16.gmra.mxu0 %v2983
        %v3120 = vpop.f32.mrf.mxu0
        %v3121 = vadd.f32 %v2714, %v3120
        %v3122 = vpop.f32.mrf.mxu0
        %v3123 = vadd.f32 %v2714, %v3122
        %3124 = vdwg.mxu0
        %3125 = vmatpush.bf16.msra.mxu0 0
        %3126 = vmatpush.bf16.msra.mxu0 0
        %3127 = vmatpush.bf16.msra.mxu0 0
        %3128 = vmatpush.bf16.msra.mxu0 0
        %3129 = vmatpush.bf16.msra.mxu0 %v2927
        %3130 = vmatpush.bf16.msra.mxu0 %v2914
        %3131 = vmatpush.bf16.msra.mxu0 %v2901
        %3132 = vmatpush.bf16.msra.mxu0 %v2888
        %3133 = vmatmul.bf16.gmra.mxu0 %v2983
        %v3134 = vpop.f32.mrf.mxu0
        %v3135 = vadd.f32 %v2715, %v3134
        %v3136 = vpop.f32.mrf.mxu0
        %v3137 = vadd.f32 %v2715, %v3136
        %3138 = vdwg.mxu0
        %3139 = vmatpush.bf16.msra.mxu0 0
        %3140 = vmatpush.bf16.msra.mxu0 0
        %3141 = vmatpush.bf16.msra.mxu0 0
        %3142 = vmatpush.bf16.msra.mxu0 0
        %3143 = vmatpush.bf16.msra.mxu0 %v2928
        %3144 = vmatpush.bf16.msra.mxu0 %v2915
        %3145 = vmatpush.bf16.msra.mxu0 %v2902
        %3146 = vmatpush.bf16.msra.mxu0 %v2889
        %3147 = vmatmul.bf16.gmra.mxu0 %v2983
        %v3148 = vpop.f32.mrf.mxu0
        %v3149 = vadd.f32 %v2716, %v3148
        %v3150 = vpop.f32.mrf.mxu0
        %v3151 = vadd.f32 %v2716, %v3150
        %3152 = vdwg.mxu0
        %3153 = vmatpush.bf16.msra.mxu0 0
        %3154 = vmatpush.bf16.msra.mxu0 0
        %3155 = vmatpush.bf16.msra.mxu0 0
        %3156 = vmatpush.bf16.msra.mxu0 0
        %3157 = vmatpush.bf16.msra.mxu0 %v2929
        %3158 = vmatpush.bf16.msra.mxu0 %v2916
        %3159 = vmatpush.bf16.msra.mxu0 %v2903
        %3160 = vmatpush.bf16.msra.mxu0 %v2890
        %3161 = vmatmul.bf16.gmra.mxu0 %v2983
        %v3162 = vpop.f32.mrf.mxu0
        %v3163 = vadd.f32 %v2717, %v3162
        %v3164 = vpop.f32.mrf.mxu0
        %v3165 = vadd.f32 %v2717, %v3164
        %3166 = vdwg.mxu0
        %v3167 = vpack.c.bf16 %v2997, %v2995
        %v3168 = vpack.c.bf16 %v3011, %v3009
        %v3169 = vpack.c.bf16 %v3025, %v3023
        %v3170 = vpack.c.bf16 %v3039, %v3037
        %v3171 = vpack.c.bf16 %v3053, %v3051
        %v3172 = vpack.c.bf16 %v3067, %v3065
        %v3173 = vpack.c.bf16 %v3081, %v3079
        %v3174 = vpack.c.bf16 %v3095, %v3093
        %v3175 = vpack.c.bf16 %v3109, %v3107
        %v3176 = vpack.c.bf16 %v3123, %v3121
        %v3177 = vpack.c.bf16 %v3137, %v3135
        %v3178 = vpack.c.bf16 %v3151, %v3149
        %v3179 = vpack.c.bf16 %v3165, %v3163
        %v3180 = vpack.c.bf16 %v2545, %v2545
        %v3181 = vpack.c.bf16 %v2558, %v2558
        %v3182 = vpack.c.bf16 %v2571, %v2571
        %v3183 = vpack.c.bf16 %v2584, %v2584
        %v3184 = vpack.c.bf16 %v2597, %v2597
        %v3185 = vpack.c.bf16 %v2610, %v2610
        %v3186 = vpack.c.bf16 %v2623, %v2623
        %v3187 = vpack.c.bf16 %v2636, %v2636
        %v3188 = vpack.c.bf16 %v2649, %v2649
        %v3189 = vpack.c.bf16 %v2662, %v2662
        %v3190 = vpack.c.bf16 %v2675, %v2675
        %v3191 = vpack.c.bf16 %v2688, %v2688
        %v3192 = vpack.c.bf16 %v2701, %v2701
        %v3209 = vunpack.c.l.b16 %v495
        %v3210 = vunpack.c.l.b16 %v496
        %v3211 = vunpack.c.l.b16 %v497
        %v3212 = vunpack.c.l.b16 %v498
        %v3213 = vunpack.c.l.b16 %v499
        %v3214 = vunpack.c.l.b16 %v500
        %v3215 = vunpack.c.l.b16 %v501
        %v3216 = vunpack.c.l.b16 %v502
        %v3217 = vunpack.c.l.b16 %v503
        %v3218 = vunpack.c.l.b16 %v504
        %v3219 = vunpack.c.l.b16 %v505
        %v3220 = vunpack.c.l.b16 %v506
        %v3221 = vunpack.c.l.b16 %v507
        %v3222 = vunpack.c.l.b16 %v508
        %v3223 = vunpack.c.l.b16 %v509
        %v3224 = vunpack.c.l.b16 %v510
        %v3225 = vpack.c.b16 %v3210, %v3209
        %v3226 = vpack.c.b16 %v3212, %v3211
        %v3227 = vpack.c.b16 %v3214, %v3213
        %v3228 = vpack.c.b16 %v3216, %v3215
        %v3229 = vpack.c.b16 %v3218, %v3217
        %v3230 = vpack.c.b16 %v3220, %v3219
        %v3231 = vpack.c.b16 %v3222, %v3221
        %v3232 = vpack.c.b16 %v3224, %v3223
        %vm3233 = vcmask 195584
        %v3235 = vsel %vm3233, %v3225, 0
        %v3238 = vsel %vm3233, %v3226, 0
        %v3241 = vsel %vm3233, %v3227, 0
        %v3244 = vsel %vm3233, %v3228, 0
        %v3247 = vsel %vm3233, %v3229, 0
        %v3250 = vsel %vm3233, %v3230, 0
        %v3253 = vsel %vm3233, %v3231, 0
        %v3256 = vsel %vm3233, %v3232, 0
        %v3259 = vsel %vm1946, %v3180, 0
        %v3262 = vsel %vm1946, %v3181, 0
        %v3265 = vsel %vm1946, %v3182, 0
        %v3268 = vsel %vm1946, %v3183, 0
        %v3271 = vsel %vm1946, %v3184, 0
        %v3274 = vsel %vm1946, %v3185, 0
        %v3277 = vsel %vm1946, %v3186, 0
        %v3280 = vsel %vm1946, %v3187, 0
        %v3283 = vsel %vm1946, %v3188, 0
        %v3286 = vsel %vm1946, %v3189, 0
        %v3289 = vsel %vm1946, %v3190, 0
        %v3292 = vsel %vm1946, %v3191, 0
        %v3295 = vsel %vm1946, %v3192, 0
        %3297 = vmatpush.bf16.msra.mxu0 0
        %3298 = vmatpush.bf16.msra.mxu0 0
        %3299 = vmatpush.bf16.msra.mxu0 0
        %3300 = vmatpush.bf16.msra.mxu0 0
        %3301 = vmatpush.bf16.msra.mxu0 0
        %3302 = vmatpush.bf16.msra.mxu0 0
        %3303 = vmatpush.bf16.msra.mxu0 %v3259
        %3304 = vmatpush.bf16.msra.mxu0 %v3167
        %3305 = vmatmul.bf16.gmra.mxu0 %v3235
        %v3306 = vpop.f32.mrf.mxu0
        %v3307 = vadd.f32 0.0, %v3306
        %v3308 = vpop.f32.mrf.mxu0
        %v3309 = vadd.f32 0.0, %v3308
        %3310 = vmatmul.bf16.gmra.mxu0 %v3238
        %v3311 = vpop.f32.mrf.mxu0
        %v3312 = vadd.f32 0.0, %v3311
        %v3313 = vpop.f32.mrf.mxu0
        %v3314 = vadd.f32 0.0, %v3313
        %3315 = vmatmul.bf16.gmra.mxu0 %v3241
        %v3316 = vpop.f32.mrf.mxu0
        %v3317 = vadd.f32 0.0, %v3316
        %v3318 = vpop.f32.mrf.mxu0
        %v3319 = vadd.f32 0.0, %v3318
        %3320 = vmatmul.bf16.gmra.mxu0 %v3244
        %v3321 = vpop.f32.mrf.mxu0
        %v3322 = vadd.f32 0.0, %v3321
        %v3323 = vpop.f32.mrf.mxu0
        %v3324 = vadd.f32 0.0, %v3323
        %3325 = vmatmul.bf16.gmra.mxu0 %v3247
        %v3326 = vpop.f32.mrf.mxu0
        %v3327 = vadd.f32 0.0, %v3326
        %v3328 = vpop.f32.mrf.mxu0
        %v3329 = vadd.f32 0.0, %v3328
        %3330 = vmatmul.bf16.gmra.mxu0 %v3250
        %v3331 = vpop.f32.mrf.mxu0
        %v3332 = vadd.f32 0.0, %v3331
        %v3333 = vpop.f32.mrf.mxu0
        %v3334 = vadd.f32 0.0, %v3333
        %3335 = vmatmul.bf16.gmra.mxu0 %v3253
        %v3336 = vpop.f32.mrf.mxu0
        %v3337 = vadd.f32 0.0, %v3336
        %v3338 = vpop.f32.mrf.mxu0
        %v3339 = vadd.f32 0.0, %v3338
        %3340 = vmatmul.bf16.gmra.mxu0 %v3256
        %v3341 = vpop.f32.mrf.mxu0
        %v3342 = vadd.f32 0.0, %v3341
        %v3343 = vpop.f32.mrf.mxu0
        %v3344 = vadd.f32 0.0, %v3343
        %3345 = vdwg.mxu0
        %3346 = vmatpush.bf16.msra.mxu0 0
        %3347 = vmatpush.bf16.msra.mxu0 0
        %3348 = vmatpush.bf16.msra.mxu0 0
        %3349 = vmatpush.bf16.msra.mxu0 0
        %3350 = vmatpush.bf16.msra.mxu0 0
        %3351 = vmatpush.bf16.msra.mxu0 0
        %3352 = vmatpush.bf16.msra.mxu0 %v3262
        %3353 = vmatpush.bf16.msra.mxu0 %v3168
        %3354 = vmatmul.bf16.gmra.mxu0 %v3235
        %v3355 = vpop.f32.mrf.mxu0
        %v3356 = vadd.f32 0.0, %v3355
        %v3357 = vpop.f32.mrf.mxu0
        %v3358 = vadd.f32 0.0, %v3357
        %3359 = vmatmul.bf16.gmra.mxu0 %v3238
        %v3360 = vpop.f32.mrf.mxu0
        %v3361 = vadd.f32 0.0, %v3360
        %v3362 = vpop.f32.mrf.mxu0
        %v3363 = vadd.f32 0.0, %v3362
        %3364 = vmatmul.bf16.gmra.mxu0 %v3241
        %v3365 = vpop.f32.mrf.mxu0
        %v3366 = vadd.f32 0.0, %v3365
        %v3367 = vpop.f32.mrf.mxu0
        %v3368 = vadd.f32 0.0, %v3367
        %3369 = vmatmul.bf16.gmra.mxu0 %v3244
        %v3370 = vpop.f32.mrf.mxu0
        %v3371 = vadd.f32 0.0, %v3370
        %v3372 = vpop.f32.mrf.mxu0
        %v3373 = vadd.f32 0.0, %v3372
        %3374 = vmatmul.bf16.gmra.mxu0 %v3247
        %v3375 = vpop.f32.mrf.mxu0
        %v3376 = vadd.f32 0.0, %v3375
        %v3377 = vpop.f32.mrf.mxu0
        %v3378 = vadd.f32 0.0, %v3377
        %3379 = vmatmul.bf16.gmra.mxu0 %v3250
        %v3380 = vpop.f32.mrf.mxu0
        %v3381 = vadd.f32 0.0, %v3380
        %v3382 = vpop.f32.mrf.mxu0
        %v3383 = vadd.f32 0.0, %v3382
        %3384 = vmatmul.bf16.gmra.mxu0 %v3253
        %v3385 = vpop.f32.mrf.mxu0
        %v3386 = vadd.f32 0.0, %v3385
        %v3387 = vpop.f32.mrf.mxu0
        %v3388 = vadd.f32 0.0, %v3387
        %3389 = vmatmul.bf16.gmra.mxu0 %v3256
        %v3390 = vpop.f32.mrf.mxu0
        %v3391 = vadd.f32 0.0, %v3390
        %v3392 = vpop.f32.mrf.mxu0
        %v3393 = vadd.f32 0.0, %v3392
        %3394 = vdwg.mxu0
        %3395 = vmatpush.bf16.msra.mxu0 0
        %3396 = vmatpush.bf16.msra.mxu0 0
        %3397 = vmatpush.bf16.msra.mxu0 0
        %3398 = vmatpush.bf16.msra.mxu0 0
        %3399 = vmatpush.bf16.msra.mxu0 0
        %3400 = vmatpush.bf16.msra.mxu0 0
        %3401 = vmatpush.bf16.msra.mxu0 %v3265
        %3402 = vmatpush.bf16.msra.mxu0 %v3169
        %3403 = vmatmul.bf16.gmra.mxu0 %v3235
        %v3404 = vpop.f32.mrf.mxu0
        %v3405 = vadd.f32 0.0, %v3404
        %v3406 = vpop.f32.mrf.mxu0
        %v3407 = vadd.f32 0.0, %v3406
        %3408 = vmatmul.bf16.gmra.mxu0 %v3238
        %v3409 = vpop.f32.mrf.mxu0
        %v3410 = vadd.f32 0.0, %v3409
        %v3411 = vpop.f32.mrf.mxu0
        %v3412 = vadd.f32 0.0, %v3411
        %3413 = vmatmul.bf16.gmra.mxu0 %v3241
        %v3414 = vpop.f32.mrf.mxu0
        %v3415 = vadd.f32 0.0, %v3414
        %v3416 = vpop.f32.mrf.mxu0
        %v3417 = vadd.f32 0.0, %v3416
        %3418 = vmatmul.bf16.gmra.mxu0 %v3244
        %v3419 = vpop.f32.mrf.mxu0
        %v3420 = vadd.f32 0.0, %v3419
        %v3421 = vpop.f32.mrf.mxu0
        %v3422 = vadd.f32 0.0, %v3421
        %3423 = vmatmul.bf16.gmra.mxu0 %v3247
        %v3424 = vpop.f32.mrf.mxu0
        %v3425 = vadd.f32 0.0, %v3424
        %v3426 = vpop.f32.mrf.mxu0
        %v3427 = vadd.f32 0.0, %v3426
        %3428 = vmatmul.bf16.gmra.mxu0 %v3250
        %v3429 = vpop.f32.mrf.mxu0
        %v3430 = vadd.f32 0.0, %v3429
        %v3431 = vpop.f32.mrf.mxu0
        %v3432 = vadd.f32 0.0, %v3431
        %3433 = vmatmul.bf16.gmra.mxu0 %v3253
        %v3434 = vpop.f32.mrf.mxu0
        %v3435 = vadd.f32 0.0, %v3434
        %v3436 = vpop.f32.mrf.mxu0
        %v3437 = vadd.f32 0.0, %v3436
        %3438 = vmatmul.bf16.gmra.mxu0 %v3256
        %v3439 = vpop.f32.mrf.mxu0
        %v3440 = vadd.f32 0.0, %v3439
        %v3441 = vpop.f32.mrf.mxu0
        %v3442 = vadd.f32 0.0, %v3441
        %3443 = vdwg.mxu0
        %3444 = vmatpush.bf16.msra.mxu0 0
        %3445 = vmatpush.bf16.msra.mxu0 0
        %3446 = vmatpush.bf16.msra.mxu0 0
        %3447 = vmatpush.bf16.msra.mxu0 0
        %3448 = vmatpush.bf16.msra.mxu0 0
        %3449 = vmatpush.bf16.msra.mxu0 0
        %3450 = vmatpush.bf16.msra.mxu0 %v3268
        %3451 = vmatpush.bf16.msra.mxu0 %v3170
        %3452 = vmatmul.bf16.gmra.mxu0 %v3235
        %v3453 = vpop.f32.mrf.mxu0
        %v3454 = vadd.f32 0.0, %v3453
        %v3455 = vpop.f32.mrf.mxu0
        %v3456 = vadd.f32 0.0, %v3455
        %3457 = vmatmul.bf16.gmra.mxu0 %v3238
        %v3458 = vpop.f32.mrf.mxu0
        %v3459 = vadd.f32 0.0, %v3458
        %v3460 = vpop.f32.mrf.mxu0
        %v3461 = vadd.f32 0.0, %v3460
        %3462 = vmatmul.bf16.gmra.mxu0 %v3241
        %v3463 = vpop.f32.mrf.mxu0
        %v3464 = vadd.f32 0.0, %v3463
        %v3465 = vpop.f32.mrf.mxu0
        %v3466 = vadd.f32 0.0, %v3465
        %3467 = vmatmul.bf16.gmra.mxu0 %v3244
        %v3468 = vpop.f32.mrf.mxu0
        %v3469 = vadd.f32 0.0, %v3468
        %v3470 = vpop.f32.mrf.mxu0
        %v3471 = vadd.f32 0.0, %v3470
        %3472 = vmatmul.bf16.gmra.mxu0 %v3247
        %v3473 = vpop.f32.mrf.mxu0
        %v3474 = vadd.f32 0.0, %v3473
        %v3475 = vpop.f32.mrf.mxu0
        %v3476 = vadd.f32 0.0, %v3475
        %3477 = vmatmul.bf16.gmra.mxu0 %v3250
        %v3478 = vpop.f32.mrf.mxu0
        %v3479 = vadd.f32 0.0, %v3478
        %v3480 = vpop.f32.mrf.mxu0
        %v3481 = vadd.f32 0.0, %v3480
        %3482 = vmatmul.bf16.gmra.mxu0 %v3253
        %v3483 = vpop.f32.mrf.mxu0
        %v3484 = vadd.f32 0.0, %v3483
        %v3485 = vpop.f32.mrf.mxu0
        %v3486 = vadd.f32 0.0, %v3485
        %3487 = vmatmul.bf16.gmra.mxu0 %v3256
        %v3488 = vpop.f32.mrf.mxu0
        %v3489 = vadd.f32 0.0, %v3488
        %v3490 = vpop.f32.mrf.mxu0
        %v3491 = vadd.f32 0.0, %v3490
        %3492 = vdwg.mxu0
        %3493 = vmatpush.bf16.msra.mxu0 0
        %3494 = vmatpush.bf16.msra.mxu0 0
        %3495 = vmatpush.bf16.msra.mxu0 0
        %3496 = vmatpush.bf16.msra.mxu0 0
        %3497 = vmatpush.bf16.msra.mxu0 0
        %3498 = vmatpush.bf16.msra.mxu0 0
        %3499 = vmatpush.bf16.msra.mxu0 %v3271
        %3500 = vmatpush.bf16.msra.mxu0 %v3171
        %3501 = vmatmul.bf16.gmra.mxu0 %v3235
        %v3502 = vpop.f32.mrf.mxu0
        %v3503 = vadd.f32 0.0, %v3502
        %v3504 = vpop.f32.mrf.mxu0
        %v3505 = vadd.f32 0.0, %v3504
        %3506 = vmatmul.bf16.gmra.mxu0 %v3238
        %v3507 = vpop.f32.mrf.mxu0
        %v3508 = vadd.f32 0.0, %v3507
        %v3509 = vpop.f32.mrf.mxu0
        %v3510 = vadd.f32 0.0, %v3509
        %3511 = vmatmul.bf16.gmra.mxu0 %v3241
        %v3512 = vpop.f32.mrf.mxu0
        %v3513 = vadd.f32 0.0, %v3512
        %v3514 = vpop.f32.mrf.mxu0
        %v3515 = vadd.f32 0.0, %v3514
        %3516 = vmatmul.bf16.gmra.mxu0 %v3244
        %v3517 = vpop.f32.mrf.mxu0
        %v3518 = vadd.f32 0.0, %v3517
        %v3519 = vpop.f32.mrf.mxu0
        %v3520 = vadd.f32 0.0, %v3519
        %3521 = vmatmul.bf16.gmra.mxu0 %v3247
        %v3522 = vpop.f32.mrf.mxu0
        %v3523 = vadd.f32 0.0, %v3522
        %v3524 = vpop.f32.mrf.mxu0
        %v3525 = vadd.f32 0.0, %v3524
        %3526 = vmatmul.bf16.gmra.mxu0 %v3250
        %v3527 = vpop.f32.mrf.mxu0
        %v3528 = vadd.f32 0.0, %v3527
        %v3529 = vpop.f32.mrf.mxu0
        %v3530 = vadd.f32 0.0, %v3529
        %3531 = vmatmul.bf16.gmra.mxu0 %v3253
        %v3532 = vpop.f32.mrf.mxu0
        %v3533 = vadd.f32 0.0, %v3532
        %v3534 = vpop.f32.mrf.mxu0
        %v3535 = vadd.f32 0.0, %v3534
        %3536 = vmatmul.bf16.gmra.mxu0 %v3256
        %v3537 = vpop.f32.mrf.mxu0
        %v3538 = vadd.f32 0.0, %v3537
        %v3539 = vpop.f32.mrf.mxu0
        %v3540 = vadd.f32 0.0, %v3539
        %3541 = vdwg.mxu0
        %3542 = vmatpush.bf16.msra.mxu0 0
        %3543 = vmatpush.bf16.msra.mxu0 0
        %3544 = vmatpush.bf16.msra.mxu0 0
        %3545 = vmatpush.bf16.msra.mxu0 0
        %3546 = vmatpush.bf16.msra.mxu0 0
        %3547 = vmatpush.bf16.msra.mxu0 0
        %3548 = vmatpush.bf16.msra.mxu0 %v3274
        %3549 = vmatpush.bf16.msra.mxu0 %v3172
        %3550 = vmatmul.bf16.gmra.mxu0 %v3235
        %v3551 = vpop.f32.mrf.mxu0
        %v3552 = vadd.f32 0.0, %v3551
        %v3553 = vpop.f32.mrf.mxu0
        %v3554 = vadd.f32 0.0, %v3553
        %3555 = vmatmul.bf16.gmra.mxu0 %v3238
        %v3556 = vpop.f32.mrf.mxu0
        %v3557 = vadd.f32 0.0, %v3556
        %v3558 = vpop.f32.mrf.mxu0
        %v3559 = vadd.f32 0.0, %v3558
        %3560 = vmatmul.bf16.gmra.mxu0 %v3241
        %v3561 = vpop.f32.mrf.mxu0
        %v3562 = vadd.f32 0.0, %v3561
        %v3563 = vpop.f32.mrf.mxu0
        %v3564 = vadd.f32 0.0, %v3563
        %3565 = vmatmul.bf16.gmra.mxu0 %v3244
        %v3566 = vpop.f32.mrf.mxu0
        %v3567 = vadd.f32 0.0, %v3566
        %v3568 = vpop.f32.mrf.mxu0
        %v3569 = vadd.f32 0.0, %v3568
        %3570 = vmatmul.bf16.gmra.mxu0 %v3247
        %v3571 = vpop.f32.mrf.mxu0
        %v3572 = vadd.f32 0.0, %v3571
        %v3573 = vpop.f32.mrf.mxu0
        %v3574 = vadd.f32 0.0, %v3573
        %3575 = vmatmul.bf16.gmra.mxu0 %v3250
        %v3576 = vpop.f32.mrf.mxu0
        %v3577 = vadd.f32 0.0, %v3576
        %v3578 = vpop.f32.mrf.mxu0
        %v3579 = vadd.f32 0.0, %v3578
        %3580 = vmatmul.bf16.gmra.mxu0 %v3253
        %v3581 = vpop.f32.mrf.mxu0
        %v3582 = vadd.f32 0.0, %v3581
        %v3583 = vpop.f32.mrf.mxu0
        %v3584 = vadd.f32 0.0, %v3583
        %3585 = vmatmul.bf16.gmra.mxu0 %v3256
        %v3586 = vpop.f32.mrf.mxu0
        %v3587 = vadd.f32 0.0, %v3586
        %v3588 = vpop.f32.mrf.mxu0
        %v3589 = vadd.f32 0.0, %v3588
        %3590 = vdwg.mxu0
        %3591 = vmatpush.bf16.msra.mxu0 0
        %3592 = vmatpush.bf16.msra.mxu0 0
        %3593 = vmatpush.bf16.msra.mxu0 0
        %3594 = vmatpush.bf16.msra.mxu0 0
        %3595 = vmatpush.bf16.msra.mxu0 0
        %3596 = vmatpush.bf16.msra.mxu0 0
        %3597 = vmatpush.bf16.msra.mxu0 %v3277
        %3598 = vmatpush.bf16.msra.mxu0 %v3173
        %3599 = vmatmul.bf16.gmra.mxu0 %v3235
        %v3600 = vpop.f32.mrf.mxu0
        %v3601 = vadd.f32 0.0, %v3600
        %v3602 = vpop.f32.mrf.mxu0
        %v3603 = vadd.f32 0.0, %v3602
        %3604 = vmatmul.bf16.gmra.mxu0 %v3238
        %v3605 = vpop.f32.mrf.mxu0
        %v3606 = vadd.f32 0.0, %v3605
        %v3607 = vpop.f32.mrf.mxu0
        %v3608 = vadd.f32 0.0, %v3607
        %3609 = vmatmul.bf16.gmra.mxu0 %v3241
        %v3610 = vpop.f32.mrf.mxu0
        %v3611 = vadd.f32 0.0, %v3610
        %v3612 = vpop.f32.mrf.mxu0
        %v3613 = vadd.f32 0.0, %v3612
        %3614 = vmatmul.bf16.gmra.mxu0 %v3244
        %v3615 = vpop.f32.mrf.mxu0
        %v3616 = vadd.f32 0.0, %v3615
        %v3617 = vpop.f32.mrf.mxu0
        %v3618 = vadd.f32 0.0, %v3617
        %3619 = vmatmul.bf16.gmra.mxu0 %v3247
        %v3620 = vpop.f32.mrf.mxu0
        %v3621 = vadd.f32 0.0, %v3620
        %v3622 = vpop.f32.mrf.mxu0
        %v3623 = vadd.f32 0.0, %v3622
        %3624 = vmatmul.bf16.gmra.mxu0 %v3250
        %v3625 = vpop.f32.mrf.mxu0
        %v3626 = vadd.f32 0.0, %v3625
        %v3627 = vpop.f32.mrf.mxu0
        %v3628 = vadd.f32 0.0, %v3627
        %3629 = vmatmul.bf16.gmra.mxu0 %v3253
        %v3630 = vpop.f32.mrf.mxu0
        %v3631 = vadd.f32 0.0, %v3630
        %v3632 = vpop.f32.mrf.mxu0
        %v3633 = vadd.f32 0.0, %v3632
        %3634 = vmatmul.bf16.gmra.mxu0 %v3256
        %v3635 = vpop.f32.mrf.mxu0
        %v3636 = vadd.f32 0.0, %v3635
        %v3637 = vpop.f32.mrf.mxu0
        %v3638 = vadd.f32 0.0, %v3637
        %3639 = vdwg.mxu0
        %3640 = vmatpush.bf16.msra.mxu0 0
        %3641 = vmatpush.bf16.msra.mxu0 0
        %3642 = vmatpush.bf16.msra.mxu0 0
        %3643 = vmatpush.bf16.msra.mxu0 0
        %3644 = vmatpush.bf16.msra.mxu0 0
        %3645 = vmatpush.bf16.msra.mxu0 0
        %3646 = vmatpush.bf16.msra.mxu0 %v3280
        %3647 = vmatpush.bf16.msra.mxu0 %v3174
        %3648 = vmatmul.bf16.gmra.mxu0 %v3235
        %v3649 = vpop.f32.mrf.mxu0
        %v3650 = vadd.f32 0.0, %v3649
        %v3651 = vpop.f32.mrf.mxu0
        %v3652 = vadd.f32 0.0, %v3651
        %3653 = vmatmul.bf16.gmra.mxu0 %v3238
        %v3654 = vpop.f32.mrf.mxu0
        %v3655 = vadd.f32 0.0, %v3654
        %v3656 = vpop.f32.mrf.mxu0
        %v3657 = vadd.f32 0.0, %v3656
        %3658 = vmatmul.bf16.gmra.mxu0 %v3241
        %v3659 = vpop.f32.mrf.mxu0
        %v3660 = vadd.f32 0.0, %v3659
        %v3661 = vpop.f32.mrf.mxu0
        %v3662 = vadd.f32 0.0, %v3661
        %3663 = vmatmul.bf16.gmra.mxu0 %v3244
        %v3664 = vpop.f32.mrf.mxu0
        %v3665 = vadd.f32 0.0, %v3664
        %v3666 = vpop.f32.mrf.mxu0
        %v3667 = vadd.f32 0.0, %v3666
        %3668 = vmatmul.bf16.gmra.mxu0 %v3247
        %v3669 = vpop.f32.mrf.mxu0
        %v3670 = vadd.f32 0.0, %v3669
        %v3671 = vpop.f32.mrf.mxu0
        %v3672 = vadd.f32 0.0, %v3671
        %3673 = vmatmul.bf16.gmra.mxu0 %v3250
        %v3674 = vpop.f32.mrf.mxu0
        %v3675 = vadd.f32 0.0, %v3674
        %v3676 = vpop.f32.mrf.mxu0
        %v3677 = vadd.f32 0.0, %v3676
        %3678 = vmatmul.bf16.gmra.mxu0 %v3253
        %v3679 = vpop.f32.mrf.mxu0
        %v3680 = vadd.f32 0.0, %v3679
        %v3681 = vpop.f32.mrf.mxu0
        %v3682 = vadd.f32 0.0, %v3681
        %3683 = vmatmul.bf16.gmra.mxu0 %v3256
        %v3684 = vpop.f32.mrf.mxu0
        %v3685 = vadd.f32 0.0, %v3684
        %v3686 = vpop.f32.mrf.mxu0
        %v3687 = vadd.f32 0.0, %v3686
        %3688 = vdwg.mxu0
        %3689 = vmatpush.bf16.msra.mxu0 0
        %3690 = vmatpush.bf16.msra.mxu0 0
        %3691 = vmatpush.bf16.msra.mxu0 0
        %3692 = vmatpush.bf16.msra.mxu0 0
        %3693 = vmatpush.bf16.msra.mxu0 0
        %3694 = vmatpush.bf16.msra.mxu0 0
        %3695 = vmatpush.bf16.msra.mxu0 %v3283
        %3696 = vmatpush.bf16.msra.mxu0 %v3175
        %3697 = vmatmul.bf16.gmra.mxu0 %v3235
        %v3698 = vpop.f32.mrf.mxu0
        %v3699 = vadd.f32 0.0, %v3698
        %v3700 = vpop.f32.mrf.mxu0
        %v3701 = vadd.f32 0.0, %v3700
        %3702 = vmatmul.bf16.gmra.mxu0 %v3238
        %v3703 = vpop.f32.mrf.mxu0
        %v3704 = vadd.f32 0.0, %v3703
        %v3705 = vpop.f32.mrf.mxu0
        %v3706 = vadd.f32 0.0, %v3705
        %3707 = vmatmul.bf16.gmra.mxu0 %v3241
        %v3708 = vpop.f32.mrf.mxu0
        %v3709 = vadd.f32 0.0, %v3708
        %v3710 = vpop.f32.mrf.mxu0
        %v3711 = vadd.f32 0.0, %v3710
        %3712 = vmatmul.bf16.gmra.mxu0 %v3244
        %v3713 = vpop.f32.mrf.mxu0
        %v3714 = vadd.f32 0.0, %v3713
        %v3715 = vpop.f32.mrf.mxu0
        %v3716 = vadd.f32 0.0, %v3715
        %3717 = vmatmul.bf16.gmra.mxu0 %v3247
        %v3718 = vpop.f32.mrf.mxu0
        %v3719 = vadd.f32 0.0, %v3718
        %v3720 = vpop.f32.mrf.mxu0
        %v3721 = vadd.f32 0.0, %v3720
        %3722 = vmatmul.bf16.gmra.mxu0 %v3250
        %v3723 = vpop.f32.mrf.mxu0
        %v3724 = vadd.f32 0.0, %v3723
        %v3725 = vpop.f32.mrf.mxu0
        %v3726 = vadd.f32 0.0, %v3725
        %3727 = vmatmul.bf16.gmra.mxu0 %v3253
        %v3728 = vpop.f32.mrf.mxu0
        %v3729 = vadd.f32 0.0, %v3728
        %v3730 = vpop.f32.mrf.mxu0
        %v3731 = vadd.f32 0.0, %v3730
        %3732 = vmatmul.bf16.gmra.mxu0 %v3256
        %v3733 = vpop.f32.mrf.mxu0
        %v3734 = vadd.f32 0.0, %v3733
        %v3735 = vpop.f32.mrf.mxu0
        %v3736 = vadd.f32 0.0, %v3735
        %3737 = vdwg.mxu0
        %3738 = vmatpush.bf16.msra.mxu0 0
        %3739 = vmatpush.bf16.msra.mxu0 0
        %3740 = vmatpush.bf16.msra.mxu0 0
        %3741 = vmatpush.bf16.msra.mxu0 0
        %3742 = vmatpush.bf16.msra.mxu0 0
        %3743 = vmatpush.bf16.msra.mxu0 0
        %3744 = vmatpush.bf16.msra.mxu0 %v3286
        %3745 = vmatpush.bf16.msra.mxu0 %v3176
        %3746 = vmatmul.bf16.gmra.mxu0 %v3235
        %v3747 = vpop.f32.mrf.mxu0
        %v3748 = vadd.f32 0.0, %v3747
        %v3749 = vpop.f32.mrf.mxu0
        %v3750 = vadd.f32 0.0, %v3749
        %3751 = vmatmul.bf16.gmra.mxu0 %v3238
        %v3752 = vpop.f32.mrf.mxu0
        %v3753 = vadd.f32 0.0, %v3752
        %v3754 = vpop.f32.mrf.mxu0
        %v3755 = vadd.f32 0.0, %v3754
        %3756 = vmatmul.bf16.gmra.mxu0 %v3241
        %v3757 = vpop.f32.mrf.mxu0
        %v3758 = vadd.f32 0.0, %v3757
        %v3759 = vpop.f32.mrf.mxu0
        %v3760 = vadd.f32 0.0, %v3759
        %3761 = vmatmul.bf16.gmra.mxu0 %v3244
        %v3762 = vpop.f32.mrf.mxu0
        %v3763 = vadd.f32 0.0, %v3762
        %v3764 = vpop.f32.mrf.mxu0
        %v3765 = vadd.f32 0.0, %v3764
        %3766 = vmatmul.bf16.gmra.mxu0 %v3247
        %v3767 = vpop.f32.mrf.mxu0
        %v3768 = vadd.f32 0.0, %v3767
        %v3769 = vpop.f32.mrf.mxu0
        %v3770 = vadd.f32 0.0, %v3769
        %3771 = vmatmul.bf16.gmra.mxu0 %v3250
        %v3772 = vpop.f32.mrf.mxu0
        %v3773 = vadd.f32 0.0, %v3772
        %v3774 = vpop.f32.mrf.mxu0
        %v3775 = vadd.f32 0.0, %v3774
        %3776 = vmatmul.bf16.gmra.mxu0 %v3253
        %v3777 = vpop.f32.mrf.mxu0
        %v3778 = vadd.f32 0.0, %v3777
        %v3779 = vpop.f32.mrf.mxu0
        %v3780 = vadd.f32 0.0, %v3779
        %3781 = vmatmul.bf16.gmra.mxu0 %v3256
        %v3782 = vpop.f32.mrf.mxu0
        %v3783 = vadd.f32 0.0, %v3782
        %v3784 = vpop.f32.mrf.mxu0
        %v3785 = vadd.f32 0.0, %v3784
        %3786 = vdwg.mxu0
        %3787 = vmatpush.bf16.msra.mxu0 0
        %3788 = vmatpush.bf16.msra.mxu0 0
        %3789 = vmatpush.bf16.msra.mxu0 0
        %3790 = vmatpush.bf16.msra.mxu0 0
        %3791 = vmatpush.bf16.msra.mxu0 0
        %3792 = vmatpush.bf16.msra.mxu0 0
        %3793 = vmatpush.bf16.msra.mxu0 %v3289
        %3794 = vmatpush.bf16.msra.mxu0 %v3177
        %3795 = vmatmul.bf16.gmra.mxu0 %v3235
        %v3796 = vpop.f32.mrf.mxu0
        %v3797 = vadd.f32 0.0, %v3796
        %v3798 = vpop.f32.mrf.mxu0
        %v3799 = vadd.f32 0.0, %v3798
        %3800 = vmatmul.bf16.gmra.mxu0 %v3238
        %v3801 = vpop.f32.mrf.mxu0
        %v3802 = vadd.f32 0.0, %v3801
        %v3803 = vpop.f32.mrf.mxu0
        %v3804 = vadd.f32 0.0, %v3803
        %3805 = vmatmul.bf16.gmra.mxu0 %v3241
        %v3806 = vpop.f32.mrf.mxu0
        %v3807 = vadd.f32 0.0, %v3806
        %v3808 = vpop.f32.mrf.mxu0
        %v3809 = vadd.f32 0.0, %v3808
        %3810 = vmatmul.bf16.gmra.mxu0 %v3244
        %v3811 = vpop.f32.mrf.mxu0
        %v3812 = vadd.f32 0.0, %v3811
        %v3813 = vpop.f32.mrf.mxu0
        %v3814 = vadd.f32 0.0, %v3813
        %3815 = vmatmul.bf16.gmra.mxu0 %v3247
        %v3816 = vpop.f32.mrf.mxu0
        %v3817 = vadd.f32 0.0, %v3816
        %v3818 = vpop.f32.mrf.mxu0
        %v3819 = vadd.f32 0.0, %v3818
        %3820 = vmatmul.bf16.gmra.mxu0 %v3250
        %v3821 = vpop.f32.mrf.mxu0
        %v3822 = vadd.f32 0.0, %v3821
        %v3823 = vpop.f32.mrf.mxu0
        %v3824 = vadd.f32 0.0, %v3823
        %3825 = vmatmul.bf16.gmra.mxu0 %v3253
        %v3826 = vpop.f32.mrf.mxu0
        %v3827 = vadd.f32 0.0, %v3826
        %v3828 = vpop.f32.mrf.mxu0
        %v3829 = vadd.f32 0.0, %v3828
        %3830 = vmatmul.bf16.gmra.mxu0 %v3256
        %v3831 = vpop.f32.mrf.mxu0
        %v3832 = vadd.f32 0.0, %v3831
        %v3833 = vpop.f32.mrf.mxu0
        %v3834 = vadd.f32 0.0, %v3833
        %3835 = vdwg.mxu0
        %3836 = vmatpush.bf16.msra.mxu0 0
        %3837 = vmatpush.bf16.msra.mxu0 0
        %3838 = vmatpush.bf16.msra.mxu0 0
        %3839 = vmatpush.bf16.msra.mxu0 0
        %3840 = vmatpush.bf16.msra.mxu0 0
        %3841 = vmatpush.bf16.msra.mxu0 0
        %3842 = vmatpush.bf16.msra.mxu0 %v3292
        %3843 = vmatpush.bf16.msra.mxu0 %v3178
        %3844 = vmatmul.bf16.gmra.mxu0 %v3235
        %v3845 = vpop.f32.mrf.mxu0
        %v3846 = vadd.f32 0.0, %v3845
        %v3847 = vpop.f32.mrf.mxu0
        %v3848 = vadd.f32 0.0, %v3847
        %3849 = vmatmul.bf16.gmra.mxu0 %v3238
        %v3850 = vpop.f32.mrf.mxu0
        %v3851 = vadd.f32 0.0, %v3850
        %v3852 = vpop.f32.mrf.mxu0
        %v3853 = vadd.f32 0.0, %v3852
        %3854 = vmatmul.bf16.gmra.mxu0 %v3241
        %v3855 = vpop.f32.mrf.mxu0
        %v3856 = vadd.f32 0.0, %v3855
        %v3857 = vpop.f32.mrf.mxu0
        %v3858 = vadd.f32 0.0, %v3857
        %3859 = vmatmul.bf16.gmra.mxu0 %v3244
        %v3860 = vpop.f32.mrf.mxu0
        %v3861 = vadd.f32 0.0, %v3860
        %v3862 = vpop.f32.mrf.mxu0
        %v3863 = vadd.f32 0.0, %v3862
        %3864 = vmatmul.bf16.gmra.mxu0 %v3247
        %v3865 = vpop.f32.mrf.mxu0
        %v3866 = vadd.f32 0.0, %v3865
        %v3867 = vpop.f32.mrf.mxu0
        %v3868 = vadd.f32 0.0, %v3867
        %3869 = vmatmul.bf16.gmra.mxu0 %v3250
        %v3870 = vpop.f32.mrf.mxu0
        %v3871 = vadd.f32 0.0, %v3870
        %v3872 = vpop.f32.mrf.mxu0
        %v3873 = vadd.f32 0.0, %v3872
        %3874 = vmatmul.bf16.gmra.mxu0 %v3253
        %v3875 = vpop.f32.mrf.mxu0
        %v3876 = vadd.f32 0.0, %v3875
        %v3877 = vpop.f32.mrf.mxu0
        %v3878 = vadd.f32 0.0, %v3877
        %3879 = vmatmul.bf16.gmra.mxu0 %v3256
        %v3880 = vpop.f32.mrf.mxu0
        %v3881 = vadd.f32 0.0, %v3880
        %v3882 = vpop.f32.mrf.mxu0
        %v3883 = vadd.f32 0.0, %v3882
        %3884 = vdwg.mxu0
        %3885 = vmatpush.bf16.msra.mxu0 0
        %3886 = vmatpush.bf16.msra.mxu0 0
        %3887 = vmatpush.bf16.msra.mxu0 0
        %3888 = vmatpush.bf16.msra.mxu0 0
        %3889 = vmatpush.bf16.msra.mxu0 0
        %3890 = vmatpush.bf16.msra.mxu0 0
        %3891 = vmatpush.bf16.msra.mxu0 %v3295
        %3892 = vmatpush.bf16.msra.mxu0 %v3179
        %3893 = vmatmul.bf16.gmra.mxu0 %v3235
        %v3894 = vpop.f32.mrf.mxu0
        %v3895 = vadd.f32 0.0, %v3894
        %v3896 = vpop.f32.mrf.mxu0
        %v3897 = vadd.f32 0.0, %v3896
        %3898 = vmatmul.bf16.gmra.mxu0 %v3238
        %v3899 = vpop.f32.mrf.mxu0
        %v3900 = vadd.f32 0.0, %v3899
        %v3901 = vpop.f32.mrf.mxu0
        %v3902 = vadd.f32 0.0, %v3901
        %3903 = vmatmul.bf16.gmra.mxu0 %v3241
        %v3904 = vpop.f32.mrf.mxu0
        %v3905 = vadd.f32 0.0, %v3904
        %v3906 = vpop.f32.mrf.mxu0
        %v3907 = vadd.f32 0.0, %v3906
        %3908 = vmatmul.bf16.gmra.mxu0 %v3244
        %v3909 = vpop.f32.mrf.mxu0
        %v3910 = vadd.f32 0.0, %v3909
        %v3911 = vpop.f32.mrf.mxu0
        %v3912 = vadd.f32 0.0, %v3911
        %3913 = vmatmul.bf16.gmra.mxu0 %v3247
        %v3914 = vpop.f32.mrf.mxu0
        %v3915 = vadd.f32 0.0, %v3914
        %v3916 = vpop.f32.mrf.mxu0
        %v3917 = vadd.f32 0.0, %v3916
        %3918 = vmatmul.bf16.gmra.mxu0 %v3250
        %v3919 = vpop.f32.mrf.mxu0
        %v3920 = vadd.f32 0.0, %v3919
        %v3921 = vpop.f32.mrf.mxu0
        %v3922 = vadd.f32 0.0, %v3921
        %3923 = vmatmul.bf16.gmra.mxu0 %v3253
        %v3924 = vpop.f32.mrf.mxu0
        %v3925 = vadd.f32 0.0, %v3924
        %v3926 = vpop.f32.mrf.mxu0
        %v3927 = vadd.f32 0.0, %v3926
        %3928 = vmatmul.bf16.gmra.mxu0 %v3256
        %v3929 = vpop.f32.mrf.mxu0
        %v3930 = vadd.f32 0.0, %v3929
        %v3931 = vpop.f32.mrf.mxu0
        %v3932 = vadd.f32 0.0, %v3931
        %3933 = vdwg.mxu0
        %v3934 = vmax.f32 %v3307, 0.0
        %v3935 = vmax.f32 %v3356, 0.0
        %v3936 = vmax.f32 %v3405, 0.0
        %v3937 = vmax.f32 %v3454, 0.0
        %v3938 = vmax.f32 %v3503, 0.0
        %v3939 = vmax.f32 %v3552, 0.0
        %v3940 = vmax.f32 %v3601, 0.0
        %v3941 = vmax.f32 %v3650, 0.0
        %v3942 = vmax.f32 %v3699, 0.0
        %v3943 = vmax.f32 %v3748, 0.0
        %v3944 = vmax.f32 %v3797, 0.0
        %v3945 = vmax.f32 %v3846, 0.0
        %v3946 = vmax.f32 %v3895, 0.0
        %v3947 = vmax.f32 %v3309, 0.0
        %v3948 = vmax.f32 %v3358, 0.0
        %v3949 = vmax.f32 %v3407, 0.0
        %v3950 = vmax.f32 %v3456, 0.0
        %v3951 = vmax.f32 %v3505, 0.0
        %v3952 = vmax.f32 %v3554, 0.0
        %v3953 = vmax.f32 %v3603, 0.0
        %v3954 = vmax.f32 %v3652, 0.0
        %v3955 = vmax.f32 %v3701, 0.0
        %v3956 = vmax.f32 %v3750, 0.0
        %v3957 = vmax.f32 %v3799, 0.0
        %v3958 = vmax.f32 %v3848, 0.0
        %v3959 = vmax.f32 %v3897, 0.0
        %v3960 = vmax.f32 %v3312, 0.0
        %v3961 = vmax.f32 %v3361, 0.0
        %v3962 = vmax.f32 %v3410, 0.0
        %v3963 = vmax.f32 %v3459, 0.0
        %v3964 = vmax.f32 %v3508, 0.0
        %v3965 = vmax.f32 %v3557, 0.0
        %v3966 = vmax.f32 %v3606, 0.0
        %v3967 = vmax.f32 %v3655, 0.0
        %v3968 = vmax.f32 %v3704, 0.0
        %v3969 = vmax.f32 %v3753, 0.0
        %v3970 = vmax.f32 %v3802, 0.0
        %v3971 = vmax.f32 %v3851, 0.0
        %v3972 = vmax.f32 %v3900, 0.0
        %v3973 = vmax.f32 %v3314, 0.0
        %v3974 = vmax.f32 %v3363, 0.0
        %v3975 = vmax.f32 %v3412, 0.0
        %v3976 = vmax.f32 %v3461, 0.0
        %v3977 = vmax.f32 %v3510, 0.0
        %v3978 = vmax.f32 %v3559, 0.0
        %v3979 = vmax.f32 %v3608, 0.0
        %v3980 = vmax.f32 %v3657, 0.0
        %v3981 = vmax.f32 %v3706, 0.0
        %v3982 = vmax.f32 %v3755, 0.0
        %v3983 = vmax.f32 %v3804, 0.0
        %v3984 = vmax.f32 %v3853, 0.0
        %v3985 = vmax.f32 %v3902, 0.0
        %v3986 = vmax.f32 %v3317, 0.0
        %v3987 = vmax.f32 %v3366, 0.0
        %v3988 = vmax.f32 %v3415, 0.0
        %v3989 = vmax.f32 %v3464, 0.0
        %v3990 = vmax.f32 %v3513, 0.0
        %v3991 = vmax.f32 %v3562, 0.0
        %v3992 = vmax.f32 %v3611, 0.0
        %v3993 = vmax.f32 %v3660, 0.0
        %v3994 = vmax.f32 %v3709, 0.0
        %v3995 = vmax.f32 %v3758, 0.0
        %v3996 = vmax.f32 %v3807, 0.0
        %v3997 = vmax.f32 %v3856, 0.0
        %v3998 = vmax.f32 %v3905, 0.0
        %v3999 = vmax.f32 %v3319, 0.0
        %v4000 = vmax.f32 %v3368, 0.0
        %v4001 = vmax.f32 %v3417, 0.0
        %v4002 = vmax.f32 %v3466, 0.0
        %v4003 = vmax.f32 %v3515, 0.0
        %v4004 = vmax.f32 %v3564, 0.0
        %v4005 = vmax.f32 %v3613, 0.0
        %v4006 = vmax.f32 %v3662, 0.0
        %v4007 = vmax.f32 %v3711, 0.0
        %v4008 = vmax.f32 %v3760, 0.0
        %v4009 = vmax.f32 %v3809, 0.0
        %v4010 = vmax.f32 %v3858, 0.0
        %v4011 = vmax.f32 %v3907, 0.0
        %v4012 = vmax.f32 %v3322, 0.0
        %v4013 = vmax.f32 %v3371, 0.0
        %v4014 = vmax.f32 %v3420, 0.0
        %v4015 = vmax.f32 %v3469, 0.0
        %v4016 = vmax.f32 %v3518, 0.0
        %v4017 = vmax.f32 %v3567, 0.0
        %v4018 = vmax.f32 %v3616, 0.0
        %v4019 = vmax.f32 %v3665, 0.0
        %v4020 = vmax.f32 %v3714, 0.0
        %v4021 = vmax.f32 %v3763, 0.0
        %v4022 = vmax.f32 %v3812, 0.0
        %v4023 = vmax.f32 %v3861, 0.0
        %v4024 = vmax.f32 %v3910, 0.0
        %v4025 = vmax.f32 %v3324, 0.0
        %v4026 = vmax.f32 %v3373, 0.0
        %v4027 = vmax.f32 %v3422, 0.0
        %v4028 = vmax.f32 %v3471, 0.0
        %v4029 = vmax.f32 %v3520, 0.0
        %v4030 = vmax.f32 %v3569, 0.0
        %v4031 = vmax.f32 %v3618, 0.0
        %v4032 = vmax.f32 %v3667, 0.0
        %v4033 = vmax.f32 %v3716, 0.0
        %v4034 = vmax.f32 %v3765, 0.0
        %v4035 = vmax.f32 %v3814, 0.0
        %v4036 = vmax.f32 %v3863, 0.0
        %v4037 = vmax.f32 %v3912, 0.0
        %v4038 = vmax.f32 %v3327, 0.0
        %v4039 = vmax.f32 %v3376, 0.0
        %v4040 = vmax.f32 %v3425, 0.0
        %v4041 = vmax.f32 %v3474, 0.0
        %v4042 = vmax.f32 %v3523, 0.0
        %v4043 = vmax.f32 %v3572, 0.0
        %v4044 = vmax.f32 %v3621, 0.0
        %v4045 = vmax.f32 %v3670, 0.0
        %v4046 = vmax.f32 %v3719, 0.0
        %v4047 = vmax.f32 %v3768, 0.0
        %v4048 = vmax.f32 %v3817, 0.0
        %v4049 = vmax.f32 %v3866, 0.0
        %v4050 = vmax.f32 %v3915, 0.0
        %v4051 = vmax.f32 %v3329, 0.0
        %v4052 = vmax.f32 %v3378, 0.0
        %v4053 = vmax.f32 %v3427, 0.0
        %v4054 = vmax.f32 %v3476, 0.0
        %v4055 = vmax.f32 %v3525, 0.0
        %v4056 = vmax.f32 %v3574, 0.0
        %v4057 = vmax.f32 %v3623, 0.0
        %v4058 = vmax.f32 %v3672, 0.0
        %v4059 = vmax.f32 %v3721, 0.0
        %v4060 = vmax.f32 %v3770, 0.0
        %v4061 = vmax.f32 %v3819, 0.0
        %v4062 = vmax.f32 %v3868, 0.0
        %v4063 = vmax.f32 %v3917, 0.0
        %v4064 = vmax.f32 %v3332, 0.0
        %v4065 = vmax.f32 %v3381, 0.0
        %v4066 = vmax.f32 %v3430, 0.0
        %v4067 = vmax.f32 %v3479, 0.0
        %v4068 = vmax.f32 %v3528, 0.0
        %v4069 = vmax.f32 %v3577, 0.0
        %v4070 = vmax.f32 %v3626, 0.0
        %v4071 = vmax.f32 %v3675, 0.0
        %v4072 = vmax.f32 %v3724, 0.0
        %v4073 = vmax.f32 %v3773, 0.0
        %v4074 = vmax.f32 %v3822, 0.0
        %v4075 = vmax.f32 %v3871, 0.0
        %v4076 = vmax.f32 %v3920, 0.0
        %v4077 = vmax.f32 %v3334, 0.0
        %v4078 = vmax.f32 %v3383, 0.0
        %v4079 = vmax.f32 %v3432, 0.0
        %v4080 = vmax.f32 %v3481, 0.0
        %v4081 = vmax.f32 %v3530, 0.0
        %v4082 = vmax.f32 %v3579, 0.0
        %v4083 = vmax.f32 %v3628, 0.0
        %v4084 = vmax.f32 %v3677, 0.0
        %v4085 = vmax.f32 %v3726, 0.0
        %v4086 = vmax.f32 %v3775, 0.0
        %v4087 = vmax.f32 %v3824, 0.0
        %v4088 = vmax.f32 %v3873, 0.0
        %v4089 = vmax.f32 %v3922, 0.0
        %v4090 = vmax.f32 %v3337, 0.0
        %v4091 = vmax.f32 %v3386, 0.0
        %v4092 = vmax.f32 %v3435, 0.0
        %v4093 = vmax.f32 %v3484, 0.0
        %v4094 = vmax.f32 %v3533, 0.0
        %v4095 = vmax.f32 %v3582, 0.0
        %v4096 = vmax.f32 %v3631, 0.0
        %v4097 = vmax.f32 %v3680, 0.0
        %v4098 = vmax.f32 %v3729, 0.0
        %v4099 = vmax.f32 %v3778, 0.0
        %v4100 = vmax.f32 %v3827, 0.0
        %v4101 = vmax.f32 %v3876, 0.0
        %v4102 = vmax.f32 %v3925, 0.0
        %v4103 = vmax.f32 %v3339, 0.0
        %v4104 = vmax.f32 %v3388, 0.0
        %v4105 = vmax.f32 %v3437, 0.0
        %v4106 = vmax.f32 %v3486, 0.0
        %v4107 = vmax.f32 %v3535, 0.0
        %v4108 = vmax.f32 %v3584, 0.0
        %v4109 = vmax.f32 %v3633, 0.0
        %v4110 = vmax.f32 %v3682, 0.0
        %v4111 = vmax.f32 %v3731, 0.0
        %v4112 = vmax.f32 %v3780, 0.0
        %v4113 = vmax.f32 %v3829, 0.0
        %v4114 = vmax.f32 %v3878, 0.0
        %v4115 = vmax.f32 %v3927, 0.0
        %v4116 = vmax.f32 %v3342, 0.0
        %v4117 = vmax.f32 %v3391, 0.0
        %v4118 = vmax.f32 %v3440, 0.0
        %v4119 = vmax.f32 %v3489, 0.0
        %v4120 = vmax.f32 %v3538, 0.0
        %v4121 = vmax.f32 %v3587, 0.0
        %v4122 = vmax.f32 %v3636, 0.0
        %v4123 = vmax.f32 %v3685, 0.0
        %v4124 = vmax.f32 %v3734, 0.0
        %v4125 = vmax.f32 %v3783, 0.0
        %v4126 = vmax.f32 %v3832, 0.0
        %v4127 = vmax.f32 %v3881, 0.0
        %v4128 = vmax.f32 %v3930, 0.0
        %v4129 = vmax.f32 %v3344, 0.0
        %v4130 = vmax.f32 %v3393, 0.0
        %v4131 = vmax.f32 %v3442, 0.0
        %v4132 = vmax.f32 %v3491, 0.0
        %v4133 = vmax.f32 %v3540, 0.0
        %v4134 = vmax.f32 %v3589, 0.0
        %v4135 = vmax.f32 %v3638, 0.0
        %v4136 = vmax.f32 %v3687, 0.0
        %v4137 = vmax.f32 %v3736, 0.0
        %v4138 = vmax.f32 %v3785, 0.0
        %v4139 = vmax.f32 %v3834, 0.0
        %v4140 = vmax.f32 %v3883, 0.0
        %v4141 = vmax.f32 %v3932, 0.0
        %v4142 = vpack.c.bf16 %v3947, %v3934
        %v4143 = vpack.c.bf16 %v3948, %v3935
        %v4144 = vpack.c.bf16 %v3949, %v3936
        %v4145 = vpack.c.bf16 %v3950, %v3937
        %v4146 = vpack.c.bf16 %v3951, %v3938
        %v4147 = vpack.c.bf16 %v3952, %v3939
        %v4148 = vpack.c.bf16 %v3953, %v3940
        %v4149 = vpack.c.bf16 %v3954, %v3941
        %v4150 = vpack.c.bf16 %v3955, %v3942
        %v4151 = vpack.c.bf16 %v3956, %v3943
        %v4152 = vpack.c.bf16 %v3957, %v3944
        %v4153 = vpack.c.bf16 %v3958, %v3945
        %v4154 = vpack.c.bf16 %v3959, %v3946
        %v4155 = vpack.c.bf16 %v3973, %v3960
        %v4156 = vpack.c.bf16 %v3974, %v3961
        %v4157 = vpack.c.bf16 %v3975, %v3962
        %v4158 = vpack.c.bf16 %v3976, %v3963
        %v4159 = vpack.c.bf16 %v3977, %v3964
        %v4160 = vpack.c.bf16 %v3978, %v3965
        %v4161 = vpack.c.bf16 %v3979, %v3966
        %v4162 = vpack.c.bf16 %v3980, %v3967
        %v4163 = vpack.c.bf16 %v3981, %v3968
        %v4164 = vpack.c.bf16 %v3982, %v3969
        %v4165 = vpack.c.bf16 %v3983, %v3970
        %v4166 = vpack.c.bf16 %v3984, %v3971
        %v4167 = vpack.c.bf16 %v3985, %v3972
        %v4168 = vpack.c.bf16 %v3999, %v3986
        %v4169 = vpack.c.bf16 %v4000, %v3987
        %v4170 = vpack.c.bf16 %v4001, %v3988
        %v4171 = vpack.c.bf16 %v4002, %v3989
        %v4172 = vpack.c.bf16 %v4003, %v3990
        %v4173 = vpack.c.bf16 %v4004, %v3991
        %v4174 = vpack.c.bf16 %v4005, %v3992
        %v4175 = vpack.c.bf16 %v4006, %v3993
        %v4176 = vpack.c.bf16 %v4007, %v3994
        %v4177 = vpack.c.bf16 %v4008, %v3995
        %v4178 = vpack.c.bf16 %v4009, %v3996
        %v4179 = vpack.c.bf16 %v4010, %v3997
        %v4180 = vpack.c.bf16 %v4011, %v3998
        %v4181 = vpack.c.bf16 %v4025, %v4012
        %v4182 = vpack.c.bf16 %v4026, %v4013
        %v4183 = vpack.c.bf16 %v4027, %v4014
        %v4184 = vpack.c.bf16 %v4028, %v4015
        %v4185 = vpack.c.bf16 %v4029, %v4016
        %v4186 = vpack.c.bf16 %v4030, %v4017
        %v4187 = vpack.c.bf16 %v4031, %v4018
        %v4188 = vpack.c.bf16 %v4032, %v4019
        %v4189 = vpack.c.bf16 %v4033, %v4020
        %v4190 = vpack.c.bf16 %v4034, %v4021
        %v4191 = vpack.c.bf16 %v4035, %v4022
        %v4192 = vpack.c.bf16 %v4036, %v4023
        %v4193 = vpack.c.bf16 %v4037, %v4024
        %v4194 = vpack.c.bf16 %v4051, %v4038
        %v4195 = vpack.c.bf16 %v4052, %v4039
        %v4196 = vpack.c.bf16 %v4053, %v4040
        %v4197 = vpack.c.bf16 %v4054, %v4041
        %v4198 = vpack.c.bf16 %v4055, %v4042
        %v4199 = vpack.c.bf16 %v4056, %v4043
        %v4200 = vpack.c.bf16 %v4057, %v4044
        %v4201 = vpack.c.bf16 %v4058, %v4045
        %v4202 = vpack.c.bf16 %v4059, %v4046
        %v4203 = vpack.c.bf16 %v4060, %v4047
        %v4204 = vpack.c.bf16 %v4061, %v4048
        %v4205 = vpack.c.bf16 %v4062, %v4049
        %v4206 = vpack.c.bf16 %v4063, %v4050
        %v4207 = vpack.c.bf16 %v4077, %v4064
        %v4208 = vpack.c.bf16 %v4078, %v4065
        %v4209 = vpack.c.bf16 %v4079, %v4066
        %v4210 = vpack.c.bf16 %v4080, %v4067
        %v4211 = vpack.c.bf16 %v4081, %v4068
        %v4212 = vpack.c.bf16 %v4082, %v4069
        %v4213 = vpack.c.bf16 %v4083, %v4070
        %v4214 = vpack.c.bf16 %v4084, %v4071
        %v4215 = vpack.c.bf16 %v4085, %v4072
        %v4216 = vpack.c.bf16 %v4086, %v4073
        %v4217 = vpack.c.bf16 %v4087, %v4074
        %v4218 = vpack.c.bf16 %v4088, %v4075
        %v4219 = vpack.c.bf16 %v4089, %v4076
        %v4220 = vpack.c.bf16 %v4103, %v4090
        %v4221 = vpack.c.bf16 %v4104, %v4091
        %v4222 = vpack.c.bf16 %v4105, %v4092
        %v4223 = vpack.c.bf16 %v4106, %v4093
        %v4224 = vpack.c.bf16 %v4107, %v4094
        %v4225 = vpack.c.bf16 %v4108, %v4095
        %v4226 = vpack.c.bf16 %v4109, %v4096
        %v4227 = vpack.c.bf16 %v4110, %v4097
        %v4228 = vpack.c.bf16 %v4111, %v4098
        %v4229 = vpack.c.bf16 %v4112, %v4099
        %v4230 = vpack.c.bf16 %v4113, %v4100
        %v4231 = vpack.c.bf16 %v4114, %v4101
        %v4232 = vpack.c.bf16 %v4115, %v4102
        %v4233 = vpack.c.bf16 %v4129, %v4116
        %v4234 = vpack.c.bf16 %v4130, %v4117
        %v4235 = vpack.c.bf16 %v4131, %v4118
        %v4236 = vpack.c.bf16 %v4132, %v4119
        %v4237 = vpack.c.bf16 %v4133, %v4120
        %v4238 = vpack.c.bf16 %v4134, %v4121
        %v4239 = vpack.c.bf16 %v4135, %v4122
        %v4240 = vpack.c.bf16 %v4136, %v4123
        %v4241 = vpack.c.bf16 %v4137, %v4124
        %v4242 = vpack.c.bf16 %v4138, %v4125
        %v4243 = vpack.c.bf16 %v4139, %v4126
        %v4244 = vpack.c.bf16 %v4140, %v4127
        %v4245 = vpack.c.bf16 %v4141, %v4128
        %v4246 = vperm.slane %v482, 3
        %v4247 = vperm.slane %v483, 3
        %v4448 = vunpack.c.l.b16 %v2067
        %v4449 = vunpack.c.h.b16 %v2067
        %v4450 = vunpack.c.l.b16 %v2068
        %v4451 = vunpack.c.h.b16 %v2068
        %v4452 = vunpack.c.l.b16 %v2069
        %v4453 = vunpack.c.h.b16 %v2069
        %v4454 = vunpack.c.l.b16 %v2070
        %v4455 = vunpack.c.h.b16 %v2070
        %v4456 = vunpack.c.l.b16 %v2071
        %v4457 = vunpack.c.h.b16 %v2071
        %v4458 = vunpack.c.l.b16 %v2072
        %v4459 = vunpack.c.h.b16 %v2072
        %v4460 = vunpack.c.l.b16 %v2073
        %v4461 = vunpack.c.h.b16 %v2073
        %v4462 = vunpack.c.l.b16 %v2074
        %v4463 = vunpack.c.h.b16 %v2074
        %v4464 = vunpack.c.l.b16 %v2075
        %v4465 = vunpack.c.h.b16 %v2075
        %v4466 = vunpack.c.l.b16 %v2076
        %v4467 = vunpack.c.h.b16 %v2076
        %v4468 = vunpack.c.l.b16 %v2077
        %v4469 = vunpack.c.h.b16 %v2077
        %v4470 = vunpack.c.l.b16 %v2078
        %v4471 = vunpack.c.h.b16 %v2078
        %v4472 = vunpack.c.l.b16 %v2079
        %v4473 = vunpack.c.h.b16 %v2079
        %v4474 = vunpack.c.l.b16 %v2080
        %v4475 = vunpack.c.h.b16 %v2080
        %v4476 = vunpack.c.l.b16 %v2081
        %v4477 = vunpack.c.h.b16 %v2081
        %v4478 = vunpack.c.l.b16 %v2082
        %v4479 = vunpack.c.h.b16 %v2082
        %v4480 = vunpack.c.l.b16 %v2083
        %v4481 = vunpack.c.h.b16 %v2083
        %v4482 = vunpack.c.l.b16 %v2084
        %v4483 = vunpack.c.h.b16 %v2084
        %v4484 = vunpack.c.l.b16 %v2085
        %v4485 = vunpack.c.h.b16 %v2085
        %v4486 = vunpack.c.l.b16 %v2086
        %v4487 = vunpack.c.h.b16 %v2086
        %v4488 = vunpack.c.l.b16 %v2087
        %v4489 = vunpack.c.h.b16 %v2087
        %v4490 = vunpack.c.l.b16 %v2088
        %v4491 = vunpack.c.h.b16 %v2088
        %v4492 = vunpack.c.l.b16 %v2089
        %v4493 = vunpack.c.h.b16 %v2089
        %v4494 = vunpack.c.l.b16 %v2090
        %v4495 = vunpack.c.h.b16 %v2090
        %v4496 = vunpack.c.l.b16 %v2091
        %v4497 = vunpack.c.h.b16 %v2091
        %v4498 = vunpack.c.l.b16 %v2092
        %v4499 = vunpack.c.h.b16 %v2092
        %v4500 = vunpack.c.l.b16 %v2093
        %v4501 = vunpack.c.h.b16 %v2093
        %v4502 = vunpack.c.l.b16 %v2094
        %v4503 = vunpack.c.h.b16 %v2094
        %v4504 = vunpack.c.l.b16 %v2095
        %v4505 = vunpack.c.h.b16 %v2095
        %v4506 = vunpack.c.l.b16 %v2096
        %v4507 = vunpack.c.h.b16 %v2096
        %v4508 = vunpack.c.l.b16 %v2097
        %v4509 = vunpack.c.h.b16 %v2097
        %v4510 = vunpack.c.l.b16 %v2098
        %v4511 = vunpack.c.h.b16 %v2098
        %v4512 = vunpack.c.l.b16 %v2099
        %v4513 = vunpack.c.h.b16 %v2099
        %v4514 = vunpack.c.l.b16 %v2100
        %v4515 = vunpack.c.h.b16 %v2100
        %v4516 = vunpack.c.l.b16 %v2101
        %v4517 = vunpack.c.h.b16 %v2101
        %v4518 = vunpack.c.l.b16 %v2102
        %v4519 = vunpack.c.h.b16 %v2102
        %v4520 = vunpack.c.l.b16 %v2103
        %v4521 = vunpack.c.h.b16 %v2103
        %v4522 = vunpack.c.l.b16 %v2104
        %v4523 = vunpack.c.h.b16 %v2104
        %v4524 = vunpack.c.l.b16 %v2105
        %v4525 = vunpack.c.h.b16 %v2105
        %v4526 = vunpack.c.l.b16 %v2106
        %v4527 = vunpack.c.h.b16 %v2106
        %v4528 = vunpack.c.l.b16 %v2107
        %v4529 = vunpack.c.h.b16 %v2107
        %v4530 = vunpack.c.l.b16 %v2108
        %v4531 = vunpack.c.h.b16 %v2108
        %v4532 = vunpack.c.l.b16 %v2109
        %v4533 = vunpack.c.h.b16 %v2109
        %v4534 = vunpack.c.l.b16 %v2110
        %v4535 = vunpack.c.h.b16 %v2110
        %v4536 = vunpack.c.l.b16 %v2111
        %v4537 = vunpack.c.h.b16 %v2111
        %v4538 = vunpack.c.l.b16 %v2112
        %v4539 = vunpack.c.h.b16 %v2112
        %v4540 = vunpack.c.l.b16 %v2113
        %v4541 = vunpack.c.h.b16 %v2113
        %v4542 = vunpack.c.l.b16 %v2114
        %v4543 = vunpack.c.h.b16 %v2114
        %v4544 = vunpack.c.l.b16 %v2115
        %v4545 = vunpack.c.h.b16 %v2115
        %v4546 = vunpack.c.l.b16 %v2116
        %v4547 = vunpack.c.h.b16 %v2116
        %v4548 = vunpack.c.l.b16 %v2117
        %v4549 = vunpack.c.h.b16 %v2117
        %v4550 = vunpack.c.l.b16 %v2118
        %v4551 = vunpack.c.h.b16 %v2118
        %v4552 = vunpack.c.l.b16 %v2119
        %v4553 = vunpack.c.h.b16 %v2119
        %v4554 = vunpack.c.l.b16 %v2120
        %v4555 = vunpack.c.h.b16 %v2120
        %v4556 = vunpack.c.l.b16 %v2121
        %v4557 = vunpack.c.h.b16 %v2121
        %v4558 = vunpack.c.l.b16 %v2122
        %v4559 = vunpack.c.h.b16 %v2122
        %v4560 = vunpack.c.l.b16 %v2123
        %v4561 = vunpack.c.h.b16 %v2123
        %v4562 = vunpack.c.l.b16 %v2124
        %v4563 = vunpack.c.h.b16 %v2124
        %v4564 = vunpack.c.l.b16 %v2125
        %v4565 = vunpack.c.h.b16 %v2125
        %v4566 = vunpack.c.l.b16 %v2126
        %v4567 = vunpack.c.h.b16 %v2126
        %v4568 = vunpack.c.l.b16 %v2127
        %v4569 = vunpack.c.h.b16 %v2127
        %v4570 = vunpack.c.l.b16 %v2128
        %v4571 = vunpack.c.h.b16 %v2128
        %v4572 = vunpack.c.l.b16 %v2129
        %v4573 = vunpack.c.h.b16 %v2129
        %v4574 = vunpack.c.l.b16 %v2130
        %v4575 = vunpack.c.h.b16 %v2130
        %v4576 = vunpack.c.l.b16 %v2131
        %v4577 = vunpack.c.h.b16 %v2131
        %v4578 = vunpack.c.l.b16 %v2132
        %v4579 = vunpack.c.h.b16 %v2132
        %v4580 = vunpack.c.l.b16 %v2133
        %v4581 = vunpack.c.h.b16 %v2133
        %v4582 = vunpack.c.l.b16 %v2134
        %v4583 = vunpack.c.h.b16 %v2134
        %v4584 = vunpack.c.l.b16 %v2135
        %v4585 = vunpack.c.h.b16 %v2135
        %v4586 = vunpack.c.l.b16 %v2136
        %v4587 = vunpack.c.h.b16 %v2136
        %v4588 = vunpack.c.l.b16 %v2137
        %v4589 = vunpack.c.h.b16 %v2137
        %v4590 = vunpack.c.l.b16 %v2138
        %v4591 = vunpack.c.h.b16 %v2138
        %v4592 = vunpack.c.l.b16 %v2139
        %v4593 = vunpack.c.h.b16 %v2139
        %v4594 = vunpack.c.l.b16 %v2140
        %v4595 = vunpack.c.h.b16 %v2140
        %v4596 = vunpack.c.l.b16 %v2141
        %v4597 = vunpack.c.h.b16 %v2141
        %v4598 = vunpack.c.l.b16 %v2142
        %v4599 = vunpack.c.h.b16 %v2142
        %v4600 = vunpack.c.l.b16 %v2143
        %v4601 = vunpack.c.h.b16 %v2143
        %v4602 = vunpack.c.l.b16 %v2144
        %v4603 = vunpack.c.h.b16 %v2144
        %v4604 = vunpack.c.l.b16 %v2145
        %v4605 = vunpack.c.h.b16 %v2145
        %v4606 = vunpack.c.l.b16 %v2146
        %v4607 = vunpack.c.h.b16 %v2146
        %v4608 = vunpack.c.l.b16 %v2147
        %v4609 = vunpack.c.h.b16 %v2147
        %v4610 = vunpack.c.l.b16 %v2148
        %v4611 = vunpack.c.h.b16 %v2148
        %v4612 = vunpack.c.l.b16 %v2149
        %v4613 = vunpack.c.h.b16 %v2149
        %v4614 = vunpack.c.l.b16 %v2150
        %v4615 = vunpack.c.h.b16 %v2150
        %v4616 = vunpack.c.l.b16 %v2151
        %v4617 = vunpack.c.h.b16 %v2151
        %v4618 = vunpack.c.l.b16 %v2152
        %v4619 = vunpack.c.h.b16 %v2152
        %v4620 = vunpack.c.l.b16 %v2153
        %v4621 = vunpack.c.h.b16 %v2153
        %v4622 = vunpack.c.l.b16 %v2154
        %v4623 = vunpack.c.h.b16 %v2154
        %v4624 = vunpack.c.l.b16 %v2155
        %v4625 = vunpack.c.h.b16 %v2155
        %v4626 = vunpack.c.l.b16 %v2156
        %v4627 = vunpack.c.h.b16 %v2156
        %v4628 = vunpack.c.l.b16 %v2157
        %v4629 = vunpack.c.h.b16 %v2157
        %v4630 = vunpack.c.l.b16 %v2158
        %v4631 = vunpack.c.h.b16 %v2158
        %v4632 = vunpack.c.l.b16 %v2159
        %v4633 = vunpack.c.h.b16 %v2159
        %v4634 = vunpack.c.l.b16 %v2160
        %v4635 = vunpack.c.h.b16 %v2160
        %v4636 = vunpack.c.l.b16 %v2161
        %v4637 = vunpack.c.h.b16 %v2161
        %v4638 = vunpack.c.l.b16 %v2162
        %v4639 = vunpack.c.h.b16 %v2162
        %v4640 = vunpack.c.l.b16 %v2163
        %v4641 = vunpack.c.h.b16 %v2163
        %v4642 = vunpack.c.l.b16 %v2164
        %v4643 = vunpack.c.h.b16 %v2164
        %v4644 = vunpack.c.l.b16 %v2165
        %v4645 = vunpack.c.h.b16 %v2165
        %v4646 = vunpack.c.l.b16 %v2166
        %v4647 = vunpack.c.h.b16 %v2166
        %v4648 = vunpack.c.l.b16 %v2167
        %v4649 = vunpack.c.h.b16 %v2167
        %v4650 = vunpack.c.l.b16 %v2168
        %v4651 = vunpack.c.h.b16 %v2168
        %v4652 = vunpack.c.l.b16 %v2169
        %v4653 = vunpack.c.h.b16 %v2169
        %v4654 = vunpack.c.l.b16 %v2170
        %v4655 = vunpack.c.h.b16 %v2170
        %v4656 = vunpack.c.l.b16 %v2171
        %v4657 = vunpack.c.h.b16 %v2171
        %v4658 = vunpack.c.l.b16 %v2172
        %v4659 = vunpack.c.h.b16 %v2172
        %v4660 = vunpack.c.l.b16 %v2173
        %v4661 = vunpack.c.h.b16 %v2173
        %v4662 = vunpack.c.l.b16 %v2174
        %v4663 = vunpack.c.h.b16 %v2174
        %v4664 = vunpack.c.l.b16 %v2175
        %v4665 = vunpack.c.h.b16 %v2175
        %v4666 = vunpack.c.l.b16 %v2176
        %v4667 = vunpack.c.h.b16 %v2176
        %v4668 = vunpack.c.l.b16 %v2177
        %v4669 = vunpack.c.h.b16 %v2177
        %v4670 = vunpack.c.l.b16 %v2178
        %v4671 = vunpack.c.h.b16 %v2178
        %v4672 = vunpack.c.l.b16 %v2179
        %v4673 = vunpack.c.h.b16 %v2179
        %v4674 = vunpack.c.l.b16 %v2180
        %v4675 = vunpack.c.h.b16 %v2180
        %v4676 = vunpack.c.l.b16 %v2181
        %v4677 = vunpack.c.h.b16 %v2181
        %v4678 = vunpack.c.l.b16 %v2182
        %v4679 = vunpack.c.h.b16 %v2182
        %v4680 = vunpack.c.l.b16 %v2183
        %v4681 = vunpack.c.h.b16 %v2183
        %v4682 = vunpack.c.l.b16 %v2184
        %v4683 = vunpack.c.h.b16 %v2184
        %v4684 = vunpack.c.l.b16 %v2185
        %v4685 = vunpack.c.h.b16 %v2185
        %v4686 = vunpack.c.l.b16 %v2186
        %v4687 = vunpack.c.h.b16 %v2186
        %v4688 = vunpack.c.l.b16 %v2187
        %v4689 = vunpack.c.h.b16 %v2187
        %v4690 = vunpack.c.l.b16 %v2188
        %v4691 = vunpack.c.h.b16 %v2188
        %v4692 = vunpack.c.l.b16 %v2189
        %v4693 = vunpack.c.h.b16 %v2189
        %v4694 = vunpack.c.l.b16 %v2190
        %v4695 = vunpack.c.h.b16 %v2190
        %v4696 = vunpack.c.l.b16 %v2191
        %v4697 = vunpack.c.h.b16 %v2191
        %v4698 = vunpack.c.l.b16 %v2192
        %v4699 = vunpack.c.h.b16 %v2192
        %v4700 = vunpack.c.l.b16 %v2193
        %v4701 = vunpack.c.h.b16 %v2193
        %v4702 = vunpack.c.l.b16 %v2194
        %v4703 = vunpack.c.h.b16 %v2194
        %v4704 = vunpack.c.l.b16 %v2195
        %v4705 = vunpack.c.h.b16 %v2195
        %v4706 = vunpack.c.l.b16 %v2196
        %v4707 = vunpack.c.h.b16 %v2196
        %v4708 = vunpack.c.l.b16 %v2197
        %v4709 = vunpack.c.h.b16 %v2197
        %v4710 = vunpack.c.l.b16 %v2198
        %v4711 = vunpack.c.h.b16 %v2198
        %v4712 = vunpack.c.l.b16 %v2199
        %v4713 = vunpack.c.h.b16 %v2199
        %v4714 = vunpack.c.l.b16 %v2200
        %v4715 = vunpack.c.h.b16 %v2200
        %v4716 = vunpack.c.l.b16 %v2201
        %v4717 = vunpack.c.h.b16 %v2201
        %v4718 = vunpack.c.l.b16 %v2202
        %v4719 = vunpack.c.h.b16 %v2202
        %v4720 = vunpack.c.l.b16 %v2203
        %v4721 = vunpack.c.h.b16 %v2203
        %v4722 = vunpack.c.l.b16 %v2204
        %v4723 = vunpack.c.h.b16 %v2204
        %v4724 = vunpack.c.l.b16 %v2205
        %v4725 = vunpack.c.h.b16 %v2205
        %v4726 = vunpack.c.l.b16 %v2206
        %v4727 = vunpack.c.h.b16 %v2206
        %v4728 = vunpack.c.l.b16 %v2207
        %v4729 = vunpack.c.h.b16 %v2207
        %v4730 = vunpack.c.l.b16 %v2208
        %v4731 = vunpack.c.h.b16 %v2208
        %v4732 = vunpack.c.l.b16 %v2209
        %v4733 = vunpack.c.h.b16 %v2209
        %v4734 = vunpack.c.l.b16 %v2210
        %v4735 = vunpack.c.h.b16 %v2210
        %v4736 = vunpack.c.l.b16 %v2211
        %v4737 = vunpack.c.h.b16 %v2211
        %v4738 = vunpack.c.l.b16 %v2212
        %v4739 = vunpack.c.h.b16 %v2212
        %v4740 = vunpack.c.l.b16 %v2213
        %v4741 = vunpack.c.h.b16 %v2213
        %v4742 = vunpack.c.l.b16 %v2214
        %v4743 = vunpack.c.h.b16 %v2214
        %v4744 = vunpack.c.l.b16 %v2215
        %v4745 = vunpack.c.h.b16 %v2215
        %v4746 = vunpack.c.l.b16 %v2216
        %v4747 = vunpack.c.h.b16 %v2216
        %v4748 = vunpack.c.l.b16 %v2217
        %v4749 = vunpack.c.h.b16 %v2217
        %v4750 = vunpack.c.l.b16 %v2218
        %v4751 = vunpack.c.h.b16 %v2218
        %v4752 = vunpack.c.l.b16 %v2219
        %v4753 = vunpack.c.h.b16 %v2219
        %v4754 = vunpack.c.l.b16 %v2220
        %v4755 = vunpack.c.h.b16 %v2220
        %v4756 = vunpack.c.l.b16 %v2221
        %v4757 = vunpack.c.h.b16 %v2221
        %v4758 = vunpack.c.l.b16 %v2222
        %v4759 = vunpack.c.h.b16 %v2222
        %v4760 = vunpack.c.l.b16 %v2223
        %v4761 = vunpack.c.h.b16 %v2223
        %v4762 = vunpack.c.l.b16 %v2224
        %v4763 = vunpack.c.h.b16 %v2224
        %v4764 = vunpack.c.l.b16 %v2225
        %v4765 = vunpack.c.h.b16 %v2225
        %v4766 = vunpack.c.l.b16 %v2226
        %v4767 = vunpack.c.h.b16 %v2226
        %v4768 = vunpack.c.l.b16 %v2227
        %v4769 = vunpack.c.h.b16 %v2227
        %v4770 = vunpack.c.l.b16 %v2228
        %v4771 = vunpack.c.h.b16 %v2228
        %v4772 = vunpack.c.l.b16 %v2229
        %v4773 = vunpack.c.h.b16 %v2229
        %v4774 = vunpack.c.l.b16 %v2230
        %v4775 = vunpack.c.h.b16 %v2230
        %v4776 = vunpack.c.l.b16 %v2231
        %v4777 = vunpack.c.h.b16 %v2231
        %v4778 = vunpack.c.l.b16 %v2232
        %v4779 = vunpack.c.h.b16 %v2232
        %v4780 = vunpack.c.l.b16 %v2233
        %v4781 = vunpack.c.h.b16 %v2233
        %v4782 = vunpack.c.l.b16 %v2234
        %v4783 = vunpack.c.h.b16 %v2234
        %v4784 = vunpack.c.l.b16 %v2235
        %v4785 = vunpack.c.h.b16 %v2235
        %v4786 = vunpack.c.l.b16 %v2236
        %v4787 = vunpack.c.h.b16 %v2236
        %v4788 = vunpack.c.l.b16 %v2237
        %v4789 = vunpack.c.h.b16 %v2237
        %v4790 = vunpack.c.l.b16 %v2238
        %v4791 = vunpack.c.h.b16 %v2238
        %v4792 = vunpack.c.l.b16 %v2239
        %v4793 = vunpack.c.h.b16 %v2239
        %v4794 = vunpack.c.l.b16 %v2240
        %v4795 = vunpack.c.h.b16 %v2240
        %v4796 = vunpack.c.l.b16 %v2241
        %v4797 = vunpack.c.h.b16 %v2241
        %v4798 = vunpack.c.l.b16 %v2242
        %v4799 = vunpack.c.h.b16 %v2242
        %v4800 = vunpack.c.l.b16 %v2243
        %v4801 = vunpack.c.h.b16 %v2243
        %v4802 = vunpack.c.l.b16 %v2244
        %v4803 = vunpack.c.h.b16 %v2244
        %v4804 = vunpack.c.l.b16 %v2245
        %v4805 = vunpack.c.h.b16 %v2245
        %v4806 = vunpack.c.l.b16 %v2246
        %v4807 = vunpack.c.h.b16 %v2246
        %v4808 = vunpack.c.l.b16 %v2247
        %v4809 = vunpack.c.h.b16 %v2247
        %v4810 = vunpack.c.l.b16 %v2248
        %v4811 = vunpack.c.h.b16 %v2248
        %v4812 = vunpack.c.l.b16 %v2249
        %v4813 = vunpack.c.h.b16 %v2249
        %v4814 = vunpack.c.l.b16 %v2250
        %v4815 = vunpack.c.h.b16 %v2250
        %v4816 = vunpack.c.l.b16 %v2251
        %v4817 = vunpack.c.h.b16 %v2251
        %v4818 = vunpack.c.l.b16 %v2252
        %v4819 = vunpack.c.h.b16 %v2252
        %v4820 = vunpack.c.l.b16 %v2253
        %v4821 = vunpack.c.h.b16 %v2253
        %v4822 = vunpack.c.l.b16 %v2254
        %v4823 = vunpack.c.h.b16 %v2254
        %v4824 = vunpack.c.l.b16 %v2255
        %v4825 = vunpack.c.h.b16 %v2255
        %v4826 = vunpack.c.l.b16 %v2256
        %v4827 = vunpack.c.h.b16 %v2256
        %v4828 = vunpack.c.l.b16 %v2257
        %v4829 = vunpack.c.h.b16 %v2257
        %v4830 = vunpack.c.l.b16 %v2258
        %v4831 = vunpack.c.h.b16 %v2258
        %v4832 = vunpack.c.l.b16 %v2259
        %v4833 = vunpack.c.h.b16 %v2259
        %v4834 = vunpack.c.l.b16 %v2260
        %v4835 = vunpack.c.h.b16 %v2260
        %v4836 = vunpack.c.l.b16 %v2261
        %v4837 = vunpack.c.h.b16 %v2261
        %v4838 = vunpack.c.l.b16 %v2262
        %v4839 = vunpack.c.h.b16 %v2262
        %v4840 = vunpack.c.l.b16 %v2263
        %v4841 = vunpack.c.h.b16 %v2263
        %v4842 = vunpack.c.l.b16 %v2264
        %v4843 = vunpack.c.h.b16 %v2264
        %v4844 = vunpack.c.l.b16 %v2265
        %v4845 = vunpack.c.h.b16 %v2265
        %v4846 = vunpack.c.l.b16 %v2266
        %v4847 = vunpack.c.h.b16 %v2266
        %v4848 = vpack.c.b16 %v4450, %v4448
        %v4849 = vpack.c.b16 %v4451, %v4449
        %v4850 = vpack.c.b16 %v4454, %v4452
        %v4851 = vpack.c.b16 %v4455, %v4453
        %v4852 = vpack.c.b16 %v4458, %v4456
        %v4853 = vpack.c.b16 %v4459, %v4457
        %v4854 = vpack.c.b16 %v4462, %v4460
        %v4855 = vpack.c.b16 %v4463, %v4461
        %v4856 = vpack.c.b16 %v4466, %v4464
        %v4857 = vpack.c.b16 %v4467, %v4465
        %v4858 = vpack.c.b16 %v4470, %v4468
        %v4859 = vpack.c.b16 %v4471, %v4469
        %v4860 = vpack.c.b16 %v4474, %v4472
        %v4861 = vpack.c.b16 %v4475, %v4473
        %v4862 = vpack.c.b16 %v4478, %v4476
        %v4863 = vpack.c.b16 %v4479, %v4477
        %v4864 = vpack.c.b16 %v4482, %v4480
        %v4865 = vpack.c.b16 %v4483, %v4481
        %v4866 = vpack.c.b16 %v4486, %v4484
        %v4867 = vpack.c.b16 %v4487, %v4485
        %v4868 = vpack.c.b16 %v4490, %v4488
        %v4869 = vpack.c.b16 %v4491, %v4489
        %v4870 = vpack.c.b16 %v4494, %v4492
        %v4871 = vpack.c.b16 %v4495, %v4493
        %v4872 = vpack.c.b16 %v4498, %v4496
        %v4873 = vpack.c.b16 %v4499, %v4497
        %v4874 = vpack.c.b16 %v4502, %v4500
        %v4875 = vpack.c.b16 %v4503, %v4501
        %v4876 = vpack.c.b16 %v4506, %v4504
        %v4877 = vpack.c.b16 %v4507, %v4505
        %v4878 = vpack.c.b16 %v4510, %v4508
        %v4879 = vpack.c.b16 %v4511, %v4509
        %v4880 = vpack.c.b16 %v4514, %v4512
        %v4881 = vpack.c.b16 %v4515, %v4513
        %v4882 = vpack.c.b16 %v4518, %v4516
        %v4883 = vpack.c.b16 %v4519, %v4517
        %v4884 = vpack.c.b16 %v4522, %v4520
        %v4885 = vpack.c.b16 %v4523, %v4521
        %v4886 = vpack.c.b16 %v4526, %v4524
        %v4887 = vpack.c.b16 %v4527, %v4525
        %v4888 = vpack.c.b16 %v4530, %v4528
        %v4889 = vpack.c.b16 %v4531, %v4529
        %v4890 = vpack.c.b16 %v4534, %v4532
        %v4891 = vpack.c.b16 %v4535, %v4533
        %v4892 = vpack.c.b16 %v4538, %v4536
        %v4893 = vpack.c.b16 %v4539, %v4537
        %v4894 = vpack.c.b16 %v4542, %v4540
        %v4895 = vpack.c.b16 %v4543, %v4541
        %v4896 = vpack.c.b16 %v4546, %v4544
        %v4897 = vpack.c.b16 %v4547, %v4545
        %v4898 = vpack.c.b16 %v4550, %v4548
        %v4899 = vpack.c.b16 %v4551, %v4549
        %v4900 = vpack.c.b16 %v4554, %v4552
        %v4901 = vpack.c.b16 %v4555, %v4553
        %v4902 = vpack.c.b16 %v4558, %v4556
        %v4903 = vpack.c.b16 %v4559, %v4557
        %v4904 = vpack.c.b16 %v4562, %v4560
        %v4905 = vpack.c.b16 %v4563, %v4561
        %v4906 = vpack.c.b16 %v4566, %v4564
        %v4907 = vpack.c.b16 %v4567, %v4565
        %v4908 = vpack.c.b16 %v4570, %v4568
        %v4909 = vpack.c.b16 %v4571, %v4569
        %v4910 = vpack.c.b16 %v4574, %v4572
        %v4911 = vpack.c.b16 %v4575, %v4573
        %v4912 = vpack.c.b16 %v4578, %v4576
        %v4913 = vpack.c.b16 %v4579, %v4577
        %v4914 = vpack.c.b16 %v4582, %v4580
        %v4915 = vpack.c.b16 %v4583, %v4581
        %v4916 = vpack.c.b16 %v4586, %v4584
        %v4917 = vpack.c.b16 %v4587, %v4585
        %v4918 = vpack.c.b16 %v4590, %v4588
        %v4919 = vpack.c.b16 %v4591, %v4589
        %v4920 = vpack.c.b16 %v4594, %v4592
        %v4921 = vpack.c.b16 %v4595, %v4593
        %v4922 = vpack.c.b16 %v4598, %v4596
        %v4923 = vpack.c.b16 %v4599, %v4597
        %v4924 = vpack.c.b16 %v4602, %v4600
        %v4925 = vpack.c.b16 %v4603, %v4601
        %v4926 = vpack.c.b16 %v4606, %v4604
        %v4927 = vpack.c.b16 %v4607, %v4605
        %v4928 = vpack.c.b16 %v4610, %v4608
        %v4929 = vpack.c.b16 %v4611, %v4609
        %v4930 = vpack.c.b16 %v4614, %v4612
        %v4931 = vpack.c.b16 %v4615, %v4613
        %v4932 = vpack.c.b16 %v4618, %v4616
        %v4933 = vpack.c.b16 %v4619, %v4617
        %v4934 = vpack.c.b16 %v4622, %v4620
        %v4935 = vpack.c.b16 %v4623, %v4621
        %v4936 = vpack.c.b16 %v4626, %v4624
        %v4937 = vpack.c.b16 %v4627, %v4625
        %v4938 = vpack.c.b16 %v4630, %v4628
        %v4939 = vpack.c.b16 %v4631, %v4629
        %v4940 = vpack.c.b16 %v4634, %v4632
        %v4941 = vpack.c.b16 %v4635, %v4633
        %v4942 = vpack.c.b16 %v4638, %v4636
        %v4943 = vpack.c.b16 %v4639, %v4637
        %v4944 = vpack.c.b16 %v4642, %v4640
        %v4945 = vpack.c.b16 %v4643, %v4641
        %v4946 = vpack.c.b16 %v4646, %v4644
        %v4947 = vpack.c.b16 %v4647, %v4645
        %v4948 = vpack.c.b16 %v4650, %v4648
        %v4949 = vpack.c.b16 %v4651, %v4649
        %v4950 = vpack.c.b16 %v4654, %v4652
        %v4951 = vpack.c.b16 %v4655, %v4653
        %v4952 = vpack.c.b16 %v4658, %v4656
        %v4953 = vpack.c.b16 %v4659, %v4657
        %v4954 = vpack.c.b16 %v4662, %v4660
        %v4955 = vpack.c.b16 %v4663, %v4661
        %v4956 = vpack.c.b16 %v4666, %v4664
        %v4957 = vpack.c.b16 %v4667, %v4665
        %v4958 = vpack.c.b16 %v4670, %v4668
        %v4959 = vpack.c.b16 %v4671, %v4669
        %v4960 = vpack.c.b16 %v4674, %v4672
        %v4961 = vpack.c.b16 %v4675, %v4673
        %v4962 = vpack.c.b16 %v4678, %v4676
        %v4963 = vpack.c.b16 %v4679, %v4677
        %v4964 = vpack.c.b16 %v4682, %v4680
        %v4965 = vpack.c.b16 %v4683, %v4681
        %v4966 = vpack.c.b16 %v4686, %v4684
        %v4967 = vpack.c.b16 %v4687, %v4685
        %v4968 = vpack.c.b16 %v4690, %v4688
        %v4969 = vpack.c.b16 %v4691, %v4689
        %v4970 = vpack.c.b16 %v4694, %v4692
        %v4971 = vpack.c.b16 %v4695, %v4693
        %v4972 = vpack.c.b16 %v4698, %v4696
        %v4973 = vpack.c.b16 %v4699, %v4697
        %v4974 = vpack.c.b16 %v4702, %v4700
        %v4975 = vpack.c.b16 %v4703, %v4701
        %v4976 = vpack.c.b16 %v4706, %v4704
        %v4977 = vpack.c.b16 %v4707, %v4705
        %v4978 = vpack.c.b16 %v4710, %v4708
        %v4979 = vpack.c.b16 %v4711, %v4709
        %v4980 = vpack.c.b16 %v4714, %v4712
        %v4981 = vpack.c.b16 %v4715, %v4713
        %v4982 = vpack.c.b16 %v4718, %v4716
        %v4983 = vpack.c.b16 %v4719, %v4717
        %v4984 = vpack.c.b16 %v4722, %v4720
        %v4985 = vpack.c.b16 %v4723, %v4721
        %v4986 = vpack.c.b16 %v4726, %v4724
        %v4987 = vpack.c.b16 %v4727, %v4725
        %v4988 = vpack.c.b16 %v4730, %v4728
        %v4989 = vpack.c.b16 %v4731, %v4729
        %v4990 = vpack.c.b16 %v4734, %v4732
        %v4991 = vpack.c.b16 %v4735, %v4733
        %v4992 = vpack.c.b16 %v4738, %v4736
        %v4993 = vpack.c.b16 %v4739, %v4737
        %v4994 = vpack.c.b16 %v4742, %v4740
        %v4995 = vpack.c.b16 %v4743, %v4741
        %v4996 = vpack.c.b16 %v4746, %v4744
        %v4997 = vpack.c.b16 %v4747, %v4745
        %v4998 = vpack.c.b16 %v4750, %v4748
        %v4999 = vpack.c.b16 %v4751, %v4749
        %v5000 = vpack.c.b16 %v4754, %v4752
        %v5001 = vpack.c.b16 %v4755, %v4753
        %v5002 = vpack.c.b16 %v4758, %v4756
        %v5003 = vpack.c.b16 %v4759, %v4757
        %v5004 = vpack.c.b16 %v4762, %v4760
        %v5005 = vpack.c.b16 %v4763, %v4761
        %v5006 = vpack.c.b16 %v4766, %v4764
        %v5007 = vpack.c.b16 %v4767, %v4765
        %v5008 = vpack.c.b16 %v4770, %v4768
        %v5009 = vpack.c.b16 %v4771, %v4769
        %v5010 = vpack.c.b16 %v4774, %v4772
        %v5011 = vpack.c.b16 %v4775, %v4773
        %v5012 = vpack.c.b16 %v4778, %v4776
        %v5013 = vpack.c.b16 %v4779, %v4777
        %v5014 = vpack.c.b16 %v4782, %v4780
        %v5015 = vpack.c.b16 %v4783, %v4781
        %v5016 = vpack.c.b16 %v4786, %v4784
        %v5017 = vpack.c.b16 %v4787, %v4785
        %v5018 = vpack.c.b16 %v4790, %v4788
        %v5019 = vpack.c.b16 %v4791, %v4789
        %v5020 = vpack.c.b16 %v4794, %v4792
        %v5021 = vpack.c.b16 %v4795, %v4793
        %v5022 = vpack.c.b16 %v4798, %v4796
        %v5023 = vpack.c.b16 %v4799, %v4797
        %v5024 = vpack.c.b16 %v4802, %v4800
        %v5025 = vpack.c.b16 %v4803, %v4801
        %v5026 = vpack.c.b16 %v4806, %v4804
        %v5027 = vpack.c.b16 %v4807, %v4805
        %v5028 = vpack.c.b16 %v4810, %v4808
        %v5029 = vpack.c.b16 %v4811, %v4809
        %v5030 = vpack.c.b16 %v4814, %v4812
        %v5031 = vpack.c.b16 %v4815, %v4813
        %v5032 = vpack.c.b16 %v4818, %v4816
        %v5033 = vpack.c.b16 %v4819, %v4817
        %v5034 = vpack.c.b16 %v4822, %v4820
        %v5035 = vpack.c.b16 %v4823, %v4821
        %v5036 = vpack.c.b16 %v4826, %v4824
        %v5037 = vpack.c.b16 %v4827, %v4825
        %v5038 = vpack.c.b16 %v4830, %v4828
        %v5039 = vpack.c.b16 %v4831, %v4829
        %v5040 = vpack.c.b16 %v4834, %v4832
        %v5041 = vpack.c.b16 %v4835, %v4833
        %v5042 = vpack.c.b16 %v4838, %v4836
        %v5043 = vpack.c.b16 %v4839, %v4837
        %v5044 = vpack.c.b16 %v4842, %v4840
        %v5045 = vpack.c.b16 %v4843, %v4841
        %v5046 = vpack.c.b16 %v4846, %v4844
        %v5047 = vpack.c.b16 %v4847, %v4845
        %v5249 = vsel %vm776, %v4154, 0
        %v5252 = vsel %vm776, %v4167, 0
        %v5255 = vsel %vm776, %v4180, 0
        %v5258 = vsel %vm776, %v4193, 0
        %v5261 = vsel %vm776, %v4206, 0
        %v5264 = vsel %vm776, %v4219, 0
        %v5267 = vsel %vm776, %v4232, 0
        %v5270 = vsel %vm776, %v4245, 0
        %5272 = vmatpush.bf16.msra.mxu0 %v4862
        %5273 = vmatpush.bf16.msra.mxu0 %v4860
        %5274 = vmatpush.bf16.msra.mxu0 %v4858
        %5275 = vmatpush.bf16.msra.mxu0 %v4856
        %5276 = vmatpush.bf16.msra.mxu0 %v4854
        %5277 = vmatpush.bf16.msra.mxu0 %v4852
        %5278 = vmatpush.bf16.msra.mxu0 %v4850
        %5279 = vmatpush.bf16.msra.mxu0 %v4848
        %5280 = vmatmul.bf16.gmra.mxu0 %v4142
        %v5281 = vpop.f32.mrf.mxu0
        %v5282 = vadd.f32 %v4246, %v5281
        %v5283 = vpop.f32.mrf.mxu0
        %v5284 = vadd.f32 %v4246, %v5283
        %5285 = vmatmul.bf16.gmra.mxu0 %v4155
        %v5286 = vpop.f32.mrf.mxu0
        %v5287 = vadd.f32 %v4246, %v5286
        %v5288 = vpop.f32.mrf.mxu0
        %v5289 = vadd.f32 %v4246, %v5288
        %5290 = vmatmul.bf16.gmra.mxu0 %v4168
        %v5291 = vpop.f32.mrf.mxu0
        %v5292 = vadd.f32 %v4246, %v5291
        %v5293 = vpop.f32.mrf.mxu0
        %v5294 = vadd.f32 %v4246, %v5293
        %5295 = vmatmul.bf16.gmra.mxu0 %v4181
        %v5296 = vpop.f32.mrf.mxu0
        %v5297 = vadd.f32 %v4246, %v5296
        %v5298 = vpop.f32.mrf.mxu0
        %v5299 = vadd.f32 %v4246, %v5298
        %5300 = vmatmul.bf16.gmra.mxu0 %v4194
        %v5301 = vpop.f32.mrf.mxu0
        %v5302 = vadd.f32 %v4246, %v5301
        %v5303 = vpop.f32.mrf.mxu0
        %v5304 = vadd.f32 %v4246, %v5303
        %5305 = vmatmul.bf16.gmra.mxu0 %v4207
        %v5306 = vpop.f32.mrf.mxu0
        %v5307 = vadd.f32 %v4246, %v5306
        %v5308 = vpop.f32.mrf.mxu0
        %v5309 = vadd.f32 %v4246, %v5308
        %5310 = vmatmul.bf16.gmra.mxu0 %v4220
        %v5311 = vpop.f32.mrf.mxu0
        %v5312 = vadd.f32 %v4246, %v5311
        %v5313 = vpop.f32.mrf.mxu0
        %v5314 = vadd.f32 %v4246, %v5313
        %5315 = vmatmul.bf16.gmra.mxu0 %v4233
        %v5316 = vpop.f32.mrf.mxu0
        %v5317 = vadd.f32 %v4246, %v5316
        %v5318 = vpop.f32.mrf.mxu0
        %v5319 = vadd.f32 %v4246, %v5318
        %5320 = vdwg.mxu0
        %5321 = vmatpush.bf16.msra.mxu0 %v4878
        %5322 = vmatpush.bf16.msra.mxu0 %v4876
        %5323 = vmatpush.bf16.msra.mxu0 %v4874
        %5324 = vmatpush.bf16.msra.mxu0 %v4872
        %5325 = vmatpush.bf16.msra.mxu0 %v4870
        %5326 = vmatpush.bf16.msra.mxu0 %v4868
        %5327 = vmatpush.bf16.msra.mxu0 %v4866
        %5328 = vmatpush.bf16.msra.mxu0 %v4864
        %5329 = vmatmul.bf16.gmra.mxu0 %v4143
        %v5330 = vpop.f32.mrf.mxu0
        %v5331 = vadd.f32 %v5282, %v5330
        %v5332 = vpop.f32.mrf.mxu0
        %v5333 = vadd.f32 %v5284, %v5332
        %5334 = vmatmul.bf16.gmra.mxu0 %v4156
        %v5335 = vpop.f32.mrf.mxu0
        %v5336 = vadd.f32 %v5287, %v5335
        %v5337 = vpop.f32.mrf.mxu0
        %v5338 = vadd.f32 %v5289, %v5337
        %5339 = vmatmul.bf16.gmra.mxu0 %v4169
        %v5340 = vpop.f32.mrf.mxu0
        %v5341 = vadd.f32 %v5292, %v5340
        %v5342 = vpop.f32.mrf.mxu0
        %v5343 = vadd.f32 %v5294, %v5342
        %5344 = vmatmul.bf16.gmra.mxu0 %v4182
        %v5345 = vpop.f32.mrf.mxu0
        %v5346 = vadd.f32 %v5297, %v5345
        %v5347 = vpop.f32.mrf.mxu0
        %v5348 = vadd.f32 %v5299, %v5347
        %5349 = vmatmul.bf16.gmra.mxu0 %v4195
        %v5350 = vpop.f32.mrf.mxu0
        %v5351 = vadd.f32 %v5302, %v5350
        %v5352 = vpop.f32.mrf.mxu0
        %v5353 = vadd.f32 %v5304, %v5352
        %5354 = vmatmul.bf16.gmra.mxu0 %v4208
        %v5355 = vpop.f32.mrf.mxu0
        %v5356 = vadd.f32 %v5307, %v5355
        %v5357 = vpop.f32.mrf.mxu0
        %v5358 = vadd.f32 %v5309, %v5357
        %5359 = vmatmul.bf16.gmra.mxu0 %v4221
        %v5360 = vpop.f32.mrf.mxu0
        %v5361 = vadd.f32 %v5312, %v5360
        %v5362 = vpop.f32.mrf.mxu0
        %v5363 = vadd.f32 %v5314, %v5362
        %5364 = vmatmul.bf16.gmra.mxu0 %v4234
        %v5365 = vpop.f32.mrf.mxu0
        %v5366 = vadd.f32 %v5317, %v5365
        %v5367 = vpop.f32.mrf.mxu0
        %v5368 = vadd.f32 %v5319, %v5367
        %5369 = vdwg.mxu0
        %5370 = vmatpush.bf16.msra.mxu0 %v4894
        %5371 = vmatpush.bf16.msra.mxu0 %v4892
        %5372 = vmatpush.bf16.msra.mxu0 %v4890
        %5373 = vmatpush.bf16.msra.mxu0 %v4888
        %5374 = vmatpush.bf16.msra.mxu0 %v4886
        %5375 = vmatpush.bf16.msra.mxu0 %v4884
        %5376 = vmatpush.bf16.msra.mxu0 %v4882
        %5377 = vmatpush.bf16.msra.mxu0 %v4880
        %5378 = vmatmul.bf16.gmra.mxu0 %v4144
        %v5379 = vpop.f32.mrf.mxu0
        %v5380 = vadd.f32 %v5331, %v5379
        %v5381 = vpop.f32.mrf.mxu0
        %v5382 = vadd.f32 %v5333, %v5381
        %5383 = vmatmul.bf16.gmra.mxu0 %v4157
        %v5384 = vpop.f32.mrf.mxu0
        %v5385 = vadd.f32 %v5336, %v5384
        %v5386 = vpop.f32.mrf.mxu0
        %v5387 = vadd.f32 %v5338, %v5386
        %5388 = vmatmul.bf16.gmra.mxu0 %v4170
        %v5389 = vpop.f32.mrf.mxu0
        %v5390 = vadd.f32 %v5341, %v5389
        %v5391 = vpop.f32.mrf.mxu0
        %v5392 = vadd.f32 %v5343, %v5391
        %5393 = vmatmul.bf16.gmra.mxu0 %v4183
        %v5394 = vpop.f32.mrf.mxu0
        %v5395 = vadd.f32 %v5346, %v5394
        %v5396 = vpop.f32.mrf.mxu0
        %v5397 = vadd.f32 %v5348, %v5396
        %5398 = vmatmul.bf16.gmra.mxu0 %v4196
        %v5399 = vpop.f32.mrf.mxu0
        %v5400 = vadd.f32 %v5351, %v5399
        %v5401 = vpop.f32.mrf.mxu0
        %v5402 = vadd.f32 %v5353, %v5401
        %5403 = vmatmul.bf16.gmra.mxu0 %v4209
        %v5404 = vpop.f32.mrf.mxu0
        %v5405 = vadd.f32 %v5356, %v5404
        %v5406 = vpop.f32.mrf.mxu0
        %v5407 = vadd.f32 %v5358, %v5406
        %5408 = vmatmul.bf16.gmra.mxu0 %v4222
        %v5409 = vpop.f32.mrf.mxu0
        %v5410 = vadd.f32 %v5361, %v5409
        %v5411 = vpop.f32.mrf.mxu0
        %v5412 = vadd.f32 %v5363, %v5411
        %5413 = vmatmul.bf16.gmra.mxu0 %v4235
        %v5414 = vpop.f32.mrf.mxu0
        %v5415 = vadd.f32 %v5366, %v5414
        %v5416 = vpop.f32.mrf.mxu0
        %v5417 = vadd.f32 %v5368, %v5416
        %5418 = vdwg.mxu0
        %5419 = vmatpush.bf16.msra.mxu0 %v4910
        %5420 = vmatpush.bf16.msra.mxu0 %v4908
        %5421 = vmatpush.bf16.msra.mxu0 %v4906
        %5422 = vmatpush.bf16.msra.mxu0 %v4904
        %5423 = vmatpush.bf16.msra.mxu0 %v4902
        %5424 = vmatpush.bf16.msra.mxu0 %v4900
        %5425 = vmatpush.bf16.msra.mxu0 %v4898
        %5426 = vmatpush.bf16.msra.mxu0 %v4896
        %5427 = vmatmul.bf16.gmra.mxu0 %v4145
        %v5428 = vpop.f32.mrf.mxu0
        %v5429 = vadd.f32 %v5380, %v5428
        %v5430 = vpop.f32.mrf.mxu0
        %v5431 = vadd.f32 %v5382, %v5430
        %5432 = vmatmul.bf16.gmra.mxu0 %v4158
        %v5433 = vpop.f32.mrf.mxu0
        %v5434 = vadd.f32 %v5385, %v5433
        %v5435 = vpop.f32.mrf.mxu0
        %v5436 = vadd.f32 %v5387, %v5435
        %5437 = vmatmul.bf16.gmra.mxu0 %v4171
        %v5438 = vpop.f32.mrf.mxu0
        %v5439 = vadd.f32 %v5390, %v5438
        %v5440 = vpop.f32.mrf.mxu0
        %v5441 = vadd.f32 %v5392, %v5440
        %5442 = vmatmul.bf16.gmra.mxu0 %v4184
        %v5443 = vpop.f32.mrf.mxu0
        %v5444 = vadd.f32 %v5395, %v5443
        %v5445 = vpop.f32.mrf.mxu0
        %v5446 = vadd.f32 %v5397, %v5445
        %5447 = vmatmul.bf16.gmra.mxu0 %v4197
        %v5448 = vpop.f32.mrf.mxu0
        %v5449 = vadd.f32 %v5400, %v5448
        %v5450 = vpop.f32.mrf.mxu0
        %v5451 = vadd.f32 %v5402, %v5450
        %5452 = vmatmul.bf16.gmra.mxu0 %v4210
        %v5453 = vpop.f32.mrf.mxu0
        %v5454 = vadd.f32 %v5405, %v5453
        %v5455 = vpop.f32.mrf.mxu0
        %v5456 = vadd.f32 %v5407, %v5455
        %5457 = vmatmul.bf16.gmra.mxu0 %v4223
        %v5458 = vpop.f32.mrf.mxu0
        %v5459 = vadd.f32 %v5410, %v5458
        %v5460 = vpop.f32.mrf.mxu0
        %v5461 = vadd.f32 %v5412, %v5460
        %5462 = vmatmul.bf16.gmra.mxu0 %v4236
        %v5463 = vpop.f32.mrf.mxu0
        %v5464 = vadd.f32 %v5415, %v5463
        %v5465 = vpop.f32.mrf.mxu0
        %v5466 = vadd.f32 %v5417, %v5465
        %5467 = vdwg.mxu0
        %5468 = vmatpush.bf16.msra.mxu0 %v4926
        %5469 = vmatpush.bf16.msra.mxu0 %v4924
        %5470 = vmatpush.bf16.msra.mxu0 %v4922
        %5471 = vmatpush.bf16.msra.mxu0 %v4920
        %5472 = vmatpush.bf16.msra.mxu0 %v4918
        %5473 = vmatpush.bf16.msra.mxu0 %v4916
        %5474 = vmatpush.bf16.msra.mxu0 %v4914
        %5475 = vmatpush.bf16.msra.mxu0 %v4912
        %5476 = vmatmul.bf16.gmra.mxu0 %v4146
        %v5477 = vpop.f32.mrf.mxu0
        %v5478 = vadd.f32 %v5429, %v5477
        %v5479 = vpop.f32.mrf.mxu0
        %v5480 = vadd.f32 %v5431, %v5479
        %5481 = vmatmul.bf16.gmra.mxu0 %v4159
        %v5482 = vpop.f32.mrf.mxu0
        %v5483 = vadd.f32 %v5434, %v5482
        %v5484 = vpop.f32.mrf.mxu0
        %v5485 = vadd.f32 %v5436, %v5484
        %5486 = vmatmul.bf16.gmra.mxu0 %v4172
        %v5487 = vpop.f32.mrf.mxu0
        %v5488 = vadd.f32 %v5439, %v5487
        %v5489 = vpop.f32.mrf.mxu0
        %v5490 = vadd.f32 %v5441, %v5489
        %5491 = vmatmul.bf16.gmra.mxu0 %v4185
        %v5492 = vpop.f32.mrf.mxu0
        %v5493 = vadd.f32 %v5444, %v5492
        %v5494 = vpop.f32.mrf.mxu0
        %v5495 = vadd.f32 %v5446, %v5494
        %5496 = vmatmul.bf16.gmra.mxu0 %v4198
        %v5497 = vpop.f32.mrf.mxu0
        %v5498 = vadd.f32 %v5449, %v5497
        %v5499 = vpop.f32.mrf.mxu0
        %v5500 = vadd.f32 %v5451, %v5499
        %5501 = vmatmul.bf16.gmra.mxu0 %v4211
        %v5502 = vpop.f32.mrf.mxu0
        %v5503 = vadd.f32 %v5454, %v5502
        %v5504 = vpop.f32.mrf.mxu0
        %v5505 = vadd.f32 %v5456, %v5504
        %5506 = vmatmul.bf16.gmra.mxu0 %v4224
        %v5507 = vpop.f32.mrf.mxu0
        %v5508 = vadd.f32 %v5459, %v5507
        %v5509 = vpop.f32.mrf.mxu0
        %v5510 = vadd.f32 %v5461, %v5509
        %5511 = vmatmul.bf16.gmra.mxu0 %v4237
        %v5512 = vpop.f32.mrf.mxu0
        %v5513 = vadd.f32 %v5464, %v5512
        %v5514 = vpop.f32.mrf.mxu0
        %v5515 = vadd.f32 %v5466, %v5514
        %5516 = vdwg.mxu0
        %5517 = vmatpush.bf16.msra.mxu0 %v4942
        %5518 = vmatpush.bf16.msra.mxu0 %v4940
        %5519 = vmatpush.bf16.msra.mxu0 %v4938
        %5520 = vmatpush.bf16.msra.mxu0 %v4936
        %5521 = vmatpush.bf16.msra.mxu0 %v4934
        %5522 = vmatpush.bf16.msra.mxu0 %v4932
        %5523 = vmatpush.bf16.msra.mxu0 %v4930
        %5524 = vmatpush.bf16.msra.mxu0 %v4928
        %5525 = vmatmul.bf16.gmra.mxu0 %v4147
        %v5526 = vpop.f32.mrf.mxu0
        %v5527 = vadd.f32 %v5478, %v5526
        %v5528 = vpop.f32.mrf.mxu0
        %v5529 = vadd.f32 %v5480, %v5528
        %5530 = vmatmul.bf16.gmra.mxu0 %v4160
        %v5531 = vpop.f32.mrf.mxu0
        %v5532 = vadd.f32 %v5483, %v5531
        %v5533 = vpop.f32.mrf.mxu0
        %v5534 = vadd.f32 %v5485, %v5533
        %5535 = vmatmul.bf16.gmra.mxu0 %v4173
        %v5536 = vpop.f32.mrf.mxu0
        %v5537 = vadd.f32 %v5488, %v5536
        %v5538 = vpop.f32.mrf.mxu0
        %v5539 = vadd.f32 %v5490, %v5538
        %5540 = vmatmul.bf16.gmra.mxu0 %v4186
        %v5541 = vpop.f32.mrf.mxu0
        %v5542 = vadd.f32 %v5493, %v5541
        %v5543 = vpop.f32.mrf.mxu0
        %v5544 = vadd.f32 %v5495, %v5543
        %5545 = vmatmul.bf16.gmra.mxu0 %v4199
        %v5546 = vpop.f32.mrf.mxu0
        %v5547 = vadd.f32 %v5498, %v5546
        %v5548 = vpop.f32.mrf.mxu0
        %v5549 = vadd.f32 %v5500, %v5548
        %5550 = vmatmul.bf16.gmra.mxu0 %v4212
        %v5551 = vpop.f32.mrf.mxu0
        %v5552 = vadd.f32 %v5503, %v5551
        %v5553 = vpop.f32.mrf.mxu0
        %v5554 = vadd.f32 %v5505, %v5553
        %5555 = vmatmul.bf16.gmra.mxu0 %v4225
        %v5556 = vpop.f32.mrf.mxu0
        %v5557 = vadd.f32 %v5508, %v5556
        %v5558 = vpop.f32.mrf.mxu0
        %v5559 = vadd.f32 %v5510, %v5558
        %5560 = vmatmul.bf16.gmra.mxu0 %v4238
        %v5561 = vpop.f32.mrf.mxu0
        %v5562 = vadd.f32 %v5513, %v5561
        %v5563 = vpop.f32.mrf.mxu0
        %v5564 = vadd.f32 %v5515, %v5563
        %5565 = vdwg.mxu0
        %5566 = vmatpush.bf16.msra.mxu0 %v4958
        %5567 = vmatpush.bf16.msra.mxu0 %v4956
        %5568 = vmatpush.bf16.msra.mxu0 %v4954
        %5569 = vmatpush.bf16.msra.mxu0 %v4952
        %5570 = vmatpush.bf16.msra.mxu0 %v4950
        %5571 = vmatpush.bf16.msra.mxu0 %v4948
        %5572 = vmatpush.bf16.msra.mxu0 %v4946
        %5573 = vmatpush.bf16.msra.mxu0 %v4944
        %5574 = vmatmul.bf16.gmra.mxu0 %v4148
        %v5575 = vpop.f32.mrf.mxu0
        %v5576 = vadd.f32 %v5527, %v5575
        %v5577 = vpop.f32.mrf.mxu0
        %v5578 = vadd.f32 %v5529, %v5577
        %5579 = vmatmul.bf16.gmra.mxu0 %v4161
        %v5580 = vpop.f32.mrf.mxu0
        %v5581 = vadd.f32 %v5532, %v5580
        %v5582 = vpop.f32.mrf.mxu0
        %v5583 = vadd.f32 %v5534, %v5582
        %5584 = vmatmul.bf16.gmra.mxu0 %v4174
        %v5585 = vpop.f32.mrf.mxu0
        %v5586 = vadd.f32 %v5537, %v5585
        %v5587 = vpop.f32.mrf.mxu0
        %v5588 = vadd.f32 %v5539, %v5587
        %5589 = vmatmul.bf16.gmra.mxu0 %v4187
        %v5590 = vpop.f32.mrf.mxu0
        %v5591 = vadd.f32 %v5542, %v5590
        %v5592 = vpop.f32.mrf.mxu0
        %v5593 = vadd.f32 %v5544, %v5592
        %5594 = vmatmul.bf16.gmra.mxu0 %v4200
        %v5595 = vpop.f32.mrf.mxu0
        %v5596 = vadd.f32 %v5547, %v5595
        %v5597 = vpop.f32.mrf.mxu0
        %v5598 = vadd.f32 %v5549, %v5597
        %5599 = vmatmul.bf16.gmra.mxu0 %v4213
        %v5600 = vpop.f32.mrf.mxu0
        %v5601 = vadd.f32 %v5552, %v5600
        %v5602 = vpop.f32.mrf.mxu0
        %v5603 = vadd.f32 %v5554, %v5602
        %5604 = vmatmul.bf16.gmra.mxu0 %v4226
        %v5605 = vpop.f32.mrf.mxu0
        %v5606 = vadd.f32 %v5557, %v5605
        %v5607 = vpop.f32.mrf.mxu0
        %v5608 = vadd.f32 %v5559, %v5607
        %5609 = vmatmul.bf16.gmra.mxu0 %v4239
        %v5610 = vpop.f32.mrf.mxu0
        %v5611 = vadd.f32 %v5562, %v5610
        %v5612 = vpop.f32.mrf.mxu0
        %v5613 = vadd.f32 %v5564, %v5612
        %5614 = vdwg.mxu0
        %5615 = vmatpush.bf16.msra.mxu0 %v4974
        %5616 = vmatpush.bf16.msra.mxu0 %v4972
        %5617 = vmatpush.bf16.msra.mxu0 %v4970
        %5618 = vmatpush.bf16.msra.mxu0 %v4968
        %5619 = vmatpush.bf16.msra.mxu0 %v4966
        %5620 = vmatpush.bf16.msra.mxu0 %v4964
        %5621 = vmatpush.bf16.msra.mxu0 %v4962
        %5622 = vmatpush.bf16.msra.mxu0 %v4960
        %5623 = vmatmul.bf16.gmra.mxu0 %v4149
        %v5624 = vpop.f32.mrf.mxu0
        %v5625 = vadd.f32 %v5576, %v5624
        %v5626 = vpop.f32.mrf.mxu0
        %v5627 = vadd.f32 %v5578, %v5626
        %5628 = vmatmul.bf16.gmra.mxu0 %v4162
        %v5629 = vpop.f32.mrf.mxu0
        %v5630 = vadd.f32 %v5581, %v5629
        %v5631 = vpop.f32.mrf.mxu0
        %v5632 = vadd.f32 %v5583, %v5631
        %5633 = vmatmul.bf16.gmra.mxu0 %v4175
        %v5634 = vpop.f32.mrf.mxu0
        %v5635 = vadd.f32 %v5586, %v5634
        %v5636 = vpop.f32.mrf.mxu0
        %v5637 = vadd.f32 %v5588, %v5636
        %5638 = vmatmul.bf16.gmra.mxu0 %v4188
        %v5639 = vpop.f32.mrf.mxu0
        %v5640 = vadd.f32 %v5591, %v5639
        %v5641 = vpop.f32.mrf.mxu0
        %v5642 = vadd.f32 %v5593, %v5641
        %5643 = vmatmul.bf16.gmra.mxu0 %v4201
        %v5644 = vpop.f32.mrf.mxu0
        %v5645 = vadd.f32 %v5596, %v5644
        %v5646 = vpop.f32.mrf.mxu0
        %v5647 = vadd.f32 %v5598, %v5646
        %5648 = vmatmul.bf16.gmra.mxu0 %v4214
        %v5649 = vpop.f32.mrf.mxu0
        %v5650 = vadd.f32 %v5601, %v5649
        %v5651 = vpop.f32.mrf.mxu0
        %v5652 = vadd.f32 %v5603, %v5651
        %5653 = vmatmul.bf16.gmra.mxu0 %v4227
        %v5654 = vpop.f32.mrf.mxu0
        %v5655 = vadd.f32 %v5606, %v5654
        %v5656 = vpop.f32.mrf.mxu0
        %v5657 = vadd.f32 %v5608, %v5656
        %5658 = vmatmul.bf16.gmra.mxu0 %v4240
        %v5659 = vpop.f32.mrf.mxu0
        %v5660 = vadd.f32 %v5611, %v5659
        %v5661 = vpop.f32.mrf.mxu0
        %v5662 = vadd.f32 %v5613, %v5661
        %5663 = vdwg.mxu0
        %5664 = vmatpush.bf16.msra.mxu0 %v4990
        %5665 = vmatpush.bf16.msra.mxu0 %v4988
        %5666 = vmatpush.bf16.msra.mxu0 %v4986
        %5667 = vmatpush.bf16.msra.mxu0 %v4984
        %5668 = vmatpush.bf16.msra.mxu0 %v4982
        %5669 = vmatpush.bf16.msra.mxu0 %v4980
        %5670 = vmatpush.bf16.msra.mxu0 %v4978
        %5671 = vmatpush.bf16.msra.mxu0 %v4976
        %5672 = vmatmul.bf16.gmra.mxu0 %v4150
        %v5673 = vpop.f32.mrf.mxu0
        %v5674 = vadd.f32 %v5625, %v5673
        %v5675 = vpop.f32.mrf.mxu0
        %v5676 = vadd.f32 %v5627, %v5675
        %5677 = vmatmul.bf16.gmra.mxu0 %v4163
        %v5678 = vpop.f32.mrf.mxu0
        %v5679 = vadd.f32 %v5630, %v5678
        %v5680 = vpop.f32.mrf.mxu0
        %v5681 = vadd.f32 %v5632, %v5680
        %5682 = vmatmul.bf16.gmra.mxu0 %v4176
        %v5683 = vpop.f32.mrf.mxu0
        %v5684 = vadd.f32 %v5635, %v5683
        %v5685 = vpop.f32.mrf.mxu0
        %v5686 = vadd.f32 %v5637, %v5685
        %5687 = vmatmul.bf16.gmra.mxu0 %v4189
        %v5688 = vpop.f32.mrf.mxu0
        %v5689 = vadd.f32 %v5640, %v5688
        %v5690 = vpop.f32.mrf.mxu0
        %v5691 = vadd.f32 %v5642, %v5690
        %5692 = vmatmul.bf16.gmra.mxu0 %v4202
        %v5693 = vpop.f32.mrf.mxu0
        %v5694 = vadd.f32 %v5645, %v5693
        %v5695 = vpop.f32.mrf.mxu0
        %v5696 = vadd.f32 %v5647, %v5695
        %5697 = vmatmul.bf16.gmra.mxu0 %v4215
        %v5698 = vpop.f32.mrf.mxu0
        %v5699 = vadd.f32 %v5650, %v5698
        %v5700 = vpop.f32.mrf.mxu0
        %v5701 = vadd.f32 %v5652, %v5700
        %5702 = vmatmul.bf16.gmra.mxu0 %v4228
        %v5703 = vpop.f32.mrf.mxu0
        %v5704 = vadd.f32 %v5655, %v5703
        %v5705 = vpop.f32.mrf.mxu0
        %v5706 = vadd.f32 %v5657, %v5705
        %5707 = vmatmul.bf16.gmra.mxu0 %v4241
        %v5708 = vpop.f32.mrf.mxu0
        %v5709 = vadd.f32 %v5660, %v5708
        %v5710 = vpop.f32.mrf.mxu0
        %v5711 = vadd.f32 %v5662, %v5710
        %5712 = vdwg.mxu0
        %5713 = vmatpush.bf16.msra.mxu0 %v5006
        %5714 = vmatpush.bf16.msra.mxu0 %v5004
        %5715 = vmatpush.bf16.msra.mxu0 %v5002
        %5716 = vmatpush.bf16.msra.mxu0 %v5000
        %5717 = vmatpush.bf16.msra.mxu0 %v4998
        %5718 = vmatpush.bf16.msra.mxu0 %v4996
        %5719 = vmatpush.bf16.msra.mxu0 %v4994
        %5720 = vmatpush.bf16.msra.mxu0 %v4992
        %5721 = vmatmul.bf16.gmra.mxu0 %v4151
        %v5722 = vpop.f32.mrf.mxu0
        %v5723 = vadd.f32 %v5674, %v5722
        %v5724 = vpop.f32.mrf.mxu0
        %v5725 = vadd.f32 %v5676, %v5724
        %5726 = vmatmul.bf16.gmra.mxu0 %v4164
        %v5727 = vpop.f32.mrf.mxu0
        %v5728 = vadd.f32 %v5679, %v5727
        %v5729 = vpop.f32.mrf.mxu0
        %v5730 = vadd.f32 %v5681, %v5729
        %5731 = vmatmul.bf16.gmra.mxu0 %v4177
        %v5732 = vpop.f32.mrf.mxu0
        %v5733 = vadd.f32 %v5684, %v5732
        %v5734 = vpop.f32.mrf.mxu0
        %v5735 = vadd.f32 %v5686, %v5734
        %5736 = vmatmul.bf16.gmra.mxu0 %v4190
        %v5737 = vpop.f32.mrf.mxu0
        %v5738 = vadd.f32 %v5689, %v5737
        %v5739 = vpop.f32.mrf.mxu0
        %v5740 = vadd.f32 %v5691, %v5739
        %5741 = vmatmul.bf16.gmra.mxu0 %v4203
        %v5742 = vpop.f32.mrf.mxu0
        %v5743 = vadd.f32 %v5694, %v5742
        %v5744 = vpop.f32.mrf.mxu0
        %v5745 = vadd.f32 %v5696, %v5744
        %5746 = vmatmul.bf16.gmra.mxu0 %v4216
        %v5747 = vpop.f32.mrf.mxu0
        %v5748 = vadd.f32 %v5699, %v5747
        %v5749 = vpop.f32.mrf.mxu0
        %v5750 = vadd.f32 %v5701, %v5749
        %5751 = vmatmul.bf16.gmra.mxu0 %v4229
        %v5752 = vpop.f32.mrf.mxu0
        %v5753 = vadd.f32 %v5704, %v5752
        %v5754 = vpop.f32.mrf.mxu0
        %v5755 = vadd.f32 %v5706, %v5754
        %5756 = vmatmul.bf16.gmra.mxu0 %v4242
        %v5757 = vpop.f32.mrf.mxu0
        %v5758 = vadd.f32 %v5709, %v5757
        %v5759 = vpop.f32.mrf.mxu0
        %v5760 = vadd.f32 %v5711, %v5759
        %5761 = vdwg.mxu0
        %5762 = vmatpush.bf16.msra.mxu0 %v5022
        %5763 = vmatpush.bf16.msra.mxu0 %v5020
        %5764 = vmatpush.bf16.msra.mxu0 %v5018
        %5765 = vmatpush.bf16.msra.mxu0 %v5016
        %5766 = vmatpush.bf16.msra.mxu0 %v5014
        %5767 = vmatpush.bf16.msra.mxu0 %v5012
        %5768 = vmatpush.bf16.msra.mxu0 %v5010
        %5769 = vmatpush.bf16.msra.mxu0 %v5008
        %5770 = vmatmul.bf16.gmra.mxu0 %v4152
        %v5771 = vpop.f32.mrf.mxu0
        %v5772 = vadd.f32 %v5723, %v5771
        %v5773 = vpop.f32.mrf.mxu0
        %v5774 = vadd.f32 %v5725, %v5773
        %5775 = vmatmul.bf16.gmra.mxu0 %v4165
        %v5776 = vpop.f32.mrf.mxu0
        %v5777 = vadd.f32 %v5728, %v5776
        %v5778 = vpop.f32.mrf.mxu0
        %v5779 = vadd.f32 %v5730, %v5778
        %5780 = vmatmul.bf16.gmra.mxu0 %v4178
        %v5781 = vpop.f32.mrf.mxu0
        %v5782 = vadd.f32 %v5733, %v5781
        %v5783 = vpop.f32.mrf.mxu0
        %v5784 = vadd.f32 %v5735, %v5783
        %5785 = vmatmul.bf16.gmra.mxu0 %v4191
        %v5786 = vpop.f32.mrf.mxu0
        %v5787 = vadd.f32 %v5738, %v5786
        %v5788 = vpop.f32.mrf.mxu0
        %v5789 = vadd.f32 %v5740, %v5788
        %5790 = vmatmul.bf16.gmra.mxu0 %v4204
        %v5791 = vpop.f32.mrf.mxu0
        %v5792 = vadd.f32 %v5743, %v5791
        %v5793 = vpop.f32.mrf.mxu0
        %v5794 = vadd.f32 %v5745, %v5793
        %5795 = vmatmul.bf16.gmra.mxu0 %v4217
        %v5796 = vpop.f32.mrf.mxu0
        %v5797 = vadd.f32 %v5748, %v5796
        %v5798 = vpop.f32.mrf.mxu0
        %v5799 = vadd.f32 %v5750, %v5798
        %5800 = vmatmul.bf16.gmra.mxu0 %v4230
        %v5801 = vpop.f32.mrf.mxu0
        %v5802 = vadd.f32 %v5753, %v5801
        %v5803 = vpop.f32.mrf.mxu0
        %v5804 = vadd.f32 %v5755, %v5803
        %5805 = vmatmul.bf16.gmra.mxu0 %v4243
        %v5806 = vpop.f32.mrf.mxu0
        %v5807 = vadd.f32 %v5758, %v5806
        %v5808 = vpop.f32.mrf.mxu0
        %v5809 = vadd.f32 %v5760, %v5808
        %5810 = vdwg.mxu0
        %5811 = vmatpush.bf16.msra.mxu0 %v5038
        %5812 = vmatpush.bf16.msra.mxu0 %v5036
        %5813 = vmatpush.bf16.msra.mxu0 %v5034
        %5814 = vmatpush.bf16.msra.mxu0 %v5032
        %5815 = vmatpush.bf16.msra.mxu0 %v5030
        %5816 = vmatpush.bf16.msra.mxu0 %v5028
        %5817 = vmatpush.bf16.msra.mxu0 %v5026
        %5818 = vmatpush.bf16.msra.mxu0 %v5024
        %5819 = vmatmul.bf16.gmra.mxu0 %v4153
        %v5820 = vpop.f32.mrf.mxu0
        %v5821 = vadd.f32 %v5772, %v5820
        %v5822 = vpop.f32.mrf.mxu0
        %v5823 = vadd.f32 %v5774, %v5822
        %5824 = vmatmul.bf16.gmra.mxu0 %v4166
        %v5825 = vpop.f32.mrf.mxu0
        %v5826 = vadd.f32 %v5777, %v5825
        %v5827 = vpop.f32.mrf.mxu0
        %v5828 = vadd.f32 %v5779, %v5827
        %5829 = vmatmul.bf16.gmra.mxu0 %v4179
        %v5830 = vpop.f32.mrf.mxu0
        %v5831 = vadd.f32 %v5782, %v5830
        %v5832 = vpop.f32.mrf.mxu0
        %v5833 = vadd.f32 %v5784, %v5832
        %5834 = vmatmul.bf16.gmra.mxu0 %v4192
        %v5835 = vpop.f32.mrf.mxu0
        %v5836 = vadd.f32 %v5787, %v5835
        %v5837 = vpop.f32.mrf.mxu0
        %v5838 = vadd.f32 %v5789, %v5837
        %5839 = vmatmul.bf16.gmra.mxu0 %v4205
        %v5840 = vpop.f32.mrf.mxu0
        %v5841 = vadd.f32 %v5792, %v5840
        %v5842 = vpop.f32.mrf.mxu0
        %v5843 = vadd.f32 %v5794, %v5842
        %5844 = vmatmul.bf16.gmra.mxu0 %v4218
        %v5845 = vpop.f32.mrf.mxu0
        %v5846 = vadd.f32 %v5797, %v5845
        %v5847 = vpop.f32.mrf.mxu0
        %v5848 = vadd.f32 %v5799, %v5847
        %5849 = vmatmul.bf16.gmra.mxu0 %v4231
        %v5850 = vpop.f32.mrf.mxu0
        %v5851 = vadd.f32 %v5802, %v5850
        %v5852 = vpop.f32.mrf.mxu0
        %v5853 = vadd.f32 %v5804, %v5852
        %5854 = vmatmul.bf16.gmra.mxu0 %v4244
        %v5855 = vpop.f32.mrf.mxu0
        %v5856 = vadd.f32 %v5807, %v5855
        %v5857 = vpop.f32.mrf.mxu0
        %v5858 = vadd.f32 %v5809, %v5857
        %5859 = vdwg.mxu0
        %5860 = vmatpush.bf16.msra.mxu0 0
        %5861 = vmatpush.bf16.msra.mxu0 0
        %5862 = vmatpush.bf16.msra.mxu0 0
        %5863 = vmatpush.bf16.msra.mxu0 0
        %5864 = vmatpush.bf16.msra.mxu0 %v5046
        %5865 = vmatpush.bf16.msra.mxu0 %v5044
        %5866 = vmatpush.bf16.msra.mxu0 %v5042
        %5867 = vmatpush.bf16.msra.mxu0 %v5040
        %5868 = vmatmul.bf16.gmra.mxu0 %v5249
        %v5869 = vpop.f32.mrf.mxu0
        %v5870 = vadd.f32 %v5821, %v5869
        %v5871 = vpop.f32.mrf.mxu0
        %v5872 = vadd.f32 %v5823, %v5871
        %5873 = vmatmul.bf16.gmra.mxu0 %v5252
        %v5874 = vpop.f32.mrf.mxu0
        %v5875 = vadd.f32 %v5826, %v5874
        %v5876 = vpop.f32.mrf.mxu0
        %v5877 = vadd.f32 %v5828, %v5876
        %5878 = vmatmul.bf16.gmra.mxu0 %v5255
        %v5879 = vpop.f32.mrf.mxu0
        %v5880 = vadd.f32 %v5831, %v5879
        %v5881 = vpop.f32.mrf.mxu0
        %v5882 = vadd.f32 %v5833, %v5881
        %5883 = vmatmul.bf16.gmra.mxu0 %v5258
        %v5884 = vpop.f32.mrf.mxu0
        %v5885 = vadd.f32 %v5836, %v5884
        %v5886 = vpop.f32.mrf.mxu0
        %v5887 = vadd.f32 %v5838, %v5886
        %5888 = vmatmul.bf16.gmra.mxu0 %v5261
        %v5889 = vpop.f32.mrf.mxu0
        %v5890 = vadd.f32 %v5841, %v5889
        %v5891 = vpop.f32.mrf.mxu0
        %v5892 = vadd.f32 %v5843, %v5891
        %5893 = vmatmul.bf16.gmra.mxu0 %v5264
        %v5894 = vpop.f32.mrf.mxu0
        %v5895 = vadd.f32 %v5846, %v5894
        %v5896 = vpop.f32.mrf.mxu0
        %v5897 = vadd.f32 %v5848, %v5896
        %5898 = vmatmul.bf16.gmra.mxu0 %v5267
        %v5899 = vpop.f32.mrf.mxu0
        %v5900 = vadd.f32 %v5851, %v5899
        %v5901 = vpop.f32.mrf.mxu0
        %v5902 = vadd.f32 %v5853, %v5901
        %5903 = vmatmul.bf16.gmra.mxu0 %v5270
        %v5904 = vpop.f32.mrf.mxu0
        %v5905 = vadd.f32 %v5856, %v5904
        %v5906 = vpop.f32.mrf.mxu0
        %v5907 = vadd.f32 %v5858, %v5906
        %5908 = vdwg.mxu0
        %5909 = vmatpush.bf16.msra.mxu0 %v4863
        %5910 = vmatpush.bf16.msra.mxu0 %v4861
        %5911 = vmatpush.bf16.msra.mxu0 %v4859
        %5912 = vmatpush.bf16.msra.mxu0 %v4857
        %5913 = vmatpush.bf16.msra.mxu0 %v4855
        %5914 = vmatpush.bf16.msra.mxu0 %v4853
        %5915 = vmatpush.bf16.msra.mxu0 %v4851
        %5916 = vmatpush.bf16.msra.mxu0 %v4849
        %5917 = vmatmul.bf16.gmra.mxu0 %v4142
        %v5918 = vpop.f32.mrf.mxu0
        %v5919 = vadd.f32 %v4247, %v5918
        %v5920 = vpop.f32.mrf.mxu0
        %v5921 = vadd.f32 %v4247, %v5920
        %5922 = vmatmul.bf16.gmra.mxu0 %v4155
        %v5923 = vpop.f32.mrf.mxu0
        %v5924 = vadd.f32 %v4247, %v5923
        %v5925 = vpop.f32.mrf.mxu0
        %v5926 = vadd.f32 %v4247, %v5925
        %5927 = vmatmul.bf16.gmra.mxu0 %v4168
        %v5928 = vpop.f32.mrf.mxu0
        %v5929 = vadd.f32 %v4247, %v5928
        %v5930 = vpop.f32.mrf.mxu0
        %v5931 = vadd.f32 %v4247, %v5930
        %5932 = vmatmul.bf16.gmra.mxu0 %v4181
        %v5933 = vpop.f32.mrf.mxu0
        %v5934 = vadd.f32 %v4247, %v5933
        %v5935 = vpop.f32.mrf.mxu0
        %v5936 = vadd.f32 %v4247, %v5935
        %5937 = vmatmul.bf16.gmra.mxu0 %v4194
        %v5938 = vpop.f32.mrf.mxu0
        %v5939 = vadd.f32 %v4247, %v5938
        %v5940 = vpop.f32.mrf.mxu0
        %v5941 = vadd.f32 %v4247, %v5940
        %5942 = vmatmul.bf16.gmra.mxu0 %v4207
        %v5943 = vpop.f32.mrf.mxu0
        %v5944 = vadd.f32 %v4247, %v5943
        %v5945 = vpop.f32.mrf.mxu0
        %v5946 = vadd.f32 %v4247, %v5945
        %5947 = vmatmul.bf16.gmra.mxu0 %v4220
        %v5948 = vpop.f32.mrf.mxu0
        %v5949 = vadd.f32 %v4247, %v5948
        %v5950 = vpop.f32.mrf.mxu0
        %v5951 = vadd.f32 %v4247, %v5950
        %5952 = vmatmul.bf16.gmra.mxu0 %v4233
        %v5953 = vpop.f32.mrf.mxu0
        %v5954 = vadd.f32 %v4247, %v5953
        %v5955 = vpop.f32.mrf.mxu0
        %v5956 = vadd.f32 %v4247, %v5955
        %5957 = vdwg.mxu0
        %5958 = vmatpush.bf16.msra.mxu0 %v4879
        %5959 = vmatpush.bf16.msra.mxu0 %v4877
        %5960 = vmatpush.bf16.msra.mxu0 %v4875
        %5961 = vmatpush.bf16.msra.mxu0 %v4873
        %5962 = vmatpush.bf16.msra.mxu0 %v4871
        %5963 = vmatpush.bf16.msra.mxu0 %v4869
        %5964 = vmatpush.bf16.msra.mxu0 %v4867
        %5965 = vmatpush.bf16.msra.mxu0 %v4865
        %5966 = vmatmul.bf16.gmra.mxu0 %v4143
        %v5967 = vpop.f32.mrf.mxu0
        %v5968 = vadd.f32 %v5919, %v5967
        %v5969 = vpop.f32.mrf.mxu0
        %v5970 = vadd.f32 %v5921, %v5969
        %5971 = vmatmul.bf16.gmra.mxu0 %v4156
        %v5972 = vpop.f32.mrf.mxu0
        %v5973 = vadd.f32 %v5924, %v5972
        %v5974 = vpop.f32.mrf.mxu0
        %v5975 = vadd.f32 %v5926, %v5974
        %5976 = vmatmul.bf16.gmra.mxu0 %v4169
        %v5977 = vpop.f32.mrf.mxu0
        %v5978 = vadd.f32 %v5929, %v5977
        %v5979 = vpop.f32.mrf.mxu0
        %v5980 = vadd.f32 %v5931, %v5979
        %5981 = vmatmul.bf16.gmra.mxu0 %v4182
        %v5982 = vpop.f32.mrf.mxu0
        %v5983 = vadd.f32 %v5934, %v5982
        %v5984 = vpop.f32.mrf.mxu0
        %v5985 = vadd.f32 %v5936, %v5984
        %5986 = vmatmul.bf16.gmra.mxu0 %v4195
        %v5987 = vpop.f32.mrf.mxu0
        %v5988 = vadd.f32 %v5939, %v5987
        %v5989 = vpop.f32.mrf.mxu0
        %v5990 = vadd.f32 %v5941, %v5989
        %5991 = vmatmul.bf16.gmra.mxu0 %v4208
        %v5992 = vpop.f32.mrf.mxu0
        %v5993 = vadd.f32 %v5944, %v5992
        %v5994 = vpop.f32.mrf.mxu0
        %v5995 = vadd.f32 %v5946, %v5994
        %5996 = vmatmul.bf16.gmra.mxu0 %v4221
        %v5997 = vpop.f32.mrf.mxu0
        %v5998 = vadd.f32 %v5949, %v5997
        %v5999 = vpop.f32.mrf.mxu0
        %v6000 = vadd.f32 %v5951, %v5999
        %6001 = vmatmul.bf16.gmra.mxu0 %v4234
        %v6002 = vpop.f32.mrf.mxu0
        %v6003 = vadd.f32 %v5954, %v6002
        %v6004 = vpop.f32.mrf.mxu0
        %v6005 = vadd.f32 %v5956, %v6004
        %6006 = vdwg.mxu0
        %6007 = vmatpush.bf16.msra.mxu0 %v4895
        %6008 = vmatpush.bf16.msra.mxu0 %v4893
        %6009 = vmatpush.bf16.msra.mxu0 %v4891
        %6010 = vmatpush.bf16.msra.mxu0 %v4889
        %6011 = vmatpush.bf16.msra.mxu0 %v4887
        %6012 = vmatpush.bf16.msra.mxu0 %v4885
        %6013 = vmatpush.bf16.msra.mxu0 %v4883
        %6014 = vmatpush.bf16.msra.mxu0 %v4881
        %6015 = vmatmul.bf16.gmra.mxu0 %v4144
        %v6016 = vpop.f32.mrf.mxu0
        %v6017 = vadd.f32 %v5968, %v6016
        %v6018 = vpop.f32.mrf.mxu0
        %v6019 = vadd.f32 %v5970, %v6018
        %6020 = vmatmul.bf16.gmra.mxu0 %v4157
        %v6021 = vpop.f32.mrf.mxu0
        %v6022 = vadd.f32 %v5973, %v6021
        %v6023 = vpop.f32.mrf.mxu0
        %v6024 = vadd.f32 %v5975, %v6023
        %6025 = vmatmul.bf16.gmra.mxu0 %v4170
        %v6026 = vpop.f32.mrf.mxu0
        %v6027 = vadd.f32 %v5978, %v6026
        %v6028 = vpop.f32.mrf.mxu0
        %v6029 = vadd.f32 %v5980, %v6028
        %6030 = vmatmul.bf16.gmra.mxu0 %v4183
        %v6031 = vpop.f32.mrf.mxu0
        %v6032 = vadd.f32 %v5983, %v6031
        %v6033 = vpop.f32.mrf.mxu0
        %v6034 = vadd.f32 %v5985, %v6033
        %6035 = vmatmul.bf16.gmra.mxu0 %v4196
        %v6036 = vpop.f32.mrf.mxu0
        %v6037 = vadd.f32 %v5988, %v6036
        %v6038 = vpop.f32.mrf.mxu0
        %v6039 = vadd.f32 %v5990, %v6038
        %6040 = vmatmul.bf16.gmra.mxu0 %v4209
        %v6041 = vpop.f32.mrf.mxu0
        %v6042 = vadd.f32 %v5993, %v6041
        %v6043 = vpop.f32.mrf.mxu0
        %v6044 = vadd.f32 %v5995, %v6043
        %6045 = vmatmul.bf16.gmra.mxu0 %v4222
        %v6046 = vpop.f32.mrf.mxu0
        %v6047 = vadd.f32 %v5998, %v6046
        %v6048 = vpop.f32.mrf.mxu0
        %v6049 = vadd.f32 %v6000, %v6048
        %6050 = vmatmul.bf16.gmra.mxu0 %v4235
        %v6051 = vpop.f32.mrf.mxu0
        %v6052 = vadd.f32 %v6003, %v6051
        %v6053 = vpop.f32.mrf.mxu0
        %v6054 = vadd.f32 %v6005, %v6053
        %6055 = vdwg.mxu0
        %6056 = vmatpush.bf16.msra.mxu0 %v4911
        %6057 = vmatpush.bf16.msra.mxu0 %v4909
        %6058 = vmatpush.bf16.msra.mxu0 %v4907
        %6059 = vmatpush.bf16.msra.mxu0 %v4905
        %6060 = vmatpush.bf16.msra.mxu0 %v4903
        %6061 = vmatpush.bf16.msra.mxu0 %v4901
        %6062 = vmatpush.bf16.msra.mxu0 %v4899
        %6063 = vmatpush.bf16.msra.mxu0 %v4897
        %6064 = vmatmul.bf16.gmra.mxu0 %v4145
        %v6065 = vpop.f32.mrf.mxu0
        %v6066 = vadd.f32 %v6017, %v6065
        %v6067 = vpop.f32.mrf.mxu0
        %v6068 = vadd.f32 %v6019, %v6067
        %6069 = vmatmul.bf16.gmra.mxu0 %v4158
        %v6070 = vpop.f32.mrf.mxu0
        %v6071 = vadd.f32 %v6022, %v6070
        %v6072 = vpop.f32.mrf.mxu0
        %v6073 = vadd.f32 %v6024, %v6072
        %6074 = vmatmul.bf16.gmra.mxu0 %v4171
        %v6075 = vpop.f32.mrf.mxu0
        %v6076 = vadd.f32 %v6027, %v6075
        %v6077 = vpop.f32.mrf.mxu0
        %v6078 = vadd.f32 %v6029, %v6077
        %6079 = vmatmul.bf16.gmra.mxu0 %v4184
        %v6080 = vpop.f32.mrf.mxu0
        %v6081 = vadd.f32 %v6032, %v6080
        %v6082 = vpop.f32.mrf.mxu0
        %v6083 = vadd.f32 %v6034, %v6082
        %6084 = vmatmul.bf16.gmra.mxu0 %v4197
        %v6085 = vpop.f32.mrf.mxu0
        %v6086 = vadd.f32 %v6037, %v6085
        %v6087 = vpop.f32.mrf.mxu0
        %v6088 = vadd.f32 %v6039, %v6087
        %6089 = vmatmul.bf16.gmra.mxu0 %v4210
        %v6090 = vpop.f32.mrf.mxu0
        %v6091 = vadd.f32 %v6042, %v6090
        %v6092 = vpop.f32.mrf.mxu0
        %v6093 = vadd.f32 %v6044, %v6092
        %6094 = vmatmul.bf16.gmra.mxu0 %v4223
        %v6095 = vpop.f32.mrf.mxu0
        %v6096 = vadd.f32 %v6047, %v6095
        %v6097 = vpop.f32.mrf.mxu0
        %v6098 = vadd.f32 %v6049, %v6097
        %6099 = vmatmul.bf16.gmra.mxu0 %v4236
        %v6100 = vpop.f32.mrf.mxu0
        %v6101 = vadd.f32 %v6052, %v6100
        %v6102 = vpop.f32.mrf.mxu0
        %v6103 = vadd.f32 %v6054, %v6102
        %6104 = vdwg.mxu0
        %6105 = vmatpush.bf16.msra.mxu0 %v4927
        %6106 = vmatpush.bf16.msra.mxu0 %v4925
        %6107 = vmatpush.bf16.msra.mxu0 %v4923
        %6108 = vmatpush.bf16.msra.mxu0 %v4921
        %6109 = vmatpush.bf16.msra.mxu0 %v4919
        %6110 = vmatpush.bf16.msra.mxu0 %v4917
        %6111 = vmatpush.bf16.msra.mxu0 %v4915
        %6112 = vmatpush.bf16.msra.mxu0 %v4913
        %6113 = vmatmul.bf16.gmra.mxu0 %v4146
        %v6114 = vpop.f32.mrf.mxu0
        %v6115 = vadd.f32 %v6066, %v6114
        %v6116 = vpop.f32.mrf.mxu0
        %v6117 = vadd.f32 %v6068, %v6116
        %6118 = vmatmul.bf16.gmra.mxu0 %v4159
        %v6119 = vpop.f32.mrf.mxu0
        %v6120 = vadd.f32 %v6071, %v6119
        %v6121 = vpop.f32.mrf.mxu0
        %v6122 = vadd.f32 %v6073, %v6121
        %6123 = vmatmul.bf16.gmra.mxu0 %v4172
        %v6124 = vpop.f32.mrf.mxu0
        %v6125 = vadd.f32 %v6076, %v6124
        %v6126 = vpop.f32.mrf.mxu0
        %v6127 = vadd.f32 %v6078, %v6126
        %6128 = vmatmul.bf16.gmra.mxu0 %v4185
        %v6129 = vpop.f32.mrf.mxu0
        %v6130 = vadd.f32 %v6081, %v6129
        %v6131 = vpop.f32.mrf.mxu0
        %v6132 = vadd.f32 %v6083, %v6131
        %6133 = vmatmul.bf16.gmra.mxu0 %v4198
        %v6134 = vpop.f32.mrf.mxu0
        %v6135 = vadd.f32 %v6086, %v6134
        %v6136 = vpop.f32.mrf.mxu0
        %v6137 = vadd.f32 %v6088, %v6136
        %6138 = vmatmul.bf16.gmra.mxu0 %v4211
        %v6139 = vpop.f32.mrf.mxu0
        %v6140 = vadd.f32 %v6091, %v6139
        %v6141 = vpop.f32.mrf.mxu0
        %v6142 = vadd.f32 %v6093, %v6141
        %6143 = vmatmul.bf16.gmra.mxu0 %v4224
        %v6144 = vpop.f32.mrf.mxu0
        %v6145 = vadd.f32 %v6096, %v6144
        %v6146 = vpop.f32.mrf.mxu0
        %v6147 = vadd.f32 %v6098, %v6146
        %6148 = vmatmul.bf16.gmra.mxu0 %v4237
        %v6149 = vpop.f32.mrf.mxu0
        %v6150 = vadd.f32 %v6101, %v6149
        %v6151 = vpop.f32.mrf.mxu0
        %v6152 = vadd.f32 %v6103, %v6151
        %6153 = vdwg.mxu0
        %6154 = vmatpush.bf16.msra.mxu0 %v4943
        %6155 = vmatpush.bf16.msra.mxu0 %v4941
        %6156 = vmatpush.bf16.msra.mxu0 %v4939
        %6157 = vmatpush.bf16.msra.mxu0 %v4937
        %6158 = vmatpush.bf16.msra.mxu0 %v4935
        %6159 = vmatpush.bf16.msra.mxu0 %v4933
        %6160 = vmatpush.bf16.msra.mxu0 %v4931
        %6161 = vmatpush.bf16.msra.mxu0 %v4929
        %6162 = vmatmul.bf16.gmra.mxu0 %v4147
        %v6163 = vpop.f32.mrf.mxu0
        %v6164 = vadd.f32 %v6115, %v6163
        %v6165 = vpop.f32.mrf.mxu0
        %v6166 = vadd.f32 %v6117, %v6165
        %6167 = vmatmul.bf16.gmra.mxu0 %v4160
        %v6168 = vpop.f32.mrf.mxu0
        %v6169 = vadd.f32 %v6120, %v6168
        %v6170 = vpop.f32.mrf.mxu0
        %v6171 = vadd.f32 %v6122, %v6170
        %6172 = vmatmul.bf16.gmra.mxu0 %v4173
        %v6173 = vpop.f32.mrf.mxu0
        %v6174 = vadd.f32 %v6125, %v6173
        %v6175 = vpop.f32.mrf.mxu0
        %v6176 = vadd.f32 %v6127, %v6175
        %6177 = vmatmul.bf16.gmra.mxu0 %v4186
        %v6178 = vpop.f32.mrf.mxu0
        %v6179 = vadd.f32 %v6130, %v6178
        %v6180 = vpop.f32.mrf.mxu0
        %v6181 = vadd.f32 %v6132, %v6180
        %6182 = vmatmul.bf16.gmra.mxu0 %v4199
        %v6183 = vpop.f32.mrf.mxu0
        %v6184 = vadd.f32 %v6135, %v6183
        %v6185 = vpop.f32.mrf.mxu0
        %v6186 = vadd.f32 %v6137, %v6185
        %6187 = vmatmul.bf16.gmra.mxu0 %v4212
        %v6188 = vpop.f32.mrf.mxu0
        %v6189 = vadd.f32 %v6140, %v6188
        %v6190 = vpop.f32.mrf.mxu0
        %v6191 = vadd.f32 %v6142, %v6190
        %6192 = vmatmul.bf16.gmra.mxu0 %v4225
        %v6193 = vpop.f32.mrf.mxu0
        %v6194 = vadd.f32 %v6145, %v6193
        %v6195 = vpop.f32.mrf.mxu0
        %v6196 = vadd.f32 %v6147, %v6195
        %6197 = vmatmul.bf16.gmra.mxu0 %v4238
        %v6198 = vpop.f32.mrf.mxu0
        %v6199 = vadd.f32 %v6150, %v6198
        %v6200 = vpop.f32.mrf.mxu0
        %v6201 = vadd.f32 %v6152, %v6200
        %6202 = vdwg.mxu0
        %6203 = vmatpush.bf16.msra.mxu0 %v4959
        %6204 = vmatpush.bf16.msra.mxu0 %v4957
        %6205 = vmatpush.bf16.msra.mxu0 %v4955
        %6206 = vmatpush.bf16.msra.mxu0 %v4953
        %6207 = vmatpush.bf16.msra.mxu0 %v4951
        %6208 = vmatpush.bf16.msra.mxu0 %v4949
        %6209 = vmatpush.bf16.msra.mxu0 %v4947
        %6210 = vmatpush.bf16.msra.mxu0 %v4945
        %6211 = vmatmul.bf16.gmra.mxu0 %v4148
        %v6212 = vpop.f32.mrf.mxu0
        %v6213 = vadd.f32 %v6164, %v6212
        %v6214 = vpop.f32.mrf.mxu0
        %v6215 = vadd.f32 %v6166, %v6214
        %6216 = vmatmul.bf16.gmra.mxu0 %v4161
        %v6217 = vpop.f32.mrf.mxu0
        %v6218 = vadd.f32 %v6169, %v6217
        %v6219 = vpop.f32.mrf.mxu0
        %v6220 = vadd.f32 %v6171, %v6219
        %6221 = vmatmul.bf16.gmra.mxu0 %v4174
        %v6222 = vpop.f32.mrf.mxu0
        %v6223 = vadd.f32 %v6174, %v6222
        %v6224 = vpop.f32.mrf.mxu0
        %v6225 = vadd.f32 %v6176, %v6224
        %6226 = vmatmul.bf16.gmra.mxu0 %v4187
        %v6227 = vpop.f32.mrf.mxu0
        %v6228 = vadd.f32 %v6179, %v6227
        %v6229 = vpop.f32.mrf.mxu0
        %v6230 = vadd.f32 %v6181, %v6229
        %6231 = vmatmul.bf16.gmra.mxu0 %v4200
        %v6232 = vpop.f32.mrf.mxu0
        %v6233 = vadd.f32 %v6184, %v6232
        %v6234 = vpop.f32.mrf.mxu0
        %v6235 = vadd.f32 %v6186, %v6234
        %6236 = vmatmul.bf16.gmra.mxu0 %v4213
        %v6237 = vpop.f32.mrf.mxu0
        %v6238 = vadd.f32 %v6189, %v6237
        %v6239 = vpop.f32.mrf.mxu0
        %v6240 = vadd.f32 %v6191, %v6239
        %6241 = vmatmul.bf16.gmra.mxu0 %v4226
        %v6242 = vpop.f32.mrf.mxu0
        %v6243 = vadd.f32 %v6194, %v6242
        %v6244 = vpop.f32.mrf.mxu0
        %v6245 = vadd.f32 %v6196, %v6244
        %6246 = vmatmul.bf16.gmra.mxu0 %v4239
        %v6247 = vpop.f32.mrf.mxu0
        %v6248 = vadd.f32 %v6199, %v6247
        %v6249 = vpop.f32.mrf.mxu0
        %v6250 = vadd.f32 %v6201, %v6249
        %6251 = vdwg.mxu0
        %6252 = vmatpush.bf16.msra.mxu0 %v4975
        %6253 = vmatpush.bf16.msra.mxu0 %v4973
        %6254 = vmatpush.bf16.msra.mxu0 %v4971
        %6255 = vmatpush.bf16.msra.mxu0 %v4969
        %6256 = vmatpush.bf16.msra.mxu0 %v4967
        %6257 = vmatpush.bf16.msra.mxu0 %v4965
        %6258 = vmatpush.bf16.msra.mxu0 %v4963
        %6259 = vmatpush.bf16.msra.mxu0 %v4961
        %6260 = vmatmul.bf16.gmra.mxu0 %v4149
        %v6261 = vpop.f32.mrf.mxu0
        %v6262 = vadd.f32 %v6213, %v6261
        %v6263 = vpop.f32.mrf.mxu0
        %v6264 = vadd.f32 %v6215, %v6263
        %6265 = vmatmul.bf16.gmra.mxu0 %v4162
        %v6266 = vpop.f32.mrf.mxu0
        %v6267 = vadd.f32 %v6218, %v6266
        %v6268 = vpop.f32.mrf.mxu0
        %v6269 = vadd.f32 %v6220, %v6268
        %6270 = vmatmul.bf16.gmra.mxu0 %v4175
        %v6271 = vpop.f32.mrf.mxu0
        %v6272 = vadd.f32 %v6223, %v6271
        %v6273 = vpop.f32.mrf.mxu0
        %v6274 = vadd.f32 %v6225, %v6273
        %6275 = vmatmul.bf16.gmra.mxu0 %v4188
        %v6276 = vpop.f32.mrf.mxu0
        %v6277 = vadd.f32 %v6228, %v6276
        %v6278 = vpop.f32.mrf.mxu0
        %v6279 = vadd.f32 %v6230, %v6278
        %6280 = vmatmul.bf16.gmra.mxu0 %v4201
        %v6281 = vpop.f32.mrf.mxu0
        %v6282 = vadd.f32 %v6233, %v6281
        %v6283 = vpop.f32.mrf.mxu0
        %v6284 = vadd.f32 %v6235, %v6283
        %6285 = vmatmul.bf16.gmra.mxu0 %v4214
        %v6286 = vpop.f32.mrf.mxu0
        %v6287 = vadd.f32 %v6238, %v6286
        %v6288 = vpop.f32.mrf.mxu0
        %v6289 = vadd.f32 %v6240, %v6288
        %6290 = vmatmul.bf16.gmra.mxu0 %v4227
        %v6291 = vpop.f32.mrf.mxu0
        %v6292 = vadd.f32 %v6243, %v6291
        %v6293 = vpop.f32.mrf.mxu0
        %v6294 = vadd.f32 %v6245, %v6293
        %6295 = vmatmul.bf16.gmra.mxu0 %v4240
        %v6296 = vpop.f32.mrf.mxu0
        %v6297 = vadd.f32 %v6248, %v6296
        %v6298 = vpop.f32.mrf.mxu0
        %v6299 = vadd.f32 %v6250, %v6298
        %6300 = vdwg.mxu0
        %6301 = vmatpush.bf16.msra.mxu0 %v4991
        %6302 = vmatpush.bf16.msra.mxu0 %v4989
        %6303 = vmatpush.bf16.msra.mxu0 %v4987
        %6304 = vmatpush.bf16.msra.mxu0 %v4985
        %6305 = vmatpush.bf16.msra.mxu0 %v4983
        %6306 = vmatpush.bf16.msra.mxu0 %v4981
        %6307 = vmatpush.bf16.msra.mxu0 %v4979
        %6308 = vmatpush.bf16.msra.mxu0 %v4977
        %6309 = vmatmul.bf16.gmra.mxu0 %v4150
        %v6310 = vpop.f32.mrf.mxu0
        %v6311 = vadd.f32 %v6262, %v6310
        %v6312 = vpop.f32.mrf.mxu0
        %v6313 = vadd.f32 %v6264, %v6312
        %6314 = vmatmul.bf16.gmra.mxu0 %v4163
        %v6315 = vpop.f32.mrf.mxu0
        %v6316 = vadd.f32 %v6267, %v6315
        %v6317 = vpop.f32.mrf.mxu0
        %v6318 = vadd.f32 %v6269, %v6317
        %6319 = vmatmul.bf16.gmra.mxu0 %v4176
        %v6320 = vpop.f32.mrf.mxu0
        %v6321 = vadd.f32 %v6272, %v6320
        %v6322 = vpop.f32.mrf.mxu0
        %v6323 = vadd.f32 %v6274, %v6322
        %6324 = vmatmul.bf16.gmra.mxu0 %v4189
        %v6325 = vpop.f32.mrf.mxu0
        %v6326 = vadd.f32 %v6277, %v6325
        %v6327 = vpop.f32.mrf.mxu0
        %v6328 = vadd.f32 %v6279, %v6327
        %6329 = vmatmul.bf16.gmra.mxu0 %v4202
        %v6330 = vpop.f32.mrf.mxu0
        %v6331 = vadd.f32 %v6282, %v6330
        %v6332 = vpop.f32.mrf.mxu0
        %v6333 = vadd.f32 %v6284, %v6332
        %6334 = vmatmul.bf16.gmra.mxu0 %v4215
        %v6335 = vpop.f32.mrf.mxu0
        %v6336 = vadd.f32 %v6287, %v6335
        %v6337 = vpop.f32.mrf.mxu0
        %v6338 = vadd.f32 %v6289, %v6337
        %6339 = vmatmul.bf16.gmra.mxu0 %v4228
        %v6340 = vpop.f32.mrf.mxu0
        %v6341 = vadd.f32 %v6292, %v6340
        %v6342 = vpop.f32.mrf.mxu0
        %v6343 = vadd.f32 %v6294, %v6342
        %6344 = vmatmul.bf16.gmra.mxu0 %v4241
        %v6345 = vpop.f32.mrf.mxu0
        %v6346 = vadd.f32 %v6297, %v6345
        %v6347 = vpop.f32.mrf.mxu0
        %v6348 = vadd.f32 %v6299, %v6347
        %6349 = vdwg.mxu0
        %6350 = vmatpush.bf16.msra.mxu0 %v5007
        %6351 = vmatpush.bf16.msra.mxu0 %v5005
        %6352 = vmatpush.bf16.msra.mxu0 %v5003
        %6353 = vmatpush.bf16.msra.mxu0 %v5001
        %6354 = vmatpush.bf16.msra.mxu0 %v4999
        %6355 = vmatpush.bf16.msra.mxu0 %v4997
        %6356 = vmatpush.bf16.msra.mxu0 %v4995
        %6357 = vmatpush.bf16.msra.mxu0 %v4993
        %6358 = vmatmul.bf16.gmra.mxu0 %v4151
        %v6359 = vpop.f32.mrf.mxu0
        %v6360 = vadd.f32 %v6311, %v6359
        %v6361 = vpop.f32.mrf.mxu0
        %v6362 = vadd.f32 %v6313, %v6361
        %6363 = vmatmul.bf16.gmra.mxu0 %v4164
        %v6364 = vpop.f32.mrf.mxu0
        %v6365 = vadd.f32 %v6316, %v6364
        %v6366 = vpop.f32.mrf.mxu0
        %v6367 = vadd.f32 %v6318, %v6366
        %6368 = vmatmul.bf16.gmra.mxu0 %v4177
        %v6369 = vpop.f32.mrf.mxu0
        %v6370 = vadd.f32 %v6321, %v6369
        %v6371 = vpop.f32.mrf.mxu0
        %v6372 = vadd.f32 %v6323, %v6371
        %6373 = vmatmul.bf16.gmra.mxu0 %v4190
        %v6374 = vpop.f32.mrf.mxu0
        %v6375 = vadd.f32 %v6326, %v6374
        %v6376 = vpop.f32.mrf.mxu0
        %v6377 = vadd.f32 %v6328, %v6376
        %6378 = vmatmul.bf16.gmra.mxu0 %v4203
        %v6379 = vpop.f32.mrf.mxu0
        %v6380 = vadd.f32 %v6331, %v6379
        %v6381 = vpop.f32.mrf.mxu0
        %v6382 = vadd.f32 %v6333, %v6381
        %6383 = vmatmul.bf16.gmra.mxu0 %v4216
        %v6384 = vpop.f32.mrf.mxu0
        %v6385 = vadd.f32 %v6336, %v6384
        %v6386 = vpop.f32.mrf.mxu0
        %v6387 = vadd.f32 %v6338, %v6386
        %6388 = vmatmul.bf16.gmra.mxu0 %v4229
        %v6389 = vpop.f32.mrf.mxu0
        %v6390 = vadd.f32 %v6341, %v6389
        %v6391 = vpop.f32.mrf.mxu0
        %v6392 = vadd.f32 %v6343, %v6391
        %6393 = vmatmul.bf16.gmra.mxu0 %v4242
        %v6394 = vpop.f32.mrf.mxu0
        %v6395 = vadd.f32 %v6346, %v6394
        %v6396 = vpop.f32.mrf.mxu0
        %v6397 = vadd.f32 %v6348, %v6396
        %6398 = vdwg.mxu0
        %6399 = vmatpush.bf16.msra.mxu0 %v5023
        %6400 = vmatpush.bf16.msra.mxu0 %v5021
        %6401 = vmatpush.bf16.msra.mxu0 %v5019
        %6402 = vmatpush.bf16.msra.mxu0 %v5017
        %6403 = vmatpush.bf16.msra.mxu0 %v5015
        %6404 = vmatpush.bf16.msra.mxu0 %v5013
        %6405 = vmatpush.bf16.msra.mxu0 %v5011
        %6406 = vmatpush.bf16.msra.mxu0 %v5009
        %6407 = vmatmul.bf16.gmra.mxu0 %v4152
        %v6408 = vpop.f32.mrf.mxu0
        %v6409 = vadd.f32 %v6360, %v6408
        %v6410 = vpop.f32.mrf.mxu0
        %v6411 = vadd.f32 %v6362, %v6410
        %6412 = vmatmul.bf16.gmra.mxu0 %v4165
        %v6413 = vpop.f32.mrf.mxu0
        %v6414 = vadd.f32 %v6365, %v6413
        %v6415 = vpop.f32.mrf.mxu0
        %v6416 = vadd.f32 %v6367, %v6415
        %6417 = vmatmul.bf16.gmra.mxu0 %v4178
        %v6418 = vpop.f32.mrf.mxu0
        %v6419 = vadd.f32 %v6370, %v6418
        %v6420 = vpop.f32.mrf.mxu0
        %v6421 = vadd.f32 %v6372, %v6420
        %6422 = vmatmul.bf16.gmra.mxu0 %v4191
        %v6423 = vpop.f32.mrf.mxu0
        %v6424 = vadd.f32 %v6375, %v6423
        %v6425 = vpop.f32.mrf.mxu0
        %v6426 = vadd.f32 %v6377, %v6425
        %6427 = vmatmul.bf16.gmra.mxu0 %v4204
        %v6428 = vpop.f32.mrf.mxu0
        %v6429 = vadd.f32 %v6380, %v6428
        %v6430 = vpop.f32.mrf.mxu0
        %v6431 = vadd.f32 %v6382, %v6430
        %6432 = vmatmul.bf16.gmra.mxu0 %v4217
        %v6433 = vpop.f32.mrf.mxu0
        %v6434 = vadd.f32 %v6385, %v6433
        %v6435 = vpop.f32.mrf.mxu0
        %v6436 = vadd.f32 %v6387, %v6435
        %6437 = vmatmul.bf16.gmra.mxu0 %v4230
        %v6438 = vpop.f32.mrf.mxu0
        %v6439 = vadd.f32 %v6390, %v6438
        %v6440 = vpop.f32.mrf.mxu0
        %v6441 = vadd.f32 %v6392, %v6440
        %6442 = vmatmul.bf16.gmra.mxu0 %v4243
        %v6443 = vpop.f32.mrf.mxu0
        %v6444 = vadd.f32 %v6395, %v6443
        %v6445 = vpop.f32.mrf.mxu0
        %v6446 = vadd.f32 %v6397, %v6445
        %6447 = vdwg.mxu0
        %6448 = vmatpush.bf16.msra.mxu0 %v5039
        %6449 = vmatpush.bf16.msra.mxu0 %v5037
        %6450 = vmatpush.bf16.msra.mxu0 %v5035
        %6451 = vmatpush.bf16.msra.mxu0 %v5033
        %6452 = vmatpush.bf16.msra.mxu0 %v5031
        %6453 = vmatpush.bf16.msra.mxu0 %v5029
        %6454 = vmatpush.bf16.msra.mxu0 %v5027
        %6455 = vmatpush.bf16.msra.mxu0 %v5025
        %6456 = vmatmul.bf16.gmra.mxu0 %v4153
        %v6457 = vpop.f32.mrf.mxu0
        %v6458 = vadd.f32 %v6409, %v6457
        %v6459 = vpop.f32.mrf.mxu0
        %v6460 = vadd.f32 %v6411, %v6459
        %6461 = vmatmul.bf16.gmra.mxu0 %v4166
        %v6462 = vpop.f32.mrf.mxu0
        %v6463 = vadd.f32 %v6414, %v6462
        %v6464 = vpop.f32.mrf.mxu0
        %v6465 = vadd.f32 %v6416, %v6464
        %6466 = vmatmul.bf16.gmra.mxu0 %v4179
        %v6467 = vpop.f32.mrf.mxu0
        %v6468 = vadd.f32 %v6419, %v6467
        %v6469 = vpop.f32.mrf.mxu0
        %v6470 = vadd.f32 %v6421, %v6469
        %6471 = vmatmul.bf16.gmra.mxu0 %v4192
        %v6472 = vpop.f32.mrf.mxu0
        %v6473 = vadd.f32 %v6424, %v6472
        %v6474 = vpop.f32.mrf.mxu0
        %v6475 = vadd.f32 %v6426, %v6474
        %6476 = vmatmul.bf16.gmra.mxu0 %v4205
        %v6477 = vpop.f32.mrf.mxu0
        %v6478 = vadd.f32 %v6429, %v6477
        %v6479 = vpop.f32.mrf.mxu0
        %v6480 = vadd.f32 %v6431, %v6479
        %6481 = vmatmul.bf16.gmra.mxu0 %v4218
        %v6482 = vpop.f32.mrf.mxu0
        %v6483 = vadd.f32 %v6434, %v6482
        %v6484 = vpop.f32.mrf.mxu0
        %v6485 = vadd.f32 %v6436, %v6484
        %6486 = vmatmul.bf16.gmra.mxu0 %v4231
        %v6487 = vpop.f32.mrf.mxu0
        %v6488 = vadd.f32 %v6439, %v6487
        %v6489 = vpop.f32.mrf.mxu0
        %v6490 = vadd.f32 %v6441, %v6489
        %6491 = vmatmul.bf16.gmra.mxu0 %v4244
        %v6492 = vpop.f32.mrf.mxu0
        %v6493 = vadd.f32 %v6444, %v6492
        %v6494 = vpop.f32.mrf.mxu0
        %v6495 = vadd.f32 %v6446, %v6494
        %6496 = vdwg.mxu0
        %6497 = vmatpush.bf16.msra.mxu0 0
        %6498 = vmatpush.bf16.msra.mxu0 0
        %6499 = vmatpush.bf16.msra.mxu0 0
        %6500 = vmatpush.bf16.msra.mxu0 0
        %6501 = vmatpush.bf16.msra.mxu0 %v5047
        %6502 = vmatpush.bf16.msra.mxu0 %v5045
        %6503 = vmatpush.bf16.msra.mxu0 %v5043
        %6504 = vmatpush.bf16.msra.mxu0 %v5041
        %6505 = vmatmul.bf16.gmra.mxu0 %v5249
        %v6506 = vpop.f32.mrf.mxu0
        %v6507 = vadd.f32 %v6458, %v6506
        %v6508 = vpop.f32.mrf.mxu0
        %v6509 = vadd.f32 %v6460, %v6508
        %6510 = vmatmul.bf16.gmra.mxu0 %v5252
        %v6511 = vpop.f32.mrf.mxu0
        %v6512 = vadd.f32 %v6463, %v6511
        %v6513 = vpop.f32.mrf.mxu0
        %v6514 = vadd.f32 %v6465, %v6513
        %6515 = vmatmul.bf16.gmra.mxu0 %v5255
        %v6516 = vpop.f32.mrf.mxu0
        %v6517 = vadd.f32 %v6468, %v6516
        %v6518 = vpop.f32.mrf.mxu0
        %v6519 = vadd.f32 %v6470, %v6518
        %6520 = vmatmul.bf16.gmra.mxu0 %v5258
        %v6521 = vpop.f32.mrf.mxu0
        %v6522 = vadd.f32 %v6473, %v6521
        %v6523 = vpop.f32.mrf.mxu0
        %v6524 = vadd.f32 %v6475, %v6523
        %6525 = vmatmul.bf16.gmra.mxu0 %v5261
        %v6526 = vpop.f32.mrf.mxu0
        %v6527 = vadd.f32 %v6478, %v6526
        %v6528 = vpop.f32.mrf.mxu0
        %v6529 = vadd.f32 %v6480, %v6528
        %6530 = vmatmul.bf16.gmra.mxu0 %v5264
        %v6531 = vpop.f32.mrf.mxu0
        %v6532 = vadd.f32 %v6483, %v6531
        %v6533 = vpop.f32.mrf.mxu0
        %v6534 = vadd.f32 %v6485, %v6533
        %6535 = vmatmul.bf16.gmra.mxu0 %v5267
        %v6536 = vpop.f32.mrf.mxu0
        %v6537 = vadd.f32 %v6488, %v6536
        %v6538 = vpop.f32.mrf.mxu0
        %v6539 = vadd.f32 %v6490, %v6538
        %6540 = vmatmul.bf16.gmra.mxu0 %v5270
        %v6541 = vpop.f32.mrf.mxu0
        %v6542 = vadd.f32 %v6493, %v6541
        %v6543 = vpop.f32.mrf.mxu0
        %v6544 = vadd.f32 %v6495, %v6543
        %6545 = vdwg.mxu0
        %v6546 = vmax.f32 %v5870, 0.0
        %v6547 = vmax.f32 %v6507, 0.0
        %v6548 = vmax.f32 %v5872, 0.0
        %v6549 = vmax.f32 %v6509, 0.0
        %v6550 = vmax.f32 %v5875, 0.0
        %v6551 = vmax.f32 %v6512, 0.0
        %v6552 = vmax.f32 %v5877, 0.0
        %v6553 = vmax.f32 %v6514, 0.0
        %v6554 = vmax.f32 %v5880, 0.0
        %v6555 = vmax.f32 %v6517, 0.0
        %v6556 = vmax.f32 %v5882, 0.0
        %v6557 = vmax.f32 %v6519, 0.0
        %v6558 = vmax.f32 %v5885, 0.0
        %v6559 = vmax.f32 %v6522, 0.0
        %v6560 = vmax.f32 %v5887, 0.0
        %v6561 = vmax.f32 %v6524, 0.0
        %v6562 = vmax.f32 %v5890, 0.0
        %v6563 = vmax.f32 %v6527, 0.0
        %v6564 = vmax.f32 %v5892, 0.0
        %v6565 = vmax.f32 %v6529, 0.0
        %v6566 = vmax.f32 %v5895, 0.0
        %v6567 = vmax.f32 %v6532, 0.0
        %v6568 = vmax.f32 %v5897, 0.0
        %v6569 = vmax.f32 %v6534, 0.0
        %v6570 = vmax.f32 %v5900, 0.0
        %v6571 = vmax.f32 %v6537, 0.0
        %v6572 = vmax.f32 %v5902, 0.0
        %v6573 = vmax.f32 %v6539, 0.0
        %v6574 = vmax.f32 %v5905, 0.0
        %v6575 = vmax.f32 %v6542, 0.0
        %v6576 = vmax.f32 %v5907, 0.0
        %v6577 = vmax.f32 %v6544, 0.0
        %v6578 = vpack.c.bf16 %v6548, %v6546
        %v6579 = vpack.c.bf16 %v6549, %v6547
        %v6580 = vpack.c.bf16 %v6552, %v6550
        %v6581 = vpack.c.bf16 %v6553, %v6551
        %v6582 = vpack.c.bf16 %v6556, %v6554
        %v6583 = vpack.c.bf16 %v6557, %v6555
        %v6584 = vpack.c.bf16 %v6560, %v6558
        %v6585 = vpack.c.bf16 %v6561, %v6559
        %v6586 = vpack.c.bf16 %v6564, %v6562
        %v6587 = vpack.c.bf16 %v6565, %v6563
        %v6588 = vpack.c.bf16 %v6568, %v6566
        %v6589 = vpack.c.bf16 %v6569, %v6567
        %v6590 = vpack.c.bf16 %v6572, %v6570
        %v6591 = vpack.c.bf16 %v6573, %v6571
        %v6592 = vpack.c.bf16 %v6576, %v6574
        %v6593 = vpack.c.bf16 %v6577, %v6575
        %v6619 = vunpack.c.l.b16 %v521
        %v6620 = vunpack.c.l.b16 %v522
        %v6621 = vunpack.c.l.b16 %v523
        %v6622 = vunpack.c.l.b16 %v524
        %v6623 = vunpack.c.l.b16 %v525
        %v6624 = vunpack.c.l.b16 %v526
        %v6625 = vunpack.c.l.b16 %v527
        %v6626 = vunpack.c.l.b16 %v528
        %v6627 = vunpack.c.l.b16 %v529
        %v6628 = vunpack.c.l.b16 %v530
        %v6629 = vunpack.c.l.b16 %v531
        %v6630 = vunpack.c.l.b16 %v532
        %v6631 = vunpack.c.l.b16 %v533
        %v6632 = vunpack.c.l.b16 %v534
        %v6633 = vunpack.c.l.b16 %v535
        %v6634 = vunpack.c.l.b16 %v536
        %v6635 = vunpack.c.l.b16 %v537
        %v6636 = vunpack.c.l.b16 %v538
        %v6637 = vunpack.c.l.b16 %v539
        %v6638 = vunpack.c.l.b16 %v540
        %v6639 = vunpack.c.l.b16 %v541
        %v6640 = vunpack.c.l.b16 %v542
        %v6641 = vunpack.c.l.b16 %v543
        %v6642 = vunpack.c.l.b16 %v544
        %v6643 = vunpack.c.l.b16 %v545
        %v6644 = vpack.c.b16 %v6620, %v6619
        %v6645 = vpack.c.b16 %v6622, %v6621
        %v6646 = vpack.c.b16 %v6624, %v6623
        %v6647 = vpack.c.b16 %v6626, %v6625
        %v6648 = vpack.c.b16 %v6628, %v6627
        %v6649 = vpack.c.b16 %v6630, %v6629
        %v6650 = vpack.c.b16 %v6632, %v6631
        %v6651 = vpack.c.b16 %v6634, %v6633
        %v6652 = vpack.c.b16 %v6636, %v6635
        %v6653 = vpack.c.b16 %v6638, %v6637
        %v6654 = vpack.c.b16 %v6640, %v6639
        %v6655 = vpack.c.b16 %v6642, %v6641
        %v6656 = vpack.c.b16 %v6643, %v6643
        %vm6669 = vcmask 588800
        %v6671 = vsel %vm6669, %v6579, 0
        %v6674 = vsel %vm6669, %v6581, 0
        %v6677 = vsel %vm6669, %v6583, 0
        %v6680 = vsel %vm6669, %v6585, 0
        %v6683 = vsel %vm6669, %v6587, 0
        %v6686 = vsel %vm6669, %v6589, 0
        %v6689 = vsel %vm6669, %v6591, 0
        %v6692 = vsel %vm6669, %v6593, 0
        %v6695 = vsel %vm1946, %v6656, 0
        %6697 = vmatpush.bf16.msra.mxu0 %v6651
        %6698 = vmatpush.bf16.msra.mxu0 %v6650
        %6699 = vmatpush.bf16.msra.mxu0 %v6649
        %6700 = vmatpush.bf16.msra.mxu0 %v6648
        %6701 = vmatpush.bf16.msra.mxu0 %v6647
        %6702 = vmatpush.bf16.msra.mxu0 %v6646
        %6703 = vmatpush.bf16.msra.mxu0 %v6645
        %6704 = vmatpush.bf16.msra.mxu0 %v6644
        %6705 = vmatmul.bf16.gmra.mxu0 %v6578
        %v6706 = vpop.f32.mrf.mxu0
        %v6707 = vadd.f32 0.0, %v6706
        %v6708 = vpop.f32.mrf.mxu0
        %v6709 = vadd.f32 0.0, %v6708
        %6710 = vmatmul.bf16.gmra.mxu0 %v6580
        %v6711 = vpop.f32.mrf.mxu0
        %v6712 = vadd.f32 0.0, %v6711
        %v6713 = vpop.f32.mrf.mxu0
        %v6714 = vadd.f32 0.0, %v6713
        %6715 = vmatmul.bf16.gmra.mxu0 %v6582
        %v6716 = vpop.f32.mrf.mxu0
        %v6717 = vadd.f32 0.0, %v6716
        %v6718 = vpop.f32.mrf.mxu0
        %v6719 = vadd.f32 0.0, %v6718
        %6720 = vmatmul.bf16.gmra.mxu0 %v6584
        %v6721 = vpop.f32.mrf.mxu0
        %v6722 = vadd.f32 0.0, %v6721
        %v6723 = vpop.f32.mrf.mxu0
        %v6724 = vadd.f32 0.0, %v6723
        %6725 = vmatmul.bf16.gmra.mxu0 %v6586
        %v6726 = vpop.f32.mrf.mxu0
        %v6727 = vadd.f32 0.0, %v6726
        %v6728 = vpop.f32.mrf.mxu0
        %v6729 = vadd.f32 0.0, %v6728
        %6730 = vmatmul.bf16.gmra.mxu0 %v6588
        %v6731 = vpop.f32.mrf.mxu0
        %v6732 = vadd.f32 0.0, %v6731
        %v6733 = vpop.f32.mrf.mxu0
        %v6734 = vadd.f32 0.0, %v6733
        %6735 = vmatmul.bf16.gmra.mxu0 %v6590
        %v6736 = vpop.f32.mrf.mxu0
        %v6737 = vadd.f32 0.0, %v6736
        %v6738 = vpop.f32.mrf.mxu0
        %v6739 = vadd.f32 0.0, %v6738
        %6740 = vmatmul.bf16.gmra.mxu0 %v6592
        %v6741 = vpop.f32.mrf.mxu0
        %v6742 = vadd.f32 0.0, %v6741
        %v6743 = vpop.f32.mrf.mxu0
        %v6744 = vadd.f32 0.0, %v6743
        %6745 = vdwg.mxu0
        %6746 = vmatpush.bf16.msra.mxu0 0
        %6747 = vmatpush.bf16.msra.mxu0 0
        %6748 = vmatpush.bf16.msra.mxu0 0
        %6749 = vmatpush.bf16.msra.mxu0 %v6695
        %6750 = vmatpush.bf16.msra.mxu0 %v6655
        %6751 = vmatpush.bf16.msra.mxu0 %v6654
        %6752 = vmatpush.bf16.msra.mxu0 %v6653
        %6753 = vmatpush.bf16.msra.mxu0 %v6652
        %6754 = vmatmul.bf16.gmra.mxu0 %v6671
        %v6755 = vpop.f32.mrf.mxu0
        %v6756 = vadd.f32 %v6707, %v6755
        %v6757 = vpop.f32.mrf.mxu0
        %v6758 = vadd.f32 %v6709, %v6757
        %6759 = vmatmul.bf16.gmra.mxu0 %v6674
        %v6760 = vpop.f32.mrf.mxu0
        %v6761 = vadd.f32 %v6712, %v6760
        %v6762 = vpop.f32.mrf.mxu0
        %v6763 = vadd.f32 %v6714, %v6762
        %6764 = vmatmul.bf16.gmra.mxu0 %v6677
        %v6765 = vpop.f32.mrf.mxu0
        %v6766 = vadd.f32 %v6717, %v6765
        %v6767 = vpop.f32.mrf.mxu0
        %v6768 = vadd.f32 %v6719, %v6767
        %6769 = vmatmul.bf16.gmra.mxu0 %v6680
        %v6770 = vpop.f32.mrf.mxu0
        %v6771 = vadd.f32 %v6722, %v6770
        %v6772 = vpop.f32.mrf.mxu0
        %v6773 = vadd.f32 %v6724, %v6772
        %6774 = vmatmul.bf16.gmra.mxu0 %v6683
        %v6775 = vpop.f32.mrf.mxu0
        %v6776 = vadd.f32 %v6727, %v6775
        %v6777 = vpop.f32.mrf.mxu0
        %v6778 = vadd.f32 %v6729, %v6777
        %6779 = vmatmul.bf16.gmra.mxu0 %v6686
        %v6780 = vpop.f32.mrf.mxu0
        %v6781 = vadd.f32 %v6732, %v6780
        %v6782 = vpop.f32.mrf.mxu0
        %v6783 = vadd.f32 %v6734, %v6782
        %6784 = vmatmul.bf16.gmra.mxu0 %v6689
        %v6785 = vpop.f32.mrf.mxu0
        %v6786 = vadd.f32 %v6737, %v6785
        %v6787 = vpop.f32.mrf.mxu0
        %v6788 = vadd.f32 %v6739, %v6787
        %6789 = vmatmul.bf16.gmra.mxu0 %v6692
        %v6790 = vpop.f32.mrf.mxu0
        %v6791 = vadd.f32 %v6742, %v6790
        %v6792 = vpop.f32.mrf.mxu0
        %v6793 = vadd.f32 %v6744, %v6792
        %6794 = vdwg.mxu0
        %v6795 = vunpack.c.l.bf16 %v495
        %v6796 = vunpack.c.l.bf16 %v496
        %v6797 = vunpack.c.l.bf16 %v497
        %v6798 = vunpack.c.l.bf16 %v498
        %v6799 = vunpack.c.l.bf16 %v499
        %v6800 = vunpack.c.l.bf16 %v500
        %v6801 = vunpack.c.l.bf16 %v501
        %v6802 = vunpack.c.l.bf16 %v502
        %v6803 = vunpack.c.l.bf16 %v503
        %v6804 = vunpack.c.l.bf16 %v504
        %v6805 = vunpack.c.l.bf16 %v505
        %v6806 = vunpack.c.l.bf16 %v506
        %v6807 = vunpack.c.l.bf16 %v507
        %v6808 = vunpack.c.l.bf16 %v508
        %v6809 = vunpack.c.l.bf16 %v509
        %v6810 = vunpack.c.l.bf16 %v510
        %v6811 = vmul.f32 %v6756, %v6795
        %v6812 = vmul.f32 %v6758, %v6796
        %v6813 = vmul.f32 %v6761, %v6797
        %v6814 = vmul.f32 %v6763, %v6798
        %v6815 = vmul.f32 %v6766, %v6799
        %v6816 = vmul.f32 %v6768, %v6800
        %v6817 = vmul.f32 %v6771, %v6801
        %v6818 = vmul.f32 %v6773, %v6802
        %v6819 = vmul.f32 %v6776, %v6803
        %v6820 = vmul.f32 %v6778, %v6804
        %v6821 = vmul.f32 %v6781, %v6805
        %v6822 = vmul.f32 %v6783, %v6806
        %v6823 = vmul.f32 %v6786, %v6807
        %v6824 = vmul.f32 %v6788, %v6808
        %v6825 = vmul.f32 %v6791, %v6809
        %v6826 = vmul.f32 %v6793, %v6810
        %v6827 = vrot.slane %v482, 4
        %s6828 = vtos %v6827
        %v6829 = vstv %s6828
        %6831 = vmatpush.msra.mxu0 %v6826
        %6832 = vmatpush.msra.mxu0 %v6825
        %6833 = vmatpush.msra.mxu0 %v6824
        %6834 = vmatpush.msra.mxu0 %v6823
        %6835 = vmatpush.msra.mxu0 %v6822
        %6836 = vmatpush.msra.mxu0 %v6821
        %6837 = vmatpush.msra.mxu0 %v6820
        %6838 = vmatpush.msra.mxu0 %v6819
        %6839 = vmatpush.msra.mxu0 %v6818
        %6840 = vmatpush.msra.mxu0 %v6817
        %6841 = vmatpush.msra.mxu0 %v6816
        %6842 = vmatpush.msra.mxu0 %v6815
        %6843 = vmatpush.msra.mxu0 %v6814
        %6844 = vmatpush.msra.mxu0 %v6813
        %6845 = vmatpush.msra.mxu0 %v6812
        %6846 = vmatpush.msra.mxu0 %v6811
        %6847 = vmatmul.f32.gmra.mxu0 %v519
        %v6848 = vpop.f32.mrf.mxu0
        %v6849 = vadd.f32 %v6829, %v6848
        %6850 = vdwg.mxu0
        %vm6851 = vcmask 130048
        %6852 = vst.msk [vmem:[%s464] sm:$0xff] %vm6851, %v6849
        %s6853 = sand.u32 %s318, 1
        %s6854 = scalar_lea.sflag [#allocation3], %s6853
        %s6855 = sand.u32 %s318, 1
        %s6856 = smul.addr %s6855, 8
        %s6857 = scalar_lea.vmem [#allocation2], %s6856
        %s6858 = sand.u32 %s344, 1
        %s6859 = scalar_lea.sflag [#allocation5], %s6858
        %s6860 = sand.u32 %s344, 1
        %s6861 = smul.addr %s6860, 4
        %s6862 = scalar_lea.vmem [#allocation4], %s6861
        // Predicated region
        $region73: #{tpu_custom_call.1} parent=71 // pred_check
          %p6863 = pneg %p328
        $region74: #{tpu_custom_call.1} parent=71 // pred_check_branch
          %6865 = sbr.rel (%p6863) target = $region76
        $region75: #{tpu_custom_call.1} parent=71 // pred_region
          %6867 = vsyncadd %s6854, 0
          %s6868 = smul.addr %s32, 8
          %s6869 = scalar_lea.hbm %s13, %s6868
          %s6871 = sshll.u32 %s6857, 4
          %s6872 = int_to_ptr.vmem [resolvable:$true] %s6871
          %s6873 = sshll.u32 %s6869, 4
          %s6874 = int_to_ptr.hbm [resolvable:$true] %s6873
          %6876 = dma.vmem_to_hbm [thread:$0]  %s6872, 128, %s6874, %s6854
        $region76: #{tpu_custom_call.1} parent=71 // pred_fallthru
          _
        // Predicated region
        $region77: #{tpu_custom_call.1} parent=71 // pred_check
          %p6877 = pneg %p354
        $region78: #{tpu_custom_call.1} parent=71 // pred_check_branch
          %6879 = sbr.rel (%p6877) target = $region80
        $region79: #{tpu_custom_call.1} parent=71 // pred_region
          %6881 = vsyncadd %s6859, 0
          %s6882 = smul.addr %s32, 4
          %s6883 = scalar_lea.hbm %s14, %s6882
          %s6885 = sshll.u32 %s6862, 4
          %s6886 = int_to_ptr.vmem [resolvable:$true] %s6885
          %s6887 = sshll.u32 %s6883, 4
          %s6888 = int_to_ptr.hbm [resolvable:$true] %s6887
          %6890 = dma.vmem_to_hbm [thread:$0]  %s6886, 64, %s6888, %s6859
        $region80: #{tpu_custom_call.1} parent=71 // pred_fallthru
          _
      $region72: #{tpu_custom_call.1} parent=5 // pred_fallthru
        _
      %p6891 = scmp.le.s32.totalorder 2, %s27
      // Predicated region
      $region81: #{tpu_custom_call.1} parent=5 // pred_check
        %p6892 = pneg %p6891
      $region82: #{tpu_custom_call.1} parent=5 // pred_check_branch
        %6894 = sbr.rel (%p6892) target = $region84
      $region83: #{tpu_custom_call.1} parent=5 // pred_region
        %s6895 = ssub.s32 %s27, 2
        // Predicated region
        $region85: #{tpu_custom_call.1} parent=83 // pred_check
          %p6896 = pneg %p334
        $region86: #{tpu_custom_call.1} parent=83 // pred_check_branch
          %6898 = sbr.rel (%p6896) target = $region88
        $region87: #{tpu_custom_call.1} parent=83 // pred_region
          %s6899 = sand.u32 %s319, 1
          %s6900 = scalar_lea.sflag [#allocation3], %s6899
          %s6901 = sand.u32 %s319, 1
          %s6902 = smul.addr %s6901, 8
          %s6903 = scalar_lea.vmem [#allocation2], %s6902
          %6905 = dma.done %s6900, 128
        $region88: #{tpu_custom_call.1} parent=83 // pred_fallthru
          _
        // Predicated region
        $region89: #{tpu_custom_call.1} parent=83 // pred_check
          %p6906 = pneg %p360
        $region90: #{tpu_custom_call.1} parent=83 // pred_check_branch
          %6908 = sbr.rel (%p6906) target = $region92
        $region91: #{tpu_custom_call.1} parent=83 // pred_region
          %s6909 = sand.u32 %s345, 1
          %s6910 = scalar_lea.sflag [#allocation5], %s6909
          %s6911 = sand.u32 %s345, 1
          %s6912 = smul.addr %s6911, 4
          %s6913 = scalar_lea.vmem [#allocation4], %s6912
          %6915 = dma.done %s6910, 64
        $region92: #{tpu_custom_call.1} parent=83 // pred_fallthru
          _
      $region84: #{tpu_custom_call.1} parent=5 // pred_fallthru
        _
    $region6: #{tpu_custom_call.1} parent=1 // loop_footer
      %s31 = sadd.s32 1, %s27
    $region7: #{tpu_custom_call.1} parent=1 // loop_footer_branch
      %26 = sbr.rel target = $region3
    $region8: #{tpu_custom_call.1} parent=1 // loop_exit
      _
    %6916 = vsyncpa [#allocation3], 1
    %s6917 = scalar_lea.sflag [#allocation3], 1
    %6918 = vsyncpa %s6917, 1
    %6919 = vsyncpa [#allocation5], 1
    %s6920 = scalar_lea.sflag [#allocation5], 1
    %6921 = vsyncpa %s6920, 1

</llo_original>
